<compile_context>
chip_gen: v5e
topology: v5e:2x2
jax: 0.10.0
libtpu: 0.0.40
codegen_flags: <defaults>
</compile_context>

<pallas_src>
import functools

import jax
import jax.numpy as jnp
import numpy as np
from jax.experimental import pallas as pl
from jax.experimental.pallas import tpu as pltpu


def _round_up(n, m):
    return ((n + m - 1) // m) * m


# ----------------------------------------------------------------------------
# Fused per-level Pallas kernel
# ----------------------------------------------------------------------------
def _fused_level_kernel(*refs, H, W, CP, stacked, use_gmat,
                        negative_slope, eps):
    """Entire aux head for one FPN level, one batch element.

    Input refs (in order):
      x:        (1, H*W, CP)   f32  channel-padded input feature (NHWC flat)
      per stacked layer l:
        w_l:    (9, CP, CP)    bf16 fused cls|reg conv weights (zero-padded)
        gamma_l, beta_l: (1, CP) f32 GroupNorm affine (cls|reg concatenated)
      gmat:     (CP, CP)       f32  group-averaging matrix (only if use_gmat)
      w_head:   (9, CP, CtotP) bf16 gfl_cls|gfl_reg weights (Scale folded)
      b_head:   (1, CtotP)     f32  head biases (Scale folded into reg part)
    Output:
      o:        (1, H*W, CtotP) f32
    Scratch (VMEM):
      xpad:     (H+2, W+2, CP) f32  zero-padded feature
    """
    n_in = 1 + 3 * stacked + (1 if use_gmat else 0) + 2
    in_refs = refs[:n_in]
    o_ref = refs[n_in]
    xpad_ref = refs[n_in + 1]

    it = iter(in_refs)
    x_ref = next(it)
    layers = [(next(it), next(it), next(it)) for _ in range(stacked)]
    gmat_ref = next(it) if use_gmat else None
    wh_ref = next(it)
    bh_ref = next(it)

    P = H * W

    # Zero only the 1-pixel border strips (every grid step, so it is correct
    # even when the batch axis is split across TensorCores).  Interior pixels
    # are fully overwritten (all CP lanes) before every conv.
    zrow = jnp.zeros((1, W + 2, CP), jnp.float32)
    xpad_ref[0:1, :, :] = zrow
    xpad_ref[H + 1:H + 2, :, :] = zrow
    zcol = jnp.zeros((H + 2, 1, CP), jnp.float32)
    xpad_ref[:, 0:1, :] = zcol
    xpad_ref[:, W + 1:W + 2, :] = zcol

    def conv3x3(feat, w_ref):
        # feat: (P, CP) f32.  One full-lane interior store, then nine
        # accumulated MXU dots taken directly from the shifted window views
        # (no im2col patch buffer).
        xpad_ref[1:H + 1, 1:W + 1, :] = feat.reshape(H, W, CP)
        acc = None
        for dy in range(3):
            for dx in range(3):
                win = xpad_ref[dy:dy + H, dx:dx + W, :].reshape(P, CP)
                part = jnp.dot(win.astype(jnp.bfloat16), w_ref[3 * dy + dx],
                               preferred_element_type=jnp.float32)
                acc = part if acc is None else acc + part
        return acc                                            # (P, Cout) f32

    def gn_leaky(acc, gamma_ref, beta_ref):
        # Per-sample GroupNorm, two-pass (centered) variance, then LeakyReLU.
        mean_c = jnp.mean(acc, axis=0, keepdims=True)          # (1, C)
        mean_g = (jnp.dot(mean_c, gmat_ref[...],
                          preferred_element_type=jnp.float32)
                  if use_gmat else mean_c)
        d = acc - mean_g
        var_c = jnp.mean(d * d, axis=0, keepdims=True)
        var_g = (jnp.dot(var_c, gmat_ref[...],
                         preferred_element_type=jnp.float32)
                 if use_gmat else var_c)
        y = d * jax.lax.rsqrt(var_g + eps)
        y = y * gamma_ref[...] + beta_ref[...]
        return jnp.where(y >= 0, y, negative_slope * y)        # LeakyReLU

    feat = x_ref[0]                                            # (P, CP) f32
    for (w_ref, g_ref, b_ref) in layers:
        feat = gn_leaky(conv3x3(feat, w_ref), g_ref, b_ref)    # (P, CP) f32

    head = conv3x3(feat, wh_ref) + bh_ref[...]                 # (P, CtotP)
    o_ref[0] = head.astype(o_ref.dtype)


def _fused_level_call(x_flat, layer_params, gmat, w_head, b_head, *, H, W,
                      negative_slope=0.1, eps=1e-5):
    """One pallas_call for a whole pyramid level. x_flat: (B, H*W, CP) f32."""
    B, P, CP = x_flat.shape
    CtotP = w_head.shape[-1]
    stacked = len(layer_params)
    use_gmat = gmat is not None

    def _full(a):
        nd = a.ndim
        return pl.BlockSpec(a.shape, lambda b, _nd=nd: (0,) * _nd)

    inputs = [x_flat]
    in_specs = [pl.BlockSpec((1, P, CP), lambda b: (b, 0, 0))]
    for (w, g, bb) in layer_params:
        inputs += [w, g, bb]
        in_specs += [_full(w), _full(g), _full(bb)]
    if use_gmat:
        inputs.append(gmat)
        in_specs.append(_full(gmat))
    inputs += [w_head, b_head]
    in_specs += [_full(w_head), _full(b_head)]

    kernel = functools.partial(
        _fused_level_kernel, H=H, W=W, CP=CP, stacked=stacked,
        use_gmat=use_gmat, negative_slope=negative_slope, eps=eps)

    # Explicit VMEM budget: double-buffered blocks + scratch + margin.
    block_bytes = P * CP * x_flat.dtype.itemsize + P * CtotP * 4
    for a in inputs[1:]:
        block_bytes += int(np.prod(a.shape)) * a.dtype.itemsize
    scratch_bytes = (H + 2) * (W + 2) * CP * 4
    vmem_limit = int(min(2 * block_bytes + scratch_bytes + (8 << 20),
                         100 << 20))

    return pl.pallas_call(
        kernel,
        out_shape=jax.ShapeDtypeStruct((B, P, CtotP), jnp.float32),
        grid=(B,),
        in_specs=in_specs,
        out_specs=pl.BlockSpec((1, P, CtotP), lambda b: (b, 0, 0)),
        scratch_shapes=[pltpu.VMEM((H + 2, W + 2, CP), jnp.float32)],
        compiler_params=pltpu.CompilerParams(
            dimension_semantics=("parallel",),
            vmem_limit_bytes=vmem_limit),
    )(*inputs)


# ----------------------------------------------------------------------------
# Parameter construction / packing (mirrors __init__ / init_weights)
# ----------------------------------------------------------------------------
def make_group_matrix(channels, num_groups, pad_to):
    """Group-averaging matrix, zero-padded to (pad_to, pad_to)."""
    cg = channels // num_groups
    m = np.zeros((pad_to, pad_to), np.float32)
    for g in range(num_groups):
        m[g * cg:(g + 1) * cg, g * cg:(g + 1) * cg] = 1.0 / cg
    return jnp.asarray(m)


def init_params(key, *, num_classes, in_channels, feat_channels, stacked_convs,
                reg_max, num_levels):
    p = {"cls_convs": [], "reg_convs": []}
    for branch in ("cls_convs", "reg_convs"):
        for i in range(stacked_convs):
            chn = in_channels if i == 0 else feat_channels
            key, k = jax.random.split(key)
            w = 0.01 * jax.random.normal(k, (3, 3, chn, feat_channels),
                                         jnp.float32)          # normal(0,0.01)
            gamma = jnp.ones((1, feat_channels), jnp.float32)   # GN weight = 1
            beta = jnp.zeros((1, feat_channels), jnp.float32)   # GN bias = 0
            p[branch].append((w, gamma, beta))
    key, k1 = jax.random.split(key)
    key, k2 = jax.random.split(key)
    p["gfl_cls_w"] = 0.01 * jax.random.normal(
        k1, (3, 3, feat_channels, num_classes), jnp.float32)
    p["gfl_cls_b"] = jnp.full((1, num_classes), -4.595, jnp.float32)
    p["gfl_reg_w"] = 0.01 * jax.random.normal(
        k2, (3, 3, feat_channels, 4 * (reg_max + 1)), jnp.float32)
    p["gfl_reg_b"] = jnp.zeros((1, 4 * (reg_max + 1)), jnp.float32)
    p["scales"] = [jnp.ones((1, 1), jnp.float32) for _ in range(num_levels)]
    return p


def _pack_conv_im2col(w33, cin_pad, cout_pad, dtype):
    """(3,3,cin,cout) -> (9, cin_pad, cout_pad), zero padded, tap-major."""
    cin, cout = w33.shape[2], w33.shape[3]
    w = jnp.zeros((3, 3, cin_pad, cout_pad), jnp.float32)
    w = w.at[:, :, :cin, :cout].set(w33)
    return w.reshape(9, cin_pad, cout_pad).astype(dtype)


def pack_params(params, *, num_classes, reg_max, num_groups):
    """Fuse cls/reg branches and build lane-padded, bf16 kernel weights."""
    F = params["cls_convs"][0][0].shape[-1]           # feat_channels
    Cin = params["cls_convs"][0][0].shape[2]
    F2 = 2 * F
    nreg = 4 * (reg_max + 1)
    Ctot = num_classes + nreg

    CP = max(_round_up(Cin, 128), _round_up(F2, 128))  # fused channel width
    CtotP = _round_up(Ctot, 128)                       # padded head width

    layers = []
    for i, ((wc, gc, bc), (wr, gr, br)) in enumerate(
            zip(params["cls_convs"], params["reg_convs"])):
        if i == 0:
            w = jnp.concatenate([wc, wr], axis=3)              # (3,3,Cin,2F)
        else:                                                  # block-diagonal
            w = jnp.zeros((3, 3, F2, F2), jnp.float32)
            w = w.at[:, :, :F, :F].set(wc)
            w = w.at[:, :, F:, F:].set(wr)
        w_packed = _pack_conv_im2col(w, CP, CP, jnp.bfloat16)
        gamma = jnp.ones((1, CP), jnp.float32).at[:, :F2].set(
            jnp.concatenate([gc, gr], axis=1))
        beta = jnp.zeros((1, CP), jnp.float32).at[:, :F2].set(
            jnp.concatenate([bc, br], axis=1))
        layers.append((w_packed, gamma, beta))

    # Head: cls takes channels [0:F], reg takes [F:2F]; outputs concatenated.
    wh = jnp.zeros((3, 3, F2, Ctot), jnp.float32)
    wh = wh.at[:, :, :F, :num_classes].set(params["gfl_cls_w"])
    wh = wh.at[:, :, F:, num_classes:].set(params["gfl_reg_w"])
    wh = _pack_conv_im2col(wh, CP, CtotP, jnp.float32)   # f32; scale-fold later
    bh = jnp.zeros((1, CtotP), jnp.float32).at[:, :Ctot].set(
        jnp.concatenate([params["gfl_cls_b"], params["gfl_reg_b"]], axis=1))

    cpg = F // num_groups
    if cpg == 1:
        gmat = None                  # GroupNorm degenerates to per-channel norm
    else:
        # Fused cls|reg tensor = 2*num_groups groups of cpg contiguous channels.
        gmat = make_group_matrix(F2, 2 * num_groups, CP)

    return dict(layers=layers, gmat=gmat, wh=wh, bh=bh, CP=CP, CtotP=CtotP,
                Ctot=Ctot, num_classes=num_classes, nreg=nreg)


# ----------------------------------------------------------------------------
# Forward pass
# ----------------------------------------------------------------------------
def nanodet_aux_head_forward(feats_nchw, params, *, num_classes, reg_max,
                             num_groups):
    """feats_nchw: list of (B, Cin, H, W) arrays (one per stride level)."""
    packed = pack_params(params, num_classes=num_classes, reg_max=reg_max,
                         num_groups=num_groups)
    CP, CtotP, Ctot = packed["CP"], packed["CtotP"], packed["Ctot"]
    outputs = []
    for x_nchw, scale in zip(feats_nchw, params["scales"]):
        B, Cin, H, W = x_nchw.shape
        x = jnp.transpose(x_nchw, (0, 2, 3, 1)).reshape(B, H * W, Cin)
        x = jnp.pad(x, ((0, 0), (0, 0), (0, CP - Cin)))        # lane-pad Cin
        # Fold the per-level learnable Scale into the reg columns of the head
        # (torch: scale(gfl_reg(x)) = (conv + bias) * s), then cast to bf16.
        scale_row = jnp.ones((1, CtotP), jnp.float32)
        scale_row = scale_row.at[:, num_classes:num_classes + packed["nreg"]
                                 ].set(scale[0, 0])
        w_head = (packed["wh"] * scale_row).astype(jnp.bfloat16)
        b_head = packed["bh"] * scale_row
        out = _fused_level_call(x, packed["layers"], packed["gmat"],
                                w_head, b_head, H=H, W=W)
        outputs.append(out[:, :, :Ctot])                       # drop lane pad
    # torch: cat over flattened-HW dim (dim=2 in NCHW) then permute(0,2,1)
    return jnp.concatenate(outputs, axis=1)                    # (B, sum HW, C)


# ----------------------------------------------------------------------------
# Pure-JAX reference (for correctness check only)
# ----------------------------------------------------------------------------
def _ref_conv(x, w, b=None):
    y = jax.lax.conv_general_dilated(
        x, w, window_strides=(1, 1), padding="SAME",
        dimension_numbers=("NHWC", "HWIO", "NHWC"))
    if b is not None:
        y = y + b.reshape(1, 1, 1, -1)
    return y


def _ref_gn(x, gamma, beta, num_groups, eps=1e-5):
    B, H, W, C = x.shape
    cg = C // num_groups
    xr = x.reshape(B, H, W, num_groups, cg)
    mean = jnp.mean(xr, axis=(1, 2, 4), keepdims=True)
    var = jnp.mean((xr - mean) ** 2, axis=(1, 2, 4), keepdims=True)
    xn = ((xr - mean) / jnp.sqrt(var + eps)).reshape(B, H, W, C)
    return xn * gamma.reshape(1, 1, 1, -1) + beta.reshape(1, 1, 1, -1)


def reference_forward(feats_nchw, params, *, num_groups):
    outputs = []
    for x_nchw, scale in zip(feats_nchw, params["scales"]):
        x = jnp.transpose(x_nchw, (0, 2, 3, 1))
        cls_feat, reg_feat = x, x
        for (w, g, b) in params["cls_convs"]:
            cls_feat = _ref_conv(cls_feat, w)
            cls_feat = _ref_gn(cls_feat, g, b, num_groups)
            cls_feat = jnp.where(cls_feat >= 0, cls_feat, 0.1 * cls_feat)
        for (w, g, b) in params["reg_convs"]:
            reg_feat = _ref_conv(reg_feat, w)
            reg_feat = _ref_gn(reg_feat, g, b, num_groups)
            reg_feat = jnp.where(reg_feat >= 0, reg_feat, 0.1 * reg_feat)
        cls_score = _ref_conv(cls_feat, params["gfl_cls_w"], params["gfl_cls_b"])
        bbox_pred = _ref_conv(reg_feat, params["gfl_reg_w"],
                              params["gfl_reg_b"]) * scale[0, 0]
        out = jnp.concatenate([cls_score, bbox_pred], axis=-1)
        B, H, W, C = out.shape
        outputs.append(out.reshape(B, H * W, C))
    return jnp.concatenate(outputs, axis=1)


# ----------------------------------------------------------------------------
if __name__ == "__main__":
    # Small synthetic config (all are constructor args of the module).
    num_classes = 4
    in_channels = 4
    feat_channels = 32
    stacked_convs = 2
    reg_max = 7               # 4*(reg_max+1) = 32 regression channels
    num_groups = 8            # 4 channels/group -> exercises the group matmul
    strides = [8, 16, 32]
    B = 2
    spatial = [16, 8, 8]      # H=W per level; multiples of 8 keep reshapes aligned

    key = jax.random.PRNGKey(0)
    key, kp = jax.random.split(key)
    params = init_params(kp, num_classes=num_classes, in_channels=in_channels,
                         feat_channels=feat_channels,
                         stacked_convs=stacked_convs, reg_max=reg_max,
                         num_levels=len(strides))
    # Non-trivial per-level scales so the Scale-folding path is exercised.
    params["scales"] = [jnp.full((1, 1), v, jnp.float32)
                        for v in (1.0, 0.5, 1.5)]

    feats = []
    for s in spatial:
        key, kf = jax.random.split(key)
        feats.append(jax.random.normal(kf, (B, in_channels, s, s), jnp.float32))

    out = nanodet_aux_head_forward(feats, params, num_classes=num_classes,
                                   reg_max=reg_max, num_groups=num_groups)
    out = jax.block_until_ready(out)

    expected_pts = sum(s * s for s in spatial)
    expected_ch = num_classes + 4 * (reg_max + 1)
    assert out.shape == (B, expected_pts, expected_ch), out.shape

    ref = jax.block_until_ready(
        reference_forward(feats, params, num_groups=num_groups))
    # bf16 weights / conv operands -> relaxed tolerance (GN renormalizes).
    np.testing.assert_allclose(np.asarray(out), np.asarray(ref),
                               rtol=5e-2, atol=5e-2)

    print("KERNEL_OK")
</pallas_src>

<mosaic_0001>
module attributes {stable_mosaic.version = 11 : i64} {
  func.func @_fused_level_kernel(%arg0: i32, %arg1: memref<1x256x128xf32, #tpu.memory_space<vmem>>, %arg2: memref<9x128x128xbf16, #tpu.memory_space<vmem>>, %arg3: memref<1x128xf32, #tpu.memory_space<vmem>>, %arg4: memref<1x128xf32, #tpu.memory_space<vmem>>, %arg5: memref<9x128x128xbf16, #tpu.memory_space<vmem>>, %arg6: memref<1x128xf32, #tpu.memory_space<vmem>>, %arg7: memref<1x128xf32, #tpu.memory_space<vmem>>, %arg8: memref<128x128xf32, #tpu.memory_space<vmem>>, %arg9: memref<9x128x128xbf16, #tpu.memory_space<vmem>>, %arg10: memref<1x128xf32, #tpu.memory_space<vmem>>, %arg11: memref<1x256x128xf32, #tpu.memory_space<vmem>>, %arg12: memref<18x18x128xf32, #tpu.memory_space<vmem>>) attributes {dimension_semantics = [#tpu.dimension_semantics<parallel>], iteration_bounds = array<i64: 2>, scalar_prefetch = 0 : i64, scratch_operands = 1 : i64, tpu.core_type = #tpu.core_type<tc>, window_params = [{transform_indices = @transform_0, window_bounds = array<i64: 1, 256, 128>}, {pipeline_mode = #tpu.pipeline_mode<synchronous>, transform_indices = @transform_1, window_bounds = array<i64: 9, 128, 128>}, {pipeline_mode = #tpu.pipeline_mode<synchronous>, transform_indices = @transform_2, window_bounds = array<i64: 1, 128>}, {pipeline_mode = #tpu.pipeline_mode<synchronous>, transform_indices = @transform_3, window_bounds = array<i64: 1, 128>}, {pipeline_mode = #tpu.pipeline_mode<synchronous>, transform_indices = @transform_4, window_bounds = array<i64: 9, 128, 128>}, {pipeline_mode = #tpu.pipeline_mode<synchronous>, transform_indices = @transform_5, window_bounds = array<i64: 1, 128>}, {pipeline_mode = #tpu.pipeline_mode<synchronous>, transform_indices = @transform_6, window_bounds = array<i64: 1, 128>}, {pipeline_mode = #tpu.pipeline_mode<synchronous>, transform_indices = @transform_7, window_bounds = array<i64: 128, 128>}, {pipeline_mode = #tpu.pipeline_mode<synchronous>, transform_indices = @transform_8, window_bounds = array<i64: 9, 128, 128>}, {pipeline_mode = #tpu.pipeline_mode<synchronous>, transform_indices = @transform_9, window_bounds = array<i64: 1, 128>}, {transform_indices = @transform_10, window_bounds = array<i64: 1, 256, 128>}]} {
    %cst = arith.constant 0.000000e+00 : f32
    %0 = vector.broadcast %cst : f32 to vector<1x18x128xf32>
    %c0 = arith.constant 0 : index
    %c0_0 = arith.constant 0 : index
    %c0_1 = arith.constant 0 : index
    %1 = vector.load %arg12[%c0, %c0_0, %c0_1] : memref<18x18x128xf32, #tpu.memory_space<vmem>>, vector<1x18x128xf32>
    tpu.vector_store %arg12[%c0, %c0_0, %c0_1], %0 {strides = array<i32>} : memref<18x18x128xf32, #tpu.memory_space<vmem>>, vector<1x18x128xf32>,
    %c17 = arith.constant 17 : index
    %c0_2 = arith.constant 0 : index
    %c0_3 = arith.constant 0 : index
    %2 = vector.load %arg12[%c17, %c0_2, %c0_3] : memref<18x18x128xf32, #tpu.memory_space<vmem>>, vector<1x18x128xf32>
    tpu.vector_store %arg12[%c17, %c0_2, %c0_3], %0 {strides = array<i32>} : memref<18x18x128xf32, #tpu.memory_space<vmem>>, vector<1x18x128xf32>,
    %cst_4 = arith.constant 0.000000e+00 : f32
    %3 = vector.broadcast %cst_4 : f32 to vector<18x1x128xf32>
    %c0_5 = arith.constant 0 : index
    %c0_6 = arith.constant 0 : index
    %c0_7 = arith.constant 0 : index
    %4 = vector.load %arg12[%c0_5, %c0_6, %c0_7] : memref<18x18x128xf32, #tpu.memory_space<vmem>>, vector<18x1x128xf32>
    tpu.vector_store %arg12[%c0_5, %c0_6, %c0_7], %3 {strides = array<i32>} : memref<18x18x128xf32, #tpu.memory_space<vmem>>, vector<18x1x128xf32>,
    %c0_8 = arith.constant 0 : index
    %c17_9 = arith.constant 17 : index
    %c0_10 = arith.constant 0 : index
    %5 = vector.load %arg12[%c0_8, %c17_9, %c0_10] : memref<18x18x128xf32, #tpu.memory_space<vmem>>, vector<18x1x128xf32>
    tpu.vector_store %arg12[%c0_8, %c17_9, %c0_10], %3 {strides = array<i32>} : memref<18x18x128xf32, #tpu.memory_space<vmem>>, vector<18x1x128xf32>,
    %c0_11 = arith.constant 0 : index
    %c0_12 = arith.constant 0 : index
    %c0_13 = arith.constant 0 : index
    %6 = vector.load %arg1[%c0_11, %c0_12, %c0_13] : memref<1x256x128xf32, #tpu.memory_space<vmem>>, vector<1x256x128xf32>
    %7 = vector.shape_cast %6 : vector<1x256x128xf32> to vector<256x128xf32>
    %8 = vector.shape_cast %7 : vector<256x128xf32> to vector<16x16x128xf32>
    %c1 = arith.constant 1 : index
    %c1_14 = arith.constant 1 : index
    %c0_15 = arith.constant 0 : index
    %9 = vector.load %arg12[%c1, %c1_14, %c0_15] : memref<18x18x128xf32, #tpu.memory_space<vmem>>, vector<16x16x128xf32>
    tpu.vector_store %arg12[%c1, %c1_14, %c0_15], %8 {strides = array<i32>} : memref<18x18x128xf32, #tpu.memory_space<vmem>>, vector<16x16x128xf32>,
    %c0_16 = arith.constant 0 : index
    %c0_17 = arith.constant 0 : index
    %c0_18 = arith.constant 0 : index
    %10 = vector.load %arg12[%c0_16, %c0_17, %c0_18] : memref<18x18x128xf32, #tpu.memory_space<vmem>>, vector<16x16x128xf32>
    %11 = vector.shape_cast %10 : vector<16x16x128xf32> to vector<256x128xf32>
    %12 = arith.truncf %11 : vector<256x128xf32> to vector<256x128xbf16>
    %c0_19 = arith.constant 0 : index
    %c0_20 = arith.constant 0 : index
    %c0_21 = arith.constant 0 : index
    %13 = vector.load %arg2[%c0_19, %c0_20, %c0_21] : memref<9x128x128xbf16, #tpu.memory_space<vmem>>, vector<1x128x128xbf16>
    %14 = vector.shape_cast %13 : vector<1x128x128xbf16> to vector<128x128xbf16>
    %cst_22 = arith.constant dense<0.000000e+00> : vector<256x128xf32>
    %15 = tpu.matmul %12, %14, %cst_22 {dimension_numbers = #tpu.dot_dimension_numbers<[1], [0], [0], [1], [0, 0, 1, 1], [], []>} : vector<256x128xbf16>, vector<128x128xbf16>, vector<256x128xf32> -> vector<256x128xf32>
    %c0_23 = arith.constant 0 : index
    %c1_24 = arith.constant 1 : index
    %c0_25 = arith.constant 0 : index
    %16 = vector.load %arg12[%c0_23, %c1_24, %c0_25] : memref<18x18x128xf32, #tpu.memory_space<vmem>>, vector<16x16x128xf32>
    %17 = vector.shape_cast %16 : vector<16x16x128xf32> to vector<256x128xf32>
    %18 = arith.truncf %17 : vector<256x128xf32> to vector<256x128xbf16>
    %c1_26 = arith.constant 1 : index
    %c0_27 = arith.constant 0 : index
    %c0_28 = arith.constant 0 : index
    %19 = vector.load %arg2[%c1_26, %c0_27, %c0_28] : memref<9x128x128xbf16, #tpu.memory_space<vmem>>, vector<1x128x128xbf16>
    %20 = vector.shape_cast %19 : vector<1x128x128xbf16> to vector<128x128xbf16>
    %cst_29 = arith.constant dense<0.000000e+00> : vector<256x128xf32>
    %21 = tpu.matmul %18, %20, %cst_29 {dimension_numbers = #tpu.dot_dimension_numbers<[1], [0], [0], [1], [0, 0, 1, 1], [], []>} : vector<256x128xbf16>, vector<128x128xbf16>, vector<256x128xf32> -> vector<256x128xf32>
    %22 = arith.addf %15, %21 : vector<256x128xf32>
    %c0_30 = arith.constant 0 : index
    %c2 = arith.constant 2 : index
    %c0_31 = arith.constant 0 : index
    %23 = vector.load %arg12[%c0_30, %c2, %c0_31] : memref<18x18x128xf32, #tpu.memory_space<vmem>>, vector<16x16x128xf32>
    %24 = vector.shape_cast %23 : vector<16x16x128xf32> to vector<256x128xf32>
    %25 = arith.truncf %24 : vector<256x128xf32> to vector<256x128xbf16>
    %c2_32 = arith.constant 2 : index
    %c0_33 = arith.constant 0 : index
    %c0_34 = arith.constant 0 : index
    %26 = vector.load %arg2[%c2_32, %c0_33, %c0_34] : memref<9x128x128xbf16, #tpu.memory_space<vmem>>, vector<1x128x128xbf16>
    %27 = vector.shape_cast %26 : vector<1x128x128xbf16> to vector<128x128xbf16>
    %cst_35 = arith.constant dense<0.000000e+00> : vector<256x128xf32>
    %28 = tpu.matmul %25, %27, %cst_35 {dimension_numbers = #tpu.dot_dimension_numbers<[1], [0], [0], [1], [0, 0, 1, 1], [], []>} : vector<256x128xbf16>, vector<128x128xbf16>, vector<256x128xf32> -> vector<256x128xf32>
    %29 = arith.addf %22, %28 : vector<256x128xf32>
    %c1_36 = arith.constant 1 : index
    %c0_37 = arith.constant 0 : index
    %c0_38 = arith.constant 0 : index
    %30 = vector.load %arg12[%c1_36, %c0_37, %c0_38] : memref<18x18x128xf32, #tpu.memory_space<vmem>>, vector<16x16x128xf32>
    %31 = vector.shape_cast %30 : vector<16x16x128xf32> to vector<256x128xf32>
    %32 = arith.truncf %31 : vector<256x128xf32> to vector<256x128xbf16>
    %c3 = arith.constant 3 : index
    %c0_39 = arith.constant 0 : index
    %c0_40 = arith.constant 0 : index
    %33 = vector.load %arg2[%c3, %c0_39, %c0_40] : memref<9x128x128xbf16, #tpu.memory_space<vmem>>, vector<1x128x128xbf16>
    %34 = vector.shape_cast %33 : vector<1x128x128xbf16> to vector<128x128xbf16>
    %cst_41 = arith.constant dense<0.000000e+00> : vector<256x128xf32>
    %35 = tpu.matmul %32, %34, %cst_41 {dimension_numbers = #tpu.dot_dimension_numbers<[1], [0], [0], [1], [0, 0, 1, 1], [], []>} : vector<256x128xbf16>, vector<128x128xbf16>, vector<256x128xf32> -> vector<256x128xf32>
    %36 = arith.addf %29, %35 : vector<256x128xf32>
    %c1_42 = arith.constant 1 : index
    %c1_43 = arith.constant 1 : index
    %c0_44 = arith.constant 0 : index
    %37 = vector.load %arg12[%c1_42, %c1_43, %c0_44] : memref<18x18x128xf32, #tpu.memory_space<vmem>>, vector<16x16x128xf32>
    %38 = vector.shape_cast %37 : vector<16x16x128xf32> to vector<256x128xf32>
    %39 = arith.truncf %38 : vector<256x128xf32> to vector<256x128xbf16>
    %c4 = arith.constant 4 : index
    %c0_45 = arith.constant 0 : index
    %c0_46 = arith.constant 0 : index
    %40 = vector.load %arg2[%c4, %c0_45, %c0_46] : memref<9x128x128xbf16, #tpu.memory_space<vmem>>, vector<1x128x128xbf16>
    %41 = vector.shape_cast %40 : vector<1x128x128xbf16> to vector<128x128xbf16>
    %cst_47 = arith.constant dense<0.000000e+00> : vector<256x128xf32>
    %42 = tpu.matmul %39, %41, %cst_47 {dimension_numbers = #tpu.dot_dimension_numbers<[1], [0], [0], [1], [0, 0, 1, 1], [], []>} : vector<256x128xbf16>, vector<128x128xbf16>, vector<256x128xf32> -> vector<256x128xf32>
    %43 = arith.addf %36, %42 : vector<256x128xf32>
    %c1_48 = arith.constant 1 : index
    %c2_49 = arith.constant 2 : index
    %c0_50 = arith.constant 0 : index
    %44 = vector.load %arg12[%c1_48, %c2_49, %c0_50] : memref<18x18x128xf32, #tpu.memory_space<vmem>>, vector<16x16x128xf32>
    %45 = vector.shape_cast %44 : vector<16x16x128xf32> to vector<256x128xf32>
    %46 = arith.truncf %45 : vector<256x128xf32> to vector<256x128xbf16>
    %c5 = arith.constant 5 : index
    %c0_51 = arith.constant 0 : index
    %c0_52 = arith.constant 0 : index
    %47 = vector.load %arg2[%c5, %c0_51, %c0_52] : memref<9x128x128xbf16, #tpu.memory_space<vmem>>, vector<1x128x128xbf16>
    %48 = vector.shape_cast %47 : vector<1x128x128xbf16> to vector<128x128xbf16>
    %cst_53 = arith.constant dense<0.000000e+00> : vector<256x128xf32>
    %49 = tpu.matmul %46, %48, %cst_53 {dimension_numbers = #tpu.dot_dimension_numbers<[1], [0], [0], [1], [0, 0, 1, 1], [], []>} : vector<256x128xbf16>, vector<128x128xbf16>, vector<256x128xf32> -> vector<256x128xf32>
    %50 = arith.addf %43, %49 : vector<256x128xf32>
    %c2_54 = arith.constant 2 : index
    %c0_55 = arith.constant 0 : index
    %c0_56 = arith.constant 0 : index
    %51 = vector.load %arg12[%c2_54, %c0_55, %c0_56] : memref<18x18x128xf32, #tpu.memory_space<vmem>>, vector<16x16x128xf32>
    %52 = vector.shape_cast %51 : vector<16x16x128xf32> to vector<256x128xf32>
    %53 = arith.truncf %52 : vector<256x128xf32> to vector<256x128xbf16>
    %c6 = arith.constant 6 : index
    %c0_57 = arith.constant 0 : index
    %c0_58 = arith.constant 0 : index
    %54 = vector.load %arg2[%c6, %c0_57, %c0_58] : memref<9x128x128xbf16, #tpu.memory_space<vmem>>, vector<1x128x128xbf16>
    %55 = vector.shape_cast %54 : vector<1x128x128xbf16> to vector<128x128xbf16>
    %cst_59 = arith.constant dense<0.000000e+00> : vector<256x128xf32>
    %56 = tpu.matmul %53, %55, %cst_59 {dimension_numbers = #tpu.dot_dimension_numbers<[1], [0], [0], [1], [0, 0, 1, 1], [], []>} : vector<256x128xbf16>, vector<128x128xbf16>, vector<256x128xf32> -> vector<256x128xf32>
    %57 = arith.addf %50, %56 : vector<256x128xf32>
    %c2_60 = arith.constant 2 : index
    %c1_61 = arith.constant 1 : index
    %c0_62 = arith.constant 0 : index
    %58 = vector.load %arg12[%c2_60, %c1_61, %c0_62] : memref<18x18x128xf32, #tpu.memory_space<vmem>>, vector<16x16x128xf32>
    %59 = vector.shape_cast %58 : vector<16x16x128xf32> to vector<256x128xf32>
    %60 = arith.truncf %59 : vector<256x128xf32> to vector<256x128xbf16>
    %c7 = arith.constant 7 : index
    %c0_63 = arith.constant 0 : index
    %c0_64 = arith.constant 0 : index
    %61 = vector.load %arg2[%c7, %c0_63, %c0_64] : memref<9x128x128xbf16, #tpu.memory_space<vmem>>, vector<1x128x128xbf16>
    %62 = vector.shape_cast %61 : vector<1x128x128xbf16> to vector<128x128xbf16>
    %cst_65 = arith.constant dense<0.000000e+00> : vector<256x128xf32>
    %63 = tpu.matmul %60, %62, %cst_65 {dimension_numbers = #tpu.dot_dimension_numbers<[1], [0], [0], [1], [0, 0, 1, 1], [], []>} : vector<256x128xbf16>, vector<128x128xbf16>, vector<256x128xf32> -> vector<256x128xf32>
    %64 = arith.addf %57, %63 : vector<256x128xf32>
    %c2_66 = arith.constant 2 : index
    %c2_67 = arith.constant 2 : index
    %c0_68 = arith.constant 0 : index
    %65 = vector.load %arg12[%c2_66, %c2_67, %c0_68] : memref<18x18x128xf32, #tpu.memory_space<vmem>>, vector<16x16x128xf32>
    %66 = vector.shape_cast %65 : vector<16x16x128xf32> to vector<256x128xf32>
    %67 = arith.truncf %66 : vector<256x128xf32> to vector<256x128xbf16>
    %c8 = arith.constant 8 : index
    %c0_69 = arith.constant 0 : index
    %c0_70 = arith.constant 0 : index
    %68 = vector.load %arg2[%c8, %c0_69, %c0_70] : memref<9x128x128xbf16, #tpu.memory_space<vmem>>, vector<1x128x128xbf16>
    %69 = vector.shape_cast %68 : vector<1x128x128xbf16> to vector<128x128xbf16>
    %cst_71 = arith.constant dense<0.000000e+00> : vector<256x128xf32>
    %70 = tpu.matmul %67, %69, %cst_71 {dimension_numbers = #tpu.dot_dimension_numbers<[1], [0], [0], [1], [0, 0, 1, 1], [], []>} : vector<256x128xbf16>, vector<128x128xbf16>, vector<256x128xf32> -> vector<256x128xf32>
    %71 = arith.addf %64, %70 : vector<256x128xf32>
    %cst_72 = arith.constant dense<0.000000e+00> : vector<128xf32>
    %72 = vector.multi_reduction <add>, %71, %cst_72 [0] : vector<256x128xf32> to vector<128xf32>
    %73 = vector.shape_cast %72 : vector<128xf32> to vector<1x128xf32>
    %cst_73 = arith.constant 2.560000e+02 : f32
    %74 = vector.broadcast %cst_73 : f32 to vector<1x128xf32>
    %75 = arith.divf %73, %74 : vector<1x128xf32>
    %c0_74 = arith.constant 0 : index
    %c0_75 = arith.constant 0 : index
    %76 = vector.load %arg8[%c0_74, %c0_75] : memref<128x128xf32, #tpu.memory_space<vmem>>, vector<128x128xf32>
    %cst_76 = arith.constant dense<0.000000e+00> : vector<1x128xf32>
    %77 = tpu.matmul %75, %76, %cst_76 {dimension_numbers = #tpu.dot_dimension_numbers<[1], [0], [0], [1], [0, 0, 1, 1], [], []>} : vector<1x128xf32>, vector<128x128xf32>, vector<1x128xf32> -> vector<1x128xf32>
    %78 = vector.broadcast %77 : vector<1x128xf32> to vector<256x128xf32>
    %79 = arith.subf %71, %78 : vector<256x128xf32>
    %80 = arith.mulf %79, %79 : vector<256x128xf32>
    %cst_77 = arith.constant dense<0.000000e+00> : vector<128xf32>
    %81 = vector.multi_reduction <add>, %80, %cst_77 [0] : vector<256x128xf32> to vector<128xf32>
    %82 = vector.shape_cast %81 : vector<128xf32> to vector<1x128xf32>
    %cst_78 = arith.constant 2.560000e+02 : f32
    %83 = vector.broadcast %cst_78 : f32 to vector<1x128xf32>
    %84 = arith.divf %82, %83 : vector<1x128xf32>
    %c0_79 = arith.constant 0 : index
    %c0_80 = arith.constant 0 : index
    %85 = vector.load %arg8[%c0_79, %c0_80] : memref<128x128xf32, #tpu.memory_space<vmem>>, vector<128x128xf32>
    %cst_81 = arith.constant dense<0.000000e+00> : vector<1x128xf32>
    %86 = tpu.matmul %84, %85, %cst_81 {dimension_numbers = #tpu.dot_dimension_numbers<[1], [0], [0], [1], [0, 0, 1, 1], [], []>} : vector<1x128xf32>, vector<128x128xf32>, vector<1x128xf32> -> vector<1x128xf32>
    %cst_82 = arith.constant 9.99999974E-6 : f32
    %87 = vector.broadcast %cst_82 : f32 to vector<1x128xf32>
    %88 = arith.addf %86, %87 : vector<1x128xf32>
    %89 = math.rsqrt %88 : vector<1x128xf32>
    %90 = vector.broadcast %89 : vector<1x128xf32> to vector<256x128xf32>
    %91 = arith.mulf %79, %90 : vector<256x128xf32>
    %c0_83 = arith.constant 0 : index
    %c0_84 = arith.constant 0 : index
    %92 = vector.load %arg3[%c0_83, %c0_84] : memref<1x128xf32, #tpu.memory_space<vmem>>, vector<1x128xf32>
    %93 = vector.broadcast %92 : vector<1x128xf32> to vector<256x128xf32>
    %94 = arith.mulf %91, %93 : vector<256x128xf32>
    %c0_85 = arith.constant 0 : index
    %c0_86 = arith.constant 0 : index
    %95 = vector.load %arg4[%c0_85, %c0_86] : memref<1x128xf32, #tpu.memory_space<vmem>>, vector<1x128xf32>
    %96 = vector.broadcast %95 : vector<1x128xf32> to vector<256x128xf32>
    %97 = arith.addf %94, %96 : vector<256x128xf32>
    %cst_87 = arith.constant 0.000000e+00 : f32
    %98 = vector.broadcast %cst_87 : f32 to vector<256x128xf32>
    %99 = arith.cmpf oge, %97, %98 : vector<256x128xf32>
    %cst_88 = arith.constant 1.000000e-01 : f32
    %100 = vector.broadcast %cst_88 : f32 to vector<256x128xf32>
    %101 = arith.mulf %100, %97 : vector<256x128xf32>
    %102 = arith.select %99, %97, %101 : vector<256x128xi1>, vector<256x128xf32>
    %103 = vector.shape_cast %102 : vector<256x128xf32> to vector<16x16x128xf32>
    %c1_89 = arith.constant 1 : index
    %c1_90 = arith.constant 1 : index
    %c0_91 = arith.constant 0 : index
    %104 = vector.load %arg12[%c1_89, %c1_90, %c0_91] : memref<18x18x128xf32, #tpu.memory_space<vmem>>, vector<16x16x128xf32>
    tpu.vector_store %arg12[%c1_89, %c1_90, %c0_91], %103 {strides = array<i32>} : memref<18x18x128xf32, #tpu.memory_space<vmem>>, vector<16x16x128xf32>,
    %c0_92 = arith.constant 0 : index
    %c0_93 = arith.constant 0 : index
    %c0_94 = arith.constant 0 : index
    %105 = vector.load %arg12[%c0_92, %c0_93, %c0_94] : memref<18x18x128xf32, #tpu.memory_space<vmem>>, vector<16x16x128xf32>
    %106 = vector.shape_cast %105 : vector<16x16x128xf32> to vector<256x128xf32>
    %107 = arith.truncf %106 : vector<256x128xf32> to vector<256x128xbf16>
    %c0_95 = arith.constant 0 : index
    %c0_96 = arith.constant 0 : index
    %c0_97 = arith.constant 0 : index
    %108 = vector.load %arg5[%c0_95, %c0_96, %c0_97] : memref<9x128x128xbf16, #tpu.memory_space<vmem>>, vector<1x128x128xbf16>
    %109 = vector.shape_cast %108 : vector<1x128x128xbf16> to vector<128x128xbf16>
    %cst_98 = arith.constant dense<0.000000e+00> : vector<256x128xf32>
    %110 = tpu.matmul %107, %109, %cst_98 {dimension_numbers = #tpu.dot_dimension_numbers<[1], [0], [0], [1], [0, 0, 1, 1], [], []>} : vector<256x128xbf16>, vector<128x128xbf16>, vector<256x128xf32> -> vector<256x128xf32>
    %c0_99 = arith.constant 0 : index
    %c1_100 = arith.constant 1 : index
    %c0_101 = arith.constant 0 : index
    %111 = vector.load %arg12[%c0_99, %c1_100, %c0_101] : memref<18x18x128xf32, #tpu.memory_space<vmem>>, vector<16x16x128xf32>
    %112 = vector.shape_cast %111 : vector<16x16x128xf32> to vector<256x128xf32>
    %113 = arith.truncf %112 : vector<256x128xf32> to vector<256x128xbf16>
    %c1_102 = arith.constant 1 : index
    %c0_103 = arith.constant 0 : index
    %c0_104 = arith.constant 0 : index
    %114 = vector.load %arg5[%c1_102, %c0_103, %c0_104] : memref<9x128x128xbf16, #tpu.memory_space<vmem>>, vector<1x128x128xbf16>
    %115 = vector.shape_cast %114 : vector<1x128x128xbf16> to vector<128x128xbf16>
    %cst_105 = arith.constant dense<0.000000e+00> : vector<256x128xf32>
    %116 = tpu.matmul %113, %115, %cst_105 {dimension_numbers = #tpu.dot_dimension_numbers<[1], [0], [0], [1], [0, 0, 1, 1], [], []>} : vector<256x128xbf16>, vector<128x128xbf16>, vector<256x128xf32> -> vector<256x128xf32>
    %117 = arith.addf %110, %116 : vector<256x128xf32>
    %c0_106 = arith.constant 0 : index
    %c2_107 = arith.constant 2 : index
    %c0_108 = arith.constant 0 : index
    %118 = vector.load %arg12[%c0_106, %c2_107, %c0_108] : memref<18x18x128xf32, #tpu.memory_space<vmem>>, vector<16x16x128xf32>
    %119 = vector.shape_cast %118 : vector<16x16x128xf32> to vector<256x128xf32>
    %120 = arith.truncf %119 : vector<256x128xf32> to vector<256x128xbf16>
    %c2_109 = arith.constant 2 : index
    %c0_110 = arith.constant 0 : index
    %c0_111 = arith.constant 0 : index
    %121 = vector.load %arg5[%c2_109, %c0_110, %c0_111] : memref<9x128x128xbf16, #tpu.memory_space<vmem>>, vector<1x128x128xbf16>
    %122 = vector.shape_cast %121 : vector<1x128x128xbf16> to vector<128x128xbf16>
    %cst_112 = arith.constant dense<0.000000e+00> : vector<256x128xf32>
    %123 = tpu.matmul %120, %122, %cst_112 {dimension_numbers = #tpu.dot_dimension_numbers<[1], [0], [0], [1], [0, 0, 1, 1], [], []>} : vector<256x128xbf16>, vector<128x128xbf16>, vector<256x128xf32> -> vector<256x128xf32>
    %124 = arith.addf %117, %123 : vector<256x128xf32>
    %c1_113 = arith.constant 1 : index
    %c0_114 = arith.constant 0 : index
    %c0_115 = arith.constant 0 : index
    %125 = vector.load %arg12[%c1_113, %c0_114, %c0_115] : memref<18x18x128xf32, #tpu.memory_space<vmem>>, vector<16x16x128xf32>
    %126 = vector.shape_cast %125 : vector<16x16x128xf32> to vector<256x128xf32>
    %127 = arith.truncf %126 : vector<256x128xf32> to vector<256x128xbf16>
    %c3_116 = arith.constant 3 : index
    %c0_117 = arith.constant 0 : index
    %c0_118 = arith.constant 0 : index
    %128 = vector.load %arg5[%c3_116, %c0_117, %c0_118] : memref<9x128x128xbf16, #tpu.memory_space<vmem>>, vector<1x128x128xbf16>
    %129 = vector.shape_cast %128 : vector<1x128x128xbf16> to vector<128x128xbf16>
    %cst_119 = arith.constant dense<0.000000e+00> : vector<256x128xf32>
    %130 = tpu.matmul %127, %129, %cst_119 {dimension_numbers = #tpu.dot_dimension_numbers<[1], [0], [0], [1], [0, 0, 1, 1], [], []>} : vector<256x128xbf16>, vector<128x128xbf16>, vector<256x128xf32> -> vector<256x128xf32>
    %131 = arith.addf %124, %130 : vector<256x128xf32>
    %c1_120 = arith.constant 1 : index
    %c1_121 = arith.constant 1 : index
    %c0_122 = arith.constant 0 : index
    %132 = vector.load %arg12[%c1_120, %c1_121, %c0_122] : memref<18x18x128xf32, #tpu.memory_space<vmem>>, vector<16x16x128xf32>
    %133 = vector.shape_cast %132 : vector<16x16x128xf32> to vector<256x128xf32>
    %134 = arith.truncf %133 : vector<256x128xf32> to vector<256x128xbf16>
    %c4_123 = arith.constant 4 : index
    %c0_124 = arith.constant 0 : index
    %c0_125 = arith.constant 0 : index
    %135 = vector.load %arg5[%c4_123, %c0_124, %c0_125] : memref<9x128x128xbf16, #tpu.memory_space<vmem>>, vector<1x128x128xbf16>
    %136 = vector.shape_cast %135 : vector<1x128x128xbf16> to vector<128x128xbf16>
    %cst_126 = arith.constant dense<0.000000e+00> : vector<256x128xf32>
    %137 = tpu.matmul %134, %136, %cst_126 {dimension_numbers = #tpu.dot_dimension_numbers<[1], [0], [0], [1], [0, 0, 1, 1], [], []>} : vector<256x128xbf16>, vector<128x128xbf16>, vector<256x128xf32> -> vector<256x128xf32>
    %138 = arith.addf %131, %137 : vector<256x128xf32>
    %c1_127 = arith.constant 1 : index
    %c2_128 = arith.constant 2 : index
    %c0_129 = arith.constant 0 : index
    %139 = vector.load %arg12[%c1_127, %c2_128, %c0_129] : memref<18x18x128xf32, #tpu.memory_space<vmem>>, vector<16x16x128xf32>
    %140 = vector.shape_cast %139 : vector<16x16x128xf32> to vector<256x128xf32>
    %141 = arith.truncf %140 : vector<256x128xf32> to vector<256x128xbf16>
    %c5_130 = arith.constant 5 : index
    %c0_131 = arith.constant 0 : index
    %c0_132 = arith.constant 0 : index
    %142 = vector.load %arg5[%c5_130, %c0_131, %c0_132] : memref<9x128x128xbf16, #tpu.memory_space<vmem>>, vector<1x128x128xbf16>
    %143 = vector.shape_cast %142 : vector<1x128x128xbf16> to vector<128x128xbf16>
    %cst_133 = arith.constant dense<0.000000e+00> : vector<256x128xf32>
    %144 = tpu.matmul %141, %143, %cst_133 {dimension_numbers = #tpu.dot_dimension_numbers<[1], [0], [0], [1], [0, 0, 1, 1], [], []>} : vector<256x128xbf16>, vector<128x128xbf16>, vector<256x128xf32> -> vector<256x128xf32>
    %145 = arith.addf %138, %144 : vector<256x128xf32>
    %c2_134 = arith.constant 2 : index
    %c0_135 = arith.constant 0 : index
    %c0_136 = arith.constant 0 : index
    %146 = vector.load %arg12[%c2_134, %c0_135, %c0_136] : memref<18x18x128xf32, #tpu.memory_space<vmem>>, vector<16x16x128xf32>
    %147 = vector.shape_cast %146 : vector<16x16x128xf32> to vector<256x128xf32>
    %148 = arith.truncf %147 : vector<256x128xf32> to vector<256x128xbf16>
    %c6_137 = arith.constant 6 : index
    %c0_138 = arith.constant 0 : index
    %c0_139 = arith.constant 0 : index
    %149 = vector.load %arg5[%c6_137, %c0_138, %c0_139] : memref<9x128x128xbf16, #tpu.memory_space<vmem>>, vector<1x128x128xbf16>
    %150 = vector.shape_cast %149 : vector<1x128x128xbf16> to vector<128x128xbf16>
    %cst_140 = arith.constant dense<0.000000e+00> : vector<256x128xf32>
    %151 = tpu.matmul %148, %150, %cst_140 {dimension_numbers = #tpu.dot_dimension_numbers<[1], [0], [0], [1], [0, 0, 1, 1], [], []>} : vector<256x128xbf16>, vector<128x128xbf16>, vector<256x128xf32> -> vector<256x128xf32>
    %152 = arith.addf %145, %151 : vector<256x128xf32>
    %c2_141 = arith.constant 2 : index
    %c1_142 = arith.constant 1 : index
    %c0_143 = arith.constant 0 : index
    %153 = vector.load %arg12[%c2_141, %c1_142, %c0_143] : memref<18x18x128xf32, #tpu.memory_space<vmem>>, vector<16x16x128xf32>
    %154 = vector.shape_cast %153 : vector<16x16x128xf32> to vector<256x128xf32>
    %155 = arith.truncf %154 : vector<256x128xf32> to vector<256x128xbf16>
    %c7_144 = arith.constant 7 : index
    %c0_145 = arith.constant 0 : index
    %c0_146 = arith.constant 0 : index
    %156 = vector.load %arg5[%c7_144, %c0_145, %c0_146] : memref<9x128x128xbf16, #tpu.memory_space<vmem>>, vector<1x128x128xbf16>
    %157 = vector.shape_cast %156 : vector<1x128x128xbf16> to vector<128x128xbf16>
    %cst_147 = arith.constant dense<0.000000e+00> : vector<256x128xf32>
    %158 = tpu.matmul %155, %157, %cst_147 {dimension_numbers = #tpu.dot_dimension_numbers<[1], [0], [0], [1], [0, 0, 1, 1], [], []>} : vector<256x128xbf16>, vector<128x128xbf16>, vector<256x128xf32> -> vector<256x128xf32>
    %159 = arith.addf %152, %158 : vector<256x128xf32>
    %c2_148 = arith.constant 2 : index
    %c2_149 = arith.constant 2 : index
    %c0_150 = arith.constant 0 : index
    %160 = vector.load %arg12[%c2_148, %c2_149, %c0_150] : memref<18x18x128xf32, #tpu.memory_space<vmem>>, vector<16x16x128xf32>
    %161 = vector.shape_cast %160 : vector<16x16x128xf32> to vector<256x128xf32>
    %162 = arith.truncf %161 : vector<256x128xf32> to vector<256x128xbf16>
    %c8_151 = arith.constant 8 : index
    %c0_152 = arith.constant 0 : index
    %c0_153 = arith.constant 0 : index
    %163 = vector.load %arg5[%c8_151, %c0_152, %c0_153] : memref<9x128x128xbf16, #tpu.memory_space<vmem>>, vector<1x128x128xbf16>
    %164 = vector.shape_cast %163 : vector<1x128x128xbf16> to vector<128x128xbf16>
    %cst_154 = arith.constant dense<0.000000e+00> : vector<256x128xf32>
    %165 = tpu.matmul %162, %164, %cst_154 {dimension_numbers = #tpu.dot_dimension_numbers<[1], [0], [0], [1], [0, 0, 1, 1], [], []>} : vector<256x128xbf16>, vector<128x128xbf16>, vector<256x128xf32> -> vector<256x128xf32>
    %166 = arith.addf %159, %165 : vector<256x128xf32>
    %cst_155 = arith.constant dense<0.000000e+00> : vector<128xf32>
    %167 = vector.multi_reduction <add>, %166, %cst_155 [0] : vector<256x128xf32> to vector<128xf32>
    %168 = vector.shape_cast %167 : vector<128xf32> to vector<1x128xf32>
    %cst_156 = arith.constant 2.560000e+02 : f32
    %169 = vector.broadcast %cst_156 : f32 to vector<1x128xf32>
    %170 = arith.divf %168, %169 : vector<1x128xf32>
    %c0_157 = arith.constant 0 : index
    %c0_158 = arith.constant 0 : index
    %171 = vector.load %arg8[%c0_157, %c0_158] : memref<128x128xf32, #tpu.memory_space<vmem>>, vector<128x128xf32>
    %cst_159 = arith.constant dense<0.000000e+00> : vector<1x128xf32>
    %172 = tpu.matmul %170, %171, %cst_159 {dimension_numbers = #tpu.dot_dimension_numbers<[1], [0], [0], [1], [0, 0, 1, 1], [], []>} : vector<1x128xf32>, vector<128x128xf32>, vector<1x128xf32> -> vector<1x128xf32>
    %173 = vector.broadcast %172 : vector<1x128xf32> to vector<256x128xf32>
    %174 = arith.subf %166, %173 : vector<256x128xf32>
    %175 = arith.mulf %174, %174 : vector<256x128xf32>
    %cst_160 = arith.constant dense<0.000000e+00> : vector<128xf32>
    %176 = vector.multi_reduction <add>, %175, %cst_160 [0] : vector<256x128xf32> to vector<128xf32>
    %177 = vector.shape_cast %176 : vector<128xf32> to vector<1x128xf32>
    %cst_161 = arith.constant 2.560000e+02 : f32
    %178 = vector.broadcast %cst_161 : f32 to vector<1x128xf32>
    %179 = arith.divf %177, %178 : vector<1x128xf32>
    %c0_162 = arith.constant 0 : index
    %c0_163 = arith.constant 0 : index
    %180 = vector.load %arg8[%c0_162, %c0_163] : memref<128x128xf32, #tpu.memory_space<vmem>>, vector<128x128xf32>
    %cst_164 = arith.constant dense<0.000000e+00> : vector<1x128xf32>
    %181 = tpu.matmul %179, %180, %cst_164 {dimension_numbers = #tpu.dot_dimension_numbers<[1], [0], [0], [1], [0, 0, 1, 1], [], []>} : vector<1x128xf32>, vector<128x128xf32>, vector<1x128xf32> -> vector<1x128xf32>
    %cst_165 = arith.constant 9.99999974E-6 : f32
    %182 = vector.broadcast %cst_165 : f32 to vector<1x128xf32>
    %183 = arith.addf %181, %182 : vector<1x128xf32>
    %184 = math.rsqrt %183 : vector<1x128xf32>
    %185 = vector.broadcast %184 : vector<1x128xf32> to vector<256x128xf32>
    %186 = arith.mulf %174, %185 : vector<256x128xf32>
    %c0_166 = arith.constant 0 : index
    %c0_167 = arith.constant 0 : index
    %187 = vector.load %arg6[%c0_166, %c0_167] : memref<1x128xf32, #tpu.memory_space<vmem>>, vector<1x128xf32>
    %188 = vector.broadcast %187 : vector<1x128xf32> to vector<256x128xf32>
    %189 = arith.mulf %186, %188 : vector<256x128xf32>
    %c0_168 = arith.constant 0 : index
    %c0_169 = arith.constant 0 : index
    %190 = vector.load %arg7[%c0_168, %c0_169] : memref<1x128xf32, #tpu.memory_space<vmem>>, vector<1x128xf32>
    %191 = vector.broadcast %190 : vector<1x128xf32> to vector<256x128xf32>
    %192 = arith.addf %189, %191 : vector<256x128xf32>
    %cst_170 = arith.constant 0.000000e+00 : f32
    %193 = vector.broadcast %cst_170 : f32 to vector<256x128xf32>
    %194 = arith.cmpf oge, %192, %193 : vector<256x128xf32>
    %cst_171 = arith.constant 1.000000e-01 : f32
    %195 = vector.broadcast %cst_171 : f32 to vector<256x128xf32>
    %196 = arith.mulf %195, %192 : vector<256x128xf32>
    %197 = arith.select %194, %192, %196 : vector<256x128xi1>, vector<256x128xf32>
    %198 = vector.shape_cast %197 : vector<256x128xf32> to vector<16x16x128xf32>
    %c1_172 = arith.constant 1 : index
    %c1_173 = arith.constant 1 : index
    %c0_174 = arith.constant 0 : index
    %199 = vector.load %arg12[%c1_172, %c1_173, %c0_174] : memref<18x18x128xf32, #tpu.memory_space<vmem>>, vector<16x16x128xf32>
    tpu.vector_store %arg12[%c1_172, %c1_173, %c0_174], %198 {strides = array<i32>} : memref<18x18x128xf32, #tpu.memory_space<vmem>>, vector<16x16x128xf32>,
    %c0_175 = arith.constant 0 : index
    %c0_176 = arith.constant 0 : index
    %c0_177 = arith.constant 0 : index
    %200 = vector.load %arg12[%c0_175, %c0_176, %c0_177] : memref<18x18x128xf32, #tpu.memory_space<vmem>>, vector<16x16x128xf32>
    %201 = vector.shape_cast %200 : vector<16x16x128xf32> to vector<256x128xf32>
    %202 = arith.truncf %201 : vector<256x128xf32> to vector<256x128xbf16>
    %c0_178 = arith.constant 0 : index
    %c0_179 = arith.constant 0 : index
    %c0_180 = arith.constant 0 : index
    %203 = vector.load %arg9[%c0_178, %c0_179, %c0_180] : memref<9x128x128xbf16, #tpu.memory_space<vmem>>, vector<1x128x128xbf16>
    %204 = vector.shape_cast %203 : vector<1x128x128xbf16> to vector<128x128xbf16>
    %cst_181 = arith.constant dense<0.000000e+00> : vector<256x128xf32>
    %205 = tpu.matmul %202, %204, %cst_181 {dimension_numbers = #tpu.dot_dimension_numbers<[1], [0], [0], [1], [0, 0, 1, 1], [], []>} : vector<256x128xbf16>, vector<128x128xbf16>, vector<256x128xf32> -> vector<256x128xf32>
    %c0_182 = arith.constant 0 : index
    %c1_183 = arith.constant 1 : index
    %c0_184 = arith.constant 0 : index
    %206 = vector.load %arg12[%c0_182, %c1_183, %c0_184] : memref<18x18x128xf32, #tpu.memory_space<vmem>>, vector<16x16x128xf32>
    %207 = vector.shape_cast %206 : vector<16x16x128xf32> to vector<256x128xf32>
    %208 = arith.truncf %207 : vector<256x128xf32> to vector<256x128xbf16>
    %c1_185 = arith.constant 1 : index
    %c0_186 = arith.constant 0 : index
    %c0_187 = arith.constant 0 : index
    %209 = vector.load %arg9[%c1_185, %c0_186, %c0_187] : memref<9x128x128xbf16, #tpu.memory_space<vmem>>, vector<1x128x128xbf16>
    %210 = vector.shape_cast %209 : vector<1x128x128xbf16> to vector<128x128xbf16>
    %cst_188 = arith.constant dense<0.000000e+00> : vector<256x128xf32>
    %211 = tpu.matmul %208, %210, %cst_188 {dimension_numbers = #tpu.dot_dimension_numbers<[1], [0], [0], [1], [0, 0, 1, 1], [], []>} : vector<256x128xbf16>, vector<128x128xbf16>, vector<256x128xf32> -> vector<256x128xf32>
    %212 = arith.addf %205, %211 : vector<256x128xf32>
    %c0_189 = arith.constant 0 : index
    %c2_190 = arith.constant 2 : index
    %c0_191 = arith.constant 0 : index
    %213 = vector.load %arg12[%c0_189, %c2_190, %c0_191] : memref<18x18x128xf32, #tpu.memory_space<vmem>>, vector<16x16x128xf32>
    %214 = vector.shape_cast %213 : vector<16x16x128xf32> to vector<256x128xf32>
    %215 = arith.truncf %214 : vector<256x128xf32> to vector<256x128xbf16>
    %c2_192 = arith.constant 2 : index
    %c0_193 = arith.constant 0 : index
    %c0_194 = arith.constant 0 : index
    %216 = vector.load %arg9[%c2_192, %c0_193, %c0_194] : memref<9x128x128xbf16, #tpu.memory_space<vmem>>, vector<1x128x128xbf16>
    %217 = vector.shape_cast %216 : vector<1x128x128xbf16> to vector<128x128xbf16>
    %cst_195 = arith.constant dense<0.000000e+00> : vector<256x128xf32>
    %218 = tpu.matmul %215, %217, %cst_195 {dimension_numbers = #tpu.dot_dimension_numbers<[1], [0], [0], [1], [0, 0, 1, 1], [], []>} : vector<256x128xbf16>, vector<128x128xbf16>, vector<256x128xf32> -> vector<256x128xf32>
    %219 = arith.addf %212, %218 : vector<256x128xf32>
    %c1_196 = arith.constant 1 : index
    %c0_197 = arith.constant 0 : index
    %c0_198 = arith.constant 0 : index
    %220 = vector.load %arg12[%c1_196, %c0_197, %c0_198] : memref<18x18x128xf32, #tpu.memory_space<vmem>>, vector<16x16x128xf32>
    %221 = vector.shape_cast %220 : vector<16x16x128xf32> to vector<256x128xf32>
    %222 = arith.truncf %221 : vector<256x128xf32> to vector<256x128xbf16>
    %c3_199 = arith.constant 3 : index
    %c0_200 = arith.constant 0 : index
    %c0_201 = arith.constant 0 : index
    %223 = vector.load %arg9[%c3_199, %c0_200, %c0_201] : memref<9x128x128xbf16, #tpu.memory_space<vmem>>, vector<1x128x128xbf16>
    %224 = vector.shape_cast %223 : vector<1x128x128xbf16> to vector<128x128xbf16>
    %cst_202 = arith.constant dense<0.000000e+00> : vector<256x128xf32>
    %225 = tpu.matmul %222, %224, %cst_202 {dimension_numbers = #tpu.dot_dimension_numbers<[1], [0], [0], [1], [0, 0, 1, 1], [], []>} : vector<256x128xbf16>, vector<128x128xbf16>, vector<256x128xf32> -> vector<256x128xf32>
    %226 = arith.addf %219, %225 : vector<256x128xf32>
    %c1_203 = arith.constant 1 : index
    %c1_204 = arith.constant 1 : index
    %c0_205 = arith.constant 0 : index
    %227 = vector.load %arg12[%c1_203, %c1_204, %c0_205] : memref<18x18x128xf32, #tpu.memory_space<vmem>>, vector<16x16x128xf32>
    %228 = vector.shape_cast %227 : vector<16x16x128xf32> to vector<256x128xf32>
    %229 = arith.truncf %228 : vector<256x128xf32> to vector<256x128xbf16>
    %c4_206 = arith.constant 4 : index
    %c0_207 = arith.constant 0 : index
    %c0_208 = arith.constant 0 : index
    %230 = vector.load %arg9[%c4_206, %c0_207, %c0_208] : memref<9x128x128xbf16, #tpu.memory_space<vmem>>, vector<1x128x128xbf16>
    %231 = vector.shape_cast %230 : vector<1x128x128xbf16> to vector<128x128xbf16>
    %cst_209 = arith.constant dense<0.000000e+00> : vector<256x128xf32>
    %232 = tpu.matmul %229, %231, %cst_209 {dimension_numbers = #tpu.dot_dimension_numbers<[1], [0], [0], [1], [0, 0, 1, 1], [], []>} : vector<256x128xbf16>, vector<128x128xbf16>, vector<256x128xf32> -> vector<256x128xf32>
    %233 = arith.addf %226, %232 : vector<256x128xf32>
    %c1_210 = arith.constant 1 : index
    %c2_211 = arith.constant 2 : index
    %c0_212 = arith.constant 0 : index
    %234 = vector.load %arg12[%c1_210, %c2_211, %c0_212] : memref<18x18x128xf32, #tpu.memory_space<vmem>>, vector<16x16x128xf32>
    %235 = vector.shape_cast %234 : vector<16x16x128xf32> to vector<256x128xf32>
    %236 = arith.truncf %235 : vector<256x128xf32> to vector<256x128xbf16>
    %c5_213 = arith.constant 5 : index
    %c0_214 = arith.constant 0 : index
    %c0_215 = arith.constant 0 : index
    %237 = vector.load %arg9[%c5_213, %c0_214, %c0_215] : memref<9x128x128xbf16, #tpu.memory_space<vmem>>, vector<1x128x128xbf16>
    %238 = vector.shape_cast %237 : vector<1x128x128xbf16> to vector<128x128xbf16>
    %cst_216 = arith.constant dense<0.000000e+00> : vector<256x128xf32>
    %239 = tpu.matmul %236, %238, %cst_216 {dimension_numbers = #tpu.dot_dimension_numbers<[1], [0], [0], [1], [0, 0, 1, 1], [], []>} : vector<256x128xbf16>, vector<128x128xbf16>, vector<256x128xf32> -> vector<256x128xf32>
    %240 = arith.addf %233, %239 : vector<256x128xf32>
    %c2_217 = arith.constant 2 : index
    %c0_218 = arith.constant 0 : index
    %c0_219 = arith.constant 0 : index
    %241 = vector.load %arg12[%c2_217, %c0_218, %c0_219] : memref<18x18x128xf32, #tpu.memory_space<vmem>>, vector<16x16x128xf32>
    %242 = vector.shape_cast %241 : vector<16x16x128xf32> to vector<256x128xf32>
    %243 = arith.truncf %242 : vector<256x128xf32> to vector<256x128xbf16>
    %c6_220 = arith.constant 6 : index
    %c0_221 = arith.constant 0 : index
    %c0_222 = arith.constant 0 : index
    %244 = vector.load %arg9[%c6_220, %c0_221, %c0_222] : memref<9x128x128xbf16, #tpu.memory_space<vmem>>, vector<1x128x128xbf16>
    %245 = vector.shape_cast %244 : vector<1x128x128xbf16> to vector<128x128xbf16>
    %cst_223 = arith.constant dense<0.000000e+00> : vector<256x128xf32>
    %246 = tpu.matmul %243, %245, %cst_223 {dimension_numbers = #tpu.dot_dimension_numbers<[1], [0], [0], [1], [0, 0, 1, 1], [], []>} : vector<256x128xbf16>, vector<128x128xbf16>, vector<256x128xf32> -> vector<256x128xf32>
    %247 = arith.addf %240, %246 : vector<256x128xf32>
    %c2_224 = arith.constant 2 : index
    %c1_225 = arith.constant 1 : index
    %c0_226 = arith.constant 0 : index
    %248 = vector.load %arg12[%c2_224, %c1_225, %c0_226] : memref<18x18x128xf32, #tpu.memory_space<vmem>>, vector<16x16x128xf32>
    %249 = vector.shape_cast %248 : vector<16x16x128xf32> to vector<256x128xf32>
    %250 = arith.truncf %249 : vector<256x128xf32> to vector<256x128xbf16>
    %c7_227 = arith.constant 7 : index
    %c0_228 = arith.constant 0 : index
    %c0_229 = arith.constant 0 : index
    %251 = vector.load %arg9[%c7_227, %c0_228, %c0_229] : memref<9x128x128xbf16, #tpu.memory_space<vmem>>, vector<1x128x128xbf16>
    %252 = vector.shape_cast %251 : vector<1x128x128xbf16> to vector<128x128xbf16>
    %cst_230 = arith.constant dense<0.000000e+00> : vector<256x128xf32>
    %253 = tpu.matmul %250, %252, %cst_230 {dimension_numbers = #tpu.dot_dimension_numbers<[1], [0], [0], [1], [0, 0, 1, 1], [], []>} : vector<256x128xbf16>, vector<128x128xbf16>, vector<256x128xf32> -> vector<256x128xf32>
    %254 = arith.addf %247, %253 : vector<256x128xf32>
    %c2_231 = arith.constant 2 : index
    %c2_232 = arith.constant 2 : index
    %c0_233 = arith.constant 0 : index
    %255 = vector.load %arg12[%c2_231, %c2_232, %c0_233] : memref<18x18x128xf32, #tpu.memory_space<vmem>>, vector<16x16x128xf32>
    %256 = vector.shape_cast %255 : vector<16x16x128xf32> to vector<256x128xf32>
    %257 = arith.truncf %256 : vector<256x128xf32> to vector<256x128xbf16>
    %c8_234 = arith.constant 8 : index
    %c0_235 = arith.constant 0 : index
    %c0_236 = arith.constant 0 : index
    %258 = vector.load %arg9[%c8_234, %c0_235, %c0_236] : memref<9x128x128xbf16, #tpu.memory_space<vmem>>, vector<1x128x128xbf16>
    %259 = vector.shape_cast %258 : vector<1x128x128xbf16> to vector<128x128xbf16>
    %cst_237 = arith.constant dense<0.000000e+00> : vector<256x128xf32>
    %260 = tpu.matmul %257, %259, %cst_237 {dimension_numbers = #tpu.dot_dimension_numbers<[1], [0], [0], [1], [0, 0, 1, 1], [], []>} : vector<256x128xbf16>, vector<128x128xbf16>, vector<256x128xf32> -> vector<256x128xf32>
    %261 = arith.addf %254, %260 : vector<256x128xf32>
    %c0_238 = arith.constant 0 : index
    %c0_239 = arith.constant 0 : index
    %262 = vector.load %arg10[%c0_238, %c0_239] : memref<1x128xf32, #tpu.memory_space<vmem>>, vector<1x128xf32>
    %263 = vector.broadcast %262 : vector<1x128xf32> to vector<256x128xf32>
    %264 = arith.addf %261, %263 : vector<256x128xf32>
    %c0_240 = arith.constant 0 : index
    %c0_241 = arith.constant 0 : index
    %c0_242 = arith.constant 0 : index
    %265 = vector.load %arg11[%c0_240, %c0_241, %c0_242] : memref<1x256x128xf32, #tpu.memory_space<vmem>>, vector<1x256x128xf32>
    %266 = vector.shape_cast %265 : vector<1x256x128xf32> to vector<256x128xf32>
    %267 = vector.shape_cast %264 : vector<256x128xf32> to vector<1x256x128xf32>
    tpu.vector_store %arg11[%c0_240, %c0_241, %c0_242], %267 {strides = array<i32>} : memref<1x256x128xf32, #tpu.memory_space<vmem>>, vector<1x256x128xf32>,
    return
  }
  func.func @transform_0(%arg0: i32) -> (i32, i32, i32) {
    %c0_i32 = arith.constant 0 : i32
    %c0_i32_0 = arith.constant 0 : i32
    %c0_i32_1 = arith.constant 0 : i32
    return %arg0, %c0_i32, %c0_i32_0 : i32, i32, i32
  }
  func.func @transform_1(%arg0: i32) -> (i32, i32, i32) {
    %c0_i32 = arith.constant 0 : i32
    %c0_i32_0 = arith.constant 0 : i32
    %c0_i32_1 = arith.constant 0 : i32
    %c0_i32_2 = arith.constant 0 : i32
    return %c0_i32, %c0_i32_0, %c0_i32_1 : i32, i32, i32
  }
  func.func @transform_2(%arg0: i32) -> (i32, i32) {
    %c0_i32 = arith.constant 0 : i32
    %c0_i32_0 = arith.constant 0 : i32
    %c0_i32_1 = arith.constant 0 : i32
    return %c0_i32, %c0_i32_0 : i32, i32
  }
  func.func @transform_3(%arg0: i32) -> (i32, i32) {
    %c0_i32 = arith.constant 0 : i32
    %c0_i32_0 = arith.constant 0 : i32
    %c0_i32_1 = arith.constant 0 : i32
    return %c0_i32, %c0_i32_0 : i32, i32
  }
  func.func @transform_4(%arg0: i32) -> (i32, i32, i32) {
    %c0_i32 = arith.constant 0 : i32
    %c0_i32_0 = arith.constant 0 : i32
    %c0_i32_1 = arith.constant 0 : i32
    %c0_i32_2 = arith.constant 0 : i32
    return %c0_i32, %c0_i32_0, %c0_i32_1 : i32, i32, i32
  }
  func.func @transform_5(%arg0: i32) -> (i32, i32) {
    %c0_i32 = arith.constant 0 : i32
    %c0_i32_0 = arith.constant 0 : i32
    %c0_i32_1 = arith.constant 0 : i32
    return %c0_i32, %c0_i32_0 : i32, i32
  }
  func.func @transform_6(%arg0: i32) -> (i32, i32) {
    %c0_i32 = arith.constant 0 : i32
    %c0_i32_0 = arith.constant 0 : i32
    %c0_i32_1 = arith.constant 0 : i32
    return %c0_i32, %c0_i32_0 : i32, i32
  }
  func.func @transform_7(%arg0: i32) -> (i32, i32) {
    %c0_i32 = arith.constant 0 : i32
    %c0_i32_0 = arith.constant 0 : i32
    %c0_i32_1 = arith.constant 0 : i32
    return %c0_i32, %c0_i32_0 : i32, i32
  }
  func.func @transform_8(%arg0: i32) -> (i32, i32, i32) {
    %c0_i32 = arith.constant 0 : i32
    %c0_i32_0 = arith.constant 0 : i32
    %c0_i32_1 = arith.constant 0 : i32
    %c0_i32_2 = arith.constant 0 : i32
    return %c0_i32, %c0_i32_0, %c0_i32_1 : i32, i32, i32
  }
  func.func @transform_9(%arg0: i32) -> (i32, i32) {
    %c0_i32 = arith.constant 0 : i32
    %c0_i32_0 = arith.constant 0 : i32
    %c0_i32_1 = arith.constant 0 : i32
    return %c0_i32, %c0_i32_0 : i32, i32
  }
  func.func @transform_10(%arg0: i32) -> (i32, i32, i32) {
    %c0_i32 = arith.constant 0 : i32
    %c0_i32_0 = arith.constant 0 : i32
    %c0_i32_1 = arith.constant 0 : i32
    return %arg0, %c0_i32, %c0_i32_0 : i32, i32, i32
  }
}

</mosaic_0001>

<llo_original>
// kernel: tpu_custom_call.1
$region0: #{tpu_custom_call.1}
  #allocation0 [shape = 'u32[]', space=smem, size = 0x4, offset = 0x4, fixed_abs, tag = 'smem constant byte address 0x4 - core index']
  #allocation1 [shape = 'u32[72,128]{1,0:T(1,128)}', space=vmem, size = 0x9000, scoped, tag = 'internal scratch']
  #allocation2 [shape = 'f32[18,18,128]{2,1,0:T(8,128)}', space=vmem, size = 0x36000, scoped, tag = 'scratch operand']
  %s0 = inlined_call_operand.hbm [shape: f32[2,256,128], index: 0, kind: input, shape index: {}]
  %s1 = inlined_call_operand.hbm [shape: bf16[9,128,128], index: 1, kind: input, shape index: {}]
  %s2 = inlined_call_operand.vmem [shape: f32[1,128], index: 2, kind: input, shape index: {}]
  %s3 = inlined_call_operand.vmem [shape: f32[1,128], index: 3, kind: input, shape index: {}]
  %s4 = inlined_call_operand.hbm [shape: bf16[9,128,128], index: 4, kind: input, shape index: {}]
  %s5 = inlined_call_operand.vmem [shape: f32[1,128], index: 5, kind: input, shape index: {}]
  %s6 = inlined_call_operand.vmem [shape: f32[1,128], index: 6, kind: input, shape index: {}]
  %s7 = inlined_call_operand.hbm [shape: f32[128,128], index: 7, kind: input, shape index: {}]
  %s8 = inlined_call_operand.hbm [shape: bf16[9,128,128], index: 8, kind: input, shape index: {}]
  %s9 = inlined_call_operand.vmem [shape: f32[1,128], index: 9, kind: input, shape index: {}]
  %s10 = inlined_call_operand.hbm [shape: f32[2,256,128], index: 10, kind: output, shape index: {}]
  %s11 = sld [smem:[#allocation0]]
  $region93: #{tpu_custom_call.1} parent=0
    _
  %s13 = ssub.s32 1, %s11
  %s14 = scalar_select 0, %s13, %s11
  $region1: #{tpu_custom_call.1} parent=0
    #allocation3 [shape = 'u8[262144]{0}', space=vmem, size = 0x40000, scoped, tag = 'input window, operand 0']
    #allocation4 [shape = 's32[2]{0}', space=sflag, size = 0x8, scoped, tag = 'scoped memory for tpu_custom_call.1']
    #allocation5 [shape = 's32[2]{0}', space=sflag, size = 0x8, scoped, tag = 'scoped memory for tpu_custom_call.1']
    #allocation6 [shape = 'u8[294912]{0}', space=vmem, size = 0x48000, scoped, tag = 'input window, operand 1, single buffered']
    #allocation7 [shape = 's32[1]{0}', space=sflag, size = 0x4, scoped, tag = 'scoped memory for tpu_custom_call.1']
    #allocation8 [shape = 'u8[294912]{0}', space=vmem, size = 0x48000, scoped, tag = 'input window, operand 4, single buffered']
    #allocation9 [shape = 'u8[65536]{0}', space=vmem, size = 0x10000, scoped, tag = 'input window, operand 7, single buffered']
    #allocation10 [shape = 's32[1]{0}', space=sflag, size = 0x4, scoped, tag = 'scoped memory for tpu_custom_call.1']
    #allocation11 [shape = 'u8[294912]{0}', space=vmem, size = 0x48000, scoped, tag = 'input window, operand 8, single buffered']
    #allocation12 [shape = 'u8[262144]{0}', space=vmem, size = 0x40000, scoped, tag = 'output window, operand 0']
    %15 = vsyncpa [#allocation4], 0
    %s16 = scalar_lea.sflag [#allocation4], 1
    %17 = vsyncpa %s16, 0
    %18 = vsyncpa [#allocation7], 0
    %19 = vsyncpa [#allocation10], 0
    %20 = vsyncpa [#allocation5], 0
    %s21 = scalar_lea.sflag [#allocation5], 1
    %22 = vsyncpa %s21, 0
    loop: start=0, step=1, limit=4
    $region2: #{tpu_custom_call.1} parent=1 // loop_pre_header
      _
    $region3: #{tpu_custom_call.1} parent=1 // loop_header
      %s24 = sphi 0, %s28
      %p25 = scmp.ge.s32.totalorder %s24, 4
      %s34 = sphi 0, %s36
      %s37 = sphi 0, %s34
      %s38 = sphi 0, %s37
      %s54 = sphi 0, %s38
      %s58 = sphi 0, %s58
      %s60 = sphi 0, %s58
      %s61 = sphi 0, %s60
      %s75 = sphi 0, %s61
      %s79 = sphi 0, %s79
      %s81 = sphi 0, %s79
      %s82 = sphi 0, %s81
      %s96 = sphi 0, %s82
      %s100 = sphi 0, %s100
      %s102 = sphi 0, %s100
      %s103 = sphi 0, %s102
      %s117 = sphi 0, %s103
      %s121 = sphi 0, %s121
      %s123 = sphi 0, %s121
      %s124 = sphi 0, %s123
      %s138 = sphi 0, %s124
      %s142 = sphi 0, %s142
      %s144 = sphi 0, %s142
      %s145 = sphi 0, %s144
      %s159 = sphi 0, %s145
      %s163 = sphi 0, %s163
      %s165 = sphi 0, %s163
      %s166 = sphi 0, %s165
      %s180 = sphi 0, %s166
      %s184 = sphi 0, %s184
      %s186 = sphi 0, %s184
      %s187 = sphi 0, %s186
      %s201 = sphi 0, %s187
      %s205 = sphi 0, %s205
      %s207 = sphi 0, %s205
      %s208 = sphi 0, %s207
      %s222 = sphi 0, %s208
      %s226 = sphi 0, %s226
      %s228 = sphi 0, %s226
      %s229 = sphi 0, %s228
      %s243 = sphi 0, %s229
      %s249 = sphi 0, %s251
      %s252 = sphi 0, %s249
      %s253 = sphi 0, %s252
      %s269 = sphi 0, %s253
    $region4: #{tpu_custom_call.1} parent=1 // loop_header_branch
      %27 = sbr.rel (%p25) target = $region8
    $region5: #{tpu_custom_call.1} parent=1 // loop_body
      %s29 = ssub.s32 %s24, 1
      %s30 = ssub.s32 %s24, 2
      %s31 = sadd.s32 %s24, 1
      %s32 = ssub.s32 %s24, %s31
      %p33 = scmp.eq.s32.totalorder %s32, 0
      %s35 = sadd.s32 %s34, 1
      %s36 = scalar_select %p33, %s34, %s35
      %p39 = pneg %p33
      %p40 = scmp.eq.s32.totalorder %s24, 1
      %p41 = por %p39, %p40
      %p42 = scmp.ne.s32.totalorder %s34, %s37
      %p43 = scmp.eq.s32.totalorder %s24, 0
      %p44 = por %p42, %p43
      %p45 = scmp.ne.s32.totalorder %s34, %s37
      %p46 = scmp.eq.s32.totalorder %s29, 1
      %p47 = por %p45, %p46
      %p48 = scmp.ne.s32.totalorder %s37, %s38
      %p49 = scmp.eq.s32.totalorder %s29, 0
      %p50 = por %p48, %p49
      %p51 = scmp.ne.s32.totalorder %s37, %s38
      %p52 = scmp.eq.s32.totalorder %s30, 1
      %p53 = por %p51, %p52
      %p55 = scmp.ne.s32.totalorder %s38, %s54
      %p56 = scmp.eq.s32.totalorder %s30, 0
      %p57 = por %p55, %p56
      %s59 = sadd.s32 %s58, 1
      %p62 = scmp.eq.s32.totalorder %s24, 1
      %p63 = scmp.ne.s32.totalorder %s58, %s60
      %p64 = scmp.eq.s32.totalorder %s24, 0
      %p65 = por %p63, %p64
      %p66 = scmp.ne.s32.totalorder %s58, %s60
      %p67 = scmp.eq.s32.totalorder %s29, 1
      %p68 = por %p66, %p67
      %p69 = scmp.ne.s32.totalorder %s60, %s61
      %p70 = scmp.eq.s32.totalorder %s29, 0
      %p71 = por %p69, %p70
      %p72 = scmp.ne.s32.totalorder %s60, %s61
      %p73 = scmp.eq.s32.totalorder %s30, 1
      %p74 = por %p72, %p73
      %p76 = scmp.ne.s32.totalorder %s61, %s75
      %p77 = scmp.eq.s32.totalorder %s30, 0
      %p78 = por %p76, %p77
      %s80 = sadd.s32 %s79, 1
      %p83 = scmp.eq.s32.totalorder %s24, 1
      %p84 = scmp.ne.s32.totalorder %s79, %s81
      %p85 = scmp.eq.s32.totalorder %s24, 0
      %p86 = por %p84, %p85
      %p87 = scmp.ne.s32.totalorder %s79, %s81
      %p88 = scmp.eq.s32.totalorder %s29, 1
      %p89 = por %p87, %p88
      %p90 = scmp.ne.s32.totalorder %s81, %s82
      %p91 = scmp.eq.s32.totalorder %s29, 0
      %p92 = por %p90, %p91
      %p93 = scmp.ne.s32.totalorder %s81, %s82
      %p94 = scmp.eq.s32.totalorder %s30, 1
      %p95 = por %p93, %p94
      %p97 = scmp.ne.s32.totalorder %s82, %s96
      %p98 = scmp.eq.s32.totalorder %s30, 0
      %p99 = por %p97, %p98
      %s101 = sadd.s32 %s100, 1
      %p104 = scmp.eq.s32.totalorder %s24, 1
      %p105 = scmp.ne.s32.totalorder %s100, %s102
      %p106 = scmp.eq.s32.totalorder %s24, 0
      %p107 = por %p105, %p106
      %p108 = scmp.ne.s32.totalorder %s100, %s102
      %p109 = scmp.eq.s32.totalorder %s29, 1
      %p110 = por %p108, %p109
      %p111 = scmp.ne.s32.totalorder %s102, %s103
      %p112 = scmp.eq.s32.totalorder %s29, 0
      %p113 = por %p111, %p112
      %p114 = scmp.ne.s32.totalorder %s102, %s103
      %p115 = scmp.eq.s32.totalorder %s30, 1
      %p116 = por %p114, %p115
      %p118 = scmp.ne.s32.totalorder %s103, %s117
      %p119 = scmp.eq.s32.totalorder %s30, 0
      %p120 = por %p118, %p119
      %s122 = sadd.s32 %s121, 1
      %p125 = scmp.eq.s32.totalorder %s24, 1
      %p126 = scmp.ne.s32.totalorder %s121, %s123
      %p127 = scmp.eq.s32.totalorder %s24, 0
      %p128 = por %p126, %p127
      %p129 = scmp.ne.s32.totalorder %s121, %s123
      %p130 = scmp.eq.s32.totalorder %s29, 1
      %p131 = por %p129, %p130
      %p132 = scmp.ne.s32.totalorder %s123, %s124
      %p133 = scmp.eq.s32.totalorder %s29, 0
      %p134 = por %p132, %p133
      %p135 = scmp.ne.s32.totalorder %s123, %s124
      %p136 = scmp.eq.s32.totalorder %s30, 1
      %p137 = por %p135, %p136
      %p139 = scmp.ne.s32.totalorder %s124, %s138
      %p140 = scmp.eq.s32.totalorder %s30, 0
      %p141 = por %p139, %p140
      %s143 = sadd.s32 %s142, 1
      %p146 = scmp.eq.s32.totalorder %s24, 1
      %p147 = scmp.ne.s32.totalorder %s142, %s144
      %p148 = scmp.eq.s32.totalorder %s24, 0
      %p149 = por %p147, %p148
      %p150 = scmp.ne.s32.totalorder %s142, %s144
      %p151 = scmp.eq.s32.totalorder %s29, 1
      %p152 = por %p150, %p151
      %p153 = scmp.ne.s32.totalorder %s144, %s145
      %p154 = scmp.eq.s32.totalorder %s29, 0
      %p155 = por %p153, %p154
      %p156 = scmp.ne.s32.totalorder %s144, %s145
      %p157 = scmp.eq.s32.totalorder %s30, 1
      %p158 = por %p156, %p157
      %p160 = scmp.ne.s32.totalorder %s145, %s159
      %p161 = scmp.eq.s32.totalorder %s30, 0
      %p162 = por %p160, %p161
      %s164 = sadd.s32 %s163, 1
      %p167 = scmp.eq.s32.totalorder %s24, 1
      %p168 = scmp.ne.s32.totalorder %s163, %s165
      %p169 = scmp.eq.s32.totalorder %s24, 0
      %p170 = por %p168, %p169
      %p171 = scmp.ne.s32.totalorder %s163, %s165
      %p172 = scmp.eq.s32.totalorder %s29, 1
      %p173 = por %p171, %p172
      %p174 = scmp.ne.s32.totalorder %s165, %s166
      %p175 = scmp.eq.s32.totalorder %s29, 0
      %p176 = por %p174, %p175
      %p177 = scmp.ne.s32.totalorder %s165, %s166
      %p178 = scmp.eq.s32.totalorder %s30, 1
      %p179 = por %p177, %p178
      %p181 = scmp.ne.s32.totalorder %s166, %s180
      %p182 = scmp.eq.s32.totalorder %s30, 0
      %p183 = por %p181, %p182
      %s185 = sadd.s32 %s184, 1
      %p188 = scmp.eq.s32.totalorder %s24, 1
      %p189 = scmp.ne.s32.totalorder %s184, %s186
      %p190 = scmp.eq.s32.totalorder %s24, 0
      %p191 = por %p189, %p190
      %p192 = scmp.ne.s32.totalorder %s184, %s186
      %p193 = scmp.eq.s32.totalorder %s29, 1
      %p194 = por %p192, %p193
      %p195 = scmp.ne.s32.totalorder %s186, %s187
      %p196 = scmp.eq.s32.totalorder %s29, 0
      %p197 = por %p195, %p196
      %p198 = scmp.ne.s32.totalorder %s186, %s187
      %p199 = scmp.eq.s32.totalorder %s30, 1
      %p200 = por %p198, %p199
      %p202 = scmp.ne.s32.totalorder %s187, %s201
      %p203 = scmp.eq.s32.totalorder %s30, 0
      %p204 = por %p202, %p203
      %s206 = sadd.s32 %s205, 1
      %p209 = scmp.eq.s32.totalorder %s24, 1
      %p210 = scmp.ne.s32.totalorder %s205, %s207
      %p211 = scmp.eq.s32.totalorder %s24, 0
      %p212 = por %p210, %p211
      %p213 = scmp.ne.s32.totalorder %s205, %s207
      %p214 = scmp.eq.s32.totalorder %s29, 1
      %p215 = por %p213, %p214
      %p216 = scmp.ne.s32.totalorder %s207, %s208
      %p217 = scmp.eq.s32.totalorder %s29, 0
      %p218 = por %p216, %p217
      %p219 = scmp.ne.s32.totalorder %s207, %s208
      %p220 = scmp.eq.s32.totalorder %s30, 1
      %p221 = por %p219, %p220
      %p223 = scmp.ne.s32.totalorder %s208, %s222
      %p224 = scmp.eq.s32.totalorder %s30, 0
      %p225 = por %p223, %p224
      %s227 = sadd.s32 %s226, 1
      %p230 = scmp.eq.s32.totalorder %s24, 1
      %p231 = scmp.ne.s32.totalorder %s226, %s228
      %p232 = scmp.eq.s32.totalorder %s24, 0
      %p233 = por %p231, %p232
      %p234 = scmp.ne.s32.totalorder %s226, %s228
      %p235 = scmp.eq.s32.totalorder %s29, 1
      %p236 = por %p234, %p235
      %p237 = scmp.ne.s32.totalorder %s228, %s229
      %p238 = scmp.eq.s32.totalorder %s29, 0
      %p239 = por %p237, %p238
      %p240 = scmp.ne.s32.totalorder %s228, %s229
      %p241 = scmp.eq.s32.totalorder %s30, 1
      %p242 = por %p240, %p241
      %p244 = scmp.ne.s32.totalorder %s229, %s243
      %p245 = scmp.eq.s32.totalorder %s30, 0
      %p246 = por %p244, %p245
      %s247 = ssub.s32 %s24, %s31
      %p248 = scmp.eq.s32.totalorder %s247, 0
      %s250 = sadd.s32 %s249, 1
      %s251 = scalar_select %p248, %s249, %s250
      %p254 = pneg %p248
      %p255 = scmp.eq.s32.totalorder %s24, 1
      %p256 = por %p254, %p255
      %p257 = scmp.ne.s32.totalorder %s249, %s252
      %p258 = scmp.eq.s32.totalorder %s24, 0
      %p259 = por %p257, %p258
      %p260 = scmp.ne.s32.totalorder %s249, %s252
      %p261 = scmp.eq.s32.totalorder %s29, 1
      %p262 = por %p260, %p261
      %p263 = scmp.ne.s32.totalorder %s252, %s253
      %p264 = scmp.eq.s32.totalorder %s29, 0
      %p265 = por %p263, %p264
      %p266 = scmp.ne.s32.totalorder %s252, %s253
      %p267 = scmp.eq.s32.totalorder %s30, 1
      %p268 = por %p266, %p267
      %p270 = scmp.ne.s32.totalorder %s253, %s269
      %p271 = scmp.eq.s32.totalorder %s30, 0
      %p272 = por %p270, %p271
      %p273 = scmp.le.s32.totalorder 1, %s24
      %p274 = scmp.lt.s32.totalorder %s24, 3
      %p275 = pnand %p273, %p274
      %p276 = pneg %p275
      // Predicated region
      $region9: #{tpu_custom_call.1} parent=5 // pred_check
        _
      $region10: #{tpu_custom_call.1} parent=5 // pred_check_branch
        %278 = sbr.rel (%p275) target = $region12
      $region11: #{tpu_custom_call.1} parent=5 // pred_region
        %s279 = ssub.s32 %s24, 1
        // Predicated region
        $region13: #{tpu_custom_call.1} parent=11 // pred_check
          %p280 = pneg %p71
        $region14: #{tpu_custom_call.1} parent=11 // pred_check_branch
          %282 = sbr.rel (%p280) target = $region16
        $region15: #{tpu_custom_call.1} parent=11 // pred_region
          %284 = vsyncadd [#allocation7], 0
          %s285 = sshll.u32 %s1, 4
          %s286 = int_to_ptr.hbm [resolvable:$true] %s285
          %s287 = sshll.u32 [#allocation6], 4
          %s288 = int_to_ptr.vmem [resolvable:$true] %s287
          %293 = dma.hbm_to_vmem [thread:$0]  %s286, 9216, %s288, [#allocation7], 64, 64, 4
        $region16: #{tpu_custom_call.1} parent=11 // pred_fallthru
          _
        // Predicated region
        $region17: #{tpu_custom_call.1} parent=11 // pred_check
          %p294 = pneg %p92
        $region18: #{tpu_custom_call.1} parent=11 // pred_check_branch
          %296 = sbr.rel (%p294) target = $region20
        $region19: #{tpu_custom_call.1} parent=11 // pred_region
          _
        $region20: #{tpu_custom_call.1} parent=11 // pred_fallthru
          _
        // Predicated region
        $region21: #{tpu_custom_call.1} parent=11 // pred_check
          %p297 = pneg %p113
        $region22: #{tpu_custom_call.1} parent=11 // pred_check_branch
          %299 = sbr.rel (%p297) target = $region24
        $region23: #{tpu_custom_call.1} parent=11 // pred_region
          _
        $region24: #{tpu_custom_call.1} parent=11 // pred_fallthru
          _
        // Predicated region
        $region25: #{tpu_custom_call.1} parent=11 // pred_check
          %p300 = pneg %p134
        $region26: #{tpu_custom_call.1} parent=11 // pred_check_branch
          %302 = sbr.rel (%p300) target = $region28
        $region27: #{tpu_custom_call.1} parent=11 // pred_region
          %304 = vsyncadd [#allocation7], 0
          %s305 = sshll.u32 %s4, 4
          %s306 = int_to_ptr.hbm [resolvable:$true] %s305
          %s307 = sshll.u32 [#allocation8], 4
          %s308 = int_to_ptr.vmem [resolvable:$true] %s307
          %313 = dma.hbm_to_vmem [thread:$0]  %s306, 9216, %s308, [#allocation7], 64, 64, 4
        $region28: #{tpu_custom_call.1} parent=11 // pred_fallthru
          _
        // Predicated region
        $region29: #{tpu_custom_call.1} parent=11 // pred_check
          %p314 = pneg %p155
        $region30: #{tpu_custom_call.1} parent=11 // pred_check_branch
          %316 = sbr.rel (%p314) target = $region32
        $region31: #{tpu_custom_call.1} parent=11 // pred_region
          _
        $region32: #{tpu_custom_call.1} parent=11 // pred_fallthru
          _
        // Predicated region
        $region33: #{tpu_custom_call.1} parent=11 // pred_check
          %p317 = pneg %p176
        $region34: #{tpu_custom_call.1} parent=11 // pred_check_branch
          %319 = sbr.rel (%p317) target = $region36
        $region35: #{tpu_custom_call.1} parent=11 // pred_region
          _
        $region36: #{tpu_custom_call.1} parent=11 // pred_fallthru
          _
        // Predicated region
        $region37: #{tpu_custom_call.1} parent=11 // pred_check
          %p320 = pneg %p197
        $region38: #{tpu_custom_call.1} parent=11 // pred_check_branch
          %322 = sbr.rel (%p320) target = $region40
        $region39: #{tpu_custom_call.1} parent=11 // pred_region
          %324 = vsyncadd [#allocation10], 0
          %s325 = sshll.u32 %s7, 4
          %s326 = int_to_ptr.hbm [resolvable:$true] %s325
          %s327 = sshll.u32 [#allocation9], 4
          %s328 = int_to_ptr.vmem [resolvable:$true] %s327
          %333 = dma.hbm_to_vmem [thread:$0]  %s326, 2048, %s328, [#allocation10], 128, 128, 8
        $region40: #{tpu_custom_call.1} parent=11 // pred_fallthru
          _
        // Predicated region
        $region41: #{tpu_custom_call.1} parent=11 // pred_check
          %p334 = pneg %p218
        $region42: #{tpu_custom_call.1} parent=11 // pred_check_branch
          %336 = sbr.rel (%p334) target = $region44
        $region43: #{tpu_custom_call.1} parent=11 // pred_region
          %338 = vsyncadd [#allocation10], 0
          %s339 = sshll.u32 %s8, 4
          %s340 = int_to_ptr.hbm [resolvable:$true] %s339
          %s341 = sshll.u32 [#allocation11], 4
          %s342 = int_to_ptr.vmem [resolvable:$true] %s341
          %347 = dma.hbm_to_vmem [thread:$0]  %s340, 9216, %s342, [#allocation10], 64, 64, 4
        $region44: #{tpu_custom_call.1} parent=11 // pred_fallthru
          _
        // Predicated region
        $region45: #{tpu_custom_call.1} parent=11 // pred_check
          %p348 = pneg %p239
        $region46: #{tpu_custom_call.1} parent=11 // pred_check_branch
          %350 = sbr.rel (%p348) target = $region48
        $region47: #{tpu_custom_call.1} parent=11 // pred_region
          _
        $region48: #{tpu_custom_call.1} parent=11 // pred_fallthru
          _
      $region12: #{tpu_custom_call.1} parent=5 // pred_fallthru
        _
      %p351 = scmp.lt.s32.totalorder %s24, 2
      // Predicated region
      $region49: #{tpu_custom_call.1} parent=5 // pred_check
        %p352 = pneg %p351
      $region50: #{tpu_custom_call.1} parent=5 // pred_check_branch
        %354 = sbr.rel (%p352) target = $region52
      $region51: #{tpu_custom_call.1} parent=5 // pred_region
        // Predicated region
        $region53: #{tpu_custom_call.1} parent=51 // pred_check
          %p355 = pneg %p44
        $region54: #{tpu_custom_call.1} parent=51 // pred_check_branch
          %357 = sbr.rel (%p355) target = $region56
        $region55: #{tpu_custom_call.1} parent=51 // pred_region
          %s358 = sand.u32 %s34, 1
          %s359 = scalar_lea.sflag [#allocation4], %s358
          %s360 = sand.u32 %s34, 1
          %s361 = smul.addr %s360, 256
          %s362 = scalar_lea.vmem [#allocation3], %s361
          %364 = vsyncadd %s359, 0
          %s365 = smul.addr %s24, 32
          %s366 = smul.addr %s365, 8
          %s367 = scalar_lea.hbm %s0, %s366
          %s368 = sshll.u32 %s367, 4
          %s369 = int_to_ptr.hbm [resolvable:$true] %s368
          %s370 = sshll.u32 %s362, 4
          %s371 = int_to_ptr.vmem [resolvable:$true] %s370
          %376 = dma.hbm_to_vmem [thread:$0]  %s369, 4096, %s371, %s359, 128, 128, 8
        $region56: #{tpu_custom_call.1} parent=51 // pred_fallthru
          _
      $region52: #{tpu_custom_call.1} parent=5 // pred_fallthru
        _
      %p377 = scmp.le.s32.totalorder 1, %s24
      %p378 = scmp.lt.s32.totalorder %s24, 3
      %p379 = pnand %p377, %p378
      %p380 = pneg %p379
      // Predicated region
      $region57: #{tpu_custom_call.1} parent=5 // pred_check
        _
      $region58: #{tpu_custom_call.1} parent=5 // pred_check_branch
        %382 = sbr.rel (%p379) target = $region60
      $region59: #{tpu_custom_call.1} parent=5 // pred_region
        %s383 = ssub.s32 %s24, 1
        %s384 = sand.u32 %s37, 1
        %s385 = scalar_lea.sflag [#allocation4], %s384
        %s386 = sand.u32 %s37, 1
        %s387 = smul.addr %s386, 256
        %s388 = scalar_lea.vmem [#allocation3], %s387
        // Predicated region
        $region61: #{tpu_custom_call.1} parent=59 // pred_check
          %p389 = pneg %p50
        $region62: #{tpu_custom_call.1} parent=59 // pred_check_branch
          %391 = sbr.rel (%p389) target = $region64
        $region63: #{tpu_custom_call.1} parent=59 // pred_region
          %393 = dma.done %s385, 4096
        $region64: #{tpu_custom_call.1} parent=59 // pred_fallthru
          _
        // Predicated region
        $region65: #{tpu_custom_call.1} parent=59 // pred_check
          %p394 = pneg %p71
        $region66: #{tpu_custom_call.1} parent=59 // pred_check_branch
          %396 = sbr.rel (%p394) target = $region68
        $region67: #{tpu_custom_call.1} parent=59 // pred_region
          %398 = dma.done [#allocation7], 9216
        $region68: #{tpu_custom_call.1} parent=59 // pred_fallthru
          _
        // Predicated region
        $region69: #{tpu_custom_call.1} parent=59 // pred_check
          %p399 = pneg %p134
        $region70: #{tpu_custom_call.1} parent=59 // pred_check_branch
          %401 = sbr.rel (%p399) target = $region72
        $region71: #{tpu_custom_call.1} parent=59 // pred_region
          %403 = dma.done [#allocation7], 9216
        $region72: #{tpu_custom_call.1} parent=59 // pred_fallthru
          _
        // Predicated region
        $region73: #{tpu_custom_call.1} parent=59 // pred_check
          %p404 = pneg %p197
        $region74: #{tpu_custom_call.1} parent=59 // pred_check_branch
          %406 = sbr.rel (%p404) target = $region76
        $region75: #{tpu_custom_call.1} parent=59 // pred_region
          %408 = dma.done [#allocation10], 2048
        $region76: #{tpu_custom_call.1} parent=59 // pred_fallthru
          _
        // Predicated region
        $region77: #{tpu_custom_call.1} parent=59 // pred_check
          %p409 = pneg %p218
        $region78: #{tpu_custom_call.1} parent=59 // pred_check_branch
          %411 = sbr.rel (%p409) target = $region80
        $region79: #{tpu_custom_call.1} parent=59 // pred_region
          %413 = dma.done [#allocation10], 9216
        $region80: #{tpu_custom_call.1} parent=59 // pred_fallthru
          _
        %s414 = sand.u32 %s37, 1
        %s415 = scalar_lea.sflag [#allocation4], %s414
        %s416 = sand.u32 %s37, 1
        %s417 = smul.addr %s416, 256
        %s418 = scalar_lea.vmem [#allocation3], %s417
        %p419 = pneg %p50
        %p420 = pneg %p47
        %p421 = pneg %p71
        %p422 = pneg %p68
        %p423 = pneg %p92
        %p424 = pneg %p89
        %p425 = pneg %p113
        %p426 = pneg %p110
        %p427 = pneg %p134
        %p428 = pneg %p131
        %p429 = pneg %p155
        %p430 = pneg %p152
        %p431 = pneg %p176
        %p432 = pneg %p173
        %p433 = pneg %p197
        %p434 = pneg %p194
        %p435 = pneg %p218
        %p436 = pneg %p215
        %p437 = pneg %p239
        %p438 = pneg %p236
        %p439 = pneg %p265
        %p440 = pneg %p262
        %s441 = sand.u32 %s252, 1
        %s442 = scalar_lea.sflag [#allocation5], %s441
        %s443 = sand.u32 %s252, 1
        %s444 = smul.addr %s443, 256
        %s445 = scalar_lea.vmem [#allocation12], %s444
        %446 = vst [vmem:[#allocation2] sm:$0xff] 0.0
        %447 = vst [vmem:[#allocation2 + $0x8] sm:$0xff] 0.0
        %448 = vst [vmem:[#allocation2 + $0x10] sm:$0x3] 0.0
        %s449 = scalar_lea.vmem [#allocation2], 408
        %450 = vst [vmem:[%s449] sm:$0xff] 0.0
        %451 = vst [vmem:[%s449 + $0x8] sm:$0xff] 0.0
        %452 = vst [vmem:[%s449 + $0x10] sm:$0x3] 0.0
        %453 = vst [vmem:[#allocation2] sm:$0x1] 0.0
        %454 = vst [vmem:[#allocation2 + $0x18] sm:$0x1] 0.0
        %455 = vst [vmem:[#allocation2 + $0x30] sm:$0x1] 0.0
        %456 = vst [vmem:[#allocation2 + $0x48] sm:$0x1] 0.0
        %457 = vst [vmem:[#allocation2 + $0x60] sm:$0x1] 0.0
        %458 = vst [vmem:[#allocation2 + $0x78] sm:$0x1] 0.0
        %459 = vst [vmem:[#allocation2 + $0x90] sm:$0x1] 0.0
        %460 = vst [vmem:[#allocation2 + $0xa8] sm:$0x1] 0.0
        %461 = vst [vmem:[#allocation2 + $0xc0] sm:$0x1] 0.0
        %462 = vst [vmem:[#allocation2 + $0xd8] sm:$0x1] 0.0
        %463 = vst [vmem:[#allocation2 + $0xf0] sm:$0x1] 0.0
        %464 = vst [vmem:[#allocation2 + $0x108] sm:$0x1] 0.0
        %465 = vst [vmem:[#allocation2 + $0x120] sm:$0x1] 0.0
        %466 = vst [vmem:[#allocation2 + $0x138] sm:$0x1] 0.0
        %467 = vst [vmem:[#allocation2 + $0x150] sm:$0x1] 0.0
        %468 = vst [vmem:[#allocation2 + $0x168] sm:$0x1] 0.0
        %469 = vst [vmem:[#allocation2 + $0x180] sm:$0x1] 0.0
        %470 = vst [vmem:[#allocation2 + $0x198] sm:$0x1] 0.0
        %471 = vst [vmem:[#allocation2 + $0x11] sm:$0x1] 0.0
        %472 = vst [vmem:[#allocation2 + $0x29] sm:$0x1] 0.0
        %473 = vst [vmem:[#allocation2 + $0x41] sm:$0x1] 0.0
        %474 = vst [vmem:[#allocation2 + $0x59] sm:$0x1] 0.0
        %475 = vst [vmem:[#allocation2 + $0x71] sm:$0x1] 0.0
        %476 = vst [vmem:[#allocation2 + $0x89] sm:$0x1] 0.0
        %477 = vst [vmem:[#allocation2 + $0xa1] sm:$0x1] 0.0
        %478 = vst [vmem:[#allocation2 + $0xb9] sm:$0x1] 0.0
        %479 = vst [vmem:[#allocation2 + $0xd1] sm:$0x1] 0.0
        %480 = vst [vmem:[#allocation2 + $0xe9] sm:$0x1] 0.0
        %481 = vst [vmem:[#allocation2 + $0x101] sm:$0x1] 0.0
        %482 = vst [vmem:[#allocation2 + $0x119] sm:$0x1] 0.0
        %483 = vst [vmem:[#allocation2 + $0x131] sm:$0x1] 0.0
        %484 = vst [vmem:[#allocation2 + $0x149] sm:$0x1] 0.0
        %485 = vst [vmem:[#allocation2 + $0x161] sm:$0x1] 0.0
        %486 = vst [vmem:[#allocation2 + $0x179] sm:$0x1] 0.0
        %487 = vst [vmem:[#allocation2 + $0x191] sm:$0x1] 0.0
        %488 = vst [vmem:[#allocation2 + $0x1a9] sm:$0x1] 0.0
        %v489 = vld [vmem:[%s388] sm:$0xff]
        %v490 = vld [vmem:[%s388 + $0x8] sm:$0xff]
        %v491 = vld [vmem:[%s388 + $0x10] sm:$0xff]
        %v492 = vld [vmem:[%s388 + $0x18] sm:$0xff]
        %v493 = vld [vmem:[%s388 + $0x20] sm:$0xff]
        %v494 = vld [vmem:[%s388 + $0x28] sm:$0xff]
        %v495 = vld [vmem:[%s388 + $0x30] sm:$0xff]
        %v496 = vld [vmem:[%s388 + $0x38] sm:$0xff]
        %v497 = vld [vmem:[%s388 + $0x40] sm:$0xff]
        %v498 = vld [vmem:[%s388 + $0x48] sm:$0xff]
        %v499 = vld [vmem:[%s388 + $0x50] sm:$0xff]
        %v500 = vld [vmem:[%s388 + $0x58] sm:$0xff]
        %v501 = vld [vmem:[%s388 + $0x60] sm:$0xff]
        %v502 = vld [vmem:[%s388 + $0x68] sm:$0xff]
        %v503 = vld [vmem:[%s388 + $0x70] sm:$0xff]
        %v504 = vld [vmem:[%s388 + $0x78] sm:$0xff]
        %v505 = vld [vmem:[%s388 + $0x80] sm:$0xff]
        %v506 = vld [vmem:[%s388 + $0x88] sm:$0xff]
        %v507 = vld [vmem:[%s388 + $0x90] sm:$0xff]
        %v508 = vld [vmem:[%s388 + $0x98] sm:$0xff]
        %v509 = vld [vmem:[%s388 + $0xa0] sm:$0xff]
        %v510 = vld [vmem:[%s388 + $0xa8] sm:$0xff]
        %v511 = vld [vmem:[%s388 + $0xb0] sm:$0xff]
        %v512 = vld [vmem:[%s388 + $0xb8] sm:$0xff]
        %v513 = vld [vmem:[%s388 + $0xc0] sm:$0xff]
        %v514 = vld [vmem:[%s388 + $0xc8] sm:$0xff]
        %v515 = vld [vmem:[%s388 + $0xd0] sm:$0xff]
        %v516 = vld [vmem:[%s388 + $0xd8] sm:$0xff]
        %v517 = vld [vmem:[%s388 + $0xe0] sm:$0xff]
        %v518 = vld [vmem:[%s388 + $0xe8] sm:$0xff]
        %v519 = vld [vmem:[%s388 + $0xf0] sm:$0xff]
        %v520 = vld [vmem:[%s388 + $0xf8] sm:$0xff]
        %s521 = scalar_lea.vmem [#allocation2], 24
        %522 = vst [vmem:[%s521 + $0x1] sm:$0xff] %v489
        %523 = vst [vmem:[%s521 + $0x9] sm:$0xff] %v490
        %524 = vst [vmem:[%s521 + $0x19] sm:$0xff] %v491
        %525 = vst [vmem:[%s521 + $0x21] sm:$0xff] %v492
        %526 = vst [vmem:[%s521 + $0x31] sm:$0xff] %v493
        %527 = vst [vmem:[%s521 + $0x39] sm:$0xff] %v494
        %528 = vst [vmem:[%s521 + $0x49] sm:$0xff] %v495
        %529 = vst [vmem:[%s521 + $0x51] sm:$0xff] %v496
        %530 = vst [vmem:[%s521 + $0x61] sm:$0xff] %v497
        %531 = vst [vmem:[%s521 + $0x69] sm:$0xff] %v498
        %532 = vst [vmem:[%s521 + $0x79] sm:$0xff] %v499
        %533 = vst [vmem:[%s521 + $0x81] sm:$0xff] %v500
        %534 = vst [vmem:[%s521 + $0x91] sm:$0xff] %v501
        %535 = vst [vmem:[%s521 + $0x99] sm:$0xff] %v502
        %536 = vst [vmem:[%s521 + $0xa9] sm:$0xff] %v503
        %537 = vst [vmem:[%s521 + $0xb1] sm:$0xff] %v504
        %538 = vst [vmem:[%s521 + $0xc1] sm:$0xff] %v505
        %539 = vst [vmem:[%s521 + $0xc9] sm:$0xff] %v506
        %540 = vst [vmem:[%s521 + $0xd9] sm:$0xff] %v507
        %541 = vst [vmem:[%s521 + $0xe1] sm:$0xff] %v508
        %542 = vst [vmem:[%s521 + $0xf1] sm:$0xff] %v509
        %543 = vst [vmem:[%s521 + $0xf9] sm:$0xff] %v510
        %544 = vst [vmem:[%s521 + $0x109] sm:$0xff] %v511
        %545 = vst [vmem:[%s521 + $0x111] sm:$0xff] %v512
        %546 = vst [vmem:[%s521 + $0x121] sm:$0xff] %v513
        %547 = vst [vmem:[%s521 + $0x129] sm:$0xff] %v514
        %548 = vst [vmem:[%s521 + $0x139] sm:$0xff] %v515
        %549 = vst [vmem:[%s521 + $0x141] sm:$0xff] %v516
        %550 = vst [vmem:[%s521 + $0x151] sm:$0xff] %v517
        %551 = vst [vmem:[%s521 + $0x159] sm:$0xff] %v518
        %552 = vst [vmem:[%s521 + $0x169] sm:$0xff] %v519
        %553 = vst [vmem:[%s521 + $0x171] sm:$0xff] %v520
        %v554 = vld [vmem:[#allocation2] sm:$0xff]
        %v555 = vld [vmem:[#allocation2 + $0x8] sm:$0xff]
        %v556 = vld [vmem:[#allocation2 + $0x18] sm:$0xff]
        %v557 = vld [vmem:[#allocation2 + $0x20] sm:$0xff]
        %v558 = vld [vmem:[#allocation2 + $0x30] sm:$0xff]
        %v559 = vld [vmem:[#allocation2 + $0x38] sm:$0xff]
        %v560 = vld [vmem:[#allocation2 + $0x48] sm:$0xff]
        %v561 = vld [vmem:[#allocation2 + $0x50] sm:$0xff]
        %v562 = vld [vmem:[#allocation2 + $0x60] sm:$0xff]
        %v563 = vld [vmem:[#allocation2 + $0x68] sm:$0xff]
        %v564 = vld [vmem:[#allocation2 + $0x78] sm:$0xff]
        %v565 = vld [vmem:[#allocation2 + $0x80] sm:$0xff]
        %v566 = vld [vmem:[#allocation2 + $0x90] sm:$0xff]
        %v567 = vld [vmem:[#allocation2 + $0x98] sm:$0xff]
        %v568 = vld [vmem:[#allocation2 + $0xa8] sm:$0xff]
        %v569 = vld [vmem:[#allocation2 + $0xb0] sm:$0xff]
        %v570 = vld [vmem:[#allocation2 + $0xc0] sm:$0xff]
        %v571 = vld [vmem:[#allocation2 + $0xc8] sm:$0xff]
        %v572 = vld [vmem:[#allocation2 + $0xd8] sm:$0xff]
        %v573 = vld [vmem:[#allocation2 + $0xe0] sm:$0xff]
        %v574 = vld [vmem:[#allocation2 + $0xf0] sm:$0xff]
        %v575 = vld [vmem:[#allocation2 + $0xf8] sm:$0xff]
        %v576 = vld [vmem:[#allocation2 + $0x108] sm:$0xff]
        %v577 = vld [vmem:[#allocation2 + $0x110] sm:$0xff]
        %v578 = vld [vmem:[#allocation2 + $0x120] sm:$0xff]
        %v579 = vld [vmem:[#allocation2 + $0x128] sm:$0xff]
        %v580 = vld [vmem:[#allocation2 + $0x138] sm:$0xff]
        %v581 = vld [vmem:[#allocation2 + $0x140] sm:$0xff]
        %v582 = vld [vmem:[#allocation2 + $0x150] sm:$0xff]
        %v583 = vld [vmem:[#allocation2 + $0x158] sm:$0xff]
        %v584 = vld [vmem:[#allocation2 + $0x168] sm:$0xff]
        %v585 = vld [vmem:[#allocation2 + $0x170] sm:$0xff]
        %v586 = vpack.c.bf16 %v555, %v554
        %v587 = vpack.c.bf16 %v557, %v556
        %v588 = vpack.c.bf16 %v559, %v558
        %v589 = vpack.c.bf16 %v561, %v560
        %v590 = vpack.c.bf16 %v563, %v562
        %v591 = vpack.c.bf16 %v565, %v564
        %v592 = vpack.c.bf16 %v567, %v566
        %v593 = vpack.c.bf16 %v569, %v568
        %v594 = vpack.c.bf16 %v571, %v570
        %v595 = vpack.c.bf16 %v573, %v572
        %v596 = vpack.c.bf16 %v575, %v574
        %v597 = vpack.c.bf16 %v577, %v576
        %v598 = vpack.c.bf16 %v579, %v578
        %v599 = vpack.c.bf16 %v581, %v580
        %v600 = vpack.c.bf16 %v583, %v582
        %v601 = vpack.c.bf16 %v585, %v584
        %v602 = vld [vmem:[#allocation6] sm:$0xf]
        %v603 = vld [vmem:[#allocation6 + $0x4] sm:$0xf]
        %v604 = vld [vmem:[#allocation6 + $0x8] sm:$0xf]
        %v605 = vld [vmem:[#allocation6 + $0xc] sm:$0xf]
        %v606 = vld [vmem:[#allocation6 + $0x10] sm:$0xf]
        %v607 = vld [vmem:[#allocation6 + $0x14] sm:$0xf]
        %v608 = vld [vmem:[#allocation6 + $0x18] sm:$0xf]
        %v609 = vld [vmem:[#allocation6 + $0x1c] sm:$0xf]
        %v610 = vld [vmem:[#allocation6 + $0x20] sm:$0xf]
        %v611 = vld [vmem:[#allocation6 + $0x24] sm:$0xf]
        %v612 = vld [vmem:[#allocation6 + $0x28] sm:$0xf]
        %v613 = vld [vmem:[#allocation6 + $0x2c] sm:$0xf]
        %v614 = vld [vmem:[#allocation6 + $0x30] sm:$0xf]
        %v615 = vld [vmem:[#allocation6 + $0x34] sm:$0xf]
        %v616 = vld [vmem:[#allocation6 + $0x38] sm:$0xf]
        %v617 = vld [vmem:[#allocation6 + $0x3c] sm:$0xf]
        %v618 = vld [vmem:[#allocation2 + $0x1] sm:$0xff]
        %v619 = vld [vmem:[#allocation2 + $0x9] sm:$0xff]
        %v620 = vld [vmem:[#allocation2 + $0x19] sm:$0xff]
        %v621 = vld [vmem:[#allocation2 + $0x21] sm:$0xff]
        %v622 = vld [vmem:[#allocation2 + $0x31] sm:$0xff]
        %v623 = vld [vmem:[#allocation2 + $0x39] sm:$0xff]
        %v624 = vld [vmem:[#allocation2 + $0x49] sm:$0xff]
        %v625 = vld [vmem:[#allocation2 + $0x51] sm:$0xff]
        %v626 = vld [vmem:[#allocation2 + $0x61] sm:$0xff]
        %v627 = vld [vmem:[#allocation2 + $0x69] sm:$0xff]
        %v628 = vld [vmem:[#allocation2 + $0x79] sm:$0xff]
        %v629 = vld [vmem:[#allocation2 + $0x81] sm:$0xff]
        %v630 = vld [vmem:[#allocation2 + $0x91] sm:$0xff]
        %v631 = vld [vmem:[#allocation2 + $0x99] sm:$0xff]
        %v632 = vld [vmem:[#allocation2 + $0xa9] sm:$0xff]
        %v633 = vld [vmem:[#allocation2 + $0xb1] sm:$0xff]
        %v634 = vld [vmem:[#allocation2 + $0xc1] sm:$0xff]
        %v635 = vld [vmem:[#allocation2 + $0xc9] sm:$0xff]
        %v636 = vld [vmem:[#allocation2 + $0xd9] sm:$0xff]
        %v637 = vld [vmem:[#allocation2 + $0xe1] sm:$0xff]
        %v638 = vld [vmem:[#allocation2 + $0xf1] sm:$0xff]
        %v639 = vld [vmem:[#allocation2 + $0xf9] sm:$0xff]
        %v640 = vld [vmem:[#allocation2 + $0x109] sm:$0xff]
        %v641 = vld [vmem:[#allocation2 + $0x111] sm:$0xff]
        %v642 = vld [vmem:[#allocation2 + $0x121] sm:$0xff]
        %v643 = vld [vmem:[#allocation2 + $0x129] sm:$0xff]
        %v644 = vld [vmem:[#allocation2 + $0x139] sm:$0xff]
        %v645 = vld [vmem:[#allocation2 + $0x141] sm:$0xff]
        %v646 = vld [vmem:[#allocation2 + $0x151] sm:$0xff]
        %v647 = vld [vmem:[#allocation2 + $0x159] sm:$0xff]
        %v648 = vld [vmem:[#allocation2 + $0x169] sm:$0xff]
        %v649 = vld [vmem:[#allocation2 + $0x171] sm:$0xff]
        %v650 = vpack.c.bf16 %v619, %v618
        %v651 = vpack.c.bf16 %v621, %v620
        %v652 = vpack.c.bf16 %v623, %v622
        %v653 = vpack.c.bf16 %v625, %v624
        %v654 = vpack.c.bf16 %v627, %v626
        %v655 = vpack.c.bf16 %v629, %v628
        %v656 = vpack.c.bf16 %v631, %v630
        %v657 = vpack.c.bf16 %v633, %v632
        %v658 = vpack.c.bf16 %v635, %v634
        %v659 = vpack.c.bf16 %v637, %v636
        %v660 = vpack.c.bf16 %v639, %v638
        %v661 = vpack.c.bf16 %v641, %v640
        %v662 = vpack.c.bf16 %v643, %v642
        %v663 = vpack.c.bf16 %v645, %v644
        %v664 = vpack.c.bf16 %v647, %v646
        %v665 = vpack.c.bf16 %v649, %v648
        %s666 = scalar_lea.vmem [#allocation6], 64
        %v667 = vld [vmem:[%s666] sm:$0xf]
        %v668 = vld [vmem:[%s666 + $0x4] sm:$0xf]
        %v669 = vld [vmem:[%s666 + $0x8] sm:$0xf]
        %v670 = vld [vmem:[%s666 + $0xc] sm:$0xf]
        %v671 = vld [vmem:[%s666 + $0x10] sm:$0xf]
        %v672 = vld [vmem:[%s666 + $0x14] sm:$0xf]
        %v673 = vld [vmem:[%s666 + $0x18] sm:$0xf]
        %v674 = vld [vmem:[%s666 + $0x1c] sm:$0xf]
        %v675 = vld [vmem:[%s666 + $0x20] sm:$0xf]
        %v676 = vld [vmem:[%s666 + $0x24] sm:$0xf]
        %v677 = vld [vmem:[%s666 + $0x28] sm:$0xf]
        %v678 = vld [vmem:[%s666 + $0x2c] sm:$0xf]
        %v679 = vld [vmem:[%s666 + $0x30] sm:$0xf]
        %v680 = vld [vmem:[%s666 + $0x34] sm:$0xf]
        %v681 = vld [vmem:[%s666 + $0x38] sm:$0xf]
        %v682 = vld [vmem:[%s666 + $0x3c] sm:$0xf]
        %v699 = vunpack.c.l.b16 %v667
        %v700 = vunpack.c.l.b16 %v668
        %v701 = vunpack.c.l.b16 %v669
        %v702 = vunpack.c.l.b16 %v670
        %v703 = vunpack.c.l.b16 %v671
        %v704 = vunpack.c.l.b16 %v672
        %v705 = vunpack.c.l.b16 %v673
        %v706 = vunpack.c.l.b16 %v674
        %v707 = vunpack.c.l.b16 %v675
        %v708 = vunpack.c.l.b16 %v676
        %v709 = vunpack.c.l.b16 %v677
        %v710 = vunpack.c.l.b16 %v678
        %v711 = vunpack.c.l.b16 %v679
        %v712 = vunpack.c.l.b16 %v680
        %v713 = vunpack.c.l.b16 %v681
        %v714 = vunpack.c.l.b16 %v682
        %v715 = vpack.c.b16 %v700, %v699
        %v716 = vpack.c.b16 %v702, %v701
        %v717 = vpack.c.b16 %v704, %v703
        %v718 = vpack.c.b16 %v706, %v705
        %v719 = vpack.c.b16 %v708, %v707
        %v720 = vpack.c.b16 %v710, %v709
        %v721 = vpack.c.b16 %v712, %v711
        %v722 = vpack.c.b16 %v714, %v713
        %731 = vmatpush.bf16.msra.mxu0 %v722
        %732 = vmatpush.bf16.msra.mxu0 %v721
        %733 = vmatpush.bf16.msra.mxu0 %v720
        %734 = vmatpush.bf16.msra.mxu0 %v719
        %735 = vmatpush.bf16.msra.mxu0 %v718
        %736 = vmatpush.bf16.msra.mxu0 %v717
        %737 = vmatpush.bf16.msra.mxu0 %v716
        %738 = vmatpush.bf16.msra.mxu0 %v715
        %739 = vmatmul.bf16.gmra.mxu0 %v650
        %v740 = vpop.f32.mrf.mxu0
        %v741 = vadd.f32 0.0, %v740
        %v742 = vpop.f32.mrf.mxu0
        %v743 = vadd.f32 0.0, %v742
        %744 = vmatmul.bf16.gmra.mxu0 %v651
        %v745 = vpop.f32.mrf.mxu0
        %v746 = vadd.f32 0.0, %v745
        %v747 = vpop.f32.mrf.mxu0
        %v748 = vadd.f32 0.0, %v747
        %749 = vmatmul.bf16.gmra.mxu0 %v652
        %v750 = vpop.f32.mrf.mxu0
        %v751 = vadd.f32 0.0, %v750
        %v752 = vpop.f32.mrf.mxu0
        %v753 = vadd.f32 0.0, %v752
        %754 = vmatmul.bf16.gmra.mxu0 %v653
        %v755 = vpop.f32.mrf.mxu0
        %v756 = vadd.f32 0.0, %v755
        %v757 = vpop.f32.mrf.mxu0
        %v758 = vadd.f32 0.0, %v757
        %759 = vmatmul.bf16.gmra.mxu0 %v654
        %v760 = vpop.f32.mrf.mxu0
        %v761 = vadd.f32 0.0, %v760
        %v762 = vpop.f32.mrf.mxu0
        %v763 = vadd.f32 0.0, %v762
        %764 = vmatmul.bf16.gmra.mxu0 %v655
        %v765 = vpop.f32.mrf.mxu0
        %v766 = vadd.f32 0.0, %v765
        %v767 = vpop.f32.mrf.mxu0
        %v768 = vadd.f32 0.0, %v767
        %769 = vmatmul.bf16.gmra.mxu0 %v656
        %v770 = vpop.f32.mrf.mxu0
        %v771 = vadd.f32 0.0, %v770
        %v772 = vpop.f32.mrf.mxu0
        %v773 = vadd.f32 0.0, %v772
        %774 = vmatmul.bf16.gmra.mxu0 %v657
        %v775 = vpop.f32.mrf.mxu0
        %v776 = vadd.f32 0.0, %v775
        %v777 = vpop.f32.mrf.mxu0
        %v778 = vadd.f32 0.0, %v777
        %779 = vmatmul.bf16.gmra.mxu0 %v658
        %v780 = vpop.f32.mrf.mxu0
        %v781 = vadd.f32 0.0, %v780
        %v782 = vpop.f32.mrf.mxu0
        %v783 = vadd.f32 0.0, %v782
        %784 = vmatmul.bf16.gmra.mxu0 %v659
        %v785 = vpop.f32.mrf.mxu0
        %v786 = vadd.f32 0.0, %v785
        %v787 = vpop.f32.mrf.mxu0
        %v788 = vadd.f32 0.0, %v787
        %789 = vmatmul.bf16.gmra.mxu0 %v660
        %v790 = vpop.f32.mrf.mxu0
        %v791 = vadd.f32 0.0, %v790
        %v792 = vpop.f32.mrf.mxu0
        %v793 = vadd.f32 0.0, %v792
        %794 = vmatmul.bf16.gmra.mxu0 %v661
        %v795 = vpop.f32.mrf.mxu0
        %v796 = vadd.f32 0.0, %v795
        %v797 = vpop.f32.mrf.mxu0
        %v798 = vadd.f32 0.0, %v797
        %799 = vmatmul.bf16.gmra.mxu0 %v662
        %v800 = vpop.f32.mrf.mxu0
        %v801 = vadd.f32 0.0, %v800
        %v802 = vpop.f32.mrf.mxu0
        %v803 = vadd.f32 0.0, %v802
        %804 = vmatmul.bf16.gmra.mxu0 %v663
        %v805 = vpop.f32.mrf.mxu0
        %v806 = vadd.f32 0.0, %v805
        %v807 = vpop.f32.mrf.mxu0
        %v808 = vadd.f32 0.0, %v807
        %809 = vmatmul.bf16.gmra.mxu0 %v664
        %v810 = vpop.f32.mrf.mxu0
        %v811 = vadd.f32 0.0, %v810
        %v812 = vpop.f32.mrf.mxu0
        %v813 = vadd.f32 0.0, %v812
        %814 = vmatmul.bf16.gmra.mxu0 %v665
        %v815 = vpop.f32.mrf.mxu0
        %v816 = vadd.f32 0.0, %v815
        %v817 = vpop.f32.mrf.mxu0
        %v818 = vadd.f32 0.0, %v817
        %819 = vdwg.mxu0
        %v836 = vunpack.c.l.b16 %v602
        %v837 = vunpack.c.l.b16 %v603
        %v838 = vunpack.c.l.b16 %v604
        %v839 = vunpack.c.l.b16 %v605
        %v840 = vunpack.c.l.b16 %v606
        %v841 = vunpack.c.l.b16 %v607
        %v842 = vunpack.c.l.b16 %v608
        %v843 = vunpack.c.l.b16 %v609
        %v844 = vunpack.c.l.b16 %v610
        %v845 = vunpack.c.l.b16 %v611
        %v846 = vunpack.c.l.b16 %v612
        %v847 = vunpack.c.l.b16 %v613
        %v848 = vunpack.c.l.b16 %v614
        %v849 = vunpack.c.l.b16 %v615
        %v850 = vunpack.c.l.b16 %v616
        %v851 = vunpack.c.l.b16 %v617
        %v852 = vpack.c.b16 %v837, %v836
        %v853 = vpack.c.b16 %v839, %v838
        %v854 = vpack.c.b16 %v841, %v840
        %v855 = vpack.c.b16 %v843, %v842
        %v856 = vpack.c.b16 %v845, %v844
        %v857 = vpack.c.b16 %v847, %v846
        %v858 = vpack.c.b16 %v849, %v848
        %v859 = vpack.c.b16 %v851, %v850
        %868 = vmatpush.bf16.msra.mxu0 %v859
        %869 = vmatpush.bf16.msra.mxu0 %v858
        %870 = vmatpush.bf16.msra.mxu0 %v857
        %871 = vmatpush.bf16.msra.mxu0 %v856
        %872 = vmatpush.bf16.msra.mxu0 %v855
        %873 = vmatpush.bf16.msra.mxu0 %v854
        %874 = vmatpush.bf16.msra.mxu0 %v853
        %875 = vmatpush.bf16.msra.mxu0 %v852
        %876 = vmatmul.bf16.gmra.mxu0 %v586
        %v877 = vpop.f32.mrf.mxu0
        %v878 = vadd.f32 %v741, %v877
        %v879 = vpop.f32.mrf.mxu0
        %v880 = vadd.f32 %v743, %v879
        %881 = vmatmul.bf16.gmra.mxu0 %v587
        %v882 = vpop.f32.mrf.mxu0
        %v883 = vadd.f32 %v746, %v882
        %v884 = vpop.f32.mrf.mxu0
        %v885 = vadd.f32 %v748, %v884
        %886 = vmatmul.bf16.gmra.mxu0 %v588
        %v887 = vpop.f32.mrf.mxu0
        %v888 = vadd.f32 %v751, %v887
        %v889 = vpop.f32.mrf.mxu0
        %v890 = vadd.f32 %v753, %v889
        %891 = vmatmul.bf16.gmra.mxu0 %v589
        %v892 = vpop.f32.mrf.mxu0
        %v893 = vadd.f32 %v756, %v892
        %v894 = vpop.f32.mrf.mxu0
        %v895 = vadd.f32 %v758, %v894
        %896 = vmatmul.bf16.gmra.mxu0 %v590
        %v897 = vpop.f32.mrf.mxu0
        %v898 = vadd.f32 %v761, %v897
        %v899 = vpop.f32.mrf.mxu0
        %v900 = vadd.f32 %v763, %v899
        %901 = vmatmul.bf16.gmra.mxu0 %v591
        %v902 = vpop.f32.mrf.mxu0
        %v903 = vadd.f32 %v766, %v902
        %v904 = vpop.f32.mrf.mxu0
        %v905 = vadd.f32 %v768, %v904
        %906 = vmatmul.bf16.gmra.mxu0 %v592
        %v907 = vpop.f32.mrf.mxu0
        %v908 = vadd.f32 %v771, %v907
        %v909 = vpop.f32.mrf.mxu0
        %v910 = vadd.f32 %v773, %v909
        %911 = vmatmul.bf16.gmra.mxu0 %v593
        %v912 = vpop.f32.mrf.mxu0
        %v913 = vadd.f32 %v776, %v912
        %v914 = vpop.f32.mrf.mxu0
        %v915 = vadd.f32 %v778, %v914
        %916 = vmatmul.bf16.gmra.mxu0 %v594
        %v917 = vpop.f32.mrf.mxu0
        %v918 = vadd.f32 %v781, %v917
        %v919 = vpop.f32.mrf.mxu0
        %v920 = vadd.f32 %v783, %v919
        %921 = vmatmul.bf16.gmra.mxu0 %v595
        %v922 = vpop.f32.mrf.mxu0
        %v923 = vadd.f32 %v786, %v922
        %v924 = vpop.f32.mrf.mxu0
        %v925 = vadd.f32 %v788, %v924
        %926 = vmatmul.bf16.gmra.mxu0 %v596
        %v927 = vpop.f32.mrf.mxu0
        %v928 = vadd.f32 %v791, %v927
        %v929 = vpop.f32.mrf.mxu0
        %v930 = vadd.f32 %v793, %v929
        %931 = vmatmul.bf16.gmra.mxu0 %v597
        %v932 = vpop.f32.mrf.mxu0
        %v933 = vadd.f32 %v796, %v932
        %v934 = vpop.f32.mrf.mxu0
        %v935 = vadd.f32 %v798, %v934
        %936 = vmatmul.bf16.gmra.mxu0 %v598
        %v937 = vpop.f32.mrf.mxu0
        %v938 = vadd.f32 %v801, %v937
        %v939 = vpop.f32.mrf.mxu0
        %v940 = vadd.f32 %v803, %v939
        %941 = vmatmul.bf16.gmra.mxu0 %v599
        %v942 = vpop.f32.mrf.mxu0
        %v943 = vadd.f32 %v806, %v942
        %v944 = vpop.f32.mrf.mxu0
        %v945 = vadd.f32 %v808, %v944
        %946 = vmatmul.bf16.gmra.mxu0 %v600
        %v947 = vpop.f32.mrf.mxu0
        %v948 = vadd.f32 %v811, %v947
        %v949 = vpop.f32.mrf.mxu0
        %v950 = vadd.f32 %v813, %v949
        %951 = vmatmul.bf16.gmra.mxu0 %v601
        %v952 = vpop.f32.mrf.mxu0
        %v953 = vadd.f32 %v816, %v952
        %v954 = vpop.f32.mrf.mxu0
        %v955 = vadd.f32 %v818, %v954
        %956 = vdwg.mxu0
        %v957 = vld [vmem:[#allocation2 + $0x2] sm:$0xff]
        %v958 = vld [vmem:[#allocation2 + $0xa] sm:$0xff]
        %v959 = vld [vmem:[#allocation2 + $0x1a] sm:$0xff]
        %v960 = vld [vmem:[#allocation2 + $0x22] sm:$0xff]
        %v961 = vld [vmem:[#allocation2 + $0x32] sm:$0xff]
        %v962 = vld [vmem:[#allocation2 + $0x3a] sm:$0xff]
        %v963 = vld [vmem:[#allocation2 + $0x4a] sm:$0xff]
        %v964 = vld [vmem:[#allocation2 + $0x52] sm:$0xff]
        %v965 = vld [vmem:[#allocation2 + $0x62] sm:$0xff]
        %v966 = vld [vmem:[#allocation2 + $0x6a] sm:$0xff]
        %v967 = vld [vmem:[#allocation2 + $0x7a] sm:$0xff]
        %v968 = vld [vmem:[#allocation2 + $0x82] sm:$0xff]
        %v969 = vld [vmem:[#allocation2 + $0x92] sm:$0xff]
        %v970 = vld [vmem:[#allocation2 + $0x9a] sm:$0xff]
        %v971 = vld [vmem:[#allocation2 + $0xaa] sm:$0xff]
        %v972 = vld [vmem:[#allocation2 + $0xb2] sm:$0xff]
        %v973 = vld [vmem:[#allocation2 + $0xc2] sm:$0xff]
        %v974 = vld [vmem:[#allocation2 + $0xca] sm:$0xff]
        %v975 = vld [vmem:[#allocation2 + $0xda] sm:$0xff]
        %v976 = vld [vmem:[#allocation2 + $0xe2] sm:$0xff]
        %v977 = vld [vmem:[#allocation2 + $0xf2] sm:$0xff]
        %v978 = vld [vmem:[#allocation2 + $0xfa] sm:$0xff]
        %v979 = vld [vmem:[#allocation2 + $0x10a] sm:$0xff]
        %v980 = vld [vmem:[#allocation2 + $0x112] sm:$0xff]
        %v981 = vld [vmem:[#allocation2 + $0x122] sm:$0xff]
        %v982 = vld [vmem:[#allocation2 + $0x12a] sm:$0xff]
        %v983 = vld [vmem:[#allocation2 + $0x13a] sm:$0xff]
        %v984 = vld [vmem:[#allocation2 + $0x142] sm:$0xff]
        %v985 = vld [vmem:[#allocation2 + $0x152] sm:$0xff]
        %v986 = vld [vmem:[#allocation2 + $0x15a] sm:$0xff]
        %v987 = vld [vmem:[#allocation2 + $0x16a] sm:$0xff]
        %v988 = vld [vmem:[#allocation2 + $0x172] sm:$0xff]
        %v989 = vpack.c.bf16 %v958, %v957
        %v990 = vpack.c.bf16 %v960, %v959
        %v991 = vpack.c.bf16 %v962, %v961
        %v992 = vpack.c.bf16 %v964, %v963
        %v993 = vpack.c.bf16 %v966, %v965
        %v994 = vpack.c.bf16 %v968, %v967
        %v995 = vpack.c.bf16 %v970, %v969
        %v996 = vpack.c.bf16 %v972, %v971
        %v997 = vpack.c.bf16 %v974, %v973
        %v998 = vpack.c.bf16 %v976, %v975
        %v999 = vpack.c.bf16 %v978, %v977
        %v1000 = vpack.c.bf16 %v980, %v979
        %v1001 = vpack.c.bf16 %v982, %v981
        %v1002 = vpack.c.bf16 %v984, %v983
        %v1003 = vpack.c.bf16 %v986, %v985
        %v1004 = vpack.c.bf16 %v988, %v987
        %s1005 = scalar_lea.vmem [#allocation6], 128
        %v1006 = vld [vmem:[%s1005] sm:$0xf]
        %v1007 = vld [vmem:[%s1005 + $0x4] sm:$0xf]
        %v1008 = vld [vmem:[%s1005 + $0x8] sm:$0xf]
        %v1009 = vld [vmem:[%s1005 + $0xc] sm:$0xf]
        %v1010 = vld [vmem:[%s1005 + $0x10] sm:$0xf]
        %v1011 = vld [vmem:[%s1005 + $0x14] sm:$0xf]
        %v1012 = vld [vmem:[%s1005 + $0x18] sm:$0xf]
        %v1013 = vld [vmem:[%s1005 + $0x1c] sm:$0xf]
        %v1014 = vld [vmem:[%s1005 + $0x20] sm:$0xf]
        %v1015 = vld [vmem:[%s1005 + $0x24] sm:$0xf]
        %v1016 = vld [vmem:[%s1005 + $0x28] sm:$0xf]
        %v1017 = vld [vmem:[%s1005 + $0x2c] sm:$0xf]
        %v1018 = vld [vmem:[%s1005 + $0x30] sm:$0xf]
        %v1019 = vld [vmem:[%s1005 + $0x34] sm:$0xf]
        %v1020 = vld [vmem:[%s1005 + $0x38] sm:$0xf]
        %v1021 = vld [vmem:[%s1005 + $0x3c] sm:$0xf]
        %v1038 = vunpack.c.l.b16 %v1006
        %v1039 = vunpack.c.l.b16 %v1007
        %v1040 = vunpack.c.l.b16 %v1008
        %v1041 = vunpack.c.l.b16 %v1009
        %v1042 = vunpack.c.l.b16 %v1010
        %v1043 = vunpack.c.l.b16 %v1011
        %v1044 = vunpack.c.l.b16 %v1012
        %v1045 = vunpack.c.l.b16 %v1013
        %v1046 = vunpack.c.l.b16 %v1014
        %v1047 = vunpack.c.l.b16 %v1015
        %v1048 = vunpack.c.l.b16 %v1016
        %v1049 = vunpack.c.l.b16 %v1017
        %v1050 = vunpack.c.l.b16 %v1018
        %v1051 = vunpack.c.l.b16 %v1019
        %v1052 = vunpack.c.l.b16 %v1020
        %v1053 = vunpack.c.l.b16 %v1021
        %v1054 = vpack.c.b16 %v1039, %v1038
        %v1055 = vpack.c.b16 %v1041, %v1040
        %v1056 = vpack.c.b16 %v1043, %v1042
        %v1057 = vpack.c.b16 %v1045, %v1044
        %v1058 = vpack.c.b16 %v1047, %v1046
        %v1059 = vpack.c.b16 %v1049, %v1048
        %v1060 = vpack.c.b16 %v1051, %v1050
        %v1061 = vpack.c.b16 %v1053, %v1052
        %1070 = vmatpush.bf16.msra.mxu0 %v1061
        %1071 = vmatpush.bf16.msra.mxu0 %v1060
        %1072 = vmatpush.bf16.msra.mxu0 %v1059
        %1073 = vmatpush.bf16.msra.mxu0 %v1058
        %1074 = vmatpush.bf16.msra.mxu0 %v1057
        %1075 = vmatpush.bf16.msra.mxu0 %v1056
        %1076 = vmatpush.bf16.msra.mxu0 %v1055
        %1077 = vmatpush.bf16.msra.mxu0 %v1054
        %1078 = vmatmul.bf16.gmra.mxu0 %v989
        %v1079 = vpop.f32.mrf.mxu0
        %v1080 = vadd.f32 0.0, %v1079
        %v1081 = vpop.f32.mrf.mxu0
        %v1082 = vadd.f32 0.0, %v1081
        %1083 = vmatmul.bf16.gmra.mxu0 %v990
        %v1084 = vpop.f32.mrf.mxu0
        %v1085 = vadd.f32 0.0, %v1084
        %v1086 = vpop.f32.mrf.mxu0
        %v1087 = vadd.f32 0.0, %v1086
        %1088 = vmatmul.bf16.gmra.mxu0 %v991
        %v1089 = vpop.f32.mrf.mxu0
        %v1090 = vadd.f32 0.0, %v1089
        %v1091 = vpop.f32.mrf.mxu0
        %v1092 = vadd.f32 0.0, %v1091
        %1093 = vmatmul.bf16.gmra.mxu0 %v992
        %v1094 = vpop.f32.mrf.mxu0
        %v1095 = vadd.f32 0.0, %v1094
        %v1096 = vpop.f32.mrf.mxu0
        %v1097 = vadd.f32 0.0, %v1096
        %1098 = vmatmul.bf16.gmra.mxu0 %v993
        %v1099 = vpop.f32.mrf.mxu0
        %v1100 = vadd.f32 0.0, %v1099
        %v1101 = vpop.f32.mrf.mxu0
        %v1102 = vadd.f32 0.0, %v1101
        %1103 = vmatmul.bf16.gmra.mxu0 %v994
        %v1104 = vpop.f32.mrf.mxu0
        %v1105 = vadd.f32 0.0, %v1104
        %v1106 = vpop.f32.mrf.mxu0
        %v1107 = vadd.f32 0.0, %v1106
        %1108 = vmatmul.bf16.gmra.mxu0 %v995
        %v1109 = vpop.f32.mrf.mxu0
        %v1110 = vadd.f32 0.0, %v1109
        %v1111 = vpop.f32.mrf.mxu0
        %v1112 = vadd.f32 0.0, %v1111
        %1113 = vmatmul.bf16.gmra.mxu0 %v996
        %v1114 = vpop.f32.mrf.mxu0
        %v1115 = vadd.f32 0.0, %v1114
        %v1116 = vpop.f32.mrf.mxu0
        %v1117 = vadd.f32 0.0, %v1116
        %1118 = vmatmul.bf16.gmra.mxu0 %v997
        %v1119 = vpop.f32.mrf.mxu0
        %v1120 = vadd.f32 0.0, %v1119
        %v1121 = vpop.f32.mrf.mxu0
        %v1122 = vadd.f32 0.0, %v1121
        %1123 = vmatmul.bf16.gmra.mxu0 %v998
        %v1124 = vpop.f32.mrf.mxu0
        %v1125 = vadd.f32 0.0, %v1124
        %v1126 = vpop.f32.mrf.mxu0
        %v1127 = vadd.f32 0.0, %v1126
        %1128 = vmatmul.bf16.gmra.mxu0 %v999
        %v1129 = vpop.f32.mrf.mxu0
        %v1130 = vadd.f32 0.0, %v1129
        %v1131 = vpop.f32.mrf.mxu0
        %v1132 = vadd.f32 0.0, %v1131
        %1133 = vmatmul.bf16.gmra.mxu0 %v1000
        %v1134 = vpop.f32.mrf.mxu0
        %v1135 = vadd.f32 0.0, %v1134
        %v1136 = vpop.f32.mrf.mxu0
        %v1137 = vadd.f32 0.0, %v1136
        %1138 = vmatmul.bf16.gmra.mxu0 %v1001
        %v1139 = vpop.f32.mrf.mxu0
        %v1140 = vadd.f32 0.0, %v1139
        %v1141 = vpop.f32.mrf.mxu0
        %v1142 = vadd.f32 0.0, %v1141
        %1143 = vmatmul.bf16.gmra.mxu0 %v1002
        %v1144 = vpop.f32.mrf.mxu0
        %v1145 = vadd.f32 0.0, %v1144
        %v1146 = vpop.f32.mrf.mxu0
        %v1147 = vadd.f32 0.0, %v1146
        %1148 = vmatmul.bf16.gmra.mxu0 %v1003
        %v1149 = vpop.f32.mrf.mxu0
        %v1150 = vadd.f32 0.0, %v1149
        %v1151 = vpop.f32.mrf.mxu0
        %v1152 = vadd.f32 0.0, %v1151
        %1153 = vmatmul.bf16.gmra.mxu0 %v1004
        %v1154 = vpop.f32.mrf.mxu0
        %v1155 = vadd.f32 0.0, %v1154
        %v1156 = vpop.f32.mrf.mxu0
        %v1157 = vadd.f32 0.0, %v1156
        %1158 = vdwg.mxu0
        %v1159 = vadd.f32 %v878, %v1080
        %v1160 = vadd.f32 %v880, %v1082
        %v1161 = vadd.f32 %v883, %v1085
        %v1162 = vadd.f32 %v885, %v1087
        %v1163 = vadd.f32 %v888, %v1090
        %v1164 = vadd.f32 %v890, %v1092
        %v1165 = vadd.f32 %v893, %v1095
        %v1166 = vadd.f32 %v895, %v1097
        %v1167 = vadd.f32 %v898, %v1100
        %v1168 = vadd.f32 %v900, %v1102
        %v1169 = vadd.f32 %v903, %v1105
        %v1170 = vadd.f32 %v905, %v1107
        %v1171 = vadd.f32 %v908, %v1110
        %v1172 = vadd.f32 %v910, %v1112
        %v1173 = vadd.f32 %v913, %v1115
        %v1174 = vadd.f32 %v915, %v1117
        %v1175 = vadd.f32 %v918, %v1120
        %v1176 = vadd.f32 %v920, %v1122
        %v1177 = vadd.f32 %v923, %v1125
        %v1178 = vadd.f32 %v925, %v1127
        %v1179 = vadd.f32 %v928, %v1130
        %v1180 = vadd.f32 %v930, %v1132
        %v1181 = vadd.f32 %v933, %v1135
        %v1182 = vadd.f32 %v935, %v1137
        %v1183 = vadd.f32 %v938, %v1140
        %v1184 = vadd.f32 %v940, %v1142
        %v1185 = vadd.f32 %v943, %v1145
        %v1186 = vadd.f32 %v945, %v1147
        %v1187 = vadd.f32 %v948, %v1150
        %v1188 = vadd.f32 %v950, %v1152
        %v1189 = vadd.f32 %v953, %v1155
        %v1190 = vadd.f32 %v955, %v1157
        %v1191 = vld [vmem:[%s521] sm:$0xff]
        %v1192 = vld [vmem:[%s521 + $0x8] sm:$0xff]
        %v1193 = vld [vmem:[%s521 + $0x18] sm:$0xff]
        %v1194 = vld [vmem:[%s521 + $0x20] sm:$0xff]
        %v1195 = vld [vmem:[%s521 + $0x30] sm:$0xff]
        %v1196 = vld [vmem:[%s521 + $0x38] sm:$0xff]
        %v1197 = vld [vmem:[%s521 + $0x48] sm:$0xff]
        %v1198 = vld [vmem:[%s521 + $0x50] sm:$0xff]
        %v1199 = vld [vmem:[%s521 + $0x60] sm:$0xff]
        %v1200 = vld [vmem:[%s521 + $0x68] sm:$0xff]
        %v1201 = vld [vmem:[%s521 + $0x78] sm:$0xff]
        %v1202 = vld [vmem:[%s521 + $0x80] sm:$0xff]
        %v1203 = vld [vmem:[%s521 + $0x90] sm:$0xff]
        %v1204 = vld [vmem:[%s521 + $0x98] sm:$0xff]
        %v1205 = vld [vmem:[%s521 + $0xa8] sm:$0xff]
        %v1206 = vld [vmem:[%s521 + $0xb0] sm:$0xff]
        %v1207 = vld [vmem:[%s521 + $0xc0] sm:$0xff]
        %v1208 = vld [vmem:[%s521 + $0xc8] sm:$0xff]
        %v1209 = vld [vmem:[%s521 + $0xd8] sm:$0xff]
        %v1210 = vld [vmem:[%s521 + $0xe0] sm:$0xff]
        %v1211 = vld [vmem:[%s521 + $0xf0] sm:$0xff]
        %v1212 = vld [vmem:[%s521 + $0xf8] sm:$0xff]
        %v1213 = vld [vmem:[%s521 + $0x108] sm:$0xff]
        %v1214 = vld [vmem:[%s521 + $0x110] sm:$0xff]
        %v1215 = vld [vmem:[%s521 + $0x120] sm:$0xff]
        %v1216 = vld [vmem:[%s521 + $0x128] sm:$0xff]
        %v1217 = vld [vmem:[%s521 + $0x138] sm:$0xff]
        %v1218 = vld [vmem:[%s521 + $0x140] sm:$0xff]
        %v1219 = vld [vmem:[%s521 + $0x150] sm:$0xff]
        %v1220 = vld [vmem:[%s521 + $0x158] sm:$0xff]
        %v1221 = vld [vmem:[%s521 + $0x168] sm:$0xff]
        %v1222 = vld [vmem:[%s521 + $0x170] sm:$0xff]
        %v1223 = vpack.c.bf16 %v1192, %v1191
        %v1224 = vpack.c.bf16 %v1194, %v1193
        %v1225 = vpack.c.bf16 %v1196, %v1195
        %v1226 = vpack.c.bf16 %v1198, %v1197
        %v1227 = vpack.c.bf16 %v1200, %v1199
        %v1228 = vpack.c.bf16 %v1202, %v1201
        %v1229 = vpack.c.bf16 %v1204, %v1203
        %v1230 = vpack.c.bf16 %v1206, %v1205
        %v1231 = vpack.c.bf16 %v1208, %v1207
        %v1232 = vpack.c.bf16 %v1210, %v1209
        %v1233 = vpack.c.bf16 %v1212, %v1211
        %v1234 = vpack.c.bf16 %v1214, %v1213
        %v1235 = vpack.c.bf16 %v1216, %v1215
        %v1236 = vpack.c.bf16 %v1218, %v1217
        %v1237 = vpack.c.bf16 %v1220, %v1219
        %v1238 = vpack.c.bf16 %v1222, %v1221
        %s1239 = scalar_lea.vmem [#allocation6], 192
        %v1240 = vld [vmem:[%s1239] sm:$0xf]
        %v1241 = vld [vmem:[%s1239 + $0x4] sm:$0xf]
        %v1242 = vld [vmem:[%s1239 + $0x8] sm:$0xf]
        %v1243 = vld [vmem:[%s1239 + $0xc] sm:$0xf]
        %v1244 = vld [vmem:[%s1239 + $0x10] sm:$0xf]
        %v1245 = vld [vmem:[%s1239 + $0x14] sm:$0xf]
        %v1246 = vld [vmem:[%s1239 + $0x18] sm:$0xf]
        %v1247 = vld [vmem:[%s1239 + $0x1c] sm:$0xf]
        %v1248 = vld [vmem:[%s1239 + $0x20] sm:$0xf]
        %v1249 = vld [vmem:[%s1239 + $0x24] sm:$0xf]
        %v1250 = vld [vmem:[%s1239 + $0x28] sm:$0xf]
        %v1251 = vld [vmem:[%s1239 + $0x2c] sm:$0xf]
        %v1252 = vld [vmem:[%s1239 + $0x30] sm:$0xf]
        %v1253 = vld [vmem:[%s1239 + $0x34] sm:$0xf]
        %v1254 = vld [vmem:[%s1239 + $0x38] sm:$0xf]
        %v1255 = vld [vmem:[%s1239 + $0x3c] sm:$0xf]
        %v1272 = vunpack.c.l.b16 %v1240
        %v1273 = vunpack.c.l.b16 %v1241
        %v1274 = vunpack.c.l.b16 %v1242
        %v1275 = vunpack.c.l.b16 %v1243
        %v1276 = vunpack.c.l.b16 %v1244
        %v1277 = vunpack.c.l.b16 %v1245
        %v1278 = vunpack.c.l.b16 %v1246
        %v1279 = vunpack.c.l.b16 %v1247
        %v1280 = vunpack.c.l.b16 %v1248
        %v1281 = vunpack.c.l.b16 %v1249
        %v1282 = vunpack.c.l.b16 %v1250
        %v1283 = vunpack.c.l.b16 %v1251
        %v1284 = vunpack.c.l.b16 %v1252
        %v1285 = vunpack.c.l.b16 %v1253
        %v1286 = vunpack.c.l.b16 %v1254
        %v1287 = vunpack.c.l.b16 %v1255
        %v1288 = vpack.c.b16 %v1273, %v1272
        %v1289 = vpack.c.b16 %v1275, %v1274
        %v1290 = vpack.c.b16 %v1277, %v1276
        %v1291 = vpack.c.b16 %v1279, %v1278
        %v1292 = vpack.c.b16 %v1281, %v1280
        %v1293 = vpack.c.b16 %v1283, %v1282
        %v1294 = vpack.c.b16 %v1285, %v1284
        %v1295 = vpack.c.b16 %v1287, %v1286
        %1304 = vmatpush.bf16.msra.mxu0 %v1295
        %1305 = vmatpush.bf16.msra.mxu0 %v1294
        %1306 = vmatpush.bf16.msra.mxu0 %v1293
        %1307 = vmatpush.bf16.msra.mxu0 %v1292
        %1308 = vmatpush.bf16.msra.mxu0 %v1291
        %1309 = vmatpush.bf16.msra.mxu0 %v1290
        %1310 = vmatpush.bf16.msra.mxu0 %v1289
        %1311 = vmatpush.bf16.msra.mxu0 %v1288
        %1312 = vmatmul.bf16.gmra.mxu0 %v1223
        %v1313 = vpop.f32.mrf.mxu0
        %v1314 = vadd.f32 0.0, %v1313
        %v1315 = vpop.f32.mrf.mxu0
        %v1316 = vadd.f32 0.0, %v1315
        %1317 = vmatmul.bf16.gmra.mxu0 %v1224
        %v1318 = vpop.f32.mrf.mxu0
        %v1319 = vadd.f32 0.0, %v1318
        %v1320 = vpop.f32.mrf.mxu0
        %v1321 = vadd.f32 0.0, %v1320
        %1322 = vmatmul.bf16.gmra.mxu0 %v1225
        %v1323 = vpop.f32.mrf.mxu0
        %v1324 = vadd.f32 0.0, %v1323
        %v1325 = vpop.f32.mrf.mxu0
        %v1326 = vadd.f32 0.0, %v1325
        %1327 = vmatmul.bf16.gmra.mxu0 %v1226
        %v1328 = vpop.f32.mrf.mxu0
        %v1329 = vadd.f32 0.0, %v1328
        %v1330 = vpop.f32.mrf.mxu0
        %v1331 = vadd.f32 0.0, %v1330
        %1332 = vmatmul.bf16.gmra.mxu0 %v1227
        %v1333 = vpop.f32.mrf.mxu0
        %v1334 = vadd.f32 0.0, %v1333
        %v1335 = vpop.f32.mrf.mxu0
        %v1336 = vadd.f32 0.0, %v1335
        %1337 = vmatmul.bf16.gmra.mxu0 %v1228
        %v1338 = vpop.f32.mrf.mxu0
        %v1339 = vadd.f32 0.0, %v1338
        %v1340 = vpop.f32.mrf.mxu0
        %v1341 = vadd.f32 0.0, %v1340
        %1342 = vmatmul.bf16.gmra.mxu0 %v1229
        %v1343 = vpop.f32.mrf.mxu0
        %v1344 = vadd.f32 0.0, %v1343
        %v1345 = vpop.f32.mrf.mxu0
        %v1346 = vadd.f32 0.0, %v1345
        %1347 = vmatmul.bf16.gmra.mxu0 %v1230
        %v1348 = vpop.f32.mrf.mxu0
        %v1349 = vadd.f32 0.0, %v1348
        %v1350 = vpop.f32.mrf.mxu0
        %v1351 = vadd.f32 0.0, %v1350
        %1352 = vmatmul.bf16.gmra.mxu0 %v1231
        %v1353 = vpop.f32.mrf.mxu0
        %v1354 = vadd.f32 0.0, %v1353
        %v1355 = vpop.f32.mrf.mxu0
        %v1356 = vadd.f32 0.0, %v1355
        %1357 = vmatmul.bf16.gmra.mxu0 %v1232
        %v1358 = vpop.f32.mrf.mxu0
        %v1359 = vadd.f32 0.0, %v1358
        %v1360 = vpop.f32.mrf.mxu0
        %v1361 = vadd.f32 0.0, %v1360
        %1362 = vmatmul.bf16.gmra.mxu0 %v1233
        %v1363 = vpop.f32.mrf.mxu0
        %v1364 = vadd.f32 0.0, %v1363
        %v1365 = vpop.f32.mrf.mxu0
        %v1366 = vadd.f32 0.0, %v1365
        %1367 = vmatmul.bf16.gmra.mxu0 %v1234
        %v1368 = vpop.f32.mrf.mxu0
        %v1369 = vadd.f32 0.0, %v1368
        %v1370 = vpop.f32.mrf.mxu0
        %v1371 = vadd.f32 0.0, %v1370
        %1372 = vmatmul.bf16.gmra.mxu0 %v1235
        %v1373 = vpop.f32.mrf.mxu0
        %v1374 = vadd.f32 0.0, %v1373
        %v1375 = vpop.f32.mrf.mxu0
        %v1376 = vadd.f32 0.0, %v1375
        %1377 = vmatmul.bf16.gmra.mxu0 %v1236
        %v1378 = vpop.f32.mrf.mxu0
        %v1379 = vadd.f32 0.0, %v1378
        %v1380 = vpop.f32.mrf.mxu0
        %v1381 = vadd.f32 0.0, %v1380
        %1382 = vmatmul.bf16.gmra.mxu0 %v1237
        %v1383 = vpop.f32.mrf.mxu0
        %v1384 = vadd.f32 0.0, %v1383
        %v1385 = vpop.f32.mrf.mxu0
        %v1386 = vadd.f32 0.0, %v1385
        %1387 = vmatmul.bf16.gmra.mxu0 %v1238
        %v1388 = vpop.f32.mrf.mxu0
        %v1389 = vadd.f32 0.0, %v1388
        %v1390 = vpop.f32.mrf.mxu0
        %v1391 = vadd.f32 0.0, %v1390
        %1392 = vdwg.mxu0
        %v1393 = vadd.f32 %v1159, %v1314
        %v1394 = vadd.f32 %v1160, %v1316
        %v1395 = vadd.f32 %v1161, %v1319
        %v1396 = vadd.f32 %v1162, %v1321
        %v1397 = vadd.f32 %v1163, %v1324
        %v1398 = vadd.f32 %v1164, %v1326
        %v1399 = vadd.f32 %v1165, %v1329
        %v1400 = vadd.f32 %v1166, %v1331
        %v1401 = vadd.f32 %v1167, %v1334
        %v1402 = vadd.f32 %v1168, %v1336
        %v1403 = vadd.f32 %v1169, %v1339
        %v1404 = vadd.f32 %v1170, %v1341
        %v1405 = vadd.f32 %v1171, %v1344
        %v1406 = vadd.f32 %v1172, %v1346
        %v1407 = vadd.f32 %v1173, %v1349
        %v1408 = vadd.f32 %v1174, %v1351
        %v1409 = vadd.f32 %v1175, %v1354
        %v1410 = vadd.f32 %v1176, %v1356
        %v1411 = vadd.f32 %v1177, %v1359
        %v1412 = vadd.f32 %v1178, %v1361
        %v1413 = vadd.f32 %v1179, %v1364
        %v1414 = vadd.f32 %v1180, %v1366
        %v1415 = vadd.f32 %v1181, %v1369
        %v1416 = vadd.f32 %v1182, %v1371
        %v1417 = vadd.f32 %v1183, %v1374
        %v1418 = vadd.f32 %v1184, %v1376
        %v1419 = vadd.f32 %v1185, %v1379
        %v1420 = vadd.f32 %v1186, %v1381
        %v1421 = vadd.f32 %v1187, %v1384
        %v1422 = vadd.f32 %v1188, %v1386
        %v1423 = vadd.f32 %v1189, %v1389
        %v1424 = vadd.f32 %v1190, %v1391
        %v1425 = vld [vmem:[%s521 + $0x1] sm:$0xff]
        %v1426 = vld [vmem:[%s521 + $0x9] sm:$0xff]
        %v1427 = vld [vmem:[%s521 + $0x19] sm:$0xff]
        %v1428 = vld [vmem:[%s521 + $0x21] sm:$0xff]
        %v1429 = vld [vmem:[%s521 + $0x31] sm:$0xff]
        %v1430 = vld [vmem:[%s521 + $0x39] sm:$0xff]
        %v1431 = vld [vmem:[%s521 + $0x49] sm:$0xff]
        %v1432 = vld [vmem:[%s521 + $0x51] sm:$0xff]
        %v1433 = vld [vmem:[%s521 + $0x61] sm:$0xff]
        %v1434 = vld [vmem:[%s521 + $0x69] sm:$0xff]
        %v1435 = vld [vmem:[%s521 + $0x79] sm:$0xff]
        %v1436 = vld [vmem:[%s521 + $0x81] sm:$0xff]
        %v1437 = vld [vmem:[%s521 + $0x91] sm:$0xff]
        %v1438 = vld [vmem:[%s521 + $0x99] sm:$0xff]
        %v1439 = vld [vmem:[%s521 + $0xa9] sm:$0xff]
        %v1440 = vld [vmem:[%s521 + $0xb1] sm:$0xff]
        %v1441 = vld [vmem:[%s521 + $0xc1] sm:$0xff]
        %v1442 = vld [vmem:[%s521 + $0xc9] sm:$0xff]
        %v1443 = vld [vmem:[%s521 + $0xd9] sm:$0xff]
        %v1444 = vld [vmem:[%s521 + $0xe1] sm:$0xff]
        %v1445 = vld [vmem:[%s521 + $0xf1] sm:$0xff]
        %v1446 = vld [vmem:[%s521 + $0xf9] sm:$0xff]
        %v1447 = vld [vmem:[%s521 + $0x109] sm:$0xff]
        %v1448 = vld [vmem:[%s521 + $0x111] sm:$0xff]
        %v1449 = vld [vmem:[%s521 + $0x121] sm:$0xff]
        %v1450 = vld [vmem:[%s521 + $0x129] sm:$0xff]
        %v1451 = vld [vmem:[%s521 + $0x139] sm:$0xff]
        %v1452 = vld [vmem:[%s521 + $0x141] sm:$0xff]
        %v1453 = vld [vmem:[%s521 + $0x151] sm:$0xff]
        %v1454 = vld [vmem:[%s521 + $0x159] sm:$0xff]
        %v1455 = vld [vmem:[%s521 + $0x169] sm:$0xff]
        %v1456 = vld [vmem:[%s521 + $0x171] sm:$0xff]
        %v1457 = vpack.c.bf16 %v1426, %v1425
        %v1458 = vpack.c.bf16 %v1428, %v1427
        %v1459 = vpack.c.bf16 %v1430, %v1429
        %v1460 = vpack.c.bf16 %v1432, %v1431
        %v1461 = vpack.c.bf16 %v1434, %v1433
        %v1462 = vpack.c.bf16 %v1436, %v1435
        %v1463 = vpack.c.bf16 %v1438, %v1437
        %v1464 = vpack.c.bf16 %v1440, %v1439
        %v1465 = vpack.c.bf16 %v1442, %v1441
        %v1466 = vpack.c.bf16 %v1444, %v1443
        %v1467 = vpack.c.bf16 %v1446, %v1445
        %v1468 = vpack.c.bf16 %v1448, %v1447
        %v1469 = vpack.c.bf16 %v1450, %v1449
        %v1470 = vpack.c.bf16 %v1452, %v1451
        %v1471 = vpack.c.bf16 %v1454, %v1453
        %v1472 = vpack.c.bf16 %v1456, %v1455
        %s1473 = scalar_lea.vmem [#allocation6], 256
        %v1474 = vld [vmem:[%s1473] sm:$0xf]
        %v1475 = vld [vmem:[%s1473 + $0x4] sm:$0xf]
        %v1476 = vld [vmem:[%s1473 + $0x8] sm:$0xf]
        %v1477 = vld [vmem:[%s1473 + $0xc] sm:$0xf]
        %v1478 = vld [vmem:[%s1473 + $0x10] sm:$0xf]
        %v1479 = vld [vmem:[%s1473 + $0x14] sm:$0xf]
        %v1480 = vld [vmem:[%s1473 + $0x18] sm:$0xf]
        %v1481 = vld [vmem:[%s1473 + $0x1c] sm:$0xf]
        %v1482 = vld [vmem:[%s1473 + $0x20] sm:$0xf]
        %v1483 = vld [vmem:[%s1473 + $0x24] sm:$0xf]
        %v1484 = vld [vmem:[%s1473 + $0x28] sm:$0xf]
        %v1485 = vld [vmem:[%s1473 + $0x2c] sm:$0xf]
        %v1486 = vld [vmem:[%s1473 + $0x30] sm:$0xf]
        %v1487 = vld [vmem:[%s1473 + $0x34] sm:$0xf]
        %v1488 = vld [vmem:[%s1473 + $0x38] sm:$0xf]
        %v1489 = vld [vmem:[%s1473 + $0x3c] sm:$0xf]
        %v1506 = vunpack.c.l.b16 %v1474
        %v1507 = vunpack.c.l.b16 %v1475
        %v1508 = vunpack.c.l.b16 %v1476
        %v1509 = vunpack.c.l.b16 %v1477
        %v1510 = vunpack.c.l.b16 %v1478
        %v1511 = vunpack.c.l.b16 %v1479
        %v1512 = vunpack.c.l.b16 %v1480
        %v1513 = vunpack.c.l.b16 %v1481
        %v1514 = vunpack.c.l.b16 %v1482
        %v1515 = vunpack.c.l.b16 %v1483
        %v1516 = vunpack.c.l.b16 %v1484
        %v1517 = vunpack.c.l.b16 %v1485
        %v1518 = vunpack.c.l.b16 %v1486
        %v1519 = vunpack.c.l.b16 %v1487
        %v1520 = vunpack.c.l.b16 %v1488
        %v1521 = vunpack.c.l.b16 %v1489
        %v1522 = vpack.c.b16 %v1507, %v1506
        %v1523 = vpack.c.b16 %v1509, %v1508
        %v1524 = vpack.c.b16 %v1511, %v1510
        %v1525 = vpack.c.b16 %v1513, %v1512
        %v1526 = vpack.c.b16 %v1515, %v1514
        %v1527 = vpack.c.b16 %v1517, %v1516
        %v1528 = vpack.c.b16 %v1519, %v1518
        %v1529 = vpack.c.b16 %v1521, %v1520
        %1538 = vmatpush.bf16.msra.mxu0 %v1529
        %1539 = vmatpush.bf16.msra.mxu0 %v1528
        %1540 = vmatpush.bf16.msra.mxu0 %v1527
        %1541 = vmatpush.bf16.msra.mxu0 %v1526
        %1542 = vmatpush.bf16.msra.mxu0 %v1525
        %1543 = vmatpush.bf16.msra.mxu0 %v1524
        %1544 = vmatpush.bf16.msra.mxu0 %v1523
        %1545 = vmatpush.bf16.msra.mxu0 %v1522
        %1546 = vmatmul.bf16.gmra.mxu0 %v1457
        %v1547 = vpop.f32.mrf.mxu0
        %v1548 = vadd.f32 0.0, %v1547
        %v1549 = vpop.f32.mrf.mxu0
        %v1550 = vadd.f32 0.0, %v1549
        %1551 = vmatmul.bf16.gmra.mxu0 %v1458
        %v1552 = vpop.f32.mrf.mxu0
        %v1553 = vadd.f32 0.0, %v1552
        %v1554 = vpop.f32.mrf.mxu0
        %v1555 = vadd.f32 0.0, %v1554
        %1556 = vmatmul.bf16.gmra.mxu0 %v1459
        %v1557 = vpop.f32.mrf.mxu0
        %v1558 = vadd.f32 0.0, %v1557
        %v1559 = vpop.f32.mrf.mxu0
        %v1560 = vadd.f32 0.0, %v1559
        %1561 = vmatmul.bf16.gmra.mxu0 %v1460
        %v1562 = vpop.f32.mrf.mxu0
        %v1563 = vadd.f32 0.0, %v1562
        %v1564 = vpop.f32.mrf.mxu0
        %v1565 = vadd.f32 0.0, %v1564
        %1566 = vmatmul.bf16.gmra.mxu0 %v1461
        %v1567 = vpop.f32.mrf.mxu0
        %v1568 = vadd.f32 0.0, %v1567
        %v1569 = vpop.f32.mrf.mxu0
        %v1570 = vadd.f32 0.0, %v1569
        %1571 = vmatmul.bf16.gmra.mxu0 %v1462
        %v1572 = vpop.f32.mrf.mxu0
        %v1573 = vadd.f32 0.0, %v1572
        %v1574 = vpop.f32.mrf.mxu0
        %v1575 = vadd.f32 0.0, %v1574
        %1576 = vmatmul.bf16.gmra.mxu0 %v1463
        %v1577 = vpop.f32.mrf.mxu0
        %v1578 = vadd.f32 0.0, %v1577
        %v1579 = vpop.f32.mrf.mxu0
        %v1580 = vadd.f32 0.0, %v1579
        %1581 = vmatmul.bf16.gmra.mxu0 %v1464
        %v1582 = vpop.f32.mrf.mxu0
        %v1583 = vadd.f32 0.0, %v1582
        %v1584 = vpop.f32.mrf.mxu0
        %v1585 = vadd.f32 0.0, %v1584
        %1586 = vmatmul.bf16.gmra.mxu0 %v1465
        %v1587 = vpop.f32.mrf.mxu0
        %v1588 = vadd.f32 0.0, %v1587
        %v1589 = vpop.f32.mrf.mxu0
        %v1590 = vadd.f32 0.0, %v1589
        %1591 = vmatmul.bf16.gmra.mxu0 %v1466
        %v1592 = vpop.f32.mrf.mxu0
        %v1593 = vadd.f32 0.0, %v1592
        %v1594 = vpop.f32.mrf.mxu0
        %v1595 = vadd.f32 0.0, %v1594
        %1596 = vmatmul.bf16.gmra.mxu0 %v1467
        %v1597 = vpop.f32.mrf.mxu0
        %v1598 = vadd.f32 0.0, %v1597
        %v1599 = vpop.f32.mrf.mxu0
        %v1600 = vadd.f32 0.0, %v1599
        %1601 = vmatmul.bf16.gmra.mxu0 %v1468
        %v1602 = vpop.f32.mrf.mxu0
        %v1603 = vadd.f32 0.0, %v1602
        %v1604 = vpop.f32.mrf.mxu0
        %v1605 = vadd.f32 0.0, %v1604
        %1606 = vmatmul.bf16.gmra.mxu0 %v1469
        %v1607 = vpop.f32.mrf.mxu0
        %v1608 = vadd.f32 0.0, %v1607
        %v1609 = vpop.f32.mrf.mxu0
        %v1610 = vadd.f32 0.0, %v1609
        %1611 = vmatmul.bf16.gmra.mxu0 %v1470
        %v1612 = vpop.f32.mrf.mxu0
        %v1613 = vadd.f32 0.0, %v1612
        %v1614 = vpop.f32.mrf.mxu0
        %v1615 = vadd.f32 0.0, %v1614
        %1616 = vmatmul.bf16.gmra.mxu0 %v1471
        %v1617 = vpop.f32.mrf.mxu0
        %v1618 = vadd.f32 0.0, %v1617
        %v1619 = vpop.f32.mrf.mxu0
        %v1620 = vadd.f32 0.0, %v1619
        %1621 = vmatmul.bf16.gmra.mxu0 %v1472
        %v1622 = vpop.f32.mrf.mxu0
        %v1623 = vadd.f32 0.0, %v1622
        %v1624 = vpop.f32.mrf.mxu0
        %v1625 = vadd.f32 0.0, %v1624
        %1626 = vdwg.mxu0
        %v1627 = vadd.f32 %v1393, %v1548
        %v1628 = vadd.f32 %v1394, %v1550
        %v1629 = vadd.f32 %v1395, %v1553
        %v1630 = vadd.f32 %v1396, %v1555
        %v1631 = vadd.f32 %v1397, %v1558
        %v1632 = vadd.f32 %v1398, %v1560
        %v1633 = vadd.f32 %v1399, %v1563
        %v1634 = vadd.f32 %v1400, %v1565
        %v1635 = vadd.f32 %v1401, %v1568
        %v1636 = vadd.f32 %v1402, %v1570
        %v1637 = vadd.f32 %v1403, %v1573
        %v1638 = vadd.f32 %v1404, %v1575
        %v1639 = vadd.f32 %v1405, %v1578
        %v1640 = vadd.f32 %v1406, %v1580
        %v1641 = vadd.f32 %v1407, %v1583
        %v1642 = vadd.f32 %v1408, %v1585
        %v1643 = vadd.f32 %v1409, %v1588
        %v1644 = vadd.f32 %v1410, %v1590
        %v1645 = vadd.f32 %v1411, %v1593
        %v1646 = vadd.f32 %v1412, %v1595
        %v1647 = vadd.f32 %v1413, %v1598
        %v1648 = vadd.f32 %v1414, %v1600
        %v1649 = vadd.f32 %v1415, %v1603
        %v1650 = vadd.f32 %v1416, %v1605
        %v1651 = vadd.f32 %v1417, %v1608
        %v1652 = vadd.f32 %v1418, %v1610
        %v1653 = vadd.f32 %v1419, %v1613
        %v1654 = vadd.f32 %v1420, %v1615
        %v1655 = vadd.f32 %v1421, %v1618
        %v1656 = vadd.f32 %v1422, %v1620
        %v1657 = vadd.f32 %v1423, %v1623
        %v1658 = vadd.f32 %v1424, %v1625
        %v1659 = vld [vmem:[%s521 + $0x2] sm:$0xff]
        %v1660 = vld [vmem:[%s521 + $0xa] sm:$0xff]
        %v1661 = vld [vmem:[%s521 + $0x1a] sm:$0xff]
        %v1662 = vld [vmem:[%s521 + $0x22] sm:$0xff]
        %v1663 = vld [vmem:[%s521 + $0x32] sm:$0xff]
        %v1664 = vld [vmem:[%s521 + $0x3a] sm:$0xff]
        %v1665 = vld [vmem:[%s521 + $0x4a] sm:$0xff]
        %v1666 = vld [vmem:[%s521 + $0x52] sm:$0xff]
        %v1667 = vld [vmem:[%s521 + $0x62] sm:$0xff]
        %v1668 = vld [vmem:[%s521 + $0x6a] sm:$0xff]
        %v1669 = vld [vmem:[%s521 + $0x7a] sm:$0xff]
        %v1670 = vld [vmem:[%s521 + $0x82] sm:$0xff]
        %v1671 = vld [vmem:[%s521 + $0x92] sm:$0xff]
        %v1672 = vld [vmem:[%s521 + $0x9a] sm:$0xff]
        %v1673 = vld [vmem:[%s521 + $0xaa] sm:$0xff]
        %v1674 = vld [vmem:[%s521 + $0xb2] sm:$0xff]
        %v1675 = vld [vmem:[%s521 + $0xc2] sm:$0xff]
        %v1676 = vld [vmem:[%s521 + $0xca] sm:$0xff]
        %v1677 = vld [vmem:[%s521 + $0xda] sm:$0xff]
        %v1678 = vld [vmem:[%s521 + $0xe2] sm:$0xff]
        %v1679 = vld [vmem:[%s521 + $0xf2] sm:$0xff]
        %v1680 = vld [vmem:[%s521 + $0xfa] sm:$0xff]
        %v1681 = vld [vmem:[%s521 + $0x10a] sm:$0xff]
        %v1682 = vld [vmem:[%s521 + $0x112] sm:$0xff]
        %v1683 = vld [vmem:[%s521 + $0x122] sm:$0xff]
        %v1684 = vld [vmem:[%s521 + $0x12a] sm:$0xff]
        %v1685 = vld [vmem:[%s521 + $0x13a] sm:$0xff]
        %v1686 = vld [vmem:[%s521 + $0x142] sm:$0xff]
        %v1687 = vld [vmem:[%s521 + $0x152] sm:$0xff]
        %v1688 = vld [vmem:[%s521 + $0x15a] sm:$0xff]
        %v1689 = vld [vmem:[%s521 + $0x16a] sm:$0xff]
        %v1690 = vld [vmem:[%s521 + $0x172] sm:$0xff]
        %v1691 = vpack.c.bf16 %v1660, %v1659
        %v1692 = vpack.c.bf16 %v1662, %v1661
        %v1693 = vpack.c.bf16 %v1664, %v1663
        %v1694 = vpack.c.bf16 %v1666, %v1665
        %v1695 = vpack.c.bf16 %v1668, %v1667
        %v1696 = vpack.c.bf16 %v1670, %v1669
        %v1697 = vpack.c.bf16 %v1672, %v1671
        %v1698 = vpack.c.bf16 %v1674, %v1673
        %v1699 = vpack.c.bf16 %v1676, %v1675
        %v1700 = vpack.c.bf16 %v1678, %v1677
        %v1701 = vpack.c.bf16 %v1680, %v1679
        %v1702 = vpack.c.bf16 %v1682, %v1681
        %v1703 = vpack.c.bf16 %v1684, %v1683
        %v1704 = vpack.c.bf16 %v1686, %v1685
        %v1705 = vpack.c.bf16 %v1688, %v1687
        %v1706 = vpack.c.bf16 %v1690, %v1689
        %s1707 = scalar_lea.vmem [#allocation6], 320
        %v1708 = vld [vmem:[%s1707] sm:$0xf]
        %v1709 = vld [vmem:[%s1707 + $0x4] sm:$0xf]
        %v1710 = vld [vmem:[%s1707 + $0x8] sm:$0xf]
        %v1711 = vld [vmem:[%s1707 + $0xc] sm:$0xf]
        %v1712 = vld [vmem:[%s1707 + $0x10] sm:$0xf]
        %v1713 = vld [vmem:[%s1707 + $0x14] sm:$0xf]
        %v1714 = vld [vmem:[%s1707 + $0x18] sm:$0xf]
        %v1715 = vld [vmem:[%s1707 + $0x1c] sm:$0xf]
        %v1716 = vld [vmem:[%s1707 + $0x20] sm:$0xf]
        %v1717 = vld [vmem:[%s1707 + $0x24] sm:$0xf]
        %v1718 = vld [vmem:[%s1707 + $0x28] sm:$0xf]
        %v1719 = vld [vmem:[%s1707 + $0x2c] sm:$0xf]
        %v1720 = vld [vmem:[%s1707 + $0x30] sm:$0xf]
        %v1721 = vld [vmem:[%s1707 + $0x34] sm:$0xf]
        %v1722 = vld [vmem:[%s1707 + $0x38] sm:$0xf]
        %v1723 = vld [vmem:[%s1707 + $0x3c] sm:$0xf]
        %v1740 = vunpack.c.l.b16 %v1708
        %v1741 = vunpack.c.l.b16 %v1709
        %v1742 = vunpack.c.l.b16 %v1710
        %v1743 = vunpack.c.l.b16 %v1711
        %v1744 = vunpack.c.l.b16 %v1712
        %v1745 = vunpack.c.l.b16 %v1713
        %v1746 = vunpack.c.l.b16 %v1714
        %v1747 = vunpack.c.l.b16 %v1715
        %v1748 = vunpack.c.l.b16 %v1716
        %v1749 = vunpack.c.l.b16 %v1717
        %v1750 = vunpack.c.l.b16 %v1718
        %v1751 = vunpack.c.l.b16 %v1719
        %v1752 = vunpack.c.l.b16 %v1720
        %v1753 = vunpack.c.l.b16 %v1721
        %v1754 = vunpack.c.l.b16 %v1722
        %v1755 = vunpack.c.l.b16 %v1723
        %v1756 = vpack.c.b16 %v1741, %v1740
        %v1757 = vpack.c.b16 %v1743, %v1742
        %v1758 = vpack.c.b16 %v1745, %v1744
        %v1759 = vpack.c.b16 %v1747, %v1746
        %v1760 = vpack.c.b16 %v1749, %v1748
        %v1761 = vpack.c.b16 %v1751, %v1750
        %v1762 = vpack.c.b16 %v1753, %v1752
        %v1763 = vpack.c.b16 %v1755, %v1754
        %1772 = vmatpush.bf16.msra.mxu0 %v1763
        %1773 = vmatpush.bf16.msra.mxu0 %v1762
        %1774 = vmatpush.bf16.msra.mxu0 %v1761
        %1775 = vmatpush.bf16.msra.mxu0 %v1760
        %1776 = vmatpush.bf16.msra.mxu0 %v1759
        %1777 = vmatpush.bf16.msra.mxu0 %v1758
        %1778 = vmatpush.bf16.msra.mxu0 %v1757
        %1779 = vmatpush.bf16.msra.mxu0 %v1756
        %1780 = vmatmul.bf16.gmra.mxu0 %v1691
        %v1781 = vpop.f32.mrf.mxu0
        %v1782 = vadd.f32 0.0, %v1781
        %v1783 = vpop.f32.mrf.mxu0
        %v1784 = vadd.f32 0.0, %v1783
        %1785 = vmatmul.bf16.gmra.mxu0 %v1692
        %v1786 = vpop.f32.mrf.mxu0
        %v1787 = vadd.f32 0.0, %v1786
        %v1788 = vpop.f32.mrf.mxu0
        %v1789 = vadd.f32 0.0, %v1788
        %1790 = vmatmul.bf16.gmra.mxu0 %v1693
        %v1791 = vpop.f32.mrf.mxu0
        %v1792 = vadd.f32 0.0, %v1791
        %v1793 = vpop.f32.mrf.mxu0
        %v1794 = vadd.f32 0.0, %v1793
        %1795 = vmatmul.bf16.gmra.mxu0 %v1694
        %v1796 = vpop.f32.mrf.mxu0
        %v1797 = vadd.f32 0.0, %v1796
        %v1798 = vpop.f32.mrf.mxu0
        %v1799 = vadd.f32 0.0, %v1798
        %1800 = vmatmul.bf16.gmra.mxu0 %v1695
        %v1801 = vpop.f32.mrf.mxu0
        %v1802 = vadd.f32 0.0, %v1801
        %v1803 = vpop.f32.mrf.mxu0
        %v1804 = vadd.f32 0.0, %v1803
        %1805 = vmatmul.bf16.gmra.mxu0 %v1696
        %v1806 = vpop.f32.mrf.mxu0
        %v1807 = vadd.f32 0.0, %v1806
        %v1808 = vpop.f32.mrf.mxu0
        %v1809 = vadd.f32 0.0, %v1808
        %1810 = vmatmul.bf16.gmra.mxu0 %v1697
        %v1811 = vpop.f32.mrf.mxu0
        %v1812 = vadd.f32 0.0, %v1811
        %v1813 = vpop.f32.mrf.mxu0
        %v1814 = vadd.f32 0.0, %v1813
        %1815 = vmatmul.bf16.gmra.mxu0 %v1698
        %v1816 = vpop.f32.mrf.mxu0
        %v1817 = vadd.f32 0.0, %v1816
        %v1818 = vpop.f32.mrf.mxu0
        %v1819 = vadd.f32 0.0, %v1818
        %1820 = vmatmul.bf16.gmra.mxu0 %v1699
        %v1821 = vpop.f32.mrf.mxu0
        %v1822 = vadd.f32 0.0, %v1821
        %v1823 = vpop.f32.mrf.mxu0
        %v1824 = vadd.f32 0.0, %v1823
        %1825 = vmatmul.bf16.gmra.mxu0 %v1700
        %v1826 = vpop.f32.mrf.mxu0
        %v1827 = vadd.f32 0.0, %v1826
        %v1828 = vpop.f32.mrf.mxu0
        %v1829 = vadd.f32 0.0, %v1828
        %1830 = vmatmul.bf16.gmra.mxu0 %v1701
        %v1831 = vpop.f32.mrf.mxu0
        %v1832 = vadd.f32 0.0, %v1831
        %v1833 = vpop.f32.mrf.mxu0
        %v1834 = vadd.f32 0.0, %v1833
        %1835 = vmatmul.bf16.gmra.mxu0 %v1702
        %v1836 = vpop.f32.mrf.mxu0
        %v1837 = vadd.f32 0.0, %v1836
        %v1838 = vpop.f32.mrf.mxu0
        %v1839 = vadd.f32 0.0, %v1838
        %1840 = vmatmul.bf16.gmra.mxu0 %v1703
        %v1841 = vpop.f32.mrf.mxu0
        %v1842 = vadd.f32 0.0, %v1841
        %v1843 = vpop.f32.mrf.mxu0
        %v1844 = vadd.f32 0.0, %v1843
        %1845 = vmatmul.bf16.gmra.mxu0 %v1704
        %v1846 = vpop.f32.mrf.mxu0
        %v1847 = vadd.f32 0.0, %v1846
        %v1848 = vpop.f32.mrf.mxu0
        %v1849 = vadd.f32 0.0, %v1848
        %1850 = vmatmul.bf16.gmra.mxu0 %v1705
        %v1851 = vpop.f32.mrf.mxu0
        %v1852 = vadd.f32 0.0, %v1851
        %v1853 = vpop.f32.mrf.mxu0
        %v1854 = vadd.f32 0.0, %v1853
        %1855 = vmatmul.bf16.gmra.mxu0 %v1706
        %v1856 = vpop.f32.mrf.mxu0
        %v1857 = vadd.f32 0.0, %v1856
        %v1858 = vpop.f32.mrf.mxu0
        %v1859 = vadd.f32 0.0, %v1858
        %1860 = vdwg.mxu0
        %v1861 = vadd.f32 %v1627, %v1782
        %v1862 = vadd.f32 %v1628, %v1784
        %v1863 = vadd.f32 %v1629, %v1787
        %v1864 = vadd.f32 %v1630, %v1789
        %v1865 = vadd.f32 %v1631, %v1792
        %v1866 = vadd.f32 %v1632, %v1794
        %v1867 = vadd.f32 %v1633, %v1797
        %v1868 = vadd.f32 %v1634, %v1799
        %v1869 = vadd.f32 %v1635, %v1802
        %v1870 = vadd.f32 %v1636, %v1804
        %v1871 = vadd.f32 %v1637, %v1807
        %v1872 = vadd.f32 %v1638, %v1809
        %v1873 = vadd.f32 %v1639, %v1812
        %v1874 = vadd.f32 %v1640, %v1814
        %v1875 = vadd.f32 %v1641, %v1817
        %v1876 = vadd.f32 %v1642, %v1819
        %v1877 = vadd.f32 %v1643, %v1822
        %v1878 = vadd.f32 %v1644, %v1824
        %v1879 = vadd.f32 %v1645, %v1827
        %v1880 = vadd.f32 %v1646, %v1829
        %v1881 = vadd.f32 %v1647, %v1832
        %v1882 = vadd.f32 %v1648, %v1834
        %v1883 = vadd.f32 %v1649, %v1837
        %v1884 = vadd.f32 %v1650, %v1839
        %v1885 = vadd.f32 %v1651, %v1842
        %v1886 = vadd.f32 %v1652, %v1844
        %v1887 = vadd.f32 %v1653, %v1847
        %v1888 = vadd.f32 %v1654, %v1849
        %v1889 = vadd.f32 %v1655, %v1852
        %v1890 = vadd.f32 %v1656, %v1854
        %v1891 = vadd.f32 %v1657, %v1857
        %v1892 = vadd.f32 %v1658, %v1859
        %s1893 = scalar_lea.vmem [#allocation2], 48
        %v1894 = vld [vmem:[%s1893] sm:$0xff]
        %v1895 = vld [vmem:[%s1893 + $0x8] sm:$0xff]
        %v1896 = vld [vmem:[%s1893 + $0x18] sm:$0xff]
        %v1897 = vld [vmem:[%s1893 + $0x20] sm:$0xff]
        %v1898 = vld [vmem:[%s1893 + $0x30] sm:$0xff]
        %v1899 = vld [vmem:[%s1893 + $0x38] sm:$0xff]
        %v1900 = vld [vmem:[%s1893 + $0x48] sm:$0xff]
        %v1901 = vld [vmem:[%s1893 + $0x50] sm:$0xff]
        %v1902 = vld [vmem:[%s1893 + $0x60] sm:$0xff]
        %v1903 = vld [vmem:[%s1893 + $0x68] sm:$0xff]
        %v1904 = vld [vmem:[%s1893 + $0x78] sm:$0xff]
        %v1905 = vld [vmem:[%s1893 + $0x80] sm:$0xff]
        %v1906 = vld [vmem:[%s1893 + $0x90] sm:$0xff]
        %v1907 = vld [vmem:[%s1893 + $0x98] sm:$0xff]
        %v1908 = vld [vmem:[%s1893 + $0xa8] sm:$0xff]
        %v1909 = vld [vmem:[%s1893 + $0xb0] sm:$0xff]
        %v1910 = vld [vmem:[%s1893 + $0xc0] sm:$0xff]
        %v1911 = vld [vmem:[%s1893 + $0xc8] sm:$0xff]
        %v1912 = vld [vmem:[%s1893 + $0xd8] sm:$0xff]
        %v1913 = vld [vmem:[%s1893 + $0xe0] sm:$0xff]
        %v1914 = vld [vmem:[%s1893 + $0xf0] sm:$0xff]
        %v1915 = vld [vmem:[%s1893 + $0xf8] sm:$0xff]
        %v1916 = vld [vmem:[%s1893 + $0x108] sm:$0xff]
        %v1917 = vld [vmem:[%s1893 + $0x110] sm:$0xff]
        %v1918 = vld [vmem:[%s1893 + $0x120] sm:$0xff]
        %v1919 = vld [vmem:[%s1893 + $0x128] sm:$0xff]
        %v1920 = vld [vmem:[%s1893 + $0x138] sm:$0xff]
        %v1921 = vld [vmem:[%s1893 + $0x140] sm:$0xff]
        %v1922 = vld [vmem:[%s1893 + $0x150] sm:$0xff]
        %v1923 = vld [vmem:[%s1893 + $0x158] sm:$0xff]
        %v1924 = vld [vmem:[%s1893 + $0x168] sm:$0xff]
        %v1925 = vld [vmem:[%s1893 + $0x170] sm:$0xff]
        %v1926 = vpack.c.bf16 %v1895, %v1894
        %v1927 = vpack.c.bf16 %v1897, %v1896
        %v1928 = vpack.c.bf16 %v1899, %v1898
        %v1929 = vpack.c.bf16 %v1901, %v1900
        %v1930 = vpack.c.bf16 %v1903, %v1902
        %v1931 = vpack.c.bf16 %v1905, %v1904
        %v1932 = vpack.c.bf16 %v1907, %v1906
        %v1933 = vpack.c.bf16 %v1909, %v1908
        %v1934 = vpack.c.bf16 %v1911, %v1910
        %v1935 = vpack.c.bf16 %v1913, %v1912
        %v1936 = vpack.c.bf16 %v1915, %v1914
        %v1937 = vpack.c.bf16 %v1917, %v1916
        %v1938 = vpack.c.bf16 %v1919, %v1918
        %v1939 = vpack.c.bf16 %v1921, %v1920
        %v1940 = vpack.c.bf16 %v1923, %v1922
        %v1941 = vpack.c.bf16 %v1925, %v1924
        %s1942 = scalar_lea.vmem [#allocation6], 384
        %v1943 = vld [vmem:[%s1942] sm:$0xf]
        %v1944 = vld [vmem:[%s1942 + $0x4] sm:$0xf]
        %v1945 = vld [vmem:[%s1942 + $0x8] sm:$0xf]
        %v1946 = vld [vmem:[%s1942 + $0xc] sm:$0xf]
        %v1947 = vld [vmem:[%s1942 + $0x10] sm:$0xf]
        %v1948 = vld [vmem:[%s1942 + $0x14] sm:$0xf]
        %v1949 = vld [vmem:[%s1942 + $0x18] sm:$0xf]
        %v1950 = vld [vmem:[%s1942 + $0x1c] sm:$0xf]
        %v1951 = vld [vmem:[%s1942 + $0x20] sm:$0xf]
        %v1952 = vld [vmem:[%s1942 + $0x24] sm:$0xf]
        %v1953 = vld [vmem:[%s1942 + $0x28] sm:$0xf]
        %v1954 = vld [vmem:[%s1942 + $0x2c] sm:$0xf]
        %v1955 = vld [vmem:[%s1942 + $0x30] sm:$0xf]
        %v1956 = vld [vmem:[%s1942 + $0x34] sm:$0xf]
        %v1957 = vld [vmem:[%s1942 + $0x38] sm:$0xf]
        %v1958 = vld [vmem:[%s1942 + $0x3c] sm:$0xf]
        %v1975 = vunpack.c.l.b16 %v1943
        %v1976 = vunpack.c.l.b16 %v1944
        %v1977 = vunpack.c.l.b16 %v1945
        %v1978 = vunpack.c.l.b16 %v1946
        %v1979 = vunpack.c.l.b16 %v1947
        %v1980 = vunpack.c.l.b16 %v1948
        %v1981 = vunpack.c.l.b16 %v1949
        %v1982 = vunpack.c.l.b16 %v1950
        %v1983 = vunpack.c.l.b16 %v1951
        %v1984 = vunpack.c.l.b16 %v1952
        %v1985 = vunpack.c.l.b16 %v1953
        %v1986 = vunpack.c.l.b16 %v1954
        %v1987 = vunpack.c.l.b16 %v1955
        %v1988 = vunpack.c.l.b16 %v1956
        %v1989 = vunpack.c.l.b16 %v1957
        %v1990 = vunpack.c.l.b16 %v1958
        %v1991 = vpack.c.b16 %v1976, %v1975
        %v1992 = vpack.c.b16 %v1978, %v1977
        %v1993 = vpack.c.b16 %v1980, %v1979
        %v1994 = vpack.c.b16 %v1982, %v1981
        %v1995 = vpack.c.b16 %v1984, %v1983
        %v1996 = vpack.c.b16 %v1986, %v1985
        %v1997 = vpack.c.b16 %v1988, %v1987
        %v1998 = vpack.c.b16 %v1990, %v1989
        %2007 = vmatpush.bf16.msra.mxu0 %v1998
        %2008 = vmatpush.bf16.msra.mxu0 %v1997
        %2009 = vmatpush.bf16.msra.mxu0 %v1996
        %2010 = vmatpush.bf16.msra.mxu0 %v1995
        %2011 = vmatpush.bf16.msra.mxu0 %v1994
        %2012 = vmatpush.bf16.msra.mxu0 %v1993
        %2013 = vmatpush.bf16.msra.mxu0 %v1992
        %2014 = vmatpush.bf16.msra.mxu0 %v1991
        %2015 = vmatmul.bf16.gmra.mxu0 %v1926
        %v2016 = vpop.f32.mrf.mxu0
        %v2017 = vadd.f32 0.0, %v2016
        %v2018 = vpop.f32.mrf.mxu0
        %v2019 = vadd.f32 0.0, %v2018
        %2020 = vmatmul.bf16.gmra.mxu0 %v1927
        %v2021 = vpop.f32.mrf.mxu0
        %v2022 = vadd.f32 0.0, %v2021
        %v2023 = vpop.f32.mrf.mxu0
        %v2024 = vadd.f32 0.0, %v2023
        %2025 = vmatmul.bf16.gmra.mxu0 %v1928
        %v2026 = vpop.f32.mrf.mxu0
        %v2027 = vadd.f32 0.0, %v2026
        %v2028 = vpop.f32.mrf.mxu0
        %v2029 = vadd.f32 0.0, %v2028
        %2030 = vmatmul.bf16.gmra.mxu0 %v1929
        %v2031 = vpop.f32.mrf.mxu0
        %v2032 = vadd.f32 0.0, %v2031
        %v2033 = vpop.f32.mrf.mxu0
        %v2034 = vadd.f32 0.0, %v2033
        %2035 = vmatmul.bf16.gmra.mxu0 %v1930
        %v2036 = vpop.f32.mrf.mxu0
        %v2037 = vadd.f32 0.0, %v2036
        %v2038 = vpop.f32.mrf.mxu0
        %v2039 = vadd.f32 0.0, %v2038
        %2040 = vmatmul.bf16.gmra.mxu0 %v1931
        %v2041 = vpop.f32.mrf.mxu0
        %v2042 = vadd.f32 0.0, %v2041
        %v2043 = vpop.f32.mrf.mxu0
        %v2044 = vadd.f32 0.0, %v2043
        %2045 = vmatmul.bf16.gmra.mxu0 %v1932
        %v2046 = vpop.f32.mrf.mxu0
        %v2047 = vadd.f32 0.0, %v2046
        %v2048 = vpop.f32.mrf.mxu0
        %v2049 = vadd.f32 0.0, %v2048
        %2050 = vmatmul.bf16.gmra.mxu0 %v1933
        %v2051 = vpop.f32.mrf.mxu0
        %v2052 = vadd.f32 0.0, %v2051
        %v2053 = vpop.f32.mrf.mxu0
        %v2054 = vadd.f32 0.0, %v2053
        %2055 = vmatmul.bf16.gmra.mxu0 %v1934
        %v2056 = vpop.f32.mrf.mxu0
        %v2057 = vadd.f32 0.0, %v2056
        %v2058 = vpop.f32.mrf.mxu0
        %v2059 = vadd.f32 0.0, %v2058
        %2060 = vmatmul.bf16.gmra.mxu0 %v1935
        %v2061 = vpop.f32.mrf.mxu0
        %v2062 = vadd.f32 0.0, %v2061
        %v2063 = vpop.f32.mrf.mxu0
        %v2064 = vadd.f32 0.0, %v2063
        %2065 = vmatmul.bf16.gmra.mxu0 %v1936
        %v2066 = vpop.f32.mrf.mxu0
        %v2067 = vadd.f32 0.0, %v2066
        %v2068 = vpop.f32.mrf.mxu0
        %v2069 = vadd.f32 0.0, %v2068
        %2070 = vmatmul.bf16.gmra.mxu0 %v1937
        %v2071 = vpop.f32.mrf.mxu0
        %v2072 = vadd.f32 0.0, %v2071
        %v2073 = vpop.f32.mrf.mxu0
        %v2074 = vadd.f32 0.0, %v2073
        %2075 = vmatmul.bf16.gmra.mxu0 %v1938
        %v2076 = vpop.f32.mrf.mxu0
        %v2077 = vadd.f32 0.0, %v2076
        %v2078 = vpop.f32.mrf.mxu0
        %v2079 = vadd.f32 0.0, %v2078
        %2080 = vmatmul.bf16.gmra.mxu0 %v1939
        %v2081 = vpop.f32.mrf.mxu0
        %v2082 = vadd.f32 0.0, %v2081
        %v2083 = vpop.f32.mrf.mxu0
        %v2084 = vadd.f32 0.0, %v2083
        %2085 = vmatmul.bf16.gmra.mxu0 %v1940
        %v2086 = vpop.f32.mrf.mxu0
        %v2087 = vadd.f32 0.0, %v2086
        %v2088 = vpop.f32.mrf.mxu0
        %v2089 = vadd.f32 0.0, %v2088
        %2090 = vmatmul.bf16.gmra.mxu0 %v1941
        %v2091 = vpop.f32.mrf.mxu0
        %v2092 = vadd.f32 0.0, %v2091
        %v2093 = vpop.f32.mrf.mxu0
        %v2094 = vadd.f32 0.0, %v2093
        %2095 = vdwg.mxu0
        %v2096 = vadd.f32 %v1861, %v2017
        %v2097 = vadd.f32 %v1862, %v2019
        %v2098 = vadd.f32 %v1863, %v2022
        %v2099 = vadd.f32 %v1864, %v2024
        %v2100 = vadd.f32 %v1865, %v2027
        %v2101 = vadd.f32 %v1866, %v2029
        %v2102 = vadd.f32 %v1867, %v2032
        %v2103 = vadd.f32 %v1868, %v2034
        %v2104 = vadd.f32 %v1869, %v2037
        %v2105 = vadd.f32 %v1870, %v2039
        %v2106 = vadd.f32 %v1871, %v2042
        %v2107 = vadd.f32 %v1872, %v2044
        %v2108 = vadd.f32 %v1873, %v2047
        %v2109 = vadd.f32 %v1874, %v2049
        %v2110 = vadd.f32 %v1875, %v2052
        %v2111 = vadd.f32 %v1876, %v2054
        %v2112 = vadd.f32 %v1877, %v2057
        %v2113 = vadd.f32 %v1878, %v2059
        %v2114 = vadd.f32 %v1879, %v2062
        %v2115 = vadd.f32 %v1880, %v2064
        %v2116 = vadd.f32 %v1881, %v2067
        %v2117 = vadd.f32 %v1882, %v2069
        %v2118 = vadd.f32 %v1883, %v2072
        %v2119 = vadd.f32 %v1884, %v2074
        %v2120 = vadd.f32 %v1885, %v2077
        %v2121 = vadd.f32 %v1886, %v2079
        %v2122 = vadd.f32 %v1887, %v2082
        %v2123 = vadd.f32 %v1888, %v2084
        %v2124 = vadd.f32 %v1889, %v2087
        %v2125 = vadd.f32 %v1890, %v2089
        %v2126 = vadd.f32 %v1891, %v2092
        %v2127 = vadd.f32 %v1892, %v2094
        %v2128 = vld [vmem:[%s1893 + $0x1] sm:$0xff]
        %v2129 = vld [vmem:[%s1893 + $0x9] sm:$0xff]
        %v2130 = vld [vmem:[%s1893 + $0x19] sm:$0xff]
        %v2131 = vld [vmem:[%s1893 + $0x21] sm:$0xff]
        %v2132 = vld [vmem:[%s1893 + $0x31] sm:$0xff]
        %v2133 = vld [vmem:[%s1893 + $0x39] sm:$0xff]
        %v2134 = vld [vmem:[%s1893 + $0x49] sm:$0xff]
        %v2135 = vld [vmem:[%s1893 + $0x51] sm:$0xff]
        %v2136 = vld [vmem:[%s1893 + $0x61] sm:$0xff]
        %v2137 = vld [vmem:[%s1893 + $0x69] sm:$0xff]
        %v2138 = vld [vmem:[%s1893 + $0x79] sm:$0xff]
        %v2139 = vld [vmem:[%s1893 + $0x81] sm:$0xff]
        %v2140 = vld [vmem:[%s1893 + $0x91] sm:$0xff]
        %v2141 = vld [vmem:[%s1893 + $0x99] sm:$0xff]
        %v2142 = vld [vmem:[%s1893 + $0xa9] sm:$0xff]
        %v2143 = vld [vmem:[%s1893 + $0xb1] sm:$0xff]
        %v2144 = vld [vmem:[%s1893 + $0xc1] sm:$0xff]
        %v2145 = vld [vmem:[%s1893 + $0xc9] sm:$0xff]
        %v2146 = vld [vmem:[%s1893 + $0xd9] sm:$0xff]
        %v2147 = vld [vmem:[%s1893 + $0xe1] sm:$0xff]
        %v2148 = vld [vmem:[%s1893 + $0xf1] sm:$0xff]
        %v2149 = vld [vmem:[%s1893 + $0xf9] sm:$0xff]
        %v2150 = vld [vmem:[%s1893 + $0x109] sm:$0xff]
        %v2151 = vld [vmem:[%s1893 + $0x111] sm:$0xff]
        %v2152 = vld [vmem:[%s1893 + $0x121] sm:$0xff]
        %v2153 = vld [vmem:[%s1893 + $0x129] sm:$0xff]
        %v2154 = vld [vmem:[%s1893 + $0x139] sm:$0xff]
        %v2155 = vld [vmem:[%s1893 + $0x141] sm:$0xff]
        %v2156 = vld [vmem:[%s1893 + $0x151] sm:$0xff]
        %v2157 = vld [vmem:[%s1893 + $0x159] sm:$0xff]
        %v2158 = vld [vmem:[%s1893 + $0x169] sm:$0xff]
        %v2159 = vld [vmem:[%s1893 + $0x171] sm:$0xff]
        %v2160 = vpack.c.bf16 %v2129, %v2128
        %v2161 = vpack.c.bf16 %v2131, %v2130
        %v2162 = vpack.c.bf16 %v2133, %v2132
        %v2163 = vpack.c.bf16 %v2135, %v2134
        %v2164 = vpack.c.bf16 %v2137, %v2136
        %v2165 = vpack.c.bf16 %v2139, %v2138
        %v2166 = vpack.c.bf16 %v2141, %v2140
        %v2167 = vpack.c.bf16 %v2143, %v2142
        %v2168 = vpack.c.bf16 %v2145, %v2144
        %v2169 = vpack.c.bf16 %v2147, %v2146
        %v2170 = vpack.c.bf16 %v2149, %v2148
        %v2171 = vpack.c.bf16 %v2151, %v2150
        %v2172 = vpack.c.bf16 %v2153, %v2152
        %v2173 = vpack.c.bf16 %v2155, %v2154
        %v2174 = vpack.c.bf16 %v2157, %v2156
        %v2175 = vpack.c.bf16 %v2159, %v2158
        %s2176 = scalar_lea.vmem [#allocation6], 448
        %v2177 = vld [vmem:[%s2176] sm:$0xf]
        %v2178 = vld [vmem:[%s2176 + $0x4] sm:$0xf]
        %v2179 = vld [vmem:[%s2176 + $0x8] sm:$0xf]
        %v2180 = vld [vmem:[%s2176 + $0xc] sm:$0xf]
        %v2181 = vld [vmem:[%s2176 + $0x10] sm:$0xf]
        %v2182 = vld [vmem:[%s2176 + $0x14] sm:$0xf]
        %v2183 = vld [vmem:[%s2176 + $0x18] sm:$0xf]
        %v2184 = vld [vmem:[%s2176 + $0x1c] sm:$0xf]
        %v2185 = vld [vmem:[%s2176 + $0x20] sm:$0xf]
        %v2186 = vld [vmem:[%s2176 + $0x24] sm:$0xf]
        %v2187 = vld [vmem:[%s2176 + $0x28] sm:$0xf]
        %v2188 = vld [vmem:[%s2176 + $0x2c] sm:$0xf]
        %v2189 = vld [vmem:[%s2176 + $0x30] sm:$0xf]
        %v2190 = vld [vmem:[%s2176 + $0x34] sm:$0xf]
        %v2191 = vld [vmem:[%s2176 + $0x38] sm:$0xf]
        %v2192 = vld [vmem:[%s2176 + $0x3c] sm:$0xf]
        %v2209 = vunpack.c.l.b16 %v2177
        %v2210 = vunpack.c.l.b16 %v2178
        %v2211 = vunpack.c.l.b16 %v2179
        %v2212 = vunpack.c.l.b16 %v2180
        %v2213 = vunpack.c.l.b16 %v2181
        %v2214 = vunpack.c.l.b16 %v2182
        %v2215 = vunpack.c.l.b16 %v2183
        %v2216 = vunpack.c.l.b16 %v2184
        %v2217 = vunpack.c.l.b16 %v2185
        %v2218 = vunpack.c.l.b16 %v2186
        %v2219 = vunpack.c.l.b16 %v2187
        %v2220 = vunpack.c.l.b16 %v2188
        %v2221 = vunpack.c.l.b16 %v2189
        %v2222 = vunpack.c.l.b16 %v2190
        %v2223 = vunpack.c.l.b16 %v2191
        %v2224 = vunpack.c.l.b16 %v2192
        %v2225 = vpack.c.b16 %v2210, %v2209
        %v2226 = vpack.c.b16 %v2212, %v2211
        %v2227 = vpack.c.b16 %v2214, %v2213
        %v2228 = vpack.c.b16 %v2216, %v2215
        %v2229 = vpack.c.b16 %v2218, %v2217
        %v2230 = vpack.c.b16 %v2220, %v2219
        %v2231 = vpack.c.b16 %v2222, %v2221
        %v2232 = vpack.c.b16 %v2224, %v2223
        %2241 = vmatpush.bf16.msra.mxu0 %v2232
        %2242 = vmatpush.bf16.msra.mxu0 %v2231
        %2243 = vmatpush.bf16.msra.mxu0 %v2230
        %2244 = vmatpush.bf16.msra.mxu0 %v2229
        %2245 = vmatpush.bf16.msra.mxu0 %v2228
        %2246 = vmatpush.bf16.msra.mxu0 %v2227
        %2247 = vmatpush.bf16.msra.mxu0 %v2226
        %2248 = vmatpush.bf16.msra.mxu0 %v2225
        %2249 = vmatmul.bf16.gmra.mxu0 %v2160
        %v2250 = vpop.f32.mrf.mxu0
        %v2251 = vadd.f32 0.0, %v2250
        %v2252 = vpop.f32.mrf.mxu0
        %v2253 = vadd.f32 0.0, %v2252
        %2254 = vmatmul.bf16.gmra.mxu0 %v2161
        %v2255 = vpop.f32.mrf.mxu0
        %v2256 = vadd.f32 0.0, %v2255
        %v2257 = vpop.f32.mrf.mxu0
        %v2258 = vadd.f32 0.0, %v2257
        %2259 = vmatmul.bf16.gmra.mxu0 %v2162
        %v2260 = vpop.f32.mrf.mxu0
        %v2261 = vadd.f32 0.0, %v2260
        %v2262 = vpop.f32.mrf.mxu0
        %v2263 = vadd.f32 0.0, %v2262
        %2264 = vmatmul.bf16.gmra.mxu0 %v2163
        %v2265 = vpop.f32.mrf.mxu0
        %v2266 = vadd.f32 0.0, %v2265
        %v2267 = vpop.f32.mrf.mxu0
        %v2268 = vadd.f32 0.0, %v2267
        %2269 = vmatmul.bf16.gmra.mxu0 %v2164
        %v2270 = vpop.f32.mrf.mxu0
        %v2271 = vadd.f32 0.0, %v2270
        %v2272 = vpop.f32.mrf.mxu0
        %v2273 = vadd.f32 0.0, %v2272
        %2274 = vmatmul.bf16.gmra.mxu0 %v2165
        %v2275 = vpop.f32.mrf.mxu0
        %v2276 = vadd.f32 0.0, %v2275
        %v2277 = vpop.f32.mrf.mxu0
        %v2278 = vadd.f32 0.0, %v2277
        %2279 = vmatmul.bf16.gmra.mxu0 %v2166
        %v2280 = vpop.f32.mrf.mxu0
        %v2281 = vadd.f32 0.0, %v2280
        %v2282 = vpop.f32.mrf.mxu0
        %v2283 = vadd.f32 0.0, %v2282
        %2284 = vmatmul.bf16.gmra.mxu0 %v2167
        %v2285 = vpop.f32.mrf.mxu0
        %v2286 = vadd.f32 0.0, %v2285
        %v2287 = vpop.f32.mrf.mxu0
        %v2288 = vadd.f32 0.0, %v2287
        %2289 = vmatmul.bf16.gmra.mxu0 %v2168
        %v2290 = vpop.f32.mrf.mxu0
        %v2291 = vadd.f32 0.0, %v2290
        %v2292 = vpop.f32.mrf.mxu0
        %v2293 = vadd.f32 0.0, %v2292
        %2294 = vmatmul.bf16.gmra.mxu0 %v2169
        %v2295 = vpop.f32.mrf.mxu0
        %v2296 = vadd.f32 0.0, %v2295
        %v2297 = vpop.f32.mrf.mxu0
        %v2298 = vadd.f32 0.0, %v2297
        %2299 = vmatmul.bf16.gmra.mxu0 %v2170
        %v2300 = vpop.f32.mrf.mxu0
        %v2301 = vadd.f32 0.0, %v2300
        %v2302 = vpop.f32.mrf.mxu0
        %v2303 = vadd.f32 0.0, %v2302
        %2304 = vmatmul.bf16.gmra.mxu0 %v2171
        %v2305 = vpop.f32.mrf.mxu0
        %v2306 = vadd.f32 0.0, %v2305
        %v2307 = vpop.f32.mrf.mxu0
        %v2308 = vadd.f32 0.0, %v2307
        %2309 = vmatmul.bf16.gmra.mxu0 %v2172
        %v2310 = vpop.f32.mrf.mxu0
        %v2311 = vadd.f32 0.0, %v2310
        %v2312 = vpop.f32.mrf.mxu0
        %v2313 = vadd.f32 0.0, %v2312
        %2314 = vmatmul.bf16.gmra.mxu0 %v2173
        %v2315 = vpop.f32.mrf.mxu0
        %v2316 = vadd.f32 0.0, %v2315
        %v2317 = vpop.f32.mrf.mxu0
        %v2318 = vadd.f32 0.0, %v2317
        %2319 = vmatmul.bf16.gmra.mxu0 %v2174
        %v2320 = vpop.f32.mrf.mxu0
        %v2321 = vadd.f32 0.0, %v2320
        %v2322 = vpop.f32.mrf.mxu0
        %v2323 = vadd.f32 0.0, %v2322
        %2324 = vmatmul.bf16.gmra.mxu0 %v2175
        %v2325 = vpop.f32.mrf.mxu0
        %v2326 = vadd.f32 0.0, %v2325
        %v2327 = vpop.f32.mrf.mxu0
        %v2328 = vadd.f32 0.0, %v2327
        %2329 = vdwg.mxu0
        %v2330 = vadd.f32 %v2096, %v2251
        %v2331 = vadd.f32 %v2097, %v2253
        %v2332 = vadd.f32 %v2098, %v2256
        %v2333 = vadd.f32 %v2099, %v2258
        %v2334 = vadd.f32 %v2100, %v2261
        %v2335 = vadd.f32 %v2101, %v2263
        %v2336 = vadd.f32 %v2102, %v2266
        %v2337 = vadd.f32 %v2103, %v2268
        %v2338 = vadd.f32 %v2104, %v2271
        %v2339 = vadd.f32 %v2105, %v2273
        %v2340 = vadd.f32 %v2106, %v2276
        %v2341 = vadd.f32 %v2107, %v2278
        %v2342 = vadd.f32 %v2108, %v2281
        %v2343 = vadd.f32 %v2109, %v2283
        %v2344 = vadd.f32 %v2110, %v2286
        %v2345 = vadd.f32 %v2111, %v2288
        %v2346 = vadd.f32 %v2112, %v2291
        %v2347 = vadd.f32 %v2113, %v2293
        %v2348 = vadd.f32 %v2114, %v2296
        %v2349 = vadd.f32 %v2115, %v2298
        %v2350 = vadd.f32 %v2116, %v2301
        %v2351 = vadd.f32 %v2117, %v2303
        %v2352 = vadd.f32 %v2118, %v2306
        %v2353 = vadd.f32 %v2119, %v2308
        %v2354 = vadd.f32 %v2120, %v2311
        %v2355 = vadd.f32 %v2121, %v2313
        %v2356 = vadd.f32 %v2122, %v2316
        %v2357 = vadd.f32 %v2123, %v2318
        %v2358 = vadd.f32 %v2124, %v2321
        %v2359 = vadd.f32 %v2125, %v2323
        %v2360 = vadd.f32 %v2126, %v2326
        %v2361 = vadd.f32 %v2127, %v2328
        %v2362 = vld [vmem:[%s1893 + $0x2] sm:$0xff]
        %v2363 = vld [vmem:[%s1893 + $0xa] sm:$0xff]
        %v2364 = vld [vmem:[%s1893 + $0x1a] sm:$0xff]
        %v2365 = vld [vmem:[%s1893 + $0x22] sm:$0xff]
        %v2366 = vld [vmem:[%s1893 + $0x32] sm:$0xff]
        %v2367 = vld [vmem:[%s1893 + $0x3a] sm:$0xff]
        %v2368 = vld [vmem:[%s1893 + $0x4a] sm:$0xff]
        %v2369 = vld [vmem:[%s1893 + $0x52] sm:$0xff]
        %v2370 = vld [vmem:[%s1893 + $0x62] sm:$0xff]
        %v2371 = vld [vmem:[%s1893 + $0x6a] sm:$0xff]
        %v2372 = vld [vmem:[%s1893 + $0x7a] sm:$0xff]
        %v2373 = vld [vmem:[%s1893 + $0x82] sm:$0xff]
        %v2374 = vld [vmem:[%s1893 + $0x92] sm:$0xff]
        %v2375 = vld [vmem:[%s1893 + $0x9a] sm:$0xff]
        %v2376 = vld [vmem:[%s1893 + $0xaa] sm:$0xff]
        %v2377 = vld [vmem:[%s1893 + $0xb2] sm:$0xff]
        %v2378 = vld [vmem:[%s1893 + $0xc2] sm:$0xff]
        %v2379 = vld [vmem:[%s1893 + $0xca] sm:$0xff]
        %v2380 = vld [vmem:[%s1893 + $0xda] sm:$0xff]
        %v2381 = vld [vmem:[%s1893 + $0xe2] sm:$0xff]
        %v2382 = vld [vmem:[%s1893 + $0xf2] sm:$0xff]
        %v2383 = vld [vmem:[%s1893 + $0xfa] sm:$0xff]
        %v2384 = vld [vmem:[%s1893 + $0x10a] sm:$0xff]
        %v2385 = vld [vmem:[%s1893 + $0x112] sm:$0xff]
        %v2386 = vld [vmem:[%s1893 + $0x122] sm:$0xff]
        %v2387 = vld [vmem:[%s1893 + $0x12a] sm:$0xff]
        %v2388 = vld [vmem:[%s1893 + $0x13a] sm:$0xff]
        %v2389 = vld [vmem:[%s1893 + $0x142] sm:$0xff]
        %v2390 = vld [vmem:[%s1893 + $0x152] sm:$0xff]
        %v2391 = vld [vmem:[%s1893 + $0x15a] sm:$0xff]
        %v2392 = vld [vmem:[%s1893 + $0x16a] sm:$0xff]
        %v2393 = vld [vmem:[%s1893 + $0x172] sm:$0xff]
        %v2394 = vpack.c.bf16 %v2363, %v2362
        %v2395 = vpack.c.bf16 %v2365, %v2364
        %v2396 = vpack.c.bf16 %v2367, %v2366
        %v2397 = vpack.c.bf16 %v2369, %v2368
        %v2398 = vpack.c.bf16 %v2371, %v2370
        %v2399 = vpack.c.bf16 %v2373, %v2372
        %v2400 = vpack.c.bf16 %v2375, %v2374
        %v2401 = vpack.c.bf16 %v2377, %v2376
        %v2402 = vpack.c.bf16 %v2379, %v2378
        %v2403 = vpack.c.bf16 %v2381, %v2380
        %v2404 = vpack.c.bf16 %v2383, %v2382
        %v2405 = vpack.c.bf16 %v2385, %v2384
        %v2406 = vpack.c.bf16 %v2387, %v2386
        %v2407 = vpack.c.bf16 %v2389, %v2388
        %v2408 = vpack.c.bf16 %v2391, %v2390
        %v2409 = vpack.c.bf16 %v2393, %v2392
        %s2410 = scalar_lea.vmem [#allocation6], 512
        %v2411 = vld [vmem:[%s2410] sm:$0xf]
        %v2412 = vld [vmem:[%s2410 + $0x4] sm:$0xf]
        %v2413 = vld [vmem:[%s2410 + $0x8] sm:$0xf]
        %v2414 = vld [vmem:[%s2410 + $0xc] sm:$0xf]
        %v2415 = vld [vmem:[%s2410 + $0x10] sm:$0xf]
        %v2416 = vld [vmem:[%s2410 + $0x14] sm:$0xf]
        %v2417 = vld [vmem:[%s2410 + $0x18] sm:$0xf]
        %v2418 = vld [vmem:[%s2410 + $0x1c] sm:$0xf]
        %v2419 = vld [vmem:[%s2410 + $0x20] sm:$0xf]
        %v2420 = vld [vmem:[%s2410 + $0x24] sm:$0xf]
        %v2421 = vld [vmem:[%s2410 + $0x28] sm:$0xf]
        %v2422 = vld [vmem:[%s2410 + $0x2c] sm:$0xf]
        %v2423 = vld [vmem:[%s2410 + $0x30] sm:$0xf]
        %v2424 = vld [vmem:[%s2410 + $0x34] sm:$0xf]
        %v2425 = vld [vmem:[%s2410 + $0x38] sm:$0xf]
        %v2426 = vld [vmem:[%s2410 + $0x3c] sm:$0xf]
        %v2443 = vunpack.c.l.b16 %v2411
        %v2444 = vunpack.c.l.b16 %v2412
        %v2445 = vunpack.c.l.b16 %v2413
        %v2446 = vunpack.c.l.b16 %v2414
        %v2447 = vunpack.c.l.b16 %v2415
        %v2448 = vunpack.c.l.b16 %v2416
        %v2449 = vunpack.c.l.b16 %v2417
        %v2450 = vunpack.c.l.b16 %v2418
        %v2451 = vunpack.c.l.b16 %v2419
        %v2452 = vunpack.c.l.b16 %v2420
        %v2453 = vunpack.c.l.b16 %v2421
        %v2454 = vunpack.c.l.b16 %v2422
        %v2455 = vunpack.c.l.b16 %v2423
        %v2456 = vunpack.c.l.b16 %v2424
        %v2457 = vunpack.c.l.b16 %v2425
        %v2458 = vunpack.c.l.b16 %v2426
        %v2459 = vpack.c.b16 %v2444, %v2443
        %v2460 = vpack.c.b16 %v2446, %v2445
        %v2461 = vpack.c.b16 %v2448, %v2447
        %v2462 = vpack.c.b16 %v2450, %v2449
        %v2463 = vpack.c.b16 %v2452, %v2451
        %v2464 = vpack.c.b16 %v2454, %v2453
        %v2465 = vpack.c.b16 %v2456, %v2455
        %v2466 = vpack.c.b16 %v2458, %v2457
        %2475 = vmatpush.bf16.msra.mxu0 %v2466
        %2476 = vmatpush.bf16.msra.mxu0 %v2465
        %2477 = vmatpush.bf16.msra.mxu0 %v2464
        %2478 = vmatpush.bf16.msra.mxu0 %v2463
        %2479 = vmatpush.bf16.msra.mxu0 %v2462
        %2480 = vmatpush.bf16.msra.mxu0 %v2461
        %2481 = vmatpush.bf16.msra.mxu0 %v2460
        %2482 = vmatpush.bf16.msra.mxu0 %v2459
        %2483 = vmatmul.bf16.gmra.mxu0 %v2394
        %v2484 = vpop.f32.mrf.mxu0
        %v2485 = vadd.f32 0.0, %v2484
        %v2486 = vpop.f32.mrf.mxu0
        %v2487 = vadd.f32 0.0, %v2486
        %2488 = vmatmul.bf16.gmra.mxu0 %v2395
        %v2489 = vpop.f32.mrf.mxu0
        %v2490 = vadd.f32 0.0, %v2489
        %v2491 = vpop.f32.mrf.mxu0
        %v2492 = vadd.f32 0.0, %v2491
        %2493 = vmatmul.bf16.gmra.mxu0 %v2396
        %v2494 = vpop.f32.mrf.mxu0
        %v2495 = vadd.f32 0.0, %v2494
        %v2496 = vpop.f32.mrf.mxu0
        %v2497 = vadd.f32 0.0, %v2496
        %2498 = vmatmul.bf16.gmra.mxu0 %v2397
        %v2499 = vpop.f32.mrf.mxu0
        %v2500 = vadd.f32 0.0, %v2499
        %v2501 = vpop.f32.mrf.mxu0
        %v2502 = vadd.f32 0.0, %v2501
        %2503 = vmatmul.bf16.gmra.mxu0 %v2398
        %v2504 = vpop.f32.mrf.mxu0
        %v2505 = vadd.f32 0.0, %v2504
        %v2506 = vpop.f32.mrf.mxu0
        %v2507 = vadd.f32 0.0, %v2506
        %2508 = vmatmul.bf16.gmra.mxu0 %v2399
        %v2509 = vpop.f32.mrf.mxu0
        %v2510 = vadd.f32 0.0, %v2509
        %v2511 = vpop.f32.mrf.mxu0
        %v2512 = vadd.f32 0.0, %v2511
        %2513 = vmatmul.bf16.gmra.mxu0 %v2400
        %v2514 = vpop.f32.mrf.mxu0
        %v2515 = vadd.f32 0.0, %v2514
        %v2516 = vpop.f32.mrf.mxu0
        %v2517 = vadd.f32 0.0, %v2516
        %2518 = vmatmul.bf16.gmra.mxu0 %v2401
        %v2519 = vpop.f32.mrf.mxu0
        %v2520 = vadd.f32 0.0, %v2519
        %v2521 = vpop.f32.mrf.mxu0
        %v2522 = vadd.f32 0.0, %v2521
        %2523 = vmatmul.bf16.gmra.mxu0 %v2402
        %v2524 = vpop.f32.mrf.mxu0
        %v2525 = vadd.f32 0.0, %v2524
        %v2526 = vpop.f32.mrf.mxu0
        %v2527 = vadd.f32 0.0, %v2526
        %2528 = vmatmul.bf16.gmra.mxu0 %v2403
        %v2529 = vpop.f32.mrf.mxu0
        %v2530 = vadd.f32 0.0, %v2529
        %v2531 = vpop.f32.mrf.mxu0
        %v2532 = vadd.f32 0.0, %v2531
        %2533 = vmatmul.bf16.gmra.mxu0 %v2404
        %v2534 = vpop.f32.mrf.mxu0
        %v2535 = vadd.f32 0.0, %v2534
        %v2536 = vpop.f32.mrf.mxu0
        %v2537 = vadd.f32 0.0, %v2536
        %2538 = vmatmul.bf16.gmra.mxu0 %v2405
        %v2539 = vpop.f32.mrf.mxu0
        %v2540 = vadd.f32 0.0, %v2539
        %v2541 = vpop.f32.mrf.mxu0
        %v2542 = vadd.f32 0.0, %v2541
        %2543 = vmatmul.bf16.gmra.mxu0 %v2406
        %v2544 = vpop.f32.mrf.mxu0
        %v2545 = vadd.f32 0.0, %v2544
        %v2546 = vpop.f32.mrf.mxu0
        %v2547 = vadd.f32 0.0, %v2546
        %2548 = vmatmul.bf16.gmra.mxu0 %v2407
        %v2549 = vpop.f32.mrf.mxu0
        %v2550 = vadd.f32 0.0, %v2549
        %v2551 = vpop.f32.mrf.mxu0
        %v2552 = vadd.f32 0.0, %v2551
        %2553 = vmatmul.bf16.gmra.mxu0 %v2408
        %v2554 = vpop.f32.mrf.mxu0
        %v2555 = vadd.f32 0.0, %v2554
        %v2556 = vpop.f32.mrf.mxu0
        %v2557 = vadd.f32 0.0, %v2556
        %2558 = vmatmul.bf16.gmra.mxu0 %v2409
        %v2559 = vpop.f32.mrf.mxu0
        %v2560 = vadd.f32 0.0, %v2559
        %v2561 = vpop.f32.mrf.mxu0
        %v2562 = vadd.f32 0.0, %v2561
        %2563 = vdwg.mxu0
        %v2564 = vadd.f32 %v2330, %v2485
        %v2565 = vadd.f32 %v2331, %v2487
        %v2566 = vadd.f32 %v2332, %v2490
        %v2567 = vadd.f32 %v2333, %v2492
        %v2568 = vadd.f32 %v2334, %v2495
        %v2569 = vadd.f32 %v2335, %v2497
        %v2570 = vadd.f32 %v2336, %v2500
        %v2571 = vadd.f32 %v2337, %v2502
        %v2572 = vadd.f32 %v2338, %v2505
        %v2573 = vadd.f32 %v2339, %v2507
        %v2574 = vadd.f32 %v2340, %v2510
        %v2575 = vadd.f32 %v2341, %v2512
        %v2576 = vadd.f32 %v2342, %v2515
        %v2577 = vadd.f32 %v2343, %v2517
        %v2578 = vadd.f32 %v2344, %v2520
        %v2579 = vadd.f32 %v2345, %v2522
        %v2580 = vadd.f32 %v2346, %v2525
        %v2581 = vadd.f32 %v2347, %v2527
        %v2582 = vadd.f32 %v2348, %v2530
        %v2583 = vadd.f32 %v2349, %v2532
        %v2584 = vadd.f32 %v2350, %v2535
        %v2585 = vadd.f32 %v2351, %v2537
        %v2586 = vadd.f32 %v2352, %v2540
        %v2587 = vadd.f32 %v2353, %v2542
        %v2588 = vadd.f32 %v2354, %v2545
        %v2589 = vadd.f32 %v2355, %v2547
        %v2590 = vadd.f32 %v2356, %v2550
        %v2591 = vadd.f32 %v2357, %v2552
        %v2592 = vadd.f32 %v2358, %v2555
        %v2593 = vadd.f32 %v2359, %v2557
        %v2594 = vadd.f32 %v2360, %v2560
        %v2595 = vadd.f32 %v2361, %v2562
        %v2596 = vadd.f32 %v2564, %v2565
        %v2597 = vadd.f32 %v2596, %v2566
        %v2598 = vadd.f32 %v2597, %v2567
        %v2599 = vadd.f32 %v2598, %v2568
        %v2600 = vadd.f32 %v2599, %v2569
        %v2601 = vadd.f32 %v2600, %v2570
        %v2602 = vadd.f32 %v2601, %v2571
        %v2603 = vadd.f32 %v2602, %v2572
        %v2604 = vadd.f32 %v2603, %v2573
        %v2605 = vadd.f32 %v2604, %v2574
        %v2606 = vadd.f32 %v2605, %v2575
        %v2607 = vadd.f32 %v2606, %v2576
        %v2608 = vadd.f32 %v2607, %v2577
        %v2609 = vadd.f32 %v2608, %v2578
        %v2610 = vadd.f32 %v2609, %v2579
        %v2611 = vadd.f32 %v2610, %v2580
        %v2612 = vadd.f32 %v2611, %v2581
        %v2613 = vadd.f32 %v2612, %v2582
        %v2614 = vadd.f32 %v2613, %v2583
        %v2615 = vadd.f32 %v2614, %v2584
        %v2616 = vadd.f32 %v2615, %v2585
        %v2617 = vadd.f32 %v2616, %v2586
        %v2618 = vadd.f32 %v2617, %v2587
        %v2619 = vadd.f32 %v2618, %v2588
        %v2620 = vadd.f32 %v2619, %v2589
        %v2621 = vadd.f32 %v2620, %v2590
        %v2622 = vadd.f32 %v2621, %v2591
        %v2623 = vadd.f32 %v2622, %v2592
        %v2624 = vadd.f32 %v2623, %v2593
        %v2625 = vadd.f32 %v2624, %v2594
        %v2626 = vadd.f32 %v2625, %v2595
        %v2627 = vrot.slane %v2626, 4
        %v2628 = vadd.f32 %v2626, %v2627
        %v2629 = vrot.slane %v2628, 2
        %v2630 = vadd.f32 %v2628, %v2629
        %v2631 = vrot.slane %v2630, 1
        %v2632 = vadd.f32 %v2630, %v2631
        %v2633 = vrcp.pop 256.0
        %v2634 = vmul.f32 256.0, %v2633
        %v2635 = vsub.f32 1.0, %v2634
        %v2636 = vmul.f32 %v2633, %v2635
        %v2637 = vadd.f32 %v2633, %v2636
        %vm2638 = vweird.f32 %v2633
        %v2639 = vsel %vm2638, %v2633, %v2637
        %v2640 = vmul.f32 %v2632, %v2639
        %v2641 = vld [vmem:[#allocation9] sm:$0xff]
        %v2642 = vld [vmem:[#allocation9 + $0x8] sm:$0xff]
        %v2643 = vld [vmem:[#allocation9 + $0x10] sm:$0xff]
        %v2644 = vld [vmem:[#allocation9 + $0x18] sm:$0xff]
        %v2645 = vld [vmem:[#allocation9 + $0x20] sm:$0xff]
        %v2646 = vld [vmem:[#allocation9 + $0x28] sm:$0xff]
        %v2647 = vld [vmem:[#allocation9 + $0x30] sm:$0xff]
        %v2648 = vld [vmem:[#allocation9 + $0x38] sm:$0xff]
        %v2649 = vld [vmem:[#allocation9 + $0x40] sm:$0xff]
        %v2650 = vld [vmem:[#allocation9 + $0x48] sm:$0xff]
        %v2651 = vld [vmem:[#allocation9 + $0x50] sm:$0xff]
        %v2652 = vld [vmem:[#allocation9 + $0x58] sm:$0xff]
        %v2653 = vld [vmem:[#allocation9 + $0x60] sm:$0xff]
        %v2654 = vld [vmem:[#allocation9 + $0x68] sm:$0xff]
        %v2655 = vld [vmem:[#allocation9 + $0x70] sm:$0xff]
        %v2656 = vld [vmem:[#allocation9 + $0x78] sm:$0xff]
        %2657 = vmatpush.msra.mxu0 %v2656
        %2658 = vmatpush.msra.mxu0 %v2655
        %2659 = vmatpush.msra.mxu0 %v2654
        %2660 = vmatpush.msra.mxu0 %v2653
        %2661 = vmatpush.msra.mxu0 %v2652
        %2662 = vmatpush.msra.mxu0 %v2651
        %2663 = vmatpush.msra.mxu0 %v2650
        %2664 = vmatpush.msra.mxu0 %v2649
        %2665 = vmatpush.msra.mxu0 %v2648
        %2666 = vmatpush.msra.mxu0 %v2647
        %2667 = vmatpush.msra.mxu0 %v2646
        %2668 = vmatpush.msra.mxu0 %v2645
        %2669 = vmatpush.msra.mxu0 %v2644
        %2670 = vmatpush.msra.mxu0 %v2643
        %2671 = vmatpush.msra.mxu0 %v2642
        %2672 = vmatpush.msra.mxu0 %v2641
        %2673 = vmatmul.f32.gmra.mxu0 %v2640
        %v2674 = vpop.f32.mrf.mxu0
        %v2675 = vadd.f32 0.0, %v2674
        %2676 = vdwg.mxu0
        %v2677 = vperm.slane %v2675, 0
        %v2678 = vsub.f32 %v2564, %v2677
        %v2679 = vsub.f32 %v2565, %v2677
        %v2680 = vsub.f32 %v2566, %v2677
        %v2681 = vsub.f32 %v2567, %v2677
        %v2682 = vsub.f32 %v2568, %v2677
        %v2683 = vsub.f32 %v2569, %v2677
        %v2684 = vsub.f32 %v2570, %v2677
        %v2685 = vsub.f32 %v2571, %v2677
        %v2686 = vsub.f32 %v2572, %v2677
        %v2687 = vsub.f32 %v2573, %v2677
        %v2688 = vsub.f32 %v2574, %v2677
        %v2689 = vsub.f32 %v2575, %v2677
        %v2690 = vsub.f32 %v2576, %v2677
        %v2691 = vsub.f32 %v2577, %v2677
        %v2692 = vsub.f32 %v2578, %v2677
        %v2693 = vsub.f32 %v2579, %v2677
        %v2694 = vsub.f32 %v2580, %v2677
        %v2695 = vsub.f32 %v2581, %v2677
        %v2696 = vsub.f32 %v2582, %v2677
        %v2697 = vsub.f32 %v2583, %v2677
        %v2698 = vsub.f32 %v2584, %v2677
        %v2699 = vsub.f32 %v2585, %v2677
        %v2700 = vsub.f32 %v2586, %v2677
        %v2701 = vsub.f32 %v2587, %v2677
        %v2702 = vsub.f32 %v2588, %v2677
        %v2703 = vsub.f32 %v2589, %v2677
        %v2704 = vsub.f32 %v2590, %v2677
        %v2705 = vsub.f32 %v2591, %v2677
        %v2706 = vsub.f32 %v2592, %v2677
        %v2707 = vsub.f32 %v2593, %v2677
        %v2708 = vsub.f32 %v2594, %v2677
        %v2709 = vsub.f32 %v2595, %v2677
        %v2710 = vmul.f32 %v2678, %v2678
        %v2711 = vmul.f32 %v2679, %v2679
        %v2712 = vmul.f32 %v2680, %v2680
        %v2713 = vmul.f32 %v2681, %v2681
        %v2714 = vmul.f32 %v2682, %v2682
        %v2715 = vmul.f32 %v2683, %v2683
        %v2716 = vmul.f32 %v2684, %v2684
        %v2717 = vmul.f32 %v2685, %v2685
        %v2718 = vmul.f32 %v2686, %v2686
        %v2719 = vmul.f32 %v2687, %v2687
        %v2720 = vmul.f32 %v2688, %v2688
        %v2721 = vmul.f32 %v2689, %v2689
        %v2722 = vmul.f32 %v2690, %v2690
        %v2723 = vmul.f32 %v2691, %v2691
        %v2724 = vmul.f32 %v2692, %v2692
        %v2725 = vmul.f32 %v2693, %v2693
        %v2726 = vmul.f32 %v2694, %v2694
        %v2727 = vmul.f32 %v2695, %v2695
        %v2728 = vmul.f32 %v2696, %v2696
        %v2729 = vmul.f32 %v2697, %v2697
        %v2730 = vmul.f32 %v2698, %v2698
        %v2731 = vmul.f32 %v2699, %v2699
        %v2732 = vmul.f32 %v2700, %v2700
        %v2733 = vmul.f32 %v2701, %v2701
        %v2734 = vmul.f32 %v2702, %v2702
        %v2735 = vmul.f32 %v2703, %v2703
        %v2736 = vmul.f32 %v2704, %v2704
        %v2737 = vmul.f32 %v2705, %v2705
        %v2738 = vmul.f32 %v2706, %v2706
        %v2739 = vmul.f32 %v2707, %v2707
        %v2740 = vmul.f32 %v2708, %v2708
        %v2741 = vmul.f32 %v2709, %v2709
        %v2742 = vadd.f32 %v2710, %v2711
        %v2743 = vadd.f32 %v2742, %v2712
        %v2744 = vadd.f32 %v2743, %v2713
        %v2745 = vadd.f32 %v2744, %v2714
        %v2746 = vadd.f32 %v2745, %v2715
        %v2747 = vadd.f32 %v2746, %v2716
        %v2748 = vadd.f32 %v2747, %v2717
        %v2749 = vadd.f32 %v2748, %v2718
        %v2750 = vadd.f32 %v2749, %v2719
        %v2751 = vadd.f32 %v2750, %v2720
        %v2752 = vadd.f32 %v2751, %v2721
        %v2753 = vadd.f32 %v2752, %v2722
        %v2754 = vadd.f32 %v2753, %v2723
        %v2755 = vadd.f32 %v2754, %v2724
        %v2756 = vadd.f32 %v2755, %v2725
        %v2757 = vadd.f32 %v2756, %v2726
        %v2758 = vadd.f32 %v2757, %v2727
        %v2759 = vadd.f32 %v2758, %v2728
        %v2760 = vadd.f32 %v2759, %v2729
        %v2761 = vadd.f32 %v2760, %v2730
        %v2762 = vadd.f32 %v2761, %v2731
        %v2763 = vadd.f32 %v2762, %v2732
        %v2764 = vadd.f32 %v2763, %v2733
        %v2765 = vadd.f32 %v2764, %v2734
        %v2766 = vadd.f32 %v2765, %v2735
        %v2767 = vadd.f32 %v2766, %v2736
        %v2768 = vadd.f32 %v2767, %v2737
        %v2769 = vadd.f32 %v2768, %v2738
        %v2770 = vadd.f32 %v2769, %v2739
        %v2771 = vadd.f32 %v2770, %v2740
        %v2772 = vadd.f32 %v2771, %v2741
        %v2773 = vrot.slane %v2772, 4
        %v2774 = vadd.f32 %v2772, %v2773
        %v2775 = vrot.slane %v2774, 2
        %v2776 = vadd.f32 %v2774, %v2775
        %v2777 = vrot.slane %v2776, 1
        %v2778 = vadd.f32 %v2776, %v2777
        %v2779 = vmul.f32 %v2778, %v2639
        %2780 = vmatpush.msra.mxu0 %v2656
        %2781 = vmatpush.msra.mxu0 %v2655
        %2782 = vmatpush.msra.mxu0 %v2654
        %2783 = vmatpush.msra.mxu0 %v2653
        %2784 = vmatpush.msra.mxu0 %v2652
        %2785 = vmatpush.msra.mxu0 %v2651
        %2786 = vmatpush.msra.mxu0 %v2650
        %2787 = vmatpush.msra.mxu0 %v2649
        %2788 = vmatpush.msra.mxu0 %v2648
        %2789 = vmatpush.msra.mxu0 %v2647
        %2790 = vmatpush.msra.mxu0 %v2646
        %2791 = vmatpush.msra.mxu0 %v2645
        %2792 = vmatpush.msra.mxu0 %v2644
        %2793 = vmatpush.msra.mxu0 %v2643
        %2794 = vmatpush.msra.mxu0 %v2642
        %2795 = vmatpush.msra.mxu0 %v2641
        %2796 = vmatmul.f32.gmra.mxu0 %v2779
        %v2797 = vpop.f32.mrf.mxu0
        %v2798 = vadd.f32 1e-05, %v2797
        %2799 = vdwg.mxu0
        %v2800 = vrsqrt.pop %v2798
        %v2801 = vmul.f32 %v2800, %v2798
        %v2802 = vmul.f32 %v2801, %v2800
        %v2803 = vmul.f32 0.5, %v2802
        %v2804 = vsub.f32 1.5, %v2803
        %v2805 = vmul.f32 %v2800, %v2804
        %vm2806 = vweird.f32 %v2798
        %vm2807 = vweird.f32 %v2800
        %vm2808 = vmor %vm2806, %vm2807
        %v2809 = vsel %vm2808, %v2800, %v2805
        %v2810 = vperm.slane %v2809, 0
        %v2811 = vmul.f32 %v2678, %v2810
        %v2812 = vmul.f32 %v2679, %v2810
        %v2813 = vmul.f32 %v2680, %v2810
        %v2814 = vmul.f32 %v2681, %v2810
        %v2815 = vmul.f32 %v2682, %v2810
        %v2816 = vmul.f32 %v2683, %v2810
        %v2817 = vmul.f32 %v2684, %v2810
        %v2818 = vmul.f32 %v2685, %v2810
        %v2819 = vmul.f32 %v2686, %v2810
        %v2820 = vmul.f32 %v2687, %v2810
        %v2821 = vmul.f32 %v2688, %v2810
        %v2822 = vmul.f32 %v2689, %v2810
        %v2823 = vmul.f32 %v2690, %v2810
        %v2824 = vmul.f32 %v2691, %v2810
        %v2825 = vmul.f32 %v2692, %v2810
        %v2826 = vmul.f32 %v2693, %v2810
        %v2827 = vmul.f32 %v2694, %v2810
        %v2828 = vmul.f32 %v2695, %v2810
        %v2829 = vmul.f32 %v2696, %v2810
        %v2830 = vmul.f32 %v2697, %v2810
        %v2831 = vmul.f32 %v2698, %v2810
        %v2832 = vmul.f32 %v2699, %v2810
        %v2833 = vmul.f32 %v2700, %v2810
        %v2834 = vmul.f32 %v2701, %v2810
        %v2835 = vmul.f32 %v2702, %v2810
        %v2836 = vmul.f32 %v2703, %v2810
        %v2837 = vmul.f32 %v2704, %v2810
        %v2838 = vmul.f32 %v2705, %v2810
        %v2839 = vmul.f32 %v2706, %v2810
        %v2840 = vmul.f32 %v2707, %v2810
        %v2841 = vmul.f32 %v2708, %v2810
        %v2842 = vmul.f32 %v2709, %v2810
        %v2843 = vld [vmem:[%s2] sm:$0x1]
        %v2845 = vperm.slane %v2843, 0
        %v2847 = vmul.f32 %v2811, %v2845
        %v2848 = vmul.f32 %v2812, %v2845
        %v2849 = vmul.f32 %v2813, %v2845
        %v2850 = vmul.f32 %v2814, %v2845
        %v2851 = vmul.f32 %v2815, %v2845
        %v2852 = vmul.f32 %v2816, %v2845
        %v2853 = vmul.f32 %v2817, %v2845
        %v2854 = vmul.f32 %v2818, %v2845
        %v2855 = vmul.f32 %v2819, %v2845
        %v2856 = vmul.f32 %v2820, %v2845
        %v2857 = vmul.f32 %v2821, %v2845
        %v2858 = vmul.f32 %v2822, %v2845
        %v2859 = vmul.f32 %v2823, %v2845
        %v2860 = vmul.f32 %v2824, %v2845
        %v2861 = vmul.f32 %v2825, %v2845
        %v2862 = vmul.f32 %v2826, %v2845
        %v2863 = vmul.f32 %v2827, %v2845
        %v2864 = vmul.f32 %v2828, %v2845
        %v2865 = vmul.f32 %v2829, %v2845
        %v2866 = vmul.f32 %v2830, %v2845
        %v2867 = vmul.f32 %v2831, %v2845
        %v2868 = vmul.f32 %v2832, %v2845
        %v2869 = vmul.f32 %v2833, %v2845
        %v2870 = vmul.f32 %v2834, %v2845
        %v2871 = vmul.f32 %v2835, %v2845
        %v2872 = vmul.f32 %v2836, %v2845
        %v2873 = vmul.f32 %v2837, %v2845
        %v2874 = vmul.f32 %v2838, %v2845
        %v2875 = vmul.f32 %v2839, %v2845
        %v2876 = vmul.f32 %v2840, %v2845
        %v2877 = vmul.f32 %v2841, %v2845
        %v2878 = vmul.f32 %v2842, %v2845
        %v2879 = vld [vmem:[%s3] sm:$0x1]
        %v2881 = vperm.slane %v2879, 0
        %v2883 = vadd.f32 %v2847, %v2881
        %v2884 = vadd.f32 %v2848, %v2881
        %v2885 = vadd.f32 %v2849, %v2881
        %v2886 = vadd.f32 %v2850, %v2881
        %v2887 = vadd.f32 %v2851, %v2881
        %v2888 = vadd.f32 %v2852, %v2881
        %v2889 = vadd.f32 %v2853, %v2881
        %v2890 = vadd.f32 %v2854, %v2881
        %v2891 = vadd.f32 %v2855, %v2881
        %v2892 = vadd.f32 %v2856, %v2881
        %v2893 = vadd.f32 %v2857, %v2881
        %v2894 = vadd.f32 %v2858, %v2881
        %v2895 = vadd.f32 %v2859, %v2881
        %v2896 = vadd.f32 %v2860, %v2881
        %v2897 = vadd.f32 %v2861, %v2881
        %v2898 = vadd.f32 %v2862, %v2881
        %v2899 = vadd.f32 %v2863, %v2881
        %v2900 = vadd.f32 %v2864, %v2881
        %v2901 = vadd.f32 %v2865, %v2881
        %v2902 = vadd.f32 %v2866, %v2881
        %v2903 = vadd.f32 %v2867, %v2881
        %v2904 = vadd.f32 %v2868, %v2881
        %v2905 = vadd.f32 %v2869, %v2881
        %v2906 = vadd.f32 %v2870, %v2881
        %v2907 = vadd.f32 %v2871, %v2881
        %v2908 = vadd.f32 %v2872, %v2881
        %v2909 = vadd.f32 %v2873, %v2881
        %v2910 = vadd.f32 %v2874, %v2881
        %v2911 = vadd.f32 %v2875, %v2881
        %v2912 = vadd.f32 %v2876, %v2881
        %v2913 = vadd.f32 %v2877, %v2881
        %v2914 = vadd.f32 %v2878, %v2881
        %vm2915 = vcmp.ge.f32.partialorder %v2883, 0.0
        %vm2916 = vcmp.ge.f32.partialorder %v2884, 0.0
        %vm2917 = vcmp.ge.f32.partialorder %v2885, 0.0
        %vm2918 = vcmp.ge.f32.partialorder %v2886, 0.0
        %vm2919 = vcmp.ge.f32.partialorder %v2887, 0.0
        %vm2920 = vcmp.ge.f32.partialorder %v2888, 0.0
        %vm2921 = vcmp.ge.f32.partialorder %v2889, 0.0
        %vm2922 = vcmp.ge.f32.partialorder %v2890, 0.0
        %vm2923 = vcmp.ge.f32.partialorder %v2891, 0.0
        %vm2924 = vcmp.ge.f32.partialorder %v2892, 0.0
        %vm2925 = vcmp.ge.f32.partialorder %v2893, 0.0
        %vm2926 = vcmp.ge.f32.partialorder %v2894, 0.0
        %vm2927 = vcmp.ge.f32.partialorder %v2895, 0.0
        %vm2928 = vcmp.ge.f32.partialorder %v2896, 0.0
        %vm2929 = vcmp.ge.f32.partialorder %v2897, 0.0
        %vm2930 = vcmp.ge.f32.partialorder %v2898, 0.0
        %vm2931 = vcmp.ge.f32.partialorder %v2899, 0.0
        %vm2932 = vcmp.ge.f32.partialorder %v2900, 0.0
        %vm2933 = vcmp.ge.f32.partialorder %v2901, 0.0
        %vm2934 = vcmp.ge.f32.partialorder %v2902, 0.0
        %vm2935 = vcmp.ge.f32.partialorder %v2903, 0.0
        %vm2936 = vcmp.ge.f32.partialorder %v2904, 0.0
        %vm2937 = vcmp.ge.f32.partialorder %v2905, 0.0
        %vm2938 = vcmp.ge.f32.partialorder %v2906, 0.0
        %vm2939 = vcmp.ge.f32.partialorder %v2907, 0.0
        %vm2940 = vcmp.ge.f32.partialorder %v2908, 0.0
        %vm2941 = vcmp.ge.f32.partialorder %v2909, 0.0
        %vm2942 = vcmp.ge.f32.partialorder %v2910, 0.0
        %vm2943 = vcmp.ge.f32.partialorder %v2911, 0.0
        %vm2944 = vcmp.ge.f32.partialorder %v2912, 0.0
        %vm2945 = vcmp.ge.f32.partialorder %v2913, 0.0
        %vm2946 = vcmp.ge.f32.partialorder %v2914, 0.0
        %v2947 = vmul.f32 %v2883, 0.1
        %v2948 = vmul.f32 %v2884, 0.1
        %v2949 = vmul.f32 %v2885, 0.1
        %v2950 = vmul.f32 %v2886, 0.1
        %v2951 = vmul.f32 %v2887, 0.1
        %v2952 = vmul.f32 %v2888, 0.1
        %v2953 = vmul.f32 %v2889, 0.1
        %v2954 = vmul.f32 %v2890, 0.1
        %v2955 = vmul.f32 %v2891, 0.1
        %v2956 = vmul.f32 %v2892, 0.1
        %v2957 = vmul.f32 %v2893, 0.1
        %v2958 = vmul.f32 %v2894, 0.1
        %v2959 = vmul.f32 %v2895, 0.1
        %v2960 = vmul.f32 %v2896, 0.1
        %v2961 = vmul.f32 %v2897, 0.1
        %v2962 = vmul.f32 %v2898, 0.1
        %v2963 = vmul.f32 %v2899, 0.1
        %v2964 = vmul.f32 %v2900, 0.1
        %v2965 = vmul.f32 %v2901, 0.1
        %v2966 = vmul.f32 %v2902, 0.1
        %v2967 = vmul.f32 %v2903, 0.1
        %v2968 = vmul.f32 %v2904, 0.1
        %v2969 = vmul.f32 %v2905, 0.1
        %v2970 = vmul.f32 %v2906, 0.1
        %v2971 = vmul.f32 %v2907, 0.1
        %v2972 = vmul.f32 %v2908, 0.1
        %v2973 = vmul.f32 %v2909, 0.1
        %v2974 = vmul.f32 %v2910, 0.1
        %v2975 = vmul.f32 %v2911, 0.1
        %v2976 = vmul.f32 %v2912, 0.1
        %v2977 = vmul.f32 %v2913, 0.1
        %v2978 = vmul.f32 %v2914, 0.1
        %v2979 = vsel %vm2915, %v2883, %v2947
        %v2980 = vsel %vm2916, %v2884, %v2948
        %v2981 = vsel %vm2917, %v2885, %v2949
        %v2982 = vsel %vm2918, %v2886, %v2950
        %v2983 = vsel %vm2919, %v2887, %v2951
        %v2984 = vsel %vm2920, %v2888, %v2952
        %v2985 = vsel %vm2921, %v2889, %v2953
        %v2986 = vsel %vm2922, %v2890, %v2954
        %v2987 = vsel %vm2923, %v2891, %v2955
        %v2988 = vsel %vm2924, %v2892, %v2956
        %v2989 = vsel %vm2925, %v2893, %v2957
        %v2990 = vsel %vm2926, %v2894, %v2958
        %v2991 = vsel %vm2927, %v2895, %v2959
        %v2992 = vsel %vm2928, %v2896, %v2960
        %v2993 = vsel %vm2929, %v2897, %v2961
        %v2994 = vsel %vm2930, %v2898, %v2962
        %v2995 = vsel %vm2931, %v2899, %v2963
        %v2996 = vsel %vm2932, %v2900, %v2964
        %v2997 = vsel %vm2933, %v2901, %v2965
        %v2998 = vsel %vm2934, %v2902, %v2966
        %v2999 = vsel %vm2935, %v2903, %v2967
        %v3000 = vsel %vm2936, %v2904, %v2968
        %v3001 = vsel %vm2937, %v2905, %v2969
        %v3002 = vsel %vm2938, %v2906, %v2970
        %v3003 = vsel %vm2939, %v2907, %v2971
        %v3004 = vsel %vm2940, %v2908, %v2972
        %v3005 = vsel %vm2941, %v2909, %v2973
        %v3006 = vsel %vm2942, %v2910, %v2974
        %v3007 = vsel %vm2943, %v2911, %v2975
        %v3008 = vsel %vm2944, %v2912, %v2976
        %v3009 = vsel %vm2945, %v2913, %v2977
        %v3010 = vsel %vm2946, %v2914, %v2978
        %3011 = vst [vmem:[%s521 + $0x1] sm:$0xff] %v2979
        %3012 = vst [vmem:[%s521 + $0x9] sm:$0xff] %v2980
        %3013 = vst [vmem:[%s521 + $0x19] sm:$0xff] %v2981
        %3014 = vst [vmem:[%s521 + $0x21] sm:$0xff] %v2982
        %3015 = vst [vmem:[%s521 + $0x31] sm:$0xff] %v2983
        %3016 = vst [vmem:[%s521 + $0x39] sm:$0xff] %v2984
        %3017 = vst [vmem:[%s521 + $0x49] sm:$0xff] %v2985
        %3018 = vst [vmem:[%s521 + $0x51] sm:$0xff] %v2986
        %3019 = vst [vmem:[%s521 + $0x61] sm:$0xff] %v2987
        %3020 = vst [vmem:[%s521 + $0x69] sm:$0xff] %v2988
        %3021 = vst [vmem:[%s521 + $0x79] sm:$0xff] %v2989
        %3022 = vst [vmem:[%s521 + $0x81] sm:$0xff] %v2990
        %3023 = vst [vmem:[%s521 + $0x91] sm:$0xff] %v2991
        %3024 = vst [vmem:[%s521 + $0x99] sm:$0xff] %v2992
        %3025 = vst [vmem:[%s521 + $0xa9] sm:$0xff] %v2993
        %3026 = vst [vmem:[%s521 + $0xb1] sm:$0xff] %v2994
        %3027 = vst [vmem:[%s521 + $0xc1] sm:$0xff] %v2995
        %3028 = vst [vmem:[%s521 + $0xc9] sm:$0xff] %v2996
        %3029 = vst [vmem:[%s521 + $0xd9] sm:$0xff] %v2997
        %3030 = vst [vmem:[%s521 + $0xe1] sm:$0xff] %v2998
        %3031 = vst [vmem:[%s521 + $0xf1] sm:$0xff] %v2999
        %3032 = vst [vmem:[%s521 + $0xf9] sm:$0xff] %v3000
        %3033 = vst [vmem:[%s521 + $0x109] sm:$0xff] %v3001
        %3034 = vst [vmem:[%s521 + $0x111] sm:$0xff] %v3002
        %3035 = vst [vmem:[%s521 + $0x121] sm:$0xff] %v3003
        %3036 = vst [vmem:[%s521 + $0x129] sm:$0xff] %v3004
        %3037 = vst [vmem:[%s521 + $0x139] sm:$0xff] %v3005
        %3038 = vst [vmem:[%s521 + $0x141] sm:$0xff] %v3006
        %3039 = vst [vmem:[%s521 + $0x151] sm:$0xff] %v3007
        %3040 = vst [vmem:[%s521 + $0x159] sm:$0xff] %v3008
        %3041 = vst [vmem:[%s521 + $0x169] sm:$0xff] %v3009
        %3042 = vst [vmem:[%s521 + $0x171] sm:$0xff] %v3010
        %v3043 = vld [vmem:[#allocation2] sm:$0xff]
        %v3044 = vld [vmem:[#allocation2 + $0x8] sm:$0xff]
        %v3045 = vld [vmem:[#allocation2 + $0x18] sm:$0xff]
        %v3046 = vld [vmem:[#allocation2 + $0x20] sm:$0xff]
        %v3047 = vld [vmem:[#allocation2 + $0x30] sm:$0xff]
        %v3048 = vld [vmem:[#allocation2 + $0x38] sm:$0xff]
        %v3049 = vld [vmem:[#allocation2 + $0x48] sm:$0xff]
        %v3050 = vld [vmem:[#allocation2 + $0x50] sm:$0xff]
        %v3051 = vld [vmem:[#allocation2 + $0x60] sm:$0xff]
        %v3052 = vld [vmem:[#allocation2 + $0x68] sm:$0xff]
        %v3053 = vld [vmem:[#allocation2 + $0x78] sm:$0xff]
        %v3054 = vld [vmem:[#allocation2 + $0x80] sm:$0xff]
        %v3055 = vld [vmem:[#allocation2 + $0x90] sm:$0xff]
        %v3056 = vld [vmem:[#allocation2 + $0x98] sm:$0xff]
        %v3057 = vld [vmem:[#allocation2 + $0xa8] sm:$0xff]
        %v3058 = vld [vmem:[#allocation2 + $0xb0] sm:$0xff]
        %v3059 = vld [vmem:[#allocation2 + $0xc0] sm:$0xff]
        %v3060 = vld [vmem:[#allocation2 + $0xc8] sm:$0xff]
        %v3061 = vld [vmem:[#allocation2 + $0xd8] sm:$0xff]
        %v3062 = vld [vmem:[#allocation2 + $0xe0] sm:$0xff]
        %v3063 = vld [vmem:[#allocation2 + $0xf0] sm:$0xff]
        %v3064 = vld [vmem:[#allocation2 + $0xf8] sm:$0xff]
        %v3065 = vld [vmem:[#allocation2 + $0x108] sm:$0xff]
        %v3066 = vld [vmem:[#allocation2 + $0x110] sm:$0xff]
        %v3067 = vld [vmem:[#allocation2 + $0x120] sm:$0xff]
        %v3068 = vld [vmem:[#allocation2 + $0x128] sm:$0xff]
        %v3069 = vld [vmem:[#allocation2 + $0x138] sm:$0xff]
        %v3070 = vld [vmem:[#allocation2 + $0x140] sm:$0xff]
        %v3071 = vld [vmem:[#allocation2 + $0x150] sm:$0xff]
        %v3072 = vld [vmem:[#allocation2 + $0x158] sm:$0xff]
        %v3073 = vld [vmem:[#allocation2 + $0x168] sm:$0xff]
        %v3074 = vld [vmem:[#allocation2 + $0x170] sm:$0xff]
        %v3075 = vpack.c.bf16 %v3044, %v3043
        %v3076 = vpack.c.bf16 %v3046, %v3045
        %v3077 = vpack.c.bf16 %v3048, %v3047
        %v3078 = vpack.c.bf16 %v3050, %v3049
        %v3079 = vpack.c.bf16 %v3052, %v3051
        %v3080 = vpack.c.bf16 %v3054, %v3053
        %v3081 = vpack.c.bf16 %v3056, %v3055
        %v3082 = vpack.c.bf16 %v3058, %v3057
        %v3083 = vpack.c.bf16 %v3060, %v3059
        %v3084 = vpack.c.bf16 %v3062, %v3061
        %v3085 = vpack.c.bf16 %v3064, %v3063
        %v3086 = vpack.c.bf16 %v3066, %v3065
        %v3087 = vpack.c.bf16 %v3068, %v3067
        %v3088 = vpack.c.bf16 %v3070, %v3069
        %v3089 = vpack.c.bf16 %v3072, %v3071
        %v3090 = vpack.c.bf16 %v3074, %v3073
        %v3091 = vld [vmem:[#allocation8] sm:$0xf]
        %v3092 = vld [vmem:[#allocation8 + $0x4] sm:$0xf]
        %v3093 = vld [vmem:[#allocation8 + $0x8] sm:$0xf]
        %v3094 = vld [vmem:[#allocation8 + $0xc] sm:$0xf]
        %v3095 = vld [vmem:[#allocation8 + $0x10] sm:$0xf]
        %v3096 = vld [vmem:[#allocation8 + $0x14] sm:$0xf]
        %v3097 = vld [vmem:[#allocation8 + $0x18] sm:$0xf]
        %v3098 = vld [vmem:[#allocation8 + $0x1c] sm:$0xf]
        %v3099 = vld [vmem:[#allocation8 + $0x20] sm:$0xf]
        %v3100 = vld [vmem:[#allocation8 + $0x24] sm:$0xf]
        %v3101 = vld [vmem:[#allocation8 + $0x28] sm:$0xf]
        %v3102 = vld [vmem:[#allocation8 + $0x2c] sm:$0xf]
        %v3103 = vld [vmem:[#allocation8 + $0x30] sm:$0xf]
        %v3104 = vld [vmem:[#allocation8 + $0x34] sm:$0xf]
        %v3105 = vld [vmem:[#allocation8 + $0x38] sm:$0xf]
        %v3106 = vld [vmem:[#allocation8 + $0x3c] sm:$0xf]
        %v3107 = vld [vmem:[#allocation2 + $0x1] sm:$0xff]
        %v3108 = vld [vmem:[#allocation2 + $0x9] sm:$0xff]
        %v3109 = vld [vmem:[#allocation2 + $0x19] sm:$0xff]
        %v3110 = vld [vmem:[#allocation2 + $0x21] sm:$0xff]
        %v3111 = vld [vmem:[#allocation2 + $0x31] sm:$0xff]
        %v3112 = vld [vmem:[#allocation2 + $0x39] sm:$0xff]
        %v3113 = vld [vmem:[#allocation2 + $0x49] sm:$0xff]
        %v3114 = vld [vmem:[#allocation2 + $0x51] sm:$0xff]
        %v3115 = vld [vmem:[#allocation2 + $0x61] sm:$0xff]
        %v3116 = vld [vmem:[#allocation2 + $0x69] sm:$0xff]
        %v3117 = vld [vmem:[#allocation2 + $0x79] sm:$0xff]
        %v3118 = vld [vmem:[#allocation2 + $0x81] sm:$0xff]
        %v3119 = vld [vmem:[#allocation2 + $0x91] sm:$0xff]
        %v3120 = vld [vmem:[#allocation2 + $0x99] sm:$0xff]
        %v3121 = vld [vmem:[#allocation2 + $0xa9] sm:$0xff]
        %v3122 = vld [vmem:[#allocation2 + $0xb1] sm:$0xff]
        %v3123 = vld [vmem:[#allocation2 + $0xc1] sm:$0xff]
        %v3124 = vld [vmem:[#allocation2 + $0xc9] sm:$0xff]
        %v3125 = vld [vmem:[#allocation2 + $0xd9] sm:$0xff]
        %v3126 = vld [vmem:[#allocation2 + $0xe1] sm:$0xff]
        %v3127 = vld [vmem:[#allocation2 + $0xf1] sm:$0xff]
        %v3128 = vld [vmem:[#allocation2 + $0xf9] sm:$0xff]
        %v3129 = vld [vmem:[#allocation2 + $0x109] sm:$0xff]
        %v3130 = vld [vmem:[#allocation2 + $0x111] sm:$0xff]
        %v3131 = vld [vmem:[#allocation2 + $0x121] sm:$0xff]
        %v3132 = vld [vmem:[#allocation2 + $0x129] sm:$0xff]
        %v3133 = vld [vmem:[#allocation2 + $0x139] sm:$0xff]
        %v3134 = vld [vmem:[#allocation2 + $0x141] sm:$0xff]
        %v3135 = vld [vmem:[#allocation2 + $0x151] sm:$0xff]
        %v3136 = vld [vmem:[#allocation2 + $0x159] sm:$0xff]
        %v3137 = vld [vmem:[#allocation2 + $0x169] sm:$0xff]
        %v3138 = vld [vmem:[#allocation2 + $0x171] sm:$0xff]
        %v3139 = vpack.c.bf16 %v3108, %v3107
        %v3140 = vpack.c.bf16 %v3110, %v3109
        %v3141 = vpack.c.bf16 %v3112, %v3111
        %v3142 = vpack.c.bf16 %v3114, %v3113
        %v3143 = vpack.c.bf16 %v3116, %v3115
        %v3144 = vpack.c.bf16 %v3118, %v3117
        %v3145 = vpack.c.bf16 %v3120, %v3119
        %v3146 = vpack.c.bf16 %v3122, %v3121
        %v3147 = vpack.c.bf16 %v3124, %v3123
        %v3148 = vpack.c.bf16 %v3126, %v3125
        %v3149 = vpack.c.bf16 %v3128, %v3127
        %v3150 = vpack.c.bf16 %v3130, %v3129
        %v3151 = vpack.c.bf16 %v3132, %v3131
        %v3152 = vpack.c.bf16 %v3134, %v3133
        %v3153 = vpack.c.bf16 %v3136, %v3135
        %v3154 = vpack.c.bf16 %v3138, %v3137
        %s3155 = scalar_lea.vmem [#allocation8], 64
        %v3156 = vld [vmem:[%s3155] sm:$0xf]
        %v3157 = vld [vmem:[%s3155 + $0x4] sm:$0xf]
        %v3158 = vld [vmem:[%s3155 + $0x8] sm:$0xf]
        %v3159 = vld [vmem:[%s3155 + $0xc] sm:$0xf]
        %v3160 = vld [vmem:[%s3155 + $0x10] sm:$0xf]
        %v3161 = vld [vmem:[%s3155 + $0x14] sm:$0xf]
        %v3162 = vld [vmem:[%s3155 + $0x18] sm:$0xf]
        %v3163 = vld [vmem:[%s3155 + $0x1c] sm:$0xf]
        %v3164 = vld [vmem:[%s3155 + $0x20] sm:$0xf]
        %v3165 = vld [vmem:[%s3155 + $0x24] sm:$0xf]
        %v3166 = vld [vmem:[%s3155 + $0x28] sm:$0xf]
        %v3167 = vld [vmem:[%s3155 + $0x2c] sm:$0xf]
        %v3168 = vld [vmem:[%s3155 + $0x30] sm:$0xf]
        %v3169 = vld [vmem:[%s3155 + $0x34] sm:$0xf]
        %v3170 = vld [vmem:[%s3155 + $0x38] sm:$0xf]
        %v3171 = vld [vmem:[%s3155 + $0x3c] sm:$0xf]
        %v3188 = vunpack.c.l.b16 %v3156
        %v3189 = vunpack.c.l.b16 %v3157
        %v3190 = vunpack.c.l.b16 %v3158
        %v3191 = vunpack.c.l.b16 %v3159
        %v3192 = vunpack.c.l.b16 %v3160
        %v3193 = vunpack.c.l.b16 %v3161
        %v3194 = vunpack.c.l.b16 %v3162
        %v3195 = vunpack.c.l.b16 %v3163
        %v3196 = vunpack.c.l.b16 %v3164
        %v3197 = vunpack.c.l.b16 %v3165
        %v3198 = vunpack.c.l.b16 %v3166
        %v3199 = vunpack.c.l.b16 %v3167
        %v3200 = vunpack.c.l.b16 %v3168
        %v3201 = vunpack.c.l.b16 %v3169
        %v3202 = vunpack.c.l.b16 %v3170
        %v3203 = vunpack.c.l.b16 %v3171
        %v3204 = vpack.c.b16 %v3189, %v3188
        %v3205 = vpack.c.b16 %v3191, %v3190
        %v3206 = vpack.c.b16 %v3193, %v3192
        %v3207 = vpack.c.b16 %v3195, %v3194
        %v3208 = vpack.c.b16 %v3197, %v3196
        %v3209 = vpack.c.b16 %v3199, %v3198
        %v3210 = vpack.c.b16 %v3201, %v3200
        %v3211 = vpack.c.b16 %v3203, %v3202
        %3220 = vmatpush.bf16.msra.mxu0 %v3211
        %3221 = vmatpush.bf16.msra.mxu0 %v3210
        %3222 = vmatpush.bf16.msra.mxu0 %v3209
        %3223 = vmatpush.bf16.msra.mxu0 %v3208
        %3224 = vmatpush.bf16.msra.mxu0 %v3207
        %3225 = vmatpush.bf16.msra.mxu0 %v3206
        %3226 = vmatpush.bf16.msra.mxu0 %v3205
        %3227 = vmatpush.bf16.msra.mxu0 %v3204
        %3228 = vmatmul.bf16.gmra.mxu0 %v3139
        %v3229 = vpop.f32.mrf.mxu0
        %v3230 = vadd.f32 0.0, %v3229
        %v3231 = vpop.f32.mrf.mxu0
        %v3232 = vadd.f32 0.0, %v3231
        %3233 = vmatmul.bf16.gmra.mxu0 %v3140
        %v3234 = vpop.f32.mrf.mxu0
        %v3235 = vadd.f32 0.0, %v3234
        %v3236 = vpop.f32.mrf.mxu0
        %v3237 = vadd.f32 0.0, %v3236
        %3238 = vmatmul.bf16.gmra.mxu0 %v3141
        %v3239 = vpop.f32.mrf.mxu0
        %v3240 = vadd.f32 0.0, %v3239
        %v3241 = vpop.f32.mrf.mxu0
        %v3242 = vadd.f32 0.0, %v3241
        %3243 = vmatmul.bf16.gmra.mxu0 %v3142
        %v3244 = vpop.f32.mrf.mxu0
        %v3245 = vadd.f32 0.0, %v3244
        %v3246 = vpop.f32.mrf.mxu0
        %v3247 = vadd.f32 0.0, %v3246
        %3248 = vmatmul.bf16.gmra.mxu0 %v3143
        %v3249 = vpop.f32.mrf.mxu0
        %v3250 = vadd.f32 0.0, %v3249
        %v3251 = vpop.f32.mrf.mxu0
        %v3252 = vadd.f32 0.0, %v3251
        %3253 = vmatmul.bf16.gmra.mxu0 %v3144
        %v3254 = vpop.f32.mrf.mxu0
        %v3255 = vadd.f32 0.0, %v3254
        %v3256 = vpop.f32.mrf.mxu0
        %v3257 = vadd.f32 0.0, %v3256
        %3258 = vmatmul.bf16.gmra.mxu0 %v3145
        %v3259 = vpop.f32.mrf.mxu0
        %v3260 = vadd.f32 0.0, %v3259
        %v3261 = vpop.f32.mrf.mxu0
        %v3262 = vadd.f32 0.0, %v3261
        %3263 = vmatmul.bf16.gmra.mxu0 %v3146
        %v3264 = vpop.f32.mrf.mxu0
        %v3265 = vadd.f32 0.0, %v3264
        %v3266 = vpop.f32.mrf.mxu0
        %v3267 = vadd.f32 0.0, %v3266
        %3268 = vmatmul.bf16.gmra.mxu0 %v3147
        %v3269 = vpop.f32.mrf.mxu0
        %v3270 = vadd.f32 0.0, %v3269
        %v3271 = vpop.f32.mrf.mxu0
        %v3272 = vadd.f32 0.0, %v3271
        %3273 = vmatmul.bf16.gmra.mxu0 %v3148
        %v3274 = vpop.f32.mrf.mxu0
        %v3275 = vadd.f32 0.0, %v3274
        %v3276 = vpop.f32.mrf.mxu0
        %v3277 = vadd.f32 0.0, %v3276
        %3278 = vmatmul.bf16.gmra.mxu0 %v3149
        %v3279 = vpop.f32.mrf.mxu0
        %v3280 = vadd.f32 0.0, %v3279
        %v3281 = vpop.f32.mrf.mxu0
        %v3282 = vadd.f32 0.0, %v3281
        %3283 = vmatmul.bf16.gmra.mxu0 %v3150
        %v3284 = vpop.f32.mrf.mxu0
        %v3285 = vadd.f32 0.0, %v3284
        %v3286 = vpop.f32.mrf.mxu0
        %v3287 = vadd.f32 0.0, %v3286
        %3288 = vmatmul.bf16.gmra.mxu0 %v3151
        %v3289 = vpop.f32.mrf.mxu0
        %v3290 = vadd.f32 0.0, %v3289
        %v3291 = vpop.f32.mrf.mxu0
        %v3292 = vadd.f32 0.0, %v3291
        %3293 = vmatmul.bf16.gmra.mxu0 %v3152
        %v3294 = vpop.f32.mrf.mxu0
        %v3295 = vadd.f32 0.0, %v3294
        %v3296 = vpop.f32.mrf.mxu0
        %v3297 = vadd.f32 0.0, %v3296
        %3298 = vmatmul.bf16.gmra.mxu0 %v3153
        %v3299 = vpop.f32.mrf.mxu0
        %v3300 = vadd.f32 0.0, %v3299
        %v3301 = vpop.f32.mrf.mxu0
        %v3302 = vadd.f32 0.0, %v3301
        %3303 = vmatmul.bf16.gmra.mxu0 %v3154
        %v3304 = vpop.f32.mrf.mxu0
        %v3305 = vadd.f32 0.0, %v3304
        %v3306 = vpop.f32.mrf.mxu0
        %v3307 = vadd.f32 0.0, %v3306
        %3308 = vdwg.mxu0
        %v3325 = vunpack.c.l.b16 %v3091
        %v3326 = vunpack.c.l.b16 %v3092
        %v3327 = vunpack.c.l.b16 %v3093
        %v3328 = vunpack.c.l.b16 %v3094
        %v3329 = vunpack.c.l.b16 %v3095
        %v3330 = vunpack.c.l.b16 %v3096
        %v3331 = vunpack.c.l.b16 %v3097
        %v3332 = vunpack.c.l.b16 %v3098
        %v3333 = vunpack.c.l.b16 %v3099
        %v3334 = vunpack.c.l.b16 %v3100
        %v3335 = vunpack.c.l.b16 %v3101
        %v3336 = vunpack.c.l.b16 %v3102
        %v3337 = vunpack.c.l.b16 %v3103
        %v3338 = vunpack.c.l.b16 %v3104
        %v3339 = vunpack.c.l.b16 %v3105
        %v3340 = vunpack.c.l.b16 %v3106
        %v3341 = vpack.c.b16 %v3326, %v3325
        %v3342 = vpack.c.b16 %v3328, %v3327
        %v3343 = vpack.c.b16 %v3330, %v3329
        %v3344 = vpack.c.b16 %v3332, %v3331
        %v3345 = vpack.c.b16 %v3334, %v3333
        %v3346 = vpack.c.b16 %v3336, %v3335
        %v3347 = vpack.c.b16 %v3338, %v3337
        %v3348 = vpack.c.b16 %v3340, %v3339
        %3357 = vmatpush.bf16.msra.mxu0 %v3348
        %3358 = vmatpush.bf16.msra.mxu0 %v3347
        %3359 = vmatpush.bf16.msra.mxu0 %v3346
        %3360 = vmatpush.bf16.msra.mxu0 %v3345
        %3361 = vmatpush.bf16.msra.mxu0 %v3344
        %3362 = vmatpush.bf16.msra.mxu0 %v3343
        %3363 = vmatpush.bf16.msra.mxu0 %v3342
        %3364 = vmatpush.bf16.msra.mxu0 %v3341
        %3365 = vmatmul.bf16.gmra.mxu0 %v3075
        %v3366 = vpop.f32.mrf.mxu0
        %v3367 = vadd.f32 %v3230, %v3366
        %v3368 = vpop.f32.mrf.mxu0
        %v3369 = vadd.f32 %v3232, %v3368
        %3370 = vmatmul.bf16.gmra.mxu0 %v3076
        %v3371 = vpop.f32.mrf.mxu0
        %v3372 = vadd.f32 %v3235, %v3371
        %v3373 = vpop.f32.mrf.mxu0
        %v3374 = vadd.f32 %v3237, %v3373
        %3375 = vmatmul.bf16.gmra.mxu0 %v3077
        %v3376 = vpop.f32.mrf.mxu0
        %v3377 = vadd.f32 %v3240, %v3376
        %v3378 = vpop.f32.mrf.mxu0
        %v3379 = vadd.f32 %v3242, %v3378
        %3380 = vmatmul.bf16.gmra.mxu0 %v3078
        %v3381 = vpop.f32.mrf.mxu0
        %v3382 = vadd.f32 %v3245, %v3381
        %v3383 = vpop.f32.mrf.mxu0
        %v3384 = vadd.f32 %v3247, %v3383
        %3385 = vmatmul.bf16.gmra.mxu0 %v3079
        %v3386 = vpop.f32.mrf.mxu0
        %v3387 = vadd.f32 %v3250, %v3386
        %v3388 = vpop.f32.mrf.mxu0
        %v3389 = vadd.f32 %v3252, %v3388
        %3390 = vmatmul.bf16.gmra.mxu0 %v3080
        %v3391 = vpop.f32.mrf.mxu0
        %v3392 = vadd.f32 %v3255, %v3391
        %v3393 = vpop.f32.mrf.mxu0
        %v3394 = vadd.f32 %v3257, %v3393
        %3395 = vmatmul.bf16.gmra.mxu0 %v3081
        %v3396 = vpop.f32.mrf.mxu0
        %v3397 = vadd.f32 %v3260, %v3396
        %v3398 = vpop.f32.mrf.mxu0
        %v3399 = vadd.f32 %v3262, %v3398
        %3400 = vmatmul.bf16.gmra.mxu0 %v3082
        %v3401 = vpop.f32.mrf.mxu0
        %v3402 = vadd.f32 %v3265, %v3401
        %v3403 = vpop.f32.mrf.mxu0
        %v3404 = vadd.f32 %v3267, %v3403
        %3405 = vmatmul.bf16.gmra.mxu0 %v3083
        %v3406 = vpop.f32.mrf.mxu0
        %v3407 = vadd.f32 %v3270, %v3406
        %v3408 = vpop.f32.mrf.mxu0
        %v3409 = vadd.f32 %v3272, %v3408
        %3410 = vmatmul.bf16.gmra.mxu0 %v3084
        %v3411 = vpop.f32.mrf.mxu0
        %v3412 = vadd.f32 %v3275, %v3411
        %v3413 = vpop.f32.mrf.mxu0
        %v3414 = vadd.f32 %v3277, %v3413
        %3415 = vmatmul.bf16.gmra.mxu0 %v3085
        %v3416 = vpop.f32.mrf.mxu0
        %v3417 = vadd.f32 %v3280, %v3416
        %v3418 = vpop.f32.mrf.mxu0
        %v3419 = vadd.f32 %v3282, %v3418
        %3420 = vmatmul.bf16.gmra.mxu0 %v3086
        %v3421 = vpop.f32.mrf.mxu0
        %v3422 = vadd.f32 %v3285, %v3421
        %v3423 = vpop.f32.mrf.mxu0
        %v3424 = vadd.f32 %v3287, %v3423
        %3425 = vmatmul.bf16.gmra.mxu0 %v3087
        %v3426 = vpop.f32.mrf.mxu0
        %v3427 = vadd.f32 %v3290, %v3426
        %v3428 = vpop.f32.mrf.mxu0
        %v3429 = vadd.f32 %v3292, %v3428
        %3430 = vmatmul.bf16.gmra.mxu0 %v3088
        %v3431 = vpop.f32.mrf.mxu0
        %v3432 = vadd.f32 %v3295, %v3431
        %v3433 = vpop.f32.mrf.mxu0
        %v3434 = vadd.f32 %v3297, %v3433
        %3435 = vmatmul.bf16.gmra.mxu0 %v3089
        %v3436 = vpop.f32.mrf.mxu0
        %v3437 = vadd.f32 %v3300, %v3436
        %v3438 = vpop.f32.mrf.mxu0
        %v3439 = vadd.f32 %v3302, %v3438
        %3440 = vmatmul.bf16.gmra.mxu0 %v3090
        %v3441 = vpop.f32.mrf.mxu0
        %v3442 = vadd.f32 %v3305, %v3441
        %v3443 = vpop.f32.mrf.mxu0
        %v3444 = vadd.f32 %v3307, %v3443
        %3445 = vdwg.mxu0
        %v3446 = vld [vmem:[#allocation2 + $0x2] sm:$0xff]
        %v3447 = vld [vmem:[#allocation2 + $0xa] sm:$0xff]
        %v3448 = vld [vmem:[#allocation2 + $0x1a] sm:$0xff]
        %v3449 = vld [vmem:[#allocation2 + $0x22] sm:$0xff]
        %v3450 = vld [vmem:[#allocation2 + $0x32] sm:$0xff]
        %v3451 = vld [vmem:[#allocation2 + $0x3a] sm:$0xff]
        %v3452 = vld [vmem:[#allocation2 + $0x4a] sm:$0xff]
        %v3453 = vld [vmem:[#allocation2 + $0x52] sm:$0xff]
        %v3454 = vld [vmem:[#allocation2 + $0x62] sm:$0xff]
        %v3455 = vld [vmem:[#allocation2 + $0x6a] sm:$0xff]
        %v3456 = vld [vmem:[#allocation2 + $0x7a] sm:$0xff]
        %v3457 = vld [vmem:[#allocation2 + $0x82] sm:$0xff]
        %v3458 = vld [vmem:[#allocation2 + $0x92] sm:$0xff]
        %v3459 = vld [vmem:[#allocation2 + $0x9a] sm:$0xff]
        %v3460 = vld [vmem:[#allocation2 + $0xaa] sm:$0xff]
        %v3461 = vld [vmem:[#allocation2 + $0xb2] sm:$0xff]
        %v3462 = vld [vmem:[#allocation2 + $0xc2] sm:$0xff]
        %v3463 = vld [vmem:[#allocation2 + $0xca] sm:$0xff]
        %v3464 = vld [vmem:[#allocation2 + $0xda] sm:$0xff]
        %v3465 = vld [vmem:[#allocation2 + $0xe2] sm:$0xff]
        %v3466 = vld [vmem:[#allocation2 + $0xf2] sm:$0xff]
        %v3467 = vld [vmem:[#allocation2 + $0xfa] sm:$0xff]
        %v3468 = vld [vmem:[#allocation2 + $0x10a] sm:$0xff]
        %v3469 = vld [vmem:[#allocation2 + $0x112] sm:$0xff]
        %v3470 = vld [vmem:[#allocation2 + $0x122] sm:$0xff]
        %v3471 = vld [vmem:[#allocation2 + $0x12a] sm:$0xff]
        %v3472 = vld [vmem:[#allocation2 + $0x13a] sm:$0xff]
        %v3473 = vld [vmem:[#allocation2 + $0x142] sm:$0xff]
        %v3474 = vld [vmem:[#allocation2 + $0x152] sm:$0xff]
        %v3475 = vld [vmem:[#allocation2 + $0x15a] sm:$0xff]
        %v3476 = vld [vmem:[#allocation2 + $0x16a] sm:$0xff]
        %v3477 = vld [vmem:[#allocation2 + $0x172] sm:$0xff]
        %v3478 = vpack.c.bf16 %v3447, %v3446
        %v3479 = vpack.c.bf16 %v3449, %v3448
        %v3480 = vpack.c.bf16 %v3451, %v3450
        %v3481 = vpack.c.bf16 %v3453, %v3452
        %v3482 = vpack.c.bf16 %v3455, %v3454
        %v3483 = vpack.c.bf16 %v3457, %v3456
        %v3484 = vpack.c.bf16 %v3459, %v3458
        %v3485 = vpack.c.bf16 %v3461, %v3460
        %v3486 = vpack.c.bf16 %v3463, %v3462
        %v3487 = vpack.c.bf16 %v3465, %v3464
        %v3488 = vpack.c.bf16 %v3467, %v3466
        %v3489 = vpack.c.bf16 %v3469, %v3468
        %v3490 = vpack.c.bf16 %v3471, %v3470
        %v3491 = vpack.c.bf16 %v3473, %v3472
        %v3492 = vpack.c.bf16 %v3475, %v3474
        %v3493 = vpack.c.bf16 %v3477, %v3476
        %s3494 = scalar_lea.vmem [#allocation8], 128
        %v3495 = vld [vmem:[%s3494] sm:$0xf]
        %v3496 = vld [vmem:[%s3494 + $0x4] sm:$0xf]
        %v3497 = vld [vmem:[%s3494 + $0x8] sm:$0xf]
        %v3498 = vld [vmem:[%s3494 + $0xc] sm:$0xf]
        %v3499 = vld [vmem:[%s3494 + $0x10] sm:$0xf]
        %v3500 = vld [vmem:[%s3494 + $0x14] sm:$0xf]
        %v3501 = vld [vmem:[%s3494 + $0x18] sm:$0xf]
        %v3502 = vld [vmem:[%s3494 + $0x1c] sm:$0xf]
        %v3503 = vld [vmem:[%s3494 + $0x20] sm:$0xf]
        %v3504 = vld [vmem:[%s3494 + $0x24] sm:$0xf]
        %v3505 = vld [vmem:[%s3494 + $0x28] sm:$0xf]
        %v3506 = vld [vmem:[%s3494 + $0x2c] sm:$0xf]
        %v3507 = vld [vmem:[%s3494 + $0x30] sm:$0xf]
        %v3508 = vld [vmem:[%s3494 + $0x34] sm:$0xf]
        %v3509 = vld [vmem:[%s3494 + $0x38] sm:$0xf]
        %v3510 = vld [vmem:[%s3494 + $0x3c] sm:$0xf]
        %v3527 = vunpack.c.l.b16 %v3495
        %v3528 = vunpack.c.l.b16 %v3496
        %v3529 = vunpack.c.l.b16 %v3497
        %v3530 = vunpack.c.l.b16 %v3498
        %v3531 = vunpack.c.l.b16 %v3499
        %v3532 = vunpack.c.l.b16 %v3500
        %v3533 = vunpack.c.l.b16 %v3501
        %v3534 = vunpack.c.l.b16 %v3502
        %v3535 = vunpack.c.l.b16 %v3503
        %v3536 = vunpack.c.l.b16 %v3504
        %v3537 = vunpack.c.l.b16 %v3505
        %v3538 = vunpack.c.l.b16 %v3506
        %v3539 = vunpack.c.l.b16 %v3507
        %v3540 = vunpack.c.l.b16 %v3508
        %v3541 = vunpack.c.l.b16 %v3509
        %v3542 = vunpack.c.l.b16 %v3510
        %v3543 = vpack.c.b16 %v3528, %v3527
        %v3544 = vpack.c.b16 %v3530, %v3529
        %v3545 = vpack.c.b16 %v3532, %v3531
        %v3546 = vpack.c.b16 %v3534, %v3533
        %v3547 = vpack.c.b16 %v3536, %v3535
        %v3548 = vpack.c.b16 %v3538, %v3537
        %v3549 = vpack.c.b16 %v3540, %v3539
        %v3550 = vpack.c.b16 %v3542, %v3541
        %3559 = vmatpush.bf16.msra.mxu0 %v3550
        %3560 = vmatpush.bf16.msra.mxu0 %v3549
        %3561 = vmatpush.bf16.msra.mxu0 %v3548
        %3562 = vmatpush.bf16.msra.mxu0 %v3547
        %3563 = vmatpush.bf16.msra.mxu0 %v3546
        %3564 = vmatpush.bf16.msra.mxu0 %v3545
        %3565 = vmatpush.bf16.msra.mxu0 %v3544
        %3566 = vmatpush.bf16.msra.mxu0 %v3543
        %3567 = vmatmul.bf16.gmra.mxu0 %v3478
        %v3568 = vpop.f32.mrf.mxu0
        %v3569 = vadd.f32 0.0, %v3568
        %v3570 = vpop.f32.mrf.mxu0
        %v3571 = vadd.f32 0.0, %v3570
        %3572 = vmatmul.bf16.gmra.mxu0 %v3479
        %v3573 = vpop.f32.mrf.mxu0
        %v3574 = vadd.f32 0.0, %v3573
        %v3575 = vpop.f32.mrf.mxu0
        %v3576 = vadd.f32 0.0, %v3575
        %3577 = vmatmul.bf16.gmra.mxu0 %v3480
        %v3578 = vpop.f32.mrf.mxu0
        %v3579 = vadd.f32 0.0, %v3578
        %v3580 = vpop.f32.mrf.mxu0
        %v3581 = vadd.f32 0.0, %v3580
        %3582 = vmatmul.bf16.gmra.mxu0 %v3481
        %v3583 = vpop.f32.mrf.mxu0
        %v3584 = vadd.f32 0.0, %v3583
        %v3585 = vpop.f32.mrf.mxu0
        %v3586 = vadd.f32 0.0, %v3585
        %3587 = vmatmul.bf16.gmra.mxu0 %v3482
        %v3588 = vpop.f32.mrf.mxu0
        %v3589 = vadd.f32 0.0, %v3588
        %v3590 = vpop.f32.mrf.mxu0
        %v3591 = vadd.f32 0.0, %v3590
        %3592 = vmatmul.bf16.gmra.mxu0 %v3483
        %v3593 = vpop.f32.mrf.mxu0
        %v3594 = vadd.f32 0.0, %v3593
        %v3595 = vpop.f32.mrf.mxu0
        %v3596 = vadd.f32 0.0, %v3595
        %3597 = vmatmul.bf16.gmra.mxu0 %v3484
        %v3598 = vpop.f32.mrf.mxu0
        %v3599 = vadd.f32 0.0, %v3598
        %v3600 = vpop.f32.mrf.mxu0
        %v3601 = vadd.f32 0.0, %v3600
        %3602 = vmatmul.bf16.gmra.mxu0 %v3485
        %v3603 = vpop.f32.mrf.mxu0
        %v3604 = vadd.f32 0.0, %v3603
        %v3605 = vpop.f32.mrf.mxu0
        %v3606 = vadd.f32 0.0, %v3605
        %3607 = vmatmul.bf16.gmra.mxu0 %v3486
        %v3608 = vpop.f32.mrf.mxu0
        %v3609 = vadd.f32 0.0, %v3608
        %v3610 = vpop.f32.mrf.mxu0
        %v3611 = vadd.f32 0.0, %v3610
        %3612 = vmatmul.bf16.gmra.mxu0 %v3487
        %v3613 = vpop.f32.mrf.mxu0
        %v3614 = vadd.f32 0.0, %v3613
        %v3615 = vpop.f32.mrf.mxu0
        %v3616 = vadd.f32 0.0, %v3615
        %3617 = vmatmul.bf16.gmra.mxu0 %v3488
        %v3618 = vpop.f32.mrf.mxu0
        %v3619 = vadd.f32 0.0, %v3618
        %v3620 = vpop.f32.mrf.mxu0
        %v3621 = vadd.f32 0.0, %v3620
        %3622 = vmatmul.bf16.gmra.mxu0 %v3489
        %v3623 = vpop.f32.mrf.mxu0
        %v3624 = vadd.f32 0.0, %v3623
        %v3625 = vpop.f32.mrf.mxu0
        %v3626 = vadd.f32 0.0, %v3625
        %3627 = vmatmul.bf16.gmra.mxu0 %v3490
        %v3628 = vpop.f32.mrf.mxu0
        %v3629 = vadd.f32 0.0, %v3628
        %v3630 = vpop.f32.mrf.mxu0
        %v3631 = vadd.f32 0.0, %v3630
        %3632 = vmatmul.bf16.gmra.mxu0 %v3491
        %v3633 = vpop.f32.mrf.mxu0
        %v3634 = vadd.f32 0.0, %v3633
        %v3635 = vpop.f32.mrf.mxu0
        %v3636 = vadd.f32 0.0, %v3635
        %3637 = vmatmul.bf16.gmra.mxu0 %v3492
        %v3638 = vpop.f32.mrf.mxu0
        %v3639 = vadd.f32 0.0, %v3638
        %v3640 = vpop.f32.mrf.mxu0
        %v3641 = vadd.f32 0.0, %v3640
        %3642 = vmatmul.bf16.gmra.mxu0 %v3493
        %v3643 = vpop.f32.mrf.mxu0
        %v3644 = vadd.f32 0.0, %v3643
        %v3645 = vpop.f32.mrf.mxu0
        %v3646 = vadd.f32 0.0, %v3645
        %3647 = vdwg.mxu0
        %v3648 = vadd.f32 %v3367, %v3569
        %v3649 = vadd.f32 %v3369, %v3571
        %v3650 = vadd.f32 %v3372, %v3574
        %v3651 = vadd.f32 %v3374, %v3576
        %v3652 = vadd.f32 %v3377, %v3579
        %v3653 = vadd.f32 %v3379, %v3581
        %v3654 = vadd.f32 %v3382, %v3584
        %v3655 = vadd.f32 %v3384, %v3586
        %v3656 = vadd.f32 %v3387, %v3589
        %v3657 = vadd.f32 %v3389, %v3591
        %v3658 = vadd.f32 %v3392, %v3594
        %v3659 = vadd.f32 %v3394, %v3596
        %v3660 = vadd.f32 %v3397, %v3599
        %v3661 = vadd.f32 %v3399, %v3601
        %v3662 = vadd.f32 %v3402, %v3604
        %v3663 = vadd.f32 %v3404, %v3606
        %v3664 = vadd.f32 %v3407, %v3609
        %v3665 = vadd.f32 %v3409, %v3611
        %v3666 = vadd.f32 %v3412, %v3614
        %v3667 = vadd.f32 %v3414, %v3616
        %v3668 = vadd.f32 %v3417, %v3619
        %v3669 = vadd.f32 %v3419, %v3621
        %v3670 = vadd.f32 %v3422, %v3624
        %v3671 = vadd.f32 %v3424, %v3626
        %v3672 = vadd.f32 %v3427, %v3629
        %v3673 = vadd.f32 %v3429, %v3631
        %v3674 = vadd.f32 %v3432, %v3634
        %v3675 = vadd.f32 %v3434, %v3636
        %v3676 = vadd.f32 %v3437, %v3639
        %v3677 = vadd.f32 %v3439, %v3641
        %v3678 = vadd.f32 %v3442, %v3644
        %v3679 = vadd.f32 %v3444, %v3646
        %v3680 = vld [vmem:[%s521] sm:$0xff]
        %v3681 = vld [vmem:[%s521 + $0x8] sm:$0xff]
        %v3682 = vld [vmem:[%s521 + $0x18] sm:$0xff]
        %v3683 = vld [vmem:[%s521 + $0x20] sm:$0xff]
        %v3684 = vld [vmem:[%s521 + $0x30] sm:$0xff]
        %v3685 = vld [vmem:[%s521 + $0x38] sm:$0xff]
        %v3686 = vld [vmem:[%s521 + $0x48] sm:$0xff]
        %v3687 = vld [vmem:[%s521 + $0x50] sm:$0xff]
        %v3688 = vld [vmem:[%s521 + $0x60] sm:$0xff]
        %v3689 = vld [vmem:[%s521 + $0x68] sm:$0xff]
        %v3690 = vld [vmem:[%s521 + $0x78] sm:$0xff]
        %v3691 = vld [vmem:[%s521 + $0x80] sm:$0xff]
        %v3692 = vld [vmem:[%s521 + $0x90] sm:$0xff]
        %v3693 = vld [vmem:[%s521 + $0x98] sm:$0xff]
        %v3694 = vld [vmem:[%s521 + $0xa8] sm:$0xff]
        %v3695 = vld [vmem:[%s521 + $0xb0] sm:$0xff]
        %v3696 = vld [vmem:[%s521 + $0xc0] sm:$0xff]
        %v3697 = vld [vmem:[%s521 + $0xc8] sm:$0xff]
        %v3698 = vld [vmem:[%s521 + $0xd8] sm:$0xff]
        %v3699 = vld [vmem:[%s521 + $0xe0] sm:$0xff]
        %v3700 = vld [vmem:[%s521 + $0xf0] sm:$0xff]
        %v3701 = vld [vmem:[%s521 + $0xf8] sm:$0xff]
        %v3702 = vld [vmem:[%s521 + $0x108] sm:$0xff]
        %v3703 = vld [vmem:[%s521 + $0x110] sm:$0xff]
        %v3704 = vld [vmem:[%s521 + $0x120] sm:$0xff]
        %v3705 = vld [vmem:[%s521 + $0x128] sm:$0xff]
        %v3706 = vld [vmem:[%s521 + $0x138] sm:$0xff]
        %v3707 = vld [vmem:[%s521 + $0x140] sm:$0xff]
        %v3708 = vld [vmem:[%s521 + $0x150] sm:$0xff]
        %v3709 = vld [vmem:[%s521 + $0x158] sm:$0xff]
        %v3710 = vld [vmem:[%s521 + $0x168] sm:$0xff]
        %v3711 = vld [vmem:[%s521 + $0x170] sm:$0xff]
        %v3712 = vpack.c.bf16 %v3681, %v3680
        %v3713 = vpack.c.bf16 %v3683, %v3682
        %v3714 = vpack.c.bf16 %v3685, %v3684
        %v3715 = vpack.c.bf16 %v3687, %v3686
        %v3716 = vpack.c.bf16 %v3689, %v3688
        %v3717 = vpack.c.bf16 %v3691, %v3690
        %v3718 = vpack.c.bf16 %v3693, %v3692
        %v3719 = vpack.c.bf16 %v3695, %v3694
        %v3720 = vpack.c.bf16 %v3697, %v3696
        %v3721 = vpack.c.bf16 %v3699, %v3698
        %v3722 = vpack.c.bf16 %v3701, %v3700
        %v3723 = vpack.c.bf16 %v3703, %v3702
        %v3724 = vpack.c.bf16 %v3705, %v3704
        %v3725 = vpack.c.bf16 %v3707, %v3706
        %v3726 = vpack.c.bf16 %v3709, %v3708
        %v3727 = vpack.c.bf16 %v3711, %v3710
        %s3728 = scalar_lea.vmem [#allocation8], 192
        %v3729 = vld [vmem:[%s3728] sm:$0xf]
        %v3730 = vld [vmem:[%s3728 + $0x4] sm:$0xf]
        %v3731 = vld [vmem:[%s3728 + $0x8] sm:$0xf]
        %v3732 = vld [vmem:[%s3728 + $0xc] sm:$0xf]
        %v3733 = vld [vmem:[%s3728 + $0x10] sm:$0xf]
        %v3734 = vld [vmem:[%s3728 + $0x14] sm:$0xf]
        %v3735 = vld [vmem:[%s3728 + $0x18] sm:$0xf]
        %v3736 = vld [vmem:[%s3728 + $0x1c] sm:$0xf]
        %v3737 = vld [vmem:[%s3728 + $0x20] sm:$0xf]
        %v3738 = vld [vmem:[%s3728 + $0x24] sm:$0xf]
        %v3739 = vld [vmem:[%s3728 + $0x28] sm:$0xf]
        %v3740 = vld [vmem:[%s3728 + $0x2c] sm:$0xf]
        %v3741 = vld [vmem:[%s3728 + $0x30] sm:$0xf]
        %v3742 = vld [vmem:[%s3728 + $0x34] sm:$0xf]
        %v3743 = vld [vmem:[%s3728 + $0x38] sm:$0xf]
        %v3744 = vld [vmem:[%s3728 + $0x3c] sm:$0xf]
        %v3761 = vunpack.c.l.b16 %v3729
        %v3762 = vunpack.c.l.b16 %v3730
        %v3763 = vunpack.c.l.b16 %v3731
        %v3764 = vunpack.c.l.b16 %v3732
        %v3765 = vunpack.c.l.b16 %v3733
        %v3766 = vunpack.c.l.b16 %v3734
        %v3767 = vunpack.c.l.b16 %v3735
        %v3768 = vunpack.c.l.b16 %v3736
        %v3769 = vunpack.c.l.b16 %v3737
        %v3770 = vunpack.c.l.b16 %v3738
        %v3771 = vunpack.c.l.b16 %v3739
        %v3772 = vunpack.c.l.b16 %v3740
        %v3773 = vunpack.c.l.b16 %v3741
        %v3774 = vunpack.c.l.b16 %v3742
        %v3775 = vunpack.c.l.b16 %v3743
        %v3776 = vunpack.c.l.b16 %v3744
        %v3777 = vpack.c.b16 %v3762, %v3761
        %v3778 = vpack.c.b16 %v3764, %v3763
        %v3779 = vpack.c.b16 %v3766, %v3765
        %v3780 = vpack.c.b16 %v3768, %v3767
        %v3781 = vpack.c.b16 %v3770, %v3769
        %v3782 = vpack.c.b16 %v3772, %v3771
        %v3783 = vpack.c.b16 %v3774, %v3773
        %v3784 = vpack.c.b16 %v3776, %v3775
        %3793 = vmatpush.bf16.msra.mxu0 %v3784
        %3794 = vmatpush.bf16.msra.mxu0 %v3783
        %3795 = vmatpush.bf16.msra.mxu0 %v3782
        %3796 = vmatpush.bf16.msra.mxu0 %v3781
        %3797 = vmatpush.bf16.msra.mxu0 %v3780
        %3798 = vmatpush.bf16.msra.mxu0 %v3779
        %3799 = vmatpush.bf16.msra.mxu0 %v3778
        %3800 = vmatpush.bf16.msra.mxu0 %v3777
        %3801 = vmatmul.bf16.gmra.mxu0 %v3712
        %v3802 = vpop.f32.mrf.mxu0
        %v3803 = vadd.f32 0.0, %v3802
        %v3804 = vpop.f32.mrf.mxu0
        %v3805 = vadd.f32 0.0, %v3804
        %3806 = vmatmul.bf16.gmra.mxu0 %v3713
        %v3807 = vpop.f32.mrf.mxu0
        %v3808 = vadd.f32 0.0, %v3807
        %v3809 = vpop.f32.mrf.mxu0
        %v3810 = vadd.f32 0.0, %v3809
        %3811 = vmatmul.bf16.gmra.mxu0 %v3714
        %v3812 = vpop.f32.mrf.mxu0
        %v3813 = vadd.f32 0.0, %v3812
        %v3814 = vpop.f32.mrf.mxu0
        %v3815 = vadd.f32 0.0, %v3814
        %3816 = vmatmul.bf16.gmra.mxu0 %v3715
        %v3817 = vpop.f32.mrf.mxu0
        %v3818 = vadd.f32 0.0, %v3817
        %v3819 = vpop.f32.mrf.mxu0
        %v3820 = vadd.f32 0.0, %v3819
        %3821 = vmatmul.bf16.gmra.mxu0 %v3716
        %v3822 = vpop.f32.mrf.mxu0
        %v3823 = vadd.f32 0.0, %v3822
        %v3824 = vpop.f32.mrf.mxu0
        %v3825 = vadd.f32 0.0, %v3824
        %3826 = vmatmul.bf16.gmra.mxu0 %v3717
        %v3827 = vpop.f32.mrf.mxu0
        %v3828 = vadd.f32 0.0, %v3827
        %v3829 = vpop.f32.mrf.mxu0
        %v3830 = vadd.f32 0.0, %v3829
        %3831 = vmatmul.bf16.gmra.mxu0 %v3718
        %v3832 = vpop.f32.mrf.mxu0
        %v3833 = vadd.f32 0.0, %v3832
        %v3834 = vpop.f32.mrf.mxu0
        %v3835 = vadd.f32 0.0, %v3834
        %3836 = vmatmul.bf16.gmra.mxu0 %v3719
        %v3837 = vpop.f32.mrf.mxu0
        %v3838 = vadd.f32 0.0, %v3837
        %v3839 = vpop.f32.mrf.mxu0
        %v3840 = vadd.f32 0.0, %v3839
        %3841 = vmatmul.bf16.gmra.mxu0 %v3720
        %v3842 = vpop.f32.mrf.mxu0
        %v3843 = vadd.f32 0.0, %v3842
        %v3844 = vpop.f32.mrf.mxu0
        %v3845 = vadd.f32 0.0, %v3844
        %3846 = vmatmul.bf16.gmra.mxu0 %v3721
        %v3847 = vpop.f32.mrf.mxu0
        %v3848 = vadd.f32 0.0, %v3847
        %v3849 = vpop.f32.mrf.mxu0
        %v3850 = vadd.f32 0.0, %v3849
        %3851 = vmatmul.bf16.gmra.mxu0 %v3722
        %v3852 = vpop.f32.mrf.mxu0
        %v3853 = vadd.f32 0.0, %v3852
        %v3854 = vpop.f32.mrf.mxu0
        %v3855 = vadd.f32 0.0, %v3854
        %3856 = vmatmul.bf16.gmra.mxu0 %v3723
        %v3857 = vpop.f32.mrf.mxu0
        %v3858 = vadd.f32 0.0, %v3857
        %v3859 = vpop.f32.mrf.mxu0
        %v3860 = vadd.f32 0.0, %v3859
        %3861 = vmatmul.bf16.gmra.mxu0 %v3724
        %v3862 = vpop.f32.mrf.mxu0
        %v3863 = vadd.f32 0.0, %v3862
        %v3864 = vpop.f32.mrf.mxu0
        %v3865 = vadd.f32 0.0, %v3864
        %3866 = vmatmul.bf16.gmra.mxu0 %v3725
        %v3867 = vpop.f32.mrf.mxu0
        %v3868 = vadd.f32 0.0, %v3867
        %v3869 = vpop.f32.mrf.mxu0
        %v3870 = vadd.f32 0.0, %v3869
        %3871 = vmatmul.bf16.gmra.mxu0 %v3726
        %v3872 = vpop.f32.mrf.mxu0
        %v3873 = vadd.f32 0.0, %v3872
        %v3874 = vpop.f32.mrf.mxu0
        %v3875 = vadd.f32 0.0, %v3874
        %3876 = vmatmul.bf16.gmra.mxu0 %v3727
        %v3877 = vpop.f32.mrf.mxu0
        %v3878 = vadd.f32 0.0, %v3877
        %v3879 = vpop.f32.mrf.mxu0
        %v3880 = vadd.f32 0.0, %v3879
        %3881 = vdwg.mxu0
        %v3882 = vadd.f32 %v3648, %v3803
        %v3883 = vadd.f32 %v3649, %v3805
        %v3884 = vadd.f32 %v3650, %v3808
        %v3885 = vadd.f32 %v3651, %v3810
        %v3886 = vadd.f32 %v3652, %v3813
        %v3887 = vadd.f32 %v3653, %v3815
        %v3888 = vadd.f32 %v3654, %v3818
        %v3889 = vadd.f32 %v3655, %v3820
        %v3890 = vadd.f32 %v3656, %v3823
        %v3891 = vadd.f32 %v3657, %v3825
        %v3892 = vadd.f32 %v3658, %v3828
        %v3893 = vadd.f32 %v3659, %v3830
        %v3894 = vadd.f32 %v3660, %v3833
        %v3895 = vadd.f32 %v3661, %v3835
        %v3896 = vadd.f32 %v3662, %v3838
        %v3897 = vadd.f32 %v3663, %v3840
        %v3898 = vadd.f32 %v3664, %v3843
        %v3899 = vadd.f32 %v3665, %v3845
        %v3900 = vadd.f32 %v3666, %v3848
        %v3901 = vadd.f32 %v3667, %v3850
        %v3902 = vadd.f32 %v3668, %v3853
        %v3903 = vadd.f32 %v3669, %v3855
        %v3904 = vadd.f32 %v3670, %v3858
        %v3905 = vadd.f32 %v3671, %v3860
        %v3906 = vadd.f32 %v3672, %v3863
        %v3907 = vadd.f32 %v3673, %v3865
        %v3908 = vadd.f32 %v3674, %v3868
        %v3909 = vadd.f32 %v3675, %v3870
        %v3910 = vadd.f32 %v3676, %v3873
        %v3911 = vadd.f32 %v3677, %v3875
        %v3912 = vadd.f32 %v3678, %v3878
        %v3913 = vadd.f32 %v3679, %v3880
        %v3914 = vld [vmem:[%s521 + $0x1] sm:$0xff]
        %v3915 = vld [vmem:[%s521 + $0x9] sm:$0xff]
        %v3916 = vld [vmem:[%s521 + $0x19] sm:$0xff]
        %v3917 = vld [vmem:[%s521 + $0x21] sm:$0xff]
        %v3918 = vld [vmem:[%s521 + $0x31] sm:$0xff]
        %v3919 = vld [vmem:[%s521 + $0x39] sm:$0xff]
        %v3920 = vld [vmem:[%s521 + $0x49] sm:$0xff]
        %v3921 = vld [vmem:[%s521 + $0x51] sm:$0xff]
        %v3922 = vld [vmem:[%s521 + $0x61] sm:$0xff]
        %v3923 = vld [vmem:[%s521 + $0x69] sm:$0xff]
        %v3924 = vld [vmem:[%s521 + $0x79] sm:$0xff]
        %v3925 = vld [vmem:[%s521 + $0x81] sm:$0xff]
        %v3926 = vld [vmem:[%s521 + $0x91] sm:$0xff]
        %v3927 = vld [vmem:[%s521 + $0x99] sm:$0xff]
        %v3928 = vld [vmem:[%s521 + $0xa9] sm:$0xff]
        %v3929 = vld [vmem:[%s521 + $0xb1] sm:$0xff]
        %v3930 = vld [vmem:[%s521 + $0xc1] sm:$0xff]
        %v3931 = vld [vmem:[%s521 + $0xc9] sm:$0xff]
        %v3932 = vld [vmem:[%s521 + $0xd9] sm:$0xff]
        %v3933 = vld [vmem:[%s521 + $0xe1] sm:$0xff]
        %v3934 = vld [vmem:[%s521 + $0xf1] sm:$0xff]
        %v3935 = vld [vmem:[%s521 + $0xf9] sm:$0xff]
        %v3936 = vld [vmem:[%s521 + $0x109] sm:$0xff]
        %v3937 = vld [vmem:[%s521 + $0x111] sm:$0xff]
        %v3938 = vld [vmem:[%s521 + $0x121] sm:$0xff]
        %v3939 = vld [vmem:[%s521 + $0x129] sm:$0xff]
        %v3940 = vld [vmem:[%s521 + $0x139] sm:$0xff]
        %v3941 = vld [vmem:[%s521 + $0x141] sm:$0xff]
        %v3942 = vld [vmem:[%s521 + $0x151] sm:$0xff]
        %v3943 = vld [vmem:[%s521 + $0x159] sm:$0xff]
        %v3944 = vld [vmem:[%s521 + $0x169] sm:$0xff]
        %v3945 = vld [vmem:[%s521 + $0x171] sm:$0xff]
        %v3946 = vpack.c.bf16 %v3915, %v3914
        %v3947 = vpack.c.bf16 %v3917, %v3916
        %v3948 = vpack.c.bf16 %v3919, %v3918
        %v3949 = vpack.c.bf16 %v3921, %v3920
        %v3950 = vpack.c.bf16 %v3923, %v3922
        %v3951 = vpack.c.bf16 %v3925, %v3924
        %v3952 = vpack.c.bf16 %v3927, %v3926
        %v3953 = vpack.c.bf16 %v3929, %v3928
        %v3954 = vpack.c.bf16 %v3931, %v3930
        %v3955 = vpack.c.bf16 %v3933, %v3932
        %v3956 = vpack.c.bf16 %v3935, %v3934
        %v3957 = vpack.c.bf16 %v3937, %v3936
        %v3958 = vpack.c.bf16 %v3939, %v3938
        %v3959 = vpack.c.bf16 %v3941, %v3940
        %v3960 = vpack.c.bf16 %v3943, %v3942
        %v3961 = vpack.c.bf16 %v3945, %v3944
        %s3962 = scalar_lea.vmem [#allocation8], 256
        %v3963 = vld [vmem:[%s3962] sm:$0xf]
        %v3964 = vld [vmem:[%s3962 + $0x4] sm:$0xf]
        %v3965 = vld [vmem:[%s3962 + $0x8] sm:$0xf]
        %v3966 = vld [vmem:[%s3962 + $0xc] sm:$0xf]
        %v3967 = vld [vmem:[%s3962 + $0x10] sm:$0xf]
        %v3968 = vld [vmem:[%s3962 + $0x14] sm:$0xf]
        %v3969 = vld [vmem:[%s3962 + $0x18] sm:$0xf]
        %v3970 = vld [vmem:[%s3962 + $0x1c] sm:$0xf]
        %v3971 = vld [vmem:[%s3962 + $0x20] sm:$0xf]
        %v3972 = vld [vmem:[%s3962 + $0x24] sm:$0xf]
        %v3973 = vld [vmem:[%s3962 + $0x28] sm:$0xf]
        %v3974 = vld [vmem:[%s3962 + $0x2c] sm:$0xf]
        %v3975 = vld [vmem:[%s3962 + $0x30] sm:$0xf]
        %v3976 = vld [vmem:[%s3962 + $0x34] sm:$0xf]
        %v3977 = vld [vmem:[%s3962 + $0x38] sm:$0xf]
        %v3978 = vld [vmem:[%s3962 + $0x3c] sm:$0xf]
        %v3995 = vunpack.c.l.b16 %v3963
        %v3996 = vunpack.c.l.b16 %v3964
        %v3997 = vunpack.c.l.b16 %v3965
        %v3998 = vunpack.c.l.b16 %v3966
        %v3999 = vunpack.c.l.b16 %v3967
        %v4000 = vunpack.c.l.b16 %v3968
        %v4001 = vunpack.c.l.b16 %v3969
        %v4002 = vunpack.c.l.b16 %v3970
        %v4003 = vunpack.c.l.b16 %v3971
        %v4004 = vunpack.c.l.b16 %v3972
        %v4005 = vunpack.c.l.b16 %v3973
        %v4006 = vunpack.c.l.b16 %v3974
        %v4007 = vunpack.c.l.b16 %v3975
        %v4008 = vunpack.c.l.b16 %v3976
        %v4009 = vunpack.c.l.b16 %v3977
        %v4010 = vunpack.c.l.b16 %v3978
        %v4011 = vpack.c.b16 %v3996, %v3995
        %v4012 = vpack.c.b16 %v3998, %v3997
        %v4013 = vpack.c.b16 %v4000, %v3999
        %v4014 = vpack.c.b16 %v4002, %v4001
        %v4015 = vpack.c.b16 %v4004, %v4003
        %v4016 = vpack.c.b16 %v4006, %v4005
        %v4017 = vpack.c.b16 %v4008, %v4007
        %v4018 = vpack.c.b16 %v4010, %v4009
        %4027 = vmatpush.bf16.msra.mxu0 %v4018
        %4028 = vmatpush.bf16.msra.mxu0 %v4017
        %4029 = vmatpush.bf16.msra.mxu0 %v4016
        %4030 = vmatpush.bf16.msra.mxu0 %v4015
        %4031 = vmatpush.bf16.msra.mxu0 %v4014
        %4032 = vmatpush.bf16.msra.mxu0 %v4013
        %4033 = vmatpush.bf16.msra.mxu0 %v4012
        %4034 = vmatpush.bf16.msra.mxu0 %v4011
        %4035 = vmatmul.bf16.gmra.mxu0 %v3946
        %v4036 = vpop.f32.mrf.mxu0
        %v4037 = vadd.f32 0.0, %v4036
        %v4038 = vpop.f32.mrf.mxu0
        %v4039 = vadd.f32 0.0, %v4038
        %4040 = vmatmul.bf16.gmra.mxu0 %v3947
        %v4041 = vpop.f32.mrf.mxu0
        %v4042 = vadd.f32 0.0, %v4041
        %v4043 = vpop.f32.mrf.mxu0
        %v4044 = vadd.f32 0.0, %v4043
        %4045 = vmatmul.bf16.gmra.mxu0 %v3948
        %v4046 = vpop.f32.mrf.mxu0
        %v4047 = vadd.f32 0.0, %v4046
        %v4048 = vpop.f32.mrf.mxu0
        %v4049 = vadd.f32 0.0, %v4048
        %4050 = vmatmul.bf16.gmra.mxu0 %v3949
        %v4051 = vpop.f32.mrf.mxu0
        %v4052 = vadd.f32 0.0, %v4051
        %v4053 = vpop.f32.mrf.mxu0
        %v4054 = vadd.f32 0.0, %v4053
        %4055 = vmatmul.bf16.gmra.mxu0 %v3950
        %v4056 = vpop.f32.mrf.mxu0
        %v4057 = vadd.f32 0.0, %v4056
        %v4058 = vpop.f32.mrf.mxu0
        %v4059 = vadd.f32 0.0, %v4058
        %4060 = vmatmul.bf16.gmra.mxu0 %v3951
        %v4061 = vpop.f32.mrf.mxu0
        %v4062 = vadd.f32 0.0, %v4061
        %v4063 = vpop.f32.mrf.mxu0
        %v4064 = vadd.f32 0.0, %v4063
        %4065 = vmatmul.bf16.gmra.mxu0 %v3952
        %v4066 = vpop.f32.mrf.mxu0
        %v4067 = vadd.f32 0.0, %v4066
        %v4068 = vpop.f32.mrf.mxu0
        %v4069 = vadd.f32 0.0, %v4068
        %4070 = vmatmul.bf16.gmra.mxu0 %v3953
        %v4071 = vpop.f32.mrf.mxu0
        %v4072 = vadd.f32 0.0, %v4071
        %v4073 = vpop.f32.mrf.mxu0
        %v4074 = vadd.f32 0.0, %v4073
        %4075 = vmatmul.bf16.gmra.mxu0 %v3954
        %v4076 = vpop.f32.mrf.mxu0
        %v4077 = vadd.f32 0.0, %v4076
        %v4078 = vpop.f32.mrf.mxu0
        %v4079 = vadd.f32 0.0, %v4078
        %4080 = vmatmul.bf16.gmra.mxu0 %v3955
        %v4081 = vpop.f32.mrf.mxu0
        %v4082 = vadd.f32 0.0, %v4081
        %v4083 = vpop.f32.mrf.mxu0
        %v4084 = vadd.f32 0.0, %v4083
        %4085 = vmatmul.bf16.gmra.mxu0 %v3956
        %v4086 = vpop.f32.mrf.mxu0
        %v4087 = vadd.f32 0.0, %v4086
        %v4088 = vpop.f32.mrf.mxu0
        %v4089 = vadd.f32 0.0, %v4088
        %4090 = vmatmul.bf16.gmra.mxu0 %v3957
        %v4091 = vpop.f32.mrf.mxu0
        %v4092 = vadd.f32 0.0, %v4091
        %v4093 = vpop.f32.mrf.mxu0
        %v4094 = vadd.f32 0.0, %v4093
        %4095 = vmatmul.bf16.gmra.mxu0 %v3958
        %v4096 = vpop.f32.mrf.mxu0
        %v4097 = vadd.f32 0.0, %v4096
        %v4098 = vpop.f32.mrf.mxu0
        %v4099 = vadd.f32 0.0, %v4098
        %4100 = vmatmul.bf16.gmra.mxu0 %v3959
        %v4101 = vpop.f32.mrf.mxu0
        %v4102 = vadd.f32 0.0, %v4101
        %v4103 = vpop.f32.mrf.mxu0
        %v4104 = vadd.f32 0.0, %v4103
        %4105 = vmatmul.bf16.gmra.mxu0 %v3960
        %v4106 = vpop.f32.mrf.mxu0
        %v4107 = vadd.f32 0.0, %v4106
        %v4108 = vpop.f32.mrf.mxu0
        %v4109 = vadd.f32 0.0, %v4108
        %4110 = vmatmul.bf16.gmra.mxu0 %v3961
        %v4111 = vpop.f32.mrf.mxu0
        %v4112 = vadd.f32 0.0, %v4111
        %v4113 = vpop.f32.mrf.mxu0
        %v4114 = vadd.f32 0.0, %v4113
        %4115 = vdwg.mxu0
        %v4116 = vadd.f32 %v3882, %v4037
        %v4117 = vadd.f32 %v3883, %v4039
        %v4118 = vadd.f32 %v3884, %v4042
        %v4119 = vadd.f32 %v3885, %v4044
        %v4120 = vadd.f32 %v3886, %v4047
        %v4121 = vadd.f32 %v3887, %v4049
        %v4122 = vadd.f32 %v3888, %v4052
        %v4123 = vadd.f32 %v3889, %v4054
        %v4124 = vadd.f32 %v3890, %v4057
        %v4125 = vadd.f32 %v3891, %v4059
        %v4126 = vadd.f32 %v3892, %v4062
        %v4127 = vadd.f32 %v3893, %v4064
        %v4128 = vadd.f32 %v3894, %v4067
        %v4129 = vadd.f32 %v3895, %v4069
        %v4130 = vadd.f32 %v3896, %v4072
        %v4131 = vadd.f32 %v3897, %v4074
        %v4132 = vadd.f32 %v3898, %v4077
        %v4133 = vadd.f32 %v3899, %v4079
        %v4134 = vadd.f32 %v3900, %v4082
        %v4135 = vadd.f32 %v3901, %v4084
        %v4136 = vadd.f32 %v3902, %v4087
        %v4137 = vadd.f32 %v3903, %v4089
        %v4138 = vadd.f32 %v3904, %v4092
        %v4139 = vadd.f32 %v3905, %v4094
        %v4140 = vadd.f32 %v3906, %v4097
        %v4141 = vadd.f32 %v3907, %v4099
        %v4142 = vadd.f32 %v3908, %v4102
        %v4143 = vadd.f32 %v3909, %v4104
        %v4144 = vadd.f32 %v3910, %v4107
        %v4145 = vadd.f32 %v3911, %v4109
        %v4146 = vadd.f32 %v3912, %v4112
        %v4147 = vadd.f32 %v3913, %v4114
        %v4148 = vld [vmem:[%s521 + $0x2] sm:$0xff]
        %v4149 = vld [vmem:[%s521 + $0xa] sm:$0xff]
        %v4150 = vld [vmem:[%s521 + $0x1a] sm:$0xff]
        %v4151 = vld [vmem:[%s521 + $0x22] sm:$0xff]
        %v4152 = vld [vmem:[%s521 + $0x32] sm:$0xff]
        %v4153 = vld [vmem:[%s521 + $0x3a] sm:$0xff]
        %v4154 = vld [vmem:[%s521 + $0x4a] sm:$0xff]
        %v4155 = vld [vmem:[%s521 + $0x52] sm:$0xff]
        %v4156 = vld [vmem:[%s521 + $0x62] sm:$0xff]
        %v4157 = vld [vmem:[%s521 + $0x6a] sm:$0xff]
        %v4158 = vld [vmem:[%s521 + $0x7a] sm:$0xff]
        %v4159 = vld [vmem:[%s521 + $0x82] sm:$0xff]
        %v4160 = vld [vmem:[%s521 + $0x92] sm:$0xff]
        %v4161 = vld [vmem:[%s521 + $0x9a] sm:$0xff]
        %v4162 = vld [vmem:[%s521 + $0xaa] sm:$0xff]
        %v4163 = vld [vmem:[%s521 + $0xb2] sm:$0xff]
        %v4164 = vld [vmem:[%s521 + $0xc2] sm:$0xff]
        %v4165 = vld [vmem:[%s521 + $0xca] sm:$0xff]
        %v4166 = vld [vmem:[%s521 + $0xda] sm:$0xff]
        %v4167 = vld [vmem:[%s521 + $0xe2] sm:$0xff]
        %v4168 = vld [vmem:[%s521 + $0xf2] sm:$0xff]
        %v4169 = vld [vmem:[%s521 + $0xfa] sm:$0xff]
        %v4170 = vld [vmem:[%s521 + $0x10a] sm:$0xff]
        %v4171 = vld [vmem:[%s521 + $0x112] sm:$0xff]
        %v4172 = vld [vmem:[%s521 + $0x122] sm:$0xff]
        %v4173 = vld [vmem:[%s521 + $0x12a] sm:$0xff]
        %v4174 = vld [vmem:[%s521 + $0x13a] sm:$0xff]
        %v4175 = vld [vmem:[%s521 + $0x142] sm:$0xff]
        %v4176 = vld [vmem:[%s521 + $0x152] sm:$0xff]
        %v4177 = vld [vmem:[%s521 + $0x15a] sm:$0xff]
        %v4178 = vld [vmem:[%s521 + $0x16a] sm:$0xff]
        %v4179 = vld [vmem:[%s521 + $0x172] sm:$0xff]
        %v4180 = vpack.c.bf16 %v4149, %v4148
        %v4181 = vpack.c.bf16 %v4151, %v4150
        %v4182 = vpack.c.bf16 %v4153, %v4152
        %v4183 = vpack.c.bf16 %v4155, %v4154
        %v4184 = vpack.c.bf16 %v4157, %v4156
        %v4185 = vpack.c.bf16 %v4159, %v4158
        %v4186 = vpack.c.bf16 %v4161, %v4160
        %v4187 = vpack.c.bf16 %v4163, %v4162
        %v4188 = vpack.c.bf16 %v4165, %v4164
        %v4189 = vpack.c.bf16 %v4167, %v4166
        %v4190 = vpack.c.bf16 %v4169, %v4168
        %v4191 = vpack.c.bf16 %v4171, %v4170
        %v4192 = vpack.c.bf16 %v4173, %v4172
        %v4193 = vpack.c.bf16 %v4175, %v4174
        %v4194 = vpack.c.bf16 %v4177, %v4176
        %v4195 = vpack.c.bf16 %v4179, %v4178
        %s4196 = scalar_lea.vmem [#allocation8], 320
        %v4197 = vld [vmem:[%s4196] sm:$0xf]
        %v4198 = vld [vmem:[%s4196 + $0x4] sm:$0xf]
        %v4199 = vld [vmem:[%s4196 + $0x8] sm:$0xf]
        %v4200 = vld [vmem:[%s4196 + $0xc] sm:$0xf]
        %v4201 = vld [vmem:[%s4196 + $0x10] sm:$0xf]
        %v4202 = vld [vmem:[%s4196 + $0x14] sm:$0xf]
        %v4203 = vld [vmem:[%s4196 + $0x18] sm:$0xf]
        %v4204 = vld [vmem:[%s4196 + $0x1c] sm:$0xf]
        %v4205 = vld [vmem:[%s4196 + $0x20] sm:$0xf]
        %v4206 = vld [vmem:[%s4196 + $0x24] sm:$0xf]
        %v4207 = vld [vmem:[%s4196 + $0x28] sm:$0xf]
        %v4208 = vld [vmem:[%s4196 + $0x2c] sm:$0xf]
        %v4209 = vld [vmem:[%s4196 + $0x30] sm:$0xf]
        %v4210 = vld [vmem:[%s4196 + $0x34] sm:$0xf]
        %v4211 = vld [vmem:[%s4196 + $0x38] sm:$0xf]
        %v4212 = vld [vmem:[%s4196 + $0x3c] sm:$0xf]
        %v4229 = vunpack.c.l.b16 %v4197
        %v4230 = vunpack.c.l.b16 %v4198
        %v4231 = vunpack.c.l.b16 %v4199
        %v4232 = vunpack.c.l.b16 %v4200
        %v4233 = vunpack.c.l.b16 %v4201
        %v4234 = vunpack.c.l.b16 %v4202
        %v4235 = vunpack.c.l.b16 %v4203
        %v4236 = vunpack.c.l.b16 %v4204
        %v4237 = vunpack.c.l.b16 %v4205
        %v4238 = vunpack.c.l.b16 %v4206
        %v4239 = vunpack.c.l.b16 %v4207
        %v4240 = vunpack.c.l.b16 %v4208
        %v4241 = vunpack.c.l.b16 %v4209
        %v4242 = vunpack.c.l.b16 %v4210
        %v4243 = vunpack.c.l.b16 %v4211
        %v4244 = vunpack.c.l.b16 %v4212
        %v4245 = vpack.c.b16 %v4230, %v4229
        %v4246 = vpack.c.b16 %v4232, %v4231
        %v4247 = vpack.c.b16 %v4234, %v4233
        %v4248 = vpack.c.b16 %v4236, %v4235
        %v4249 = vpack.c.b16 %v4238, %v4237
        %v4250 = vpack.c.b16 %v4240, %v4239
        %v4251 = vpack.c.b16 %v4242, %v4241
        %v4252 = vpack.c.b16 %v4244, %v4243
        %4261 = vmatpush.bf16.msra.mxu0 %v4252
        %4262 = vmatpush.bf16.msra.mxu0 %v4251
        %4263 = vmatpush.bf16.msra.mxu0 %v4250
        %4264 = vmatpush.bf16.msra.mxu0 %v4249
        %4265 = vmatpush.bf16.msra.mxu0 %v4248
        %4266 = vmatpush.bf16.msra.mxu0 %v4247
        %4267 = vmatpush.bf16.msra.mxu0 %v4246
        %4268 = vmatpush.bf16.msra.mxu0 %v4245
        %4269 = vmatmul.bf16.gmra.mxu0 %v4180
        %v4270 = vpop.f32.mrf.mxu0
        %v4271 = vadd.f32 0.0, %v4270
        %v4272 = vpop.f32.mrf.mxu0
        %v4273 = vadd.f32 0.0, %v4272
        %4274 = vmatmul.bf16.gmra.mxu0 %v4181
        %v4275 = vpop.f32.mrf.mxu0
        %v4276 = vadd.f32 0.0, %v4275
        %v4277 = vpop.f32.mrf.mxu0
        %v4278 = vadd.f32 0.0, %v4277
        %4279 = vmatmul.bf16.gmra.mxu0 %v4182
        %v4280 = vpop.f32.mrf.mxu0
        %v4281 = vadd.f32 0.0, %v4280
        %v4282 = vpop.f32.mrf.mxu0
        %v4283 = vadd.f32 0.0, %v4282
        %4284 = vmatmul.bf16.gmra.mxu0 %v4183
        %v4285 = vpop.f32.mrf.mxu0
        %v4286 = vadd.f32 0.0, %v4285
        %v4287 = vpop.f32.mrf.mxu0
        %v4288 = vadd.f32 0.0, %v4287
        %4289 = vmatmul.bf16.gmra.mxu0 %v4184
        %v4290 = vpop.f32.mrf.mxu0
        %v4291 = vadd.f32 0.0, %v4290
        %v4292 = vpop.f32.mrf.mxu0
        %v4293 = vadd.f32 0.0, %v4292
        %4294 = vmatmul.bf16.gmra.mxu0 %v4185
        %v4295 = vpop.f32.mrf.mxu0
        %v4296 = vadd.f32 0.0, %v4295
        %v4297 = vpop.f32.mrf.mxu0
        %v4298 = vadd.f32 0.0, %v4297
        %4299 = vmatmul.bf16.gmra.mxu0 %v4186
        %v4300 = vpop.f32.mrf.mxu0
        %v4301 = vadd.f32 0.0, %v4300
        %v4302 = vpop.f32.mrf.mxu0
        %v4303 = vadd.f32 0.0, %v4302
        %4304 = vmatmul.bf16.gmra.mxu0 %v4187
        %v4305 = vpop.f32.mrf.mxu0
        %v4306 = vadd.f32 0.0, %v4305
        %v4307 = vpop.f32.mrf.mxu0
        %v4308 = vadd.f32 0.0, %v4307
        %4309 = vmatmul.bf16.gmra.mxu0 %v4188
        %v4310 = vpop.f32.mrf.mxu0
        %v4311 = vadd.f32 0.0, %v4310
        %v4312 = vpop.f32.mrf.mxu0
        %v4313 = vadd.f32 0.0, %v4312
        %4314 = vmatmul.bf16.gmra.mxu0 %v4189
        %v4315 = vpop.f32.mrf.mxu0
        %v4316 = vadd.f32 0.0, %v4315
        %v4317 = vpop.f32.mrf.mxu0
        %v4318 = vadd.f32 0.0, %v4317
        %4319 = vmatmul.bf16.gmra.mxu0 %v4190
        %v4320 = vpop.f32.mrf.mxu0
        %v4321 = vadd.f32 0.0, %v4320
        %v4322 = vpop.f32.mrf.mxu0
        %v4323 = vadd.f32 0.0, %v4322
        %4324 = vmatmul.bf16.gmra.mxu0 %v4191
        %v4325 = vpop.f32.mrf.mxu0
        %v4326 = vadd.f32 0.0, %v4325
        %v4327 = vpop.f32.mrf.mxu0
        %v4328 = vadd.f32 0.0, %v4327
        %4329 = vmatmul.bf16.gmra.mxu0 %v4192
        %v4330 = vpop.f32.mrf.mxu0
        %v4331 = vadd.f32 0.0, %v4330
        %v4332 = vpop.f32.mrf.mxu0
        %v4333 = vadd.f32 0.0, %v4332
        %4334 = vmatmul.bf16.gmra.mxu0 %v4193
        %v4335 = vpop.f32.mrf.mxu0
        %v4336 = vadd.f32 0.0, %v4335
        %v4337 = vpop.f32.mrf.mxu0
        %v4338 = vadd.f32 0.0, %v4337
        %4339 = vmatmul.bf16.gmra.mxu0 %v4194
        %v4340 = vpop.f32.mrf.mxu0
        %v4341 = vadd.f32 0.0, %v4340
        %v4342 = vpop.f32.mrf.mxu0
        %v4343 = vadd.f32 0.0, %v4342
        %4344 = vmatmul.bf16.gmra.mxu0 %v4195
        %v4345 = vpop.f32.mrf.mxu0
        %v4346 = vadd.f32 0.0, %v4345
        %v4347 = vpop.f32.mrf.mxu0
        %v4348 = vadd.f32 0.0, %v4347
        %4349 = vdwg.mxu0
        %v4350 = vadd.f32 %v4116, %v4271
        %v4351 = vadd.f32 %v4117, %v4273
        %v4352 = vadd.f32 %v4118, %v4276
        %v4353 = vadd.f32 %v4119, %v4278
        %v4354 = vadd.f32 %v4120, %v4281
        %v4355 = vadd.f32 %v4121, %v4283
        %v4356 = vadd.f32 %v4122, %v4286
        %v4357 = vadd.f32 %v4123, %v4288
        %v4358 = vadd.f32 %v4124, %v4291
        %v4359 = vadd.f32 %v4125, %v4293
        %v4360 = vadd.f32 %v4126, %v4296
        %v4361 = vadd.f32 %v4127, %v4298
        %v4362 = vadd.f32 %v4128, %v4301
        %v4363 = vadd.f32 %v4129, %v4303
        %v4364 = vadd.f32 %v4130, %v4306
        %v4365 = vadd.f32 %v4131, %v4308
        %v4366 = vadd.f32 %v4132, %v4311
        %v4367 = vadd.f32 %v4133, %v4313
        %v4368 = vadd.f32 %v4134, %v4316
        %v4369 = vadd.f32 %v4135, %v4318
        %v4370 = vadd.f32 %v4136, %v4321
        %v4371 = vadd.f32 %v4137, %v4323
        %v4372 = vadd.f32 %v4138, %v4326
        %v4373 = vadd.f32 %v4139, %v4328
        %v4374 = vadd.f32 %v4140, %v4331
        %v4375 = vadd.f32 %v4141, %v4333
        %v4376 = vadd.f32 %v4142, %v4336
        %v4377 = vadd.f32 %v4143, %v4338
        %v4378 = vadd.f32 %v4144, %v4341
        %v4379 = vadd.f32 %v4145, %v4343
        %v4380 = vadd.f32 %v4146, %v4346
        %v4381 = vadd.f32 %v4147, %v4348
        %v4382 = vld [vmem:[%s1893] sm:$0xff]
        %v4383 = vld [vmem:[%s1893 + $0x8] sm:$0xff]
        %v4384 = vld [vmem:[%s1893 + $0x18] sm:$0xff]
        %v4385 = vld [vmem:[%s1893 + $0x20] sm:$0xff]
        %v4386 = vld [vmem:[%s1893 + $0x30] sm:$0xff]
        %v4387 = vld [vmem:[%s1893 + $0x38] sm:$0xff]
        %v4388 = vld [vmem:[%s1893 + $0x48] sm:$0xff]
        %v4389 = vld [vmem:[%s1893 + $0x50] sm:$0xff]
        %v4390 = vld [vmem:[%s1893 + $0x60] sm:$0xff]
        %v4391 = vld [vmem:[%s1893 + $0x68] sm:$0xff]
        %v4392 = vld [vmem:[%s1893 + $0x78] sm:$0xff]
        %v4393 = vld [vmem:[%s1893 + $0x80] sm:$0xff]
        %v4394 = vld [vmem:[%s1893 + $0x90] sm:$0xff]
        %v4395 = vld [vmem:[%s1893 + $0x98] sm:$0xff]
        %v4396 = vld [vmem:[%s1893 + $0xa8] sm:$0xff]
        %v4397 = vld [vmem:[%s1893 + $0xb0] sm:$0xff]
        %v4398 = vld [vmem:[%s1893 + $0xc0] sm:$0xff]
        %v4399 = vld [vmem:[%s1893 + $0xc8] sm:$0xff]
        %v4400 = vld [vmem:[%s1893 + $0xd8] sm:$0xff]
        %v4401 = vld [vmem:[%s1893 + $0xe0] sm:$0xff]
        %v4402 = vld [vmem:[%s1893 + $0xf0] sm:$0xff]
        %v4403 = vld [vmem:[%s1893 + $0xf8] sm:$0xff]
        %v4404 = vld [vmem:[%s1893 + $0x108] sm:$0xff]
        %v4405 = vld [vmem:[%s1893 + $0x110] sm:$0xff]
        %v4406 = vld [vmem:[%s1893 + $0x120] sm:$0xff]
        %v4407 = vld [vmem:[%s1893 + $0x128] sm:$0xff]
        %v4408 = vld [vmem:[%s1893 + $0x138] sm:$0xff]
        %v4409 = vld [vmem:[%s1893 + $0x140] sm:$0xff]
        %v4410 = vld [vmem:[%s1893 + $0x150] sm:$0xff]
        %v4411 = vld [vmem:[%s1893 + $0x158] sm:$0xff]
        %v4412 = vld [vmem:[%s1893 + $0x168] sm:$0xff]
        %v4413 = vld [vmem:[%s1893 + $0x170] sm:$0xff]
        %v4414 = vpack.c.bf16 %v4383, %v4382
        %v4415 = vpack.c.bf16 %v4385, %v4384
        %v4416 = vpack.c.bf16 %v4387, %v4386
        %v4417 = vpack.c.bf16 %v4389, %v4388
        %v4418 = vpack.c.bf16 %v4391, %v4390
        %v4419 = vpack.c.bf16 %v4393, %v4392
        %v4420 = vpack.c.bf16 %v4395, %v4394
        %v4421 = vpack.c.bf16 %v4397, %v4396
        %v4422 = vpack.c.bf16 %v4399, %v4398
        %v4423 = vpack.c.bf16 %v4401, %v4400
        %v4424 = vpack.c.bf16 %v4403, %v4402
        %v4425 = vpack.c.bf16 %v4405, %v4404
        %v4426 = vpack.c.bf16 %v4407, %v4406
        %v4427 = vpack.c.bf16 %v4409, %v4408
        %v4428 = vpack.c.bf16 %v4411, %v4410
        %v4429 = vpack.c.bf16 %v4413, %v4412
        %s4430 = scalar_lea.vmem [#allocation8], 384
        %v4431 = vld [vmem:[%s4430] sm:$0xf]
        %v4432 = vld [vmem:[%s4430 + $0x4] sm:$0xf]
        %v4433 = vld [vmem:[%s4430 + $0x8] sm:$0xf]
        %v4434 = vld [vmem:[%s4430 + $0xc] sm:$0xf]
        %v4435 = vld [vmem:[%s4430 + $0x10] sm:$0xf]
        %v4436 = vld [vmem:[%s4430 + $0x14] sm:$0xf]
        %v4437 = vld [vmem:[%s4430 + $0x18] sm:$0xf]
        %v4438 = vld [vmem:[%s4430 + $0x1c] sm:$0xf]
        %v4439 = vld [vmem:[%s4430 + $0x20] sm:$0xf]
        %v4440 = vld [vmem:[%s4430 + $0x24] sm:$0xf]
        %v4441 = vld [vmem:[%s4430 + $0x28] sm:$0xf]
        %v4442 = vld [vmem:[%s4430 + $0x2c] sm:$0xf]
        %v4443 = vld [vmem:[%s4430 + $0x30] sm:$0xf]
        %v4444 = vld [vmem:[%s4430 + $0x34] sm:$0xf]
        %v4445 = vld [vmem:[%s4430 + $0x38] sm:$0xf]
        %v4446 = vld [vmem:[%s4430 + $0x3c] sm:$0xf]
        %v4463 = vunpack.c.l.b16 %v4431
        %v4464 = vunpack.c.l.b16 %v4432
        %v4465 = vunpack.c.l.b16 %v4433
        %v4466 = vunpack.c.l.b16 %v4434
        %v4467 = vunpack.c.l.b16 %v4435
        %v4468 = vunpack.c.l.b16 %v4436
        %v4469 = vunpack.c.l.b16 %v4437
        %v4470 = vunpack.c.l.b16 %v4438
        %v4471 = vunpack.c.l.b16 %v4439
        %v4472 = vunpack.c.l.b16 %v4440
        %v4473 = vunpack.c.l.b16 %v4441
        %v4474 = vunpack.c.l.b16 %v4442
        %v4475 = vunpack.c.l.b16 %v4443
        %v4476 = vunpack.c.l.b16 %v4444
        %v4477 = vunpack.c.l.b16 %v4445
        %v4478 = vunpack.c.l.b16 %v4446
        %v4479 = vpack.c.b16 %v4464, %v4463
        %v4480 = vpack.c.b16 %v4466, %v4465
        %v4481 = vpack.c.b16 %v4468, %v4467
        %v4482 = vpack.c.b16 %v4470, %v4469
        %v4483 = vpack.c.b16 %v4472, %v4471
        %v4484 = vpack.c.b16 %v4474, %v4473
        %v4485 = vpack.c.b16 %v4476, %v4475
        %v4486 = vpack.c.b16 %v4478, %v4477
        %4495 = vmatpush.bf16.msra.mxu0 %v4486
        %4496 = vmatpush.bf16.msra.mxu0 %v4485
        %4497 = vmatpush.bf16.msra.mxu0 %v4484
        %4498 = vmatpush.bf16.msra.mxu0 %v4483
        %4499 = vmatpush.bf16.msra.mxu0 %v4482
        %4500 = vmatpush.bf16.msra.mxu0 %v4481
        %4501 = vmatpush.bf16.msra.mxu0 %v4480
        %4502 = vmatpush.bf16.msra.mxu0 %v4479
        %4503 = vmatmul.bf16.gmra.mxu0 %v4414
        %v4504 = vpop.f32.mrf.mxu0
        %v4505 = vadd.f32 0.0, %v4504
        %v4506 = vpop.f32.mrf.mxu0
        %v4507 = vadd.f32 0.0, %v4506
        %4508 = vmatmul.bf16.gmra.mxu0 %v4415
        %v4509 = vpop.f32.mrf.mxu0
        %v4510 = vadd.f32 0.0, %v4509
        %v4511 = vpop.f32.mrf.mxu0
        %v4512 = vadd.f32 0.0, %v4511
        %4513 = vmatmul.bf16.gmra.mxu0 %v4416
        %v4514 = vpop.f32.mrf.mxu0
        %v4515 = vadd.f32 0.0, %v4514
        %v4516 = vpop.f32.mrf.mxu0
        %v4517 = vadd.f32 0.0, %v4516
        %4518 = vmatmul.bf16.gmra.mxu0 %v4417
        %v4519 = vpop.f32.mrf.mxu0
        %v4520 = vadd.f32 0.0, %v4519
        %v4521 = vpop.f32.mrf.mxu0
        %v4522 = vadd.f32 0.0, %v4521
        %4523 = vmatmul.bf16.gmra.mxu0 %v4418
        %v4524 = vpop.f32.mrf.mxu0
        %v4525 = vadd.f32 0.0, %v4524
        %v4526 = vpop.f32.mrf.mxu0
        %v4527 = vadd.f32 0.0, %v4526
        %4528 = vmatmul.bf16.gmra.mxu0 %v4419
        %v4529 = vpop.f32.mrf.mxu0
        %v4530 = vadd.f32 0.0, %v4529
        %v4531 = vpop.f32.mrf.mxu0
        %v4532 = vadd.f32 0.0, %v4531
        %4533 = vmatmul.bf16.gmra.mxu0 %v4420
        %v4534 = vpop.f32.mrf.mxu0
        %v4535 = vadd.f32 0.0, %v4534
        %v4536 = vpop.f32.mrf.mxu0
        %v4537 = vadd.f32 0.0, %v4536
        %4538 = vmatmul.bf16.gmra.mxu0 %v4421
        %v4539 = vpop.f32.mrf.mxu0
        %v4540 = vadd.f32 0.0, %v4539
        %v4541 = vpop.f32.mrf.mxu0
        %v4542 = vadd.f32 0.0, %v4541
        %4543 = vmatmul.bf16.gmra.mxu0 %v4422
        %v4544 = vpop.f32.mrf.mxu0
        %v4545 = vadd.f32 0.0, %v4544
        %v4546 = vpop.f32.mrf.mxu0
        %v4547 = vadd.f32 0.0, %v4546
        %4548 = vmatmul.bf16.gmra.mxu0 %v4423
        %v4549 = vpop.f32.mrf.mxu0
        %v4550 = vadd.f32 0.0, %v4549
        %v4551 = vpop.f32.mrf.mxu0
        %v4552 = vadd.f32 0.0, %v4551
        %4553 = vmatmul.bf16.gmra.mxu0 %v4424
        %v4554 = vpop.f32.mrf.mxu0
        %v4555 = vadd.f32 0.0, %v4554
        %v4556 = vpop.f32.mrf.mxu0
        %v4557 = vadd.f32 0.0, %v4556
        %4558 = vmatmul.bf16.gmra.mxu0 %v4425
        %v4559 = vpop.f32.mrf.mxu0
        %v4560 = vadd.f32 0.0, %v4559
        %v4561 = vpop.f32.mrf.mxu0
        %v4562 = vadd.f32 0.0, %v4561
        %4563 = vmatmul.bf16.gmra.mxu0 %v4426
        %v4564 = vpop.f32.mrf.mxu0
        %v4565 = vadd.f32 0.0, %v4564
        %v4566 = vpop.f32.mrf.mxu0
        %v4567 = vadd.f32 0.0, %v4566
        %4568 = vmatmul.bf16.gmra.mxu0 %v4427
        %v4569 = vpop.f32.mrf.mxu0
        %v4570 = vadd.f32 0.0, %v4569
        %v4571 = vpop.f32.mrf.mxu0
        %v4572 = vadd.f32 0.0, %v4571
        %4573 = vmatmul.bf16.gmra.mxu0 %v4428
        %v4574 = vpop.f32.mrf.mxu0
        %v4575 = vadd.f32 0.0, %v4574
        %v4576 = vpop.f32.mrf.mxu0
        %v4577 = vadd.f32 0.0, %v4576
        %4578 = vmatmul.bf16.gmra.mxu0 %v4429
        %v4579 = vpop.f32.mrf.mxu0
        %v4580 = vadd.f32 0.0, %v4579
        %v4581 = vpop.f32.mrf.mxu0
        %v4582 = vadd.f32 0.0, %v4581
        %4583 = vdwg.mxu0
        %v4584 = vadd.f32 %v4350, %v4505
        %v4585 = vadd.f32 %v4351, %v4507
        %v4586 = vadd.f32 %v4352, %v4510
        %v4587 = vadd.f32 %v4353, %v4512
        %v4588 = vadd.f32 %v4354, %v4515
        %v4589 = vadd.f32 %v4355, %v4517
        %v4590 = vadd.f32 %v4356, %v4520
        %v4591 = vadd.f32 %v4357, %v4522
        %v4592 = vadd.f32 %v4358, %v4525
        %v4593 = vadd.f32 %v4359, %v4527
        %v4594 = vadd.f32 %v4360, %v4530
        %v4595 = vadd.f32 %v4361, %v4532
        %v4596 = vadd.f32 %v4362, %v4535
        %v4597 = vadd.f32 %v4363, %v4537
        %v4598 = vadd.f32 %v4364, %v4540
        %v4599 = vadd.f32 %v4365, %v4542
        %v4600 = vadd.f32 %v4366, %v4545
        %v4601 = vadd.f32 %v4367, %v4547
        %v4602 = vadd.f32 %v4368, %v4550
        %v4603 = vadd.f32 %v4369, %v4552
        %v4604 = vadd.f32 %v4370, %v4555
        %v4605 = vadd.f32 %v4371, %v4557
        %v4606 = vadd.f32 %v4372, %v4560
        %v4607 = vadd.f32 %v4373, %v4562
        %v4608 = vadd.f32 %v4374, %v4565
        %v4609 = vadd.f32 %v4375, %v4567
        %v4610 = vadd.f32 %v4376, %v4570
        %v4611 = vadd.f32 %v4377, %v4572
        %v4612 = vadd.f32 %v4378, %v4575
        %v4613 = vadd.f32 %v4379, %v4577
        %v4614 = vadd.f32 %v4380, %v4580
        %v4615 = vadd.f32 %v4381, %v4582
        %v4616 = vld [vmem:[%s1893 + $0x1] sm:$0xff]
        %v4617 = vld [vmem:[%s1893 + $0x9] sm:$0xff]
        %v4618 = vld [vmem:[%s1893 + $0x19] sm:$0xff]
        %v4619 = vld [vmem:[%s1893 + $0x21] sm:$0xff]
        %v4620 = vld [vmem:[%s1893 + $0x31] sm:$0xff]
        %v4621 = vld [vmem:[%s1893 + $0x39] sm:$0xff]
        %v4622 = vld [vmem:[%s1893 + $0x49] sm:$0xff]
        %v4623 = vld [vmem:[%s1893 + $0x51] sm:$0xff]
        %v4624 = vld [vmem:[%s1893 + $0x61] sm:$0xff]
        %v4625 = vld [vmem:[%s1893 + $0x69] sm:$0xff]
        %v4626 = vld [vmem:[%s1893 + $0x79] sm:$0xff]
        %v4627 = vld [vmem:[%s1893 + $0x81] sm:$0xff]
        %v4628 = vld [vmem:[%s1893 + $0x91] sm:$0xff]
        %v4629 = vld [vmem:[%s1893 + $0x99] sm:$0xff]
        %v4630 = vld [vmem:[%s1893 + $0xa9] sm:$0xff]
        %v4631 = vld [vmem:[%s1893 + $0xb1] sm:$0xff]
        %v4632 = vld [vmem:[%s1893 + $0xc1] sm:$0xff]
        %v4633 = vld [vmem:[%s1893 + $0xc9] sm:$0xff]
        %v4634 = vld [vmem:[%s1893 + $0xd9] sm:$0xff]
        %v4635 = vld [vmem:[%s1893 + $0xe1] sm:$0xff]
        %v4636 = vld [vmem:[%s1893 + $0xf1] sm:$0xff]
        %v4637 = vld [vmem:[%s1893 + $0xf9] sm:$0xff]
        %v4638 = vld [vmem:[%s1893 + $0x109] sm:$0xff]
        %v4639 = vld [vmem:[%s1893 + $0x111] sm:$0xff]
        %v4640 = vld [vmem:[%s1893 + $0x121] sm:$0xff]
        %v4641 = vld [vmem:[%s1893 + $0x129] sm:$0xff]
        %v4642 = vld [vmem:[%s1893 + $0x139] sm:$0xff]
        %v4643 = vld [vmem:[%s1893 + $0x141] sm:$0xff]
        %v4644 = vld [vmem:[%s1893 + $0x151] sm:$0xff]
        %v4645 = vld [vmem:[%s1893 + $0x159] sm:$0xff]
        %v4646 = vld [vmem:[%s1893 + $0x169] sm:$0xff]
        %v4647 = vld [vmem:[%s1893 + $0x171] sm:$0xff]
        %v4648 = vpack.c.bf16 %v4617, %v4616
        %v4649 = vpack.c.bf16 %v4619, %v4618
        %v4650 = vpack.c.bf16 %v4621, %v4620
        %v4651 = vpack.c.bf16 %v4623, %v4622
        %v4652 = vpack.c.bf16 %v4625, %v4624
        %v4653 = vpack.c.bf16 %v4627, %v4626
        %v4654 = vpack.c.bf16 %v4629, %v4628
        %v4655 = vpack.c.bf16 %v4631, %v4630
        %v4656 = vpack.c.bf16 %v4633, %v4632
        %v4657 = vpack.c.bf16 %v4635, %v4634
        %v4658 = vpack.c.bf16 %v4637, %v4636
        %v4659 = vpack.c.bf16 %v4639, %v4638
        %v4660 = vpack.c.bf16 %v4641, %v4640
        %v4661 = vpack.c.bf16 %v4643, %v4642
        %v4662 = vpack.c.bf16 %v4645, %v4644
        %v4663 = vpack.c.bf16 %v4647, %v4646
        %s4664 = scalar_lea.vmem [#allocation8], 448
        %v4665 = vld [vmem:[%s4664] sm:$0xf]
        %v4666 = vld [vmem:[%s4664 + $0x4] sm:$0xf]
        %v4667 = vld [vmem:[%s4664 + $0x8] sm:$0xf]
        %v4668 = vld [vmem:[%s4664 + $0xc] sm:$0xf]
        %v4669 = vld [vmem:[%s4664 + $0x10] sm:$0xf]
        %v4670 = vld [vmem:[%s4664 + $0x14] sm:$0xf]
        %v4671 = vld [vmem:[%s4664 + $0x18] sm:$0xf]
        %v4672 = vld [vmem:[%s4664 + $0x1c] sm:$0xf]
        %v4673 = vld [vmem:[%s4664 + $0x20] sm:$0xf]
        %v4674 = vld [vmem:[%s4664 + $0x24] sm:$0xf]
        %v4675 = vld [vmem:[%s4664 + $0x28] sm:$0xf]
        %v4676 = vld [vmem:[%s4664 + $0x2c] sm:$0xf]
        %v4677 = vld [vmem:[%s4664 + $0x30] sm:$0xf]
        %v4678 = vld [vmem:[%s4664 + $0x34] sm:$0xf]
        %v4679 = vld [vmem:[%s4664 + $0x38] sm:$0xf]
        %v4680 = vld [vmem:[%s4664 + $0x3c] sm:$0xf]
        %v4697 = vunpack.c.l.b16 %v4665
        %v4698 = vunpack.c.l.b16 %v4666
        %v4699 = vunpack.c.l.b16 %v4667
        %v4700 = vunpack.c.l.b16 %v4668
        %v4701 = vunpack.c.l.b16 %v4669
        %v4702 = vunpack.c.l.b16 %v4670
        %v4703 = vunpack.c.l.b16 %v4671
        %v4704 = vunpack.c.l.b16 %v4672
        %v4705 = vunpack.c.l.b16 %v4673
        %v4706 = vunpack.c.l.b16 %v4674
        %v4707 = vunpack.c.l.b16 %v4675
        %v4708 = vunpack.c.l.b16 %v4676
        %v4709 = vunpack.c.l.b16 %v4677
        %v4710 = vunpack.c.l.b16 %v4678
        %v4711 = vunpack.c.l.b16 %v4679
        %v4712 = vunpack.c.l.b16 %v4680
        %v4713 = vpack.c.b16 %v4698, %v4697
        %v4714 = vpack.c.b16 %v4700, %v4699
        %v4715 = vpack.c.b16 %v4702, %v4701
        %v4716 = vpack.c.b16 %v4704, %v4703
        %v4717 = vpack.c.b16 %v4706, %v4705
        %v4718 = vpack.c.b16 %v4708, %v4707
        %v4719 = vpack.c.b16 %v4710, %v4709
        %v4720 = vpack.c.b16 %v4712, %v4711
        %4729 = vmatpush.bf16.msra.mxu0 %v4720
        %4730 = vmatpush.bf16.msra.mxu0 %v4719
        %4731 = vmatpush.bf16.msra.mxu0 %v4718
        %4732 = vmatpush.bf16.msra.mxu0 %v4717
        %4733 = vmatpush.bf16.msra.mxu0 %v4716
        %4734 = vmatpush.bf16.msra.mxu0 %v4715
        %4735 = vmatpush.bf16.msra.mxu0 %v4714
        %4736 = vmatpush.bf16.msra.mxu0 %v4713
        %4737 = vmatmul.bf16.gmra.mxu0 %v4648
        %v4738 = vpop.f32.mrf.mxu0
        %v4739 = vadd.f32 0.0, %v4738
        %v4740 = vpop.f32.mrf.mxu0
        %v4741 = vadd.f32 0.0, %v4740
        %4742 = vmatmul.bf16.gmra.mxu0 %v4649
        %v4743 = vpop.f32.mrf.mxu0
        %v4744 = vadd.f32 0.0, %v4743
        %v4745 = vpop.f32.mrf.mxu0
        %v4746 = vadd.f32 0.0, %v4745
        %4747 = vmatmul.bf16.gmra.mxu0 %v4650
        %v4748 = vpop.f32.mrf.mxu0
        %v4749 = vadd.f32 0.0, %v4748
        %v4750 = vpop.f32.mrf.mxu0
        %v4751 = vadd.f32 0.0, %v4750
        %4752 = vmatmul.bf16.gmra.mxu0 %v4651
        %v4753 = vpop.f32.mrf.mxu0
        %v4754 = vadd.f32 0.0, %v4753
        %v4755 = vpop.f32.mrf.mxu0
        %v4756 = vadd.f32 0.0, %v4755
        %4757 = vmatmul.bf16.gmra.mxu0 %v4652
        %v4758 = vpop.f32.mrf.mxu0
        %v4759 = vadd.f32 0.0, %v4758
        %v4760 = vpop.f32.mrf.mxu0
        %v4761 = vadd.f32 0.0, %v4760
        %4762 = vmatmul.bf16.gmra.mxu0 %v4653
        %v4763 = vpop.f32.mrf.mxu0
        %v4764 = vadd.f32 0.0, %v4763
        %v4765 = vpop.f32.mrf.mxu0
        %v4766 = vadd.f32 0.0, %v4765
        %4767 = vmatmul.bf16.gmra.mxu0 %v4654
        %v4768 = vpop.f32.mrf.mxu0
        %v4769 = vadd.f32 0.0, %v4768
        %v4770 = vpop.f32.mrf.mxu0
        %v4771 = vadd.f32 0.0, %v4770
        %4772 = vmatmul.bf16.gmra.mxu0 %v4655
        %v4773 = vpop.f32.mrf.mxu0
        %v4774 = vadd.f32 0.0, %v4773
        %v4775 = vpop.f32.mrf.mxu0
        %v4776 = vadd.f32 0.0, %v4775
        %4777 = vmatmul.bf16.gmra.mxu0 %v4656
        %v4778 = vpop.f32.mrf.mxu0
        %v4779 = vadd.f32 0.0, %v4778
        %v4780 = vpop.f32.mrf.mxu0
        %v4781 = vadd.f32 0.0, %v4780
        %4782 = vmatmul.bf16.gmra.mxu0 %v4657
        %v4783 = vpop.f32.mrf.mxu0
        %v4784 = vadd.f32 0.0, %v4783
        %v4785 = vpop.f32.mrf.mxu0
        %v4786 = vadd.f32 0.0, %v4785
        %4787 = vmatmul.bf16.gmra.mxu0 %v4658
        %v4788 = vpop.f32.mrf.mxu0
        %v4789 = vadd.f32 0.0, %v4788
        %v4790 = vpop.f32.mrf.mxu0
        %v4791 = vadd.f32 0.0, %v4790
        %4792 = vmatmul.bf16.gmra.mxu0 %v4659
        %v4793 = vpop.f32.mrf.mxu0
        %v4794 = vadd.f32 0.0, %v4793
        %v4795 = vpop.f32.mrf.mxu0
        %v4796 = vadd.f32 0.0, %v4795
        %4797 = vmatmul.bf16.gmra.mxu0 %v4660
        %v4798 = vpop.f32.mrf.mxu0
        %v4799 = vadd.f32 0.0, %v4798
        %v4800 = vpop.f32.mrf.mxu0
        %v4801 = vadd.f32 0.0, %v4800
        %4802 = vmatmul.bf16.gmra.mxu0 %v4661
        %v4803 = vpop.f32.mrf.mxu0
        %v4804 = vadd.f32 0.0, %v4803
        %v4805 = vpop.f32.mrf.mxu0
        %v4806 = vadd.f32 0.0, %v4805
        %4807 = vmatmul.bf16.gmra.mxu0 %v4662
        %v4808 = vpop.f32.mrf.mxu0
        %v4809 = vadd.f32 0.0, %v4808
        %v4810 = vpop.f32.mrf.mxu0
        %v4811 = vadd.f32 0.0, %v4810
        %4812 = vmatmul.bf16.gmra.mxu0 %v4663
        %v4813 = vpop.f32.mrf.mxu0
        %v4814 = vadd.f32 0.0, %v4813
        %v4815 = vpop.f32.mrf.mxu0
        %v4816 = vadd.f32 0.0, %v4815
        %4817 = vdwg.mxu0
        %v4818 = vadd.f32 %v4584, %v4739
        %v4819 = vadd.f32 %v4585, %v4741
        %v4820 = vadd.f32 %v4586, %v4744
        %v4821 = vadd.f32 %v4587, %v4746
        %v4822 = vadd.f32 %v4588, %v4749
        %v4823 = vadd.f32 %v4589, %v4751
        %v4824 = vadd.f32 %v4590, %v4754
        %v4825 = vadd.f32 %v4591, %v4756
        %v4826 = vadd.f32 %v4592, %v4759
        %v4827 = vadd.f32 %v4593, %v4761
        %v4828 = vadd.f32 %v4594, %v4764
        %v4829 = vadd.f32 %v4595, %v4766
        %v4830 = vadd.f32 %v4596, %v4769
        %v4831 = vadd.f32 %v4597, %v4771
        %v4832 = vadd.f32 %v4598, %v4774
        %v4833 = vadd.f32 %v4599, %v4776
        %v4834 = vadd.f32 %v4600, %v4779
        %v4835 = vadd.f32 %v4601, %v4781
        %v4836 = vadd.f32 %v4602, %v4784
        %v4837 = vadd.f32 %v4603, %v4786
        %v4838 = vadd.f32 %v4604, %v4789
        %v4839 = vadd.f32 %v4605, %v4791
        %v4840 = vadd.f32 %v4606, %v4794
        %v4841 = vadd.f32 %v4607, %v4796
        %v4842 = vadd.f32 %v4608, %v4799
        %v4843 = vadd.f32 %v4609, %v4801
        %v4844 = vadd.f32 %v4610, %v4804
        %v4845 = vadd.f32 %v4611, %v4806
        %v4846 = vadd.f32 %v4612, %v4809
        %v4847 = vadd.f32 %v4613, %v4811
        %v4848 = vadd.f32 %v4614, %v4814
        %v4849 = vadd.f32 %v4615, %v4816
        %v4850 = vld [vmem:[%s1893 + $0x2] sm:$0xff]
        %v4851 = vld [vmem:[%s1893 + $0xa] sm:$0xff]
        %v4852 = vld [vmem:[%s1893 + $0x1a] sm:$0xff]
        %v4853 = vld [vmem:[%s1893 + $0x22] sm:$0xff]
        %v4854 = vld [vmem:[%s1893 + $0x32] sm:$0xff]
        %v4855 = vld [vmem:[%s1893 + $0x3a] sm:$0xff]
        %v4856 = vld [vmem:[%s1893 + $0x4a] sm:$0xff]
        %v4857 = vld [vmem:[%s1893 + $0x52] sm:$0xff]
        %v4858 = vld [vmem:[%s1893 + $0x62] sm:$0xff]
        %v4859 = vld [vmem:[%s1893 + $0x6a] sm:$0xff]
        %v4860 = vld [vmem:[%s1893 + $0x7a] sm:$0xff]
        %v4861 = vld [vmem:[%s1893 + $0x82] sm:$0xff]
        %v4862 = vld [vmem:[%s1893 + $0x92] sm:$0xff]
        %v4863 = vld [vmem:[%s1893 + $0x9a] sm:$0xff]
        %v4864 = vld [vmem:[%s1893 + $0xaa] sm:$0xff]
        %v4865 = vld [vmem:[%s1893 + $0xb2] sm:$0xff]
        %v4866 = vld [vmem:[%s1893 + $0xc2] sm:$0xff]
        %v4867 = vld [vmem:[%s1893 + $0xca] sm:$0xff]
        %v4868 = vld [vmem:[%s1893 + $0xda] sm:$0xff]
        %v4869 = vld [vmem:[%s1893 + $0xe2] sm:$0xff]
        %v4870 = vld [vmem:[%s1893 + $0xf2] sm:$0xff]
        %v4871 = vld [vmem:[%s1893 + $0xfa] sm:$0xff]
        %v4872 = vld [vmem:[%s1893 + $0x10a] sm:$0xff]
        %v4873 = vld [vmem:[%s1893 + $0x112] sm:$0xff]
        %v4874 = vld [vmem:[%s1893 + $0x122] sm:$0xff]
        %v4875 = vld [vmem:[%s1893 + $0x12a] sm:$0xff]
        %v4876 = vld [vmem:[%s1893 + $0x13a] sm:$0xff]
        %v4877 = vld [vmem:[%s1893 + $0x142] sm:$0xff]
        %v4878 = vld [vmem:[%s1893 + $0x152] sm:$0xff]
        %v4879 = vld [vmem:[%s1893 + $0x15a] sm:$0xff]
        %v4880 = vld [vmem:[%s1893 + $0x16a] sm:$0xff]
        %v4881 = vld [vmem:[%s1893 + $0x172] sm:$0xff]
        %v4882 = vpack.c.bf16 %v4851, %v4850
        %v4883 = vpack.c.bf16 %v4853, %v4852
        %v4884 = vpack.c.bf16 %v4855, %v4854
        %v4885 = vpack.c.bf16 %v4857, %v4856
        %v4886 = vpack.c.bf16 %v4859, %v4858
        %v4887 = vpack.c.bf16 %v4861, %v4860
        %v4888 = vpack.c.bf16 %v4863, %v4862
        %v4889 = vpack.c.bf16 %v4865, %v4864
        %v4890 = vpack.c.bf16 %v4867, %v4866
        %v4891 = vpack.c.bf16 %v4869, %v4868
        %v4892 = vpack.c.bf16 %v4871, %v4870
        %v4893 = vpack.c.bf16 %v4873, %v4872
        %v4894 = vpack.c.bf16 %v4875, %v4874
        %v4895 = vpack.c.bf16 %v4877, %v4876
        %v4896 = vpack.c.bf16 %v4879, %v4878
        %v4897 = vpack.c.bf16 %v4881, %v4880
        %s4898 = scalar_lea.vmem [#allocation8], 512
        %v4899 = vld [vmem:[%s4898] sm:$0xf]
        %v4900 = vld [vmem:[%s4898 + $0x4] sm:$0xf]
        %v4901 = vld [vmem:[%s4898 + $0x8] sm:$0xf]
        %v4902 = vld [vmem:[%s4898 + $0xc] sm:$0xf]
        %v4903 = vld [vmem:[%s4898 + $0x10] sm:$0xf]
        %v4904 = vld [vmem:[%s4898 + $0x14] sm:$0xf]
        %v4905 = vld [vmem:[%s4898 + $0x18] sm:$0xf]
        %v4906 = vld [vmem:[%s4898 + $0x1c] sm:$0xf]
        %v4907 = vld [vmem:[%s4898 + $0x20] sm:$0xf]
        %v4908 = vld [vmem:[%s4898 + $0x24] sm:$0xf]
        %v4909 = vld [vmem:[%s4898 + $0x28] sm:$0xf]
        %v4910 = vld [vmem:[%s4898 + $0x2c] sm:$0xf]
        %v4911 = vld [vmem:[%s4898 + $0x30] sm:$0xf]
        %v4912 = vld [vmem:[%s4898 + $0x34] sm:$0xf]
        %v4913 = vld [vmem:[%s4898 + $0x38] sm:$0xf]
        %v4914 = vld [vmem:[%s4898 + $0x3c] sm:$0xf]
        %v4931 = vunpack.c.l.b16 %v4899
        %v4932 = vunpack.c.l.b16 %v4900
        %v4933 = vunpack.c.l.b16 %v4901
        %v4934 = vunpack.c.l.b16 %v4902
        %v4935 = vunpack.c.l.b16 %v4903
        %v4936 = vunpack.c.l.b16 %v4904
        %v4937 = vunpack.c.l.b16 %v4905
        %v4938 = vunpack.c.l.b16 %v4906
        %v4939 = vunpack.c.l.b16 %v4907
        %v4940 = vunpack.c.l.b16 %v4908
        %v4941 = vunpack.c.l.b16 %v4909
        %v4942 = vunpack.c.l.b16 %v4910
        %v4943 = vunpack.c.l.b16 %v4911
        %v4944 = vunpack.c.l.b16 %v4912
        %v4945 = vunpack.c.l.b16 %v4913
        %v4946 = vunpack.c.l.b16 %v4914
        %v4947 = vpack.c.b16 %v4932, %v4931
        %v4948 = vpack.c.b16 %v4934, %v4933
        %v4949 = vpack.c.b16 %v4936, %v4935
        %v4950 = vpack.c.b16 %v4938, %v4937
        %v4951 = vpack.c.b16 %v4940, %v4939
        %v4952 = vpack.c.b16 %v4942, %v4941
        %v4953 = vpack.c.b16 %v4944, %v4943
        %v4954 = vpack.c.b16 %v4946, %v4945
        %4963 = vmatpush.bf16.msra.mxu0 %v4954
        %4964 = vmatpush.bf16.msra.mxu0 %v4953
        %4965 = vmatpush.bf16.msra.mxu0 %v4952
        %4966 = vmatpush.bf16.msra.mxu0 %v4951
        %4967 = vmatpush.bf16.msra.mxu0 %v4950
        %4968 = vmatpush.bf16.msra.mxu0 %v4949
        %4969 = vmatpush.bf16.msra.mxu0 %v4948
        %4970 = vmatpush.bf16.msra.mxu0 %v4947
        %4971 = vmatmul.bf16.gmra.mxu0 %v4882
        %v4972 = vpop.f32.mrf.mxu0
        %v4973 = vadd.f32 0.0, %v4972
        %v4974 = vpop.f32.mrf.mxu0
        %v4975 = vadd.f32 0.0, %v4974
        %4976 = vmatmul.bf16.gmra.mxu0 %v4883
        %v4977 = vpop.f32.mrf.mxu0
        %v4978 = vadd.f32 0.0, %v4977
        %v4979 = vpop.f32.mrf.mxu0
        %v4980 = vadd.f32 0.0, %v4979
        %4981 = vmatmul.bf16.gmra.mxu0 %v4884
        %v4982 = vpop.f32.mrf.mxu0
        %v4983 = vadd.f32 0.0, %v4982
        %v4984 = vpop.f32.mrf.mxu0
        %v4985 = vadd.f32 0.0, %v4984
        %4986 = vmatmul.bf16.gmra.mxu0 %v4885
        %v4987 = vpop.f32.mrf.mxu0
        %v4988 = vadd.f32 0.0, %v4987
        %v4989 = vpop.f32.mrf.mxu0
        %v4990 = vadd.f32 0.0, %v4989
        %4991 = vmatmul.bf16.gmra.mxu0 %v4886
        %v4992 = vpop.f32.mrf.mxu0
        %v4993 = vadd.f32 0.0, %v4992
        %v4994 = vpop.f32.mrf.mxu0
        %v4995 = vadd.f32 0.0, %v4994
        %4996 = vmatmul.bf16.gmra.mxu0 %v4887
        %v4997 = vpop.f32.mrf.mxu0
        %v4998 = vadd.f32 0.0, %v4997
        %v4999 = vpop.f32.mrf.mxu0
        %v5000 = vadd.f32 0.0, %v4999
        %5001 = vmatmul.bf16.gmra.mxu0 %v4888
        %v5002 = vpop.f32.mrf.mxu0
        %v5003 = vadd.f32 0.0, %v5002
        %v5004 = vpop.f32.mrf.mxu0
        %v5005 = vadd.f32 0.0, %v5004
        %5006 = vmatmul.bf16.gmra.mxu0 %v4889
        %v5007 = vpop.f32.mrf.mxu0
        %v5008 = vadd.f32 0.0, %v5007
        %v5009 = vpop.f32.mrf.mxu0
        %v5010 = vadd.f32 0.0, %v5009
        %5011 = vmatmul.bf16.gmra.mxu0 %v4890
        %v5012 = vpop.f32.mrf.mxu0
        %v5013 = vadd.f32 0.0, %v5012
        %v5014 = vpop.f32.mrf.mxu0
        %v5015 = vadd.f32 0.0, %v5014
        %5016 = vmatmul.bf16.gmra.mxu0 %v4891
        %v5017 = vpop.f32.mrf.mxu0
        %v5018 = vadd.f32 0.0, %v5017
        %v5019 = vpop.f32.mrf.mxu0
        %v5020 = vadd.f32 0.0, %v5019
        %5021 = vmatmul.bf16.gmra.mxu0 %v4892
        %v5022 = vpop.f32.mrf.mxu0
        %v5023 = vadd.f32 0.0, %v5022
        %v5024 = vpop.f32.mrf.mxu0
        %v5025 = vadd.f32 0.0, %v5024
        %5026 = vmatmul.bf16.gmra.mxu0 %v4893
        %v5027 = vpop.f32.mrf.mxu0
        %v5028 = vadd.f32 0.0, %v5027
        %v5029 = vpop.f32.mrf.mxu0
        %v5030 = vadd.f32 0.0, %v5029
        %5031 = vmatmul.bf16.gmra.mxu0 %v4894
        %v5032 = vpop.f32.mrf.mxu0
        %v5033 = vadd.f32 0.0, %v5032
        %v5034 = vpop.f32.mrf.mxu0
        %v5035 = vadd.f32 0.0, %v5034
        %5036 = vmatmul.bf16.gmra.mxu0 %v4895
        %v5037 = vpop.f32.mrf.mxu0
        %v5038 = vadd.f32 0.0, %v5037
        %v5039 = vpop.f32.mrf.mxu0
        %v5040 = vadd.f32 0.0, %v5039
        %5041 = vmatmul.bf16.gmra.mxu0 %v4896
        %v5042 = vpop.f32.mrf.mxu0
        %v5043 = vadd.f32 0.0, %v5042
        %v5044 = vpop.f32.mrf.mxu0
        %v5045 = vadd.f32 0.0, %v5044
        %5046 = vmatmul.bf16.gmra.mxu0 %v4897
        %v5047 = vpop.f32.mrf.mxu0
        %v5048 = vadd.f32 0.0, %v5047
        %v5049 = vpop.f32.mrf.mxu0
        %v5050 = vadd.f32 0.0, %v5049
        %5051 = vdwg.mxu0
        %v5052 = vadd.f32 %v4818, %v4973
        %v5053 = vadd.f32 %v4819, %v4975
        %v5054 = vadd.f32 %v4820, %v4978
        %v5055 = vadd.f32 %v4821, %v4980
        %v5056 = vadd.f32 %v4822, %v4983
        %v5057 = vadd.f32 %v4823, %v4985
        %v5058 = vadd.f32 %v4824, %v4988
        %v5059 = vadd.f32 %v4825, %v4990
        %v5060 = vadd.f32 %v4826, %v4993
        %v5061 = vadd.f32 %v4827, %v4995
        %v5062 = vadd.f32 %v4828, %v4998
        %v5063 = vadd.f32 %v4829, %v5000
        %v5064 = vadd.f32 %v4830, %v5003
        %v5065 = vadd.f32 %v4831, %v5005
        %v5066 = vadd.f32 %v4832, %v5008
        %v5067 = vadd.f32 %v4833, %v5010
        %v5068 = vadd.f32 %v4834, %v5013
        %v5069 = vadd.f32 %v4835, %v5015
        %v5070 = vadd.f32 %v4836, %v5018
        %v5071 = vadd.f32 %v4837, %v5020
        %v5072 = vadd.f32 %v4838, %v5023
        %v5073 = vadd.f32 %v4839, %v5025
        %v5074 = vadd.f32 %v4840, %v5028
        %v5075 = vadd.f32 %v4841, %v5030
        %v5076 = vadd.f32 %v4842, %v5033
        %v5077 = vadd.f32 %v4843, %v5035
        %v5078 = vadd.f32 %v4844, %v5038
        %v5079 = vadd.f32 %v4845, %v5040
        %v5080 = vadd.f32 %v4846, %v5043
        %v5081 = vadd.f32 %v4847, %v5045
        %v5082 = vadd.f32 %v4848, %v5048
        %v5083 = vadd.f32 %v4849, %v5050
        %v5084 = vadd.f32 %v5052, %v5053
        %v5085 = vadd.f32 %v5084, %v5054
        %v5086 = vadd.f32 %v5085, %v5055
        %v5087 = vadd.f32 %v5086, %v5056
        %v5088 = vadd.f32 %v5087, %v5057
        %v5089 = vadd.f32 %v5088, %v5058
        %v5090 = vadd.f32 %v5089, %v5059
        %v5091 = vadd.f32 %v5090, %v5060
        %v5092 = vadd.f32 %v5091, %v5061
        %v5093 = vadd.f32 %v5092, %v5062
        %v5094 = vadd.f32 %v5093, %v5063
        %v5095 = vadd.f32 %v5094, %v5064
        %v5096 = vadd.f32 %v5095, %v5065
        %v5097 = vadd.f32 %v5096, %v5066
        %v5098 = vadd.f32 %v5097, %v5067
        %v5099 = vadd.f32 %v5098, %v5068
        %v5100 = vadd.f32 %v5099, %v5069
        %v5101 = vadd.f32 %v5100, %v5070
        %v5102 = vadd.f32 %v5101, %v5071
        %v5103 = vadd.f32 %v5102, %v5072
        %v5104 = vadd.f32 %v5103, %v5073
        %v5105 = vadd.f32 %v5104, %v5074
        %v5106 = vadd.f32 %v5105, %v5075
        %v5107 = vadd.f32 %v5106, %v5076
        %v5108 = vadd.f32 %v5107, %v5077
        %v5109 = vadd.f32 %v5108, %v5078
        %v5110 = vadd.f32 %v5109, %v5079
        %v5111 = vadd.f32 %v5110, %v5080
        %v5112 = vadd.f32 %v5111, %v5081
        %v5113 = vadd.f32 %v5112, %v5082
        %v5114 = vadd.f32 %v5113, %v5083
        %v5115 = vrot.slane %v5114, 4
        %v5116 = vadd.f32 %v5114, %v5115
        %v5117 = vrot.slane %v5116, 2
        %v5118 = vadd.f32 %v5116, %v5117
        %v5119 = vrot.slane %v5118, 1
        %v5120 = vadd.f32 %v5118, %v5119
        %v5121 = vmul.f32 %v5120, %v2639
        %v5122 = vld [vmem:[#allocation9] sm:$0xff]
        %v5123 = vld [vmem:[#allocation9 + $0x8] sm:$0xff]
        %v5124 = vld [vmem:[#allocation9 + $0x10] sm:$0xff]
        %v5125 = vld [vmem:[#allocation9 + $0x18] sm:$0xff]
        %v5126 = vld [vmem:[#allocation9 + $0x20] sm:$0xff]
        %v5127 = vld [vmem:[#allocation9 + $0x28] sm:$0xff]
        %v5128 = vld [vmem:[#allocation9 + $0x30] sm:$0xff]
        %v5129 = vld [vmem:[#allocation9 + $0x38] sm:$0xff]
        %v5130 = vld [vmem:[#allocation9 + $0x40] sm:$0xff]
        %v5131 = vld [vmem:[#allocation9 + $0x48] sm:$0xff]
        %v5132 = vld [vmem:[#allocation9 + $0x50] sm:$0xff]
        %v5133 = vld [vmem:[#allocation9 + $0x58] sm:$0xff]
        %v5134 = vld [vmem:[#allocation9 + $0x60] sm:$0xff]
        %v5135 = vld [vmem:[#allocation9 + $0x68] sm:$0xff]
        %v5136 = vld [vmem:[#allocation9 + $0x70] sm:$0xff]
        %v5137 = vld [vmem:[#allocation9 + $0x78] sm:$0xff]
        %5138 = vmatpush.msra.mxu0 %v5137
        %5139 = vmatpush.msra.mxu0 %v5136
        %5140 = vmatpush.msra.mxu0 %v5135
        %5141 = vmatpush.msra.mxu0 %v5134
        %5142 = vmatpush.msra.mxu0 %v5133
        %5143 = vmatpush.msra.mxu0 %v5132
        %5144 = vmatpush.msra.mxu0 %v5131
        %5145 = vmatpush.msra.mxu0 %v5130
        %5146 = vmatpush.msra.mxu0 %v5129
        %5147 = vmatpush.msra.mxu0 %v5128
        %5148 = vmatpush.msra.mxu0 %v5127
        %5149 = vmatpush.msra.mxu0 %v5126
        %5150 = vmatpush.msra.mxu0 %v5125
        %5151 = vmatpush.msra.mxu0 %v5124
        %5152 = vmatpush.msra.mxu0 %v5123
        %5153 = vmatpush.msra.mxu0 %v5122
        %5154 = vmatmul.f32.gmra.mxu0 %v5121
        %v5155 = vpop.f32.mrf.mxu0
        %v5156 = vadd.f32 0.0, %v5155
        %5157 = vdwg.mxu0
        %v5158 = vperm.slane %v5156, 0
        %v5159 = vsub.f32 %v5052, %v5158
        %v5160 = vsub.f32 %v5053, %v5158
        %v5161 = vsub.f32 %v5054, %v5158
        %v5162 = vsub.f32 %v5055, %v5158
        %v5163 = vsub.f32 %v5056, %v5158
        %v5164 = vsub.f32 %v5057, %v5158
        %v5165 = vsub.f32 %v5058, %v5158
        %v5166 = vsub.f32 %v5059, %v5158
        %v5167 = vsub.f32 %v5060, %v5158
        %v5168 = vsub.f32 %v5061, %v5158
        %v5169 = vsub.f32 %v5062, %v5158
        %v5170 = vsub.f32 %v5063, %v5158
        %v5171 = vsub.f32 %v5064, %v5158
        %v5172 = vsub.f32 %v5065, %v5158
        %v5173 = vsub.f32 %v5066, %v5158
        %v5174 = vsub.f32 %v5067, %v5158
        %v5175 = vsub.f32 %v5068, %v5158
        %v5176 = vsub.f32 %v5069, %v5158
        %v5177 = vsub.f32 %v5070, %v5158
        %v5178 = vsub.f32 %v5071, %v5158
        %v5179 = vsub.f32 %v5072, %v5158
        %v5180 = vsub.f32 %v5073, %v5158
        %v5181 = vsub.f32 %v5074, %v5158
        %v5182 = vsub.f32 %v5075, %v5158
        %v5183 = vsub.f32 %v5076, %v5158
        %v5184 = vsub.f32 %v5077, %v5158
        %v5185 = vsub.f32 %v5078, %v5158
        %v5186 = vsub.f32 %v5079, %v5158
        %v5187 = vsub.f32 %v5080, %v5158
        %v5188 = vsub.f32 %v5081, %v5158
        %v5189 = vsub.f32 %v5082, %v5158
        %v5190 = vsub.f32 %v5083, %v5158
        %v5191 = vmul.f32 %v5159, %v5159
        %v5192 = vmul.f32 %v5160, %v5160
        %v5193 = vmul.f32 %v5161, %v5161
        %v5194 = vmul.f32 %v5162, %v5162
        %v5195 = vmul.f32 %v5163, %v5163
        %v5196 = vmul.f32 %v5164, %v5164
        %v5197 = vmul.f32 %v5165, %v5165
        %v5198 = vmul.f32 %v5166, %v5166
        %v5199 = vmul.f32 %v5167, %v5167
        %v5200 = vmul.f32 %v5168, %v5168
        %v5201 = vmul.f32 %v5169, %v5169
        %v5202 = vmul.f32 %v5170, %v5170
        %v5203 = vmul.f32 %v5171, %v5171
        %v5204 = vmul.f32 %v5172, %v5172
        %v5205 = vmul.f32 %v5173, %v5173
        %v5206 = vmul.f32 %v5174, %v5174
        %v5207 = vmul.f32 %v5175, %v5175
        %v5208 = vmul.f32 %v5176, %v5176
        %v5209 = vmul.f32 %v5177, %v5177
        %v5210 = vmul.f32 %v5178, %v5178
        %v5211 = vmul.f32 %v5179, %v5179
        %v5212 = vmul.f32 %v5180, %v5180
        %v5213 = vmul.f32 %v5181, %v5181
        %v5214 = vmul.f32 %v5182, %v5182
        %v5215 = vmul.f32 %v5183, %v5183
        %v5216 = vmul.f32 %v5184, %v5184
        %v5217 = vmul.f32 %v5185, %v5185
        %v5218 = vmul.f32 %v5186, %v5186
        %v5219 = vmul.f32 %v5187, %v5187
        %v5220 = vmul.f32 %v5188, %v5188
        %v5221 = vmul.f32 %v5189, %v5189
        %v5222 = vmul.f32 %v5190, %v5190
        %v5223 = vadd.f32 %v5191, %v5192
        %v5224 = vadd.f32 %v5223, %v5193
        %v5225 = vadd.f32 %v5224, %v5194
        %v5226 = vadd.f32 %v5225, %v5195
        %v5227 = vadd.f32 %v5226, %v5196
        %v5228 = vadd.f32 %v5227, %v5197
        %v5229 = vadd.f32 %v5228, %v5198
        %v5230 = vadd.f32 %v5229, %v5199
        %v5231 = vadd.f32 %v5230, %v5200
        %v5232 = vadd.f32 %v5231, %v5201
        %v5233 = vadd.f32 %v5232, %v5202
        %v5234 = vadd.f32 %v5233, %v5203
        %v5235 = vadd.f32 %v5234, %v5204
        %v5236 = vadd.f32 %v5235, %v5205
        %v5237 = vadd.f32 %v5236, %v5206
        %v5238 = vadd.f32 %v5237, %v5207
        %v5239 = vadd.f32 %v5238, %v5208
        %v5240 = vadd.f32 %v5239, %v5209
        %v5241 = vadd.f32 %v5240, %v5210
        %v5242 = vadd.f32 %v5241, %v5211
        %v5243 = vadd.f32 %v5242, %v5212
        %v5244 = vadd.f32 %v5243, %v5213
        %v5245 = vadd.f32 %v5244, %v5214
        %v5246 = vadd.f32 %v5245, %v5215
        %v5247 = vadd.f32 %v5246, %v5216
        %v5248 = vadd.f32 %v5247, %v5217
        %v5249 = vadd.f32 %v5248, %v5218
        %v5250 = vadd.f32 %v5249, %v5219
        %v5251 = vadd.f32 %v5250, %v5220
        %v5252 = vadd.f32 %v5251, %v5221
        %v5253 = vadd.f32 %v5252, %v5222
        %v5254 = vrot.slane %v5253, 4
        %v5255 = vadd.f32 %v5253, %v5254
        %v5256 = vrot.slane %v5255, 2
        %v5257 = vadd.f32 %v5255, %v5256
        %v5258 = vrot.slane %v5257, 1
        %v5259 = vadd.f32 %v5257, %v5258
        %v5260 = vmul.f32 %v5259, %v2639
        %5261 = vmatpush.msra.mxu0 %v5137
        %5262 = vmatpush.msra.mxu0 %v5136
        %5263 = vmatpush.msra.mxu0 %v5135
        %5264 = vmatpush.msra.mxu0 %v5134
        %5265 = vmatpush.msra.mxu0 %v5133
        %5266 = vmatpush.msra.mxu0 %v5132
        %5267 = vmatpush.msra.mxu0 %v5131
        %5268 = vmatpush.msra.mxu0 %v5130
        %5269 = vmatpush.msra.mxu0 %v5129
        %5270 = vmatpush.msra.mxu0 %v5128
        %5271 = vmatpush.msra.mxu0 %v5127
        %5272 = vmatpush.msra.mxu0 %v5126
        %5273 = vmatpush.msra.mxu0 %v5125
        %5274 = vmatpush.msra.mxu0 %v5124
        %5275 = vmatpush.msra.mxu0 %v5123
        %5276 = vmatpush.msra.mxu0 %v5122
        %5277 = vmatmul.f32.gmra.mxu0 %v5260
        %v5278 = vpop.f32.mrf.mxu0
        %v5279 = vadd.f32 1e-05, %v5278
        %5280 = vdwg.mxu0
        %v5281 = vrsqrt.pop %v5279
        %v5282 = vmul.f32 %v5281, %v5279
        %v5283 = vmul.f32 %v5282, %v5281
        %v5284 = vmul.f32 0.5, %v5283
        %v5285 = vsub.f32 1.5, %v5284
        %v5286 = vmul.f32 %v5281, %v5285
        %vm5287 = vweird.f32 %v5279
        %vm5288 = vweird.f32 %v5281
        %vm5289 = vmor %vm5287, %vm5288
        %v5290 = vsel %vm5289, %v5281, %v5286
        %v5291 = vperm.slane %v5290, 0
        %v5292 = vmul.f32 %v5159, %v5291
        %v5293 = vmul.f32 %v5160, %v5291
        %v5294 = vmul.f32 %v5161, %v5291
        %v5295 = vmul.f32 %v5162, %v5291
        %v5296 = vmul.f32 %v5163, %v5291
        %v5297 = vmul.f32 %v5164, %v5291
        %v5298 = vmul.f32 %v5165, %v5291
        %v5299 = vmul.f32 %v5166, %v5291
        %v5300 = vmul.f32 %v5167, %v5291
        %v5301 = vmul.f32 %v5168, %v5291
        %v5302 = vmul.f32 %v5169, %v5291
        %v5303 = vmul.f32 %v5170, %v5291
        %v5304 = vmul.f32 %v5171, %v5291
        %v5305 = vmul.f32 %v5172, %v5291
        %v5306 = vmul.f32 %v5173, %v5291
        %v5307 = vmul.f32 %v5174, %v5291
        %v5308 = vmul.f32 %v5175, %v5291
        %v5309 = vmul.f32 %v5176, %v5291
        %v5310 = vmul.f32 %v5177, %v5291
        %v5311 = vmul.f32 %v5178, %v5291
        %v5312 = vmul.f32 %v5179, %v5291
        %v5313 = vmul.f32 %v5180, %v5291
        %v5314 = vmul.f32 %v5181, %v5291
        %v5315 = vmul.f32 %v5182, %v5291
        %v5316 = vmul.f32 %v5183, %v5291
        %v5317 = vmul.f32 %v5184, %v5291
        %v5318 = vmul.f32 %v5185, %v5291
        %v5319 = vmul.f32 %v5186, %v5291
        %v5320 = vmul.f32 %v5187, %v5291
        %v5321 = vmul.f32 %v5188, %v5291
        %v5322 = vmul.f32 %v5189, %v5291
        %v5323 = vmul.f32 %v5190, %v5291
        %v5324 = vld [vmem:[%s5] sm:$0x1]
        %v5326 = vperm.slane %v5324, 0
        %v5328 = vmul.f32 %v5292, %v5326
        %v5329 = vmul.f32 %v5293, %v5326
        %v5330 = vmul.f32 %v5294, %v5326
        %v5331 = vmul.f32 %v5295, %v5326
        %v5332 = vmul.f32 %v5296, %v5326
        %v5333 = vmul.f32 %v5297, %v5326
        %v5334 = vmul.f32 %v5298, %v5326
        %v5335 = vmul.f32 %v5299, %v5326
        %v5336 = vmul.f32 %v5300, %v5326
        %v5337 = vmul.f32 %v5301, %v5326
        %v5338 = vmul.f32 %v5302, %v5326
        %v5339 = vmul.f32 %v5303, %v5326
        %v5340 = vmul.f32 %v5304, %v5326
        %v5341 = vmul.f32 %v5305, %v5326
        %v5342 = vmul.f32 %v5306, %v5326
        %v5343 = vmul.f32 %v5307, %v5326
        %v5344 = vmul.f32 %v5308, %v5326
        %v5345 = vmul.f32 %v5309, %v5326
        %v5346 = vmul.f32 %v5310, %v5326
        %v5347 = vmul.f32 %v5311, %v5326
        %v5348 = vmul.f32 %v5312, %v5326
        %v5349 = vmul.f32 %v5313, %v5326
        %v5350 = vmul.f32 %v5314, %v5326
        %v5351 = vmul.f32 %v5315, %v5326
        %v5352 = vmul.f32 %v5316, %v5326
        %v5353 = vmul.f32 %v5317, %v5326
        %v5354 = vmul.f32 %v5318, %v5326
        %v5355 = vmul.f32 %v5319, %v5326
        %v5356 = vmul.f32 %v5320, %v5326
        %v5357 = vmul.f32 %v5321, %v5326
        %v5358 = vmul.f32 %v5322, %v5326
        %v5359 = vmul.f32 %v5323, %v5326
        %v5360 = vld [vmem:[%s6] sm:$0x1]
        %v5362 = vperm.slane %v5360, 0
        %v5364 = vadd.f32 %v5328, %v5362
        %v5365 = vadd.f32 %v5329, %v5362
        %v5366 = vadd.f32 %v5330, %v5362
        %v5367 = vadd.f32 %v5331, %v5362
        %v5368 = vadd.f32 %v5332, %v5362
        %v5369 = vadd.f32 %v5333, %v5362
        %v5370 = vadd.f32 %v5334, %v5362
        %v5371 = vadd.f32 %v5335, %v5362
        %v5372 = vadd.f32 %v5336, %v5362
        %v5373 = vadd.f32 %v5337, %v5362
        %v5374 = vadd.f32 %v5338, %v5362
        %v5375 = vadd.f32 %v5339, %v5362
        %v5376 = vadd.f32 %v5340, %v5362
        %v5377 = vadd.f32 %v5341, %v5362
        %v5378 = vadd.f32 %v5342, %v5362
        %v5379 = vadd.f32 %v5343, %v5362
        %v5380 = vadd.f32 %v5344, %v5362
        %v5381 = vadd.f32 %v5345, %v5362
        %v5382 = vadd.f32 %v5346, %v5362
        %v5383 = vadd.f32 %v5347, %v5362
        %v5384 = vadd.f32 %v5348, %v5362
        %v5385 = vadd.f32 %v5349, %v5362
        %v5386 = vadd.f32 %v5350, %v5362
        %v5387 = vadd.f32 %v5351, %v5362
        %v5388 = vadd.f32 %v5352, %v5362
        %v5389 = vadd.f32 %v5353, %v5362
        %v5390 = vadd.f32 %v5354, %v5362
        %v5391 = vadd.f32 %v5355, %v5362
        %v5392 = vadd.f32 %v5356, %v5362
        %v5393 = vadd.f32 %v5357, %v5362
        %v5394 = vadd.f32 %v5358, %v5362
        %v5395 = vadd.f32 %v5359, %v5362
        %vm5396 = vcmp.ge.f32.partialorder %v5364, 0.0
        %vm5397 = vcmp.ge.f32.partialorder %v5365, 0.0
        %vm5398 = vcmp.ge.f32.partialorder %v5366, 0.0
        %vm5399 = vcmp.ge.f32.partialorder %v5367, 0.0
        %vm5400 = vcmp.ge.f32.partialorder %v5368, 0.0
        %vm5401 = vcmp.ge.f32.partialorder %v5369, 0.0
        %vm5402 = vcmp.ge.f32.partialorder %v5370, 0.0
        %vm5403 = vcmp.ge.f32.partialorder %v5371, 0.0
        %vm5404 = vcmp.ge.f32.partialorder %v5372, 0.0
        %vm5405 = vcmp.ge.f32.partialorder %v5373, 0.0
        %vm5406 = vcmp.ge.f32.partialorder %v5374, 0.0
        %vm5407 = vcmp.ge.f32.partialorder %v5375, 0.0
        %vm5408 = vcmp.ge.f32.partialorder %v5376, 0.0
        %vm5409 = vcmp.ge.f32.partialorder %v5377, 0.0
        %vm5410 = vcmp.ge.f32.partialorder %v5378, 0.0
        %vm5411 = vcmp.ge.f32.partialorder %v5379, 0.0
        %vm5412 = vcmp.ge.f32.partialorder %v5380, 0.0
        %vm5413 = vcmp.ge.f32.partialorder %v5381, 0.0
        %vm5414 = vcmp.ge.f32.partialorder %v5382, 0.0
        %vm5415 = vcmp.ge.f32.partialorder %v5383, 0.0
        %vm5416 = vcmp.ge.f32.partialorder %v5384, 0.0
        %vm5417 = vcmp.ge.f32.partialorder %v5385, 0.0
        %vm5418 = vcmp.ge.f32.partialorder %v5386, 0.0
        %vm5419 = vcmp.ge.f32.partialorder %v5387, 0.0
        %vm5420 = vcmp.ge.f32.partialorder %v5388, 0.0
        %vm5421 = vcmp.ge.f32.partialorder %v5389, 0.0
        %vm5422 = vcmp.ge.f32.partialorder %v5390, 0.0
        %vm5423 = vcmp.ge.f32.partialorder %v5391, 0.0
        %vm5424 = vcmp.ge.f32.partialorder %v5392, 0.0
        %vm5425 = vcmp.ge.f32.partialorder %v5393, 0.0
        %vm5426 = vcmp.ge.f32.partialorder %v5394, 0.0
        %vm5427 = vcmp.ge.f32.partialorder %v5395, 0.0
        %v5428 = vmul.f32 %v5364, 0.1
        %v5429 = vmul.f32 %v5365, 0.1
        %v5430 = vmul.f32 %v5366, 0.1
        %v5431 = vmul.f32 %v5367, 0.1
        %v5432 = vmul.f32 %v5368, 0.1
        %v5433 = vmul.f32 %v5369, 0.1
        %v5434 = vmul.f32 %v5370, 0.1
        %v5435 = vmul.f32 %v5371, 0.1
        %v5436 = vmul.f32 %v5372, 0.1
        %v5437 = vmul.f32 %v5373, 0.1
        %v5438 = vmul.f32 %v5374, 0.1
        %v5439 = vmul.f32 %v5375, 0.1
        %v5440 = vmul.f32 %v5376, 0.1
        %v5441 = vmul.f32 %v5377, 0.1
        %v5442 = vmul.f32 %v5378, 0.1
        %v5443 = vmul.f32 %v5379, 0.1
        %v5444 = vmul.f32 %v5380, 0.1
        %v5445 = vmul.f32 %v5381, 0.1
        %v5446 = vmul.f32 %v5382, 0.1
        %v5447 = vmul.f32 %v5383, 0.1
        %v5448 = vmul.f32 %v5384, 0.1
        %v5449 = vmul.f32 %v5385, 0.1
        %v5450 = vmul.f32 %v5386, 0.1
        %v5451 = vmul.f32 %v5387, 0.1
        %v5452 = vmul.f32 %v5388, 0.1
        %v5453 = vmul.f32 %v5389, 0.1
        %v5454 = vmul.f32 %v5390, 0.1
        %v5455 = vmul.f32 %v5391, 0.1
        %v5456 = vmul.f32 %v5392, 0.1
        %v5457 = vmul.f32 %v5393, 0.1
        %v5458 = vmul.f32 %v5394, 0.1
        %v5459 = vmul.f32 %v5395, 0.1
        %v5460 = vsel %vm5396, %v5364, %v5428
        %v5461 = vsel %vm5397, %v5365, %v5429
        %v5462 = vsel %vm5398, %v5366, %v5430
        %v5463 = vsel %vm5399, %v5367, %v5431
        %v5464 = vsel %vm5400, %v5368, %v5432
        %v5465 = vsel %vm5401, %v5369, %v5433
        %v5466 = vsel %vm5402, %v5370, %v5434
        %v5467 = vsel %vm5403, %v5371, %v5435
        %v5468 = vsel %vm5404, %v5372, %v5436
        %v5469 = vsel %vm5405, %v5373, %v5437
        %v5470 = vsel %vm5406, %v5374, %v5438
        %v5471 = vsel %vm5407, %v5375, %v5439
        %v5472 = vsel %vm5408, %v5376, %v5440
        %v5473 = vsel %vm5409, %v5377, %v5441
        %v5474 = vsel %vm5410, %v5378, %v5442
        %v5475 = vsel %vm5411, %v5379, %v5443
        %v5476 = vsel %vm5412, %v5380, %v5444
        %v5477 = vsel %vm5413, %v5381, %v5445
        %v5478 = vsel %vm5414, %v5382, %v5446
        %v5479 = vsel %vm5415, %v5383, %v5447
        %v5480 = vsel %vm5416, %v5384, %v5448
        %v5481 = vsel %vm5417, %v5385, %v5449
        %v5482 = vsel %vm5418, %v5386, %v5450
        %v5483 = vsel %vm5419, %v5387, %v5451
        %v5484 = vsel %vm5420, %v5388, %v5452
        %v5485 = vsel %vm5421, %v5389, %v5453
        %v5486 = vsel %vm5422, %v5390, %v5454
        %v5487 = vsel %vm5423, %v5391, %v5455
        %v5488 = vsel %vm5424, %v5392, %v5456
        %v5489 = vsel %vm5425, %v5393, %v5457
        %v5490 = vsel %vm5426, %v5394, %v5458
        %v5491 = vsel %vm5427, %v5395, %v5459
        %5492 = vst [vmem:[%s521 + $0x1] sm:$0xff] %v5460
        %5493 = vst [vmem:[%s521 + $0x9] sm:$0xff] %v5461
        %5494 = vst [vmem:[%s521 + $0x19] sm:$0xff] %v5462
        %5495 = vst [vmem:[%s521 + $0x21] sm:$0xff] %v5463
        %5496 = vst [vmem:[%s521 + $0x31] sm:$0xff] %v5464
        %5497 = vst [vmem:[%s521 + $0x39] sm:$0xff] %v5465
        %5498 = vst [vmem:[%s521 + $0x49] sm:$0xff] %v5466
        %5499 = vst [vmem:[%s521 + $0x51] sm:$0xff] %v5467
        %5500 = vst [vmem:[%s521 + $0x61] sm:$0xff] %v5468
        %5501 = vst [vmem:[%s521 + $0x69] sm:$0xff] %v5469
        %5502 = vst [vmem:[%s521 + $0x79] sm:$0xff] %v5470
        %5503 = vst [vmem:[%s521 + $0x81] sm:$0xff] %v5471
        %5504 = vst [vmem:[%s521 + $0x91] sm:$0xff] %v5472
        %5505 = vst [vmem:[%s521 + $0x99] sm:$0xff] %v5473
        %5506 = vst [vmem:[%s521 + $0xa9] sm:$0xff] %v5474
        %5507 = vst [vmem:[%s521 + $0xb1] sm:$0xff] %v5475
        %5508 = vst [vmem:[%s521 + $0xc1] sm:$0xff] %v5476
        %5509 = vst [vmem:[%s521 + $0xc9] sm:$0xff] %v5477
        %5510 = vst [vmem:[%s521 + $0xd9] sm:$0xff] %v5478
        %5511 = vst [vmem:[%s521 + $0xe1] sm:$0xff] %v5479
        %5512 = vst [vmem:[%s521 + $0xf1] sm:$0xff] %v5480
        %5513 = vst [vmem:[%s521 + $0xf9] sm:$0xff] %v5481
        %5514 = vst [vmem:[%s521 + $0x109] sm:$0xff] %v5482
        %5515 = vst [vmem:[%s521 + $0x111] sm:$0xff] %v5483
        %5516 = vst [vmem:[%s521 + $0x121] sm:$0xff] %v5484
        %5517 = vst [vmem:[%s521 + $0x129] sm:$0xff] %v5485
        %5518 = vst [vmem:[%s521 + $0x139] sm:$0xff] %v5486
        %5519 = vst [vmem:[%s521 + $0x141] sm:$0xff] %v5487
        %5520 = vst [vmem:[%s521 + $0x151] sm:$0xff] %v5488
        %5521 = vst [vmem:[%s521 + $0x159] sm:$0xff] %v5489
        %5522 = vst [vmem:[%s521 + $0x169] sm:$0xff] %v5490
        %5523 = vst [vmem:[%s521 + $0x171] sm:$0xff] %v5491
        %v5524 = vld [vmem:[#allocation2] sm:$0xff]
        %v5525 = vld [vmem:[#allocation2 + $0x8] sm:$0xff]
        %v5526 = vld [vmem:[#allocation2 + $0x18] sm:$0xff]
        %v5527 = vld [vmem:[#allocation2 + $0x20] sm:$0xff]
        %v5528 = vld [vmem:[#allocation2 + $0x30] sm:$0xff]
        %v5529 = vld [vmem:[#allocation2 + $0x38] sm:$0xff]
        %v5530 = vld [vmem:[#allocation2 + $0x48] sm:$0xff]
        %v5531 = vld [vmem:[#allocation2 + $0x50] sm:$0xff]
        %v5532 = vld [vmem:[#allocation2 + $0x60] sm:$0xff]
        %v5533 = vld [vmem:[#allocation2 + $0x68] sm:$0xff]
        %v5534 = vld [vmem:[#allocation2 + $0x78] sm:$0xff]
        %v5535 = vld [vmem:[#allocation2 + $0x80] sm:$0xff]
        %v5536 = vld [vmem:[#allocation2 + $0x90] sm:$0xff]
        %v5537 = vld [vmem:[#allocation2 + $0x98] sm:$0xff]
        %v5538 = vld [vmem:[#allocation2 + $0xa8] sm:$0xff]
        %v5539 = vld [vmem:[#allocation2 + $0xb0] sm:$0xff]
        %v5540 = vld [vmem:[#allocation2 + $0xc0] sm:$0xff]
        %v5541 = vld [vmem:[#allocation2 + $0xc8] sm:$0xff]
        %v5542 = vld [vmem:[#allocation2 + $0xd8] sm:$0xff]
        %v5543 = vld [vmem:[#allocation2 + $0xe0] sm:$0xff]
        %v5544 = vld [vmem:[#allocation2 + $0xf0] sm:$0xff]
        %v5545 = vld [vmem:[#allocation2 + $0xf8] sm:$0xff]
        %v5546 = vld [vmem:[#allocation2 + $0x108] sm:$0xff]
        %v5547 = vld [vmem:[#allocation2 + $0x110] sm:$0xff]
        %v5548 = vld [vmem:[#allocation2 + $0x120] sm:$0xff]
        %v5549 = vld [vmem:[#allocation2 + $0x128] sm:$0xff]
        %v5550 = vld [vmem:[#allocation2 + $0x138] sm:$0xff]
        %v5551 = vld [vmem:[#allocation2 + $0x140] sm:$0xff]
        %v5552 = vld [vmem:[#allocation2 + $0x150] sm:$0xff]
        %v5553 = vld [vmem:[#allocation2 + $0x158] sm:$0xff]
        %v5554 = vld [vmem:[#allocation2 + $0x168] sm:$0xff]
        %v5555 = vld [vmem:[#allocation2 + $0x170] sm:$0xff]
        %v5556 = vpack.c.bf16 %v5525, %v5524
        %v5557 = vpack.c.bf16 %v5527, %v5526
        %v5558 = vpack.c.bf16 %v5529, %v5528
        %v5559 = vpack.c.bf16 %v5531, %v5530
        %v5560 = vpack.c.bf16 %v5533, %v5532
        %v5561 = vpack.c.bf16 %v5535, %v5534
        %v5562 = vpack.c.bf16 %v5537, %v5536
        %v5563 = vpack.c.bf16 %v5539, %v5538
        %v5564 = vpack.c.bf16 %v5541, %v5540
        %v5565 = vpack.c.bf16 %v5543, %v5542
        %v5566 = vpack.c.bf16 %v5545, %v5544
        %v5567 = vpack.c.bf16 %v5547, %v5546
        %v5568 = vpack.c.bf16 %v5549, %v5548
        %v5569 = vpack.c.bf16 %v5551, %v5550
        %v5570 = vpack.c.bf16 %v5553, %v5552
        %v5571 = vpack.c.bf16 %v5555, %v5554
        %v5572 = vld [vmem:[#allocation11] sm:$0xf]
        %v5573 = vld [vmem:[#allocation11 + $0x4] sm:$0xf]
        %v5574 = vld [vmem:[#allocation11 + $0x8] sm:$0xf]
        %v5575 = vld [vmem:[#allocation11 + $0xc] sm:$0xf]
        %v5576 = vld [vmem:[#allocation11 + $0x10] sm:$0xf]
        %v5577 = vld [vmem:[#allocation11 + $0x14] sm:$0xf]
        %v5578 = vld [vmem:[#allocation11 + $0x18] sm:$0xf]
        %v5579 = vld [vmem:[#allocation11 + $0x1c] sm:$0xf]
        %v5580 = vld [vmem:[#allocation11 + $0x20] sm:$0xf]
        %v5581 = vld [vmem:[#allocation11 + $0x24] sm:$0xf]
        %v5582 = vld [vmem:[#allocation11 + $0x28] sm:$0xf]
        %v5583 = vld [vmem:[#allocation11 + $0x2c] sm:$0xf]
        %v5584 = vld [vmem:[#allocation11 + $0x30] sm:$0xf]
        %v5585 = vld [vmem:[#allocation11 + $0x34] sm:$0xf]
        %v5586 = vld [vmem:[#allocation11 + $0x38] sm:$0xf]
        %v5587 = vld [vmem:[#allocation11 + $0x3c] sm:$0xf]
        %v5588 = vld [vmem:[#allocation2 + $0x1] sm:$0xff]
        %v5589 = vld [vmem:[#allocation2 + $0x9] sm:$0xff]
        %v5590 = vld [vmem:[#allocation2 + $0x19] sm:$0xff]
        %v5591 = vld [vmem:[#allocation2 + $0x21] sm:$0xff]
        %v5592 = vld [vmem:[#allocation2 + $0x31] sm:$0xff]
        %v5593 = vld [vmem:[#allocation2 + $0x39] sm:$0xff]
        %v5594 = vld [vmem:[#allocation2 + $0x49] sm:$0xff]
        %v5595 = vld [vmem:[#allocation2 + $0x51] sm:$0xff]
        %v5596 = vld [vmem:[#allocation2 + $0x61] sm:$0xff]
        %v5597 = vld [vmem:[#allocation2 + $0x69] sm:$0xff]
        %v5598 = vld [vmem:[#allocation2 + $0x79] sm:$0xff]
        %v5599 = vld [vmem:[#allocation2 + $0x81] sm:$0xff]
        %v5600 = vld [vmem:[#allocation2 + $0x91] sm:$0xff]
        %v5601 = vld [vmem:[#allocation2 + $0x99] sm:$0xff]
        %v5602 = vld [vmem:[#allocation2 + $0xa9] sm:$0xff]
        %v5603 = vld [vmem:[#allocation2 + $0xb1] sm:$0xff]
        %v5604 = vld [vmem:[#allocation2 + $0xc1] sm:$0xff]
        %v5605 = vld [vmem:[#allocation2 + $0xc9] sm:$0xff]
        %v5606 = vld [vmem:[#allocation2 + $0xd9] sm:$0xff]
        %v5607 = vld [vmem:[#allocation2 + $0xe1] sm:$0xff]
        %v5608 = vld [vmem:[#allocation2 + $0xf1] sm:$0xff]
        %v5609 = vld [vmem:[#allocation2 + $0xf9] sm:$0xff]
        %v5610 = vld [vmem:[#allocation2 + $0x109] sm:$0xff]
        %v5611 = vld [vmem:[#allocation2 + $0x111] sm:$0xff]
        %v5612 = vld [vmem:[#allocation2 + $0x121] sm:$0xff]
        %v5613 = vld [vmem:[#allocation2 + $0x129] sm:$0xff]
        %v5614 = vld [vmem:[#allocation2 + $0x139] sm:$0xff]
        %v5615 = vld [vmem:[#allocation2 + $0x141] sm:$0xff]
        %v5616 = vld [vmem:[#allocation2 + $0x151] sm:$0xff]
        %v5617 = vld [vmem:[#allocation2 + $0x159] sm:$0xff]
        %v5618 = vld [vmem:[#allocation2 + $0x169] sm:$0xff]
        %v5619 = vld [vmem:[#allocation2 + $0x171] sm:$0xff]
        %v5620 = vpack.c.bf16 %v5589, %v5588
        %v5621 = vpack.c.bf16 %v5591, %v5590
        %v5622 = vpack.c.bf16 %v5593, %v5592
        %v5623 = vpack.c.bf16 %v5595, %v5594
        %v5624 = vpack.c.bf16 %v5597, %v5596
        %v5625 = vpack.c.bf16 %v5599, %v5598
        %v5626 = vpack.c.bf16 %v5601, %v5600
        %v5627 = vpack.c.bf16 %v5603, %v5602
        %v5628 = vpack.c.bf16 %v5605, %v5604
        %v5629 = vpack.c.bf16 %v5607, %v5606
        %v5630 = vpack.c.bf16 %v5609, %v5608
        %v5631 = vpack.c.bf16 %v5611, %v5610
        %v5632 = vpack.c.bf16 %v5613, %v5612
        %v5633 = vpack.c.bf16 %v5615, %v5614
        %v5634 = vpack.c.bf16 %v5617, %v5616
        %v5635 = vpack.c.bf16 %v5619, %v5618
        %s5636 = scalar_lea.vmem [#allocation11], 64
        %v5637 = vld [vmem:[%s5636] sm:$0xf]
        %v5638 = vld [vmem:[%s5636 + $0x4] sm:$0xf]
        %v5639 = vld [vmem:[%s5636 + $0x8] sm:$0xf]
        %v5640 = vld [vmem:[%s5636 + $0xc] sm:$0xf]
        %v5641 = vld [vmem:[%s5636 + $0x10] sm:$0xf]
        %v5642 = vld [vmem:[%s5636 + $0x14] sm:$0xf]
        %v5643 = vld [vmem:[%s5636 + $0x18] sm:$0xf]
        %v5644 = vld [vmem:[%s5636 + $0x1c] sm:$0xf]
        %v5645 = vld [vmem:[%s5636 + $0x20] sm:$0xf]
        %v5646 = vld [vmem:[%s5636 + $0x24] sm:$0xf]
        %v5647 = vld [vmem:[%s5636 + $0x28] sm:$0xf]
        %v5648 = vld [vmem:[%s5636 + $0x2c] sm:$0xf]
        %v5649 = vld [vmem:[%s5636 + $0x30] sm:$0xf]
        %v5650 = vld [vmem:[%s5636 + $0x34] sm:$0xf]
        %v5651 = vld [vmem:[%s5636 + $0x38] sm:$0xf]
        %v5652 = vld [vmem:[%s5636 + $0x3c] sm:$0xf]
        %v5669 = vunpack.c.l.b16 %v5637
        %v5670 = vunpack.c.l.b16 %v5638
        %v5671 = vunpack.c.l.b16 %v5639
        %v5672 = vunpack.c.l.b16 %v5640
        %v5673 = vunpack.c.l.b16 %v5641
        %v5674 = vunpack.c.l.b16 %v5642
        %v5675 = vunpack.c.l.b16 %v5643
        %v5676 = vunpack.c.l.b16 %v5644
        %v5677 = vunpack.c.l.b16 %v5645
        %v5678 = vunpack.c.l.b16 %v5646
        %v5679 = vunpack.c.l.b16 %v5647
        %v5680 = vunpack.c.l.b16 %v5648
        %v5681 = vunpack.c.l.b16 %v5649
        %v5682 = vunpack.c.l.b16 %v5650
        %v5683 = vunpack.c.l.b16 %v5651
        %v5684 = vunpack.c.l.b16 %v5652
        %v5685 = vpack.c.b16 %v5670, %v5669
        %v5686 = vpack.c.b16 %v5672, %v5671
        %v5687 = vpack.c.b16 %v5674, %v5673
        %v5688 = vpack.c.b16 %v5676, %v5675
        %v5689 = vpack.c.b16 %v5678, %v5677
        %v5690 = vpack.c.b16 %v5680, %v5679
        %v5691 = vpack.c.b16 %v5682, %v5681
        %v5692 = vpack.c.b16 %v5684, %v5683
        %5701 = vmatpush.bf16.msra.mxu0 %v5692
        %5702 = vmatpush.bf16.msra.mxu0 %v5691
        %5703 = vmatpush.bf16.msra.mxu0 %v5690
        %5704 = vmatpush.bf16.msra.mxu0 %v5689
        %5705 = vmatpush.bf16.msra.mxu0 %v5688
        %5706 = vmatpush.bf16.msra.mxu0 %v5687
        %5707 = vmatpush.bf16.msra.mxu0 %v5686
        %5708 = vmatpush.bf16.msra.mxu0 %v5685
        %5709 = vmatmul.bf16.gmra.mxu0 %v5620
        %v5710 = vpop.f32.mrf.mxu0
        %v5711 = vadd.f32 0.0, %v5710
        %v5712 = vpop.f32.mrf.mxu0
        %v5713 = vadd.f32 0.0, %v5712
        %5714 = vmatmul.bf16.gmra.mxu0 %v5621
        %v5715 = vpop.f32.mrf.mxu0
        %v5716 = vadd.f32 0.0, %v5715
        %v5717 = vpop.f32.mrf.mxu0
        %v5718 = vadd.f32 0.0, %v5717
        %5719 = vmatmul.bf16.gmra.mxu0 %v5622
        %v5720 = vpop.f32.mrf.mxu0
        %v5721 = vadd.f32 0.0, %v5720
        %v5722 = vpop.f32.mrf.mxu0
        %v5723 = vadd.f32 0.0, %v5722
        %5724 = vmatmul.bf16.gmra.mxu0 %v5623
        %v5725 = vpop.f32.mrf.mxu0
        %v5726 = vadd.f32 0.0, %v5725
        %v5727 = vpop.f32.mrf.mxu0
        %v5728 = vadd.f32 0.0, %v5727
        %5729 = vmatmul.bf16.gmra.mxu0 %v5624
        %v5730 = vpop.f32.mrf.mxu0
        %v5731 = vadd.f32 0.0, %v5730
        %v5732 = vpop.f32.mrf.mxu0
        %v5733 = vadd.f32 0.0, %v5732
        %5734 = vmatmul.bf16.gmra.mxu0 %v5625
        %v5735 = vpop.f32.mrf.mxu0
        %v5736 = vadd.f32 0.0, %v5735
        %v5737 = vpop.f32.mrf.mxu0
        %v5738 = vadd.f32 0.0, %v5737
        %5739 = vmatmul.bf16.gmra.mxu0 %v5626
        %v5740 = vpop.f32.mrf.mxu0
        %v5741 = vadd.f32 0.0, %v5740
        %v5742 = vpop.f32.mrf.mxu0
        %v5743 = vadd.f32 0.0, %v5742
        %5744 = vmatmul.bf16.gmra.mxu0 %v5627
        %v5745 = vpop.f32.mrf.mxu0
        %v5746 = vadd.f32 0.0, %v5745
        %v5747 = vpop.f32.mrf.mxu0
        %v5748 = vadd.f32 0.0, %v5747
        %5749 = vmatmul.bf16.gmra.mxu0 %v5628
        %v5750 = vpop.f32.mrf.mxu0
        %v5751 = vadd.f32 0.0, %v5750
        %v5752 = vpop.f32.mrf.mxu0
        %v5753 = vadd.f32 0.0, %v5752
        %5754 = vmatmul.bf16.gmra.mxu0 %v5629
        %v5755 = vpop.f32.mrf.mxu0
        %v5756 = vadd.f32 0.0, %v5755
        %v5757 = vpop.f32.mrf.mxu0
        %v5758 = vadd.f32 0.0, %v5757
        %5759 = vmatmul.bf16.gmra.mxu0 %v5630
        %v5760 = vpop.f32.mrf.mxu0
        %v5761 = vadd.f32 0.0, %v5760
        %v5762 = vpop.f32.mrf.mxu0
        %v5763 = vadd.f32 0.0, %v5762
        %5764 = vmatmul.bf16.gmra.mxu0 %v5631
        %v5765 = vpop.f32.mrf.mxu0
        %v5766 = vadd.f32 0.0, %v5765
        %v5767 = vpop.f32.mrf.mxu0
        %v5768 = vadd.f32 0.0, %v5767
        %5769 = vmatmul.bf16.gmra.mxu0 %v5632
        %v5770 = vpop.f32.mrf.mxu0
        %v5771 = vadd.f32 0.0, %v5770
        %v5772 = vpop.f32.mrf.mxu0
        %v5773 = vadd.f32 0.0, %v5772
        %5774 = vmatmul.bf16.gmra.mxu0 %v5633
        %v5775 = vpop.f32.mrf.mxu0
        %v5776 = vadd.f32 0.0, %v5775
        %v5777 = vpop.f32.mrf.mxu0
        %v5778 = vadd.f32 0.0, %v5777
        %5779 = vmatmul.bf16.gmra.mxu0 %v5634
        %v5780 = vpop.f32.mrf.mxu0
        %v5781 = vadd.f32 0.0, %v5780
        %v5782 = vpop.f32.mrf.mxu0
        %v5783 = vadd.f32 0.0, %v5782
        %5784 = vmatmul.bf16.gmra.mxu0 %v5635
        %v5785 = vpop.f32.mrf.mxu0
        %v5786 = vadd.f32 0.0, %v5785
        %v5787 = vpop.f32.mrf.mxu0
        %v5788 = vadd.f32 0.0, %v5787
        %5789 = vdwg.mxu0
        %v5806 = vunpack.c.l.b16 %v5572
        %v5807 = vunpack.c.l.b16 %v5573
        %v5808 = vunpack.c.l.b16 %v5574
        %v5809 = vunpack.c.l.b16 %v5575
        %v5810 = vunpack.c.l.b16 %v5576
        %v5811 = vunpack.c.l.b16 %v5577
        %v5812 = vunpack.c.l.b16 %v5578
        %v5813 = vunpack.c.l.b16 %v5579
        %v5814 = vunpack.c.l.b16 %v5580
        %v5815 = vunpack.c.l.b16 %v5581
        %v5816 = vunpack.c.l.b16 %v5582
        %v5817 = vunpack.c.l.b16 %v5583
        %v5818 = vunpack.c.l.b16 %v5584
        %v5819 = vunpack.c.l.b16 %v5585
        %v5820 = vunpack.c.l.b16 %v5586
        %v5821 = vunpack.c.l.b16 %v5587
        %v5822 = vpack.c.b16 %v5807, %v5806
        %v5823 = vpack.c.b16 %v5809, %v5808
        %v5824 = vpack.c.b16 %v5811, %v5810
        %v5825 = vpack.c.b16 %v5813, %v5812
        %v5826 = vpack.c.b16 %v5815, %v5814
        %v5827 = vpack.c.b16 %v5817, %v5816
        %v5828 = vpack.c.b16 %v5819, %v5818
        %v5829 = vpack.c.b16 %v5821, %v5820
        %5838 = vmatpush.bf16.msra.mxu0 %v5829
        %5839 = vmatpush.bf16.msra.mxu0 %v5828
        %5840 = vmatpush.bf16.msra.mxu0 %v5827
        %5841 = vmatpush.bf16.msra.mxu0 %v5826
        %5842 = vmatpush.bf16.msra.mxu0 %v5825
        %5843 = vmatpush.bf16.msra.mxu0 %v5824
        %5844 = vmatpush.bf16.msra.mxu0 %v5823
        %5845 = vmatpush.bf16.msra.mxu0 %v5822
        %5846 = vmatmul.bf16.gmra.mxu0 %v5556
        %v5847 = vpop.f32.mrf.mxu0
        %v5848 = vadd.f32 %v5711, %v5847
        %v5849 = vpop.f32.mrf.mxu0
        %v5850 = vadd.f32 %v5713, %v5849
        %5851 = vmatmul.bf16.gmra.mxu0 %v5557
        %v5852 = vpop.f32.mrf.mxu0
        %v5853 = vadd.f32 %v5716, %v5852
        %v5854 = vpop.f32.mrf.mxu0
        %v5855 = vadd.f32 %v5718, %v5854
        %5856 = vmatmul.bf16.gmra.mxu0 %v5558
        %v5857 = vpop.f32.mrf.mxu0
        %v5858 = vadd.f32 %v5721, %v5857
        %v5859 = vpop.f32.mrf.mxu0
        %v5860 = vadd.f32 %v5723, %v5859
        %5861 = vmatmul.bf16.gmra.mxu0 %v5559
        %v5862 = vpop.f32.mrf.mxu0
        %v5863 = vadd.f32 %v5726, %v5862
        %v5864 = vpop.f32.mrf.mxu0
        %v5865 = vadd.f32 %v5728, %v5864
        %5866 = vmatmul.bf16.gmra.mxu0 %v5560
        %v5867 = vpop.f32.mrf.mxu0
        %v5868 = vadd.f32 %v5731, %v5867
        %v5869 = vpop.f32.mrf.mxu0
        %v5870 = vadd.f32 %v5733, %v5869
        %5871 = vmatmul.bf16.gmra.mxu0 %v5561
        %v5872 = vpop.f32.mrf.mxu0
        %v5873 = vadd.f32 %v5736, %v5872
        %v5874 = vpop.f32.mrf.mxu0
        %v5875 = vadd.f32 %v5738, %v5874
        %5876 = vmatmul.bf16.gmra.mxu0 %v5562
        %v5877 = vpop.f32.mrf.mxu0
        %v5878 = vadd.f32 %v5741, %v5877
        %v5879 = vpop.f32.mrf.mxu0
        %v5880 = vadd.f32 %v5743, %v5879
        %5881 = vmatmul.bf16.gmra.mxu0 %v5563
        %v5882 = vpop.f32.mrf.mxu0
        %v5883 = vadd.f32 %v5746, %v5882
        %v5884 = vpop.f32.mrf.mxu0
        %v5885 = vadd.f32 %v5748, %v5884
        %5886 = vmatmul.bf16.gmra.mxu0 %v5564
        %v5887 = vpop.f32.mrf.mxu0
        %v5888 = vadd.f32 %v5751, %v5887
        %v5889 = vpop.f32.mrf.mxu0
        %v5890 = vadd.f32 %v5753, %v5889
        %5891 = vmatmul.bf16.gmra.mxu0 %v5565
        %v5892 = vpop.f32.mrf.mxu0
        %v5893 = vadd.f32 %v5756, %v5892
        %v5894 = vpop.f32.mrf.mxu0
        %v5895 = vadd.f32 %v5758, %v5894
        %5896 = vmatmul.bf16.gmra.mxu0 %v5566
        %v5897 = vpop.f32.mrf.mxu0
        %v5898 = vadd.f32 %v5761, %v5897
        %v5899 = vpop.f32.mrf.mxu0
        %v5900 = vadd.f32 %v5763, %v5899
        %5901 = vmatmul.bf16.gmra.mxu0 %v5567
        %v5902 = vpop.f32.mrf.mxu0
        %v5903 = vadd.f32 %v5766, %v5902
        %v5904 = vpop.f32.mrf.mxu0
        %v5905 = vadd.f32 %v5768, %v5904
        %5906 = vmatmul.bf16.gmra.mxu0 %v5568
        %v5907 = vpop.f32.mrf.mxu0
        %v5908 = vadd.f32 %v5771, %v5907
        %v5909 = vpop.f32.mrf.mxu0
        %v5910 = vadd.f32 %v5773, %v5909
        %5911 = vmatmul.bf16.gmra.mxu0 %v5569
        %v5912 = vpop.f32.mrf.mxu0
        %v5913 = vadd.f32 %v5776, %v5912
        %v5914 = vpop.f32.mrf.mxu0
        %v5915 = vadd.f32 %v5778, %v5914
        %5916 = vmatmul.bf16.gmra.mxu0 %v5570
        %v5917 = vpop.f32.mrf.mxu0
        %v5918 = vadd.f32 %v5781, %v5917
        %v5919 = vpop.f32.mrf.mxu0
        %v5920 = vadd.f32 %v5783, %v5919
        %5921 = vmatmul.bf16.gmra.mxu0 %v5571
        %v5922 = vpop.f32.mrf.mxu0
        %v5923 = vadd.f32 %v5786, %v5922
        %v5924 = vpop.f32.mrf.mxu0
        %v5925 = vadd.f32 %v5788, %v5924
        %5926 = vdwg.mxu0
        %v5927 = vld [vmem:[#allocation2 + $0x2] sm:$0xff]
        %v5928 = vld [vmem:[#allocation2 + $0xa] sm:$0xff]
        %v5929 = vld [vmem:[#allocation2 + $0x1a] sm:$0xff]
        %v5930 = vld [vmem:[#allocation2 + $0x22] sm:$0xff]
        %v5931 = vld [vmem:[#allocation2 + $0x32] sm:$0xff]
        %v5932 = vld [vmem:[#allocation2 + $0x3a] sm:$0xff]
        %v5933 = vld [vmem:[#allocation2 + $0x4a] sm:$0xff]
        %v5934 = vld [vmem:[#allocation2 + $0x52] sm:$0xff]
        %v5935 = vld [vmem:[#allocation2 + $0x62] sm:$0xff]
        %v5936 = vld [vmem:[#allocation2 + $0x6a] sm:$0xff]
        %v5937 = vld [vmem:[#allocation2 + $0x7a] sm:$0xff]
        %v5938 = vld [vmem:[#allocation2 + $0x82] sm:$0xff]
        %v5939 = vld [vmem:[#allocation2 + $0x92] sm:$0xff]
        %v5940 = vld [vmem:[#allocation2 + $0x9a] sm:$0xff]
        %v5941 = vld [vmem:[#allocation2 + $0xaa] sm:$0xff]
        %v5942 = vld [vmem:[#allocation2 + $0xb2] sm:$0xff]
        %v5943 = vld [vmem:[#allocation2 + $0xc2] sm:$0xff]
        %v5944 = vld [vmem:[#allocation2 + $0xca] sm:$0xff]
        %v5945 = vld [vmem:[#allocation2 + $0xda] sm:$0xff]
        %v5946 = vld [vmem:[#allocation2 + $0xe2] sm:$0xff]
        %v5947 = vld [vmem:[#allocation2 + $0xf2] sm:$0xff]
        %v5948 = vld [vmem:[#allocation2 + $0xfa] sm:$0xff]
        %v5949 = vld [vmem:[#allocation2 + $0x10a] sm:$0xff]
        %v5950 = vld [vmem:[#allocation2 + $0x112] sm:$0xff]
        %v5951 = vld [vmem:[#allocation2 + $0x122] sm:$0xff]
        %v5952 = vld [vmem:[#allocation2 + $0x12a] sm:$0xff]
        %v5953 = vld [vmem:[#allocation2 + $0x13a] sm:$0xff]
        %v5954 = vld [vmem:[#allocation2 + $0x142] sm:$0xff]
        %v5955 = vld [vmem:[#allocation2 + $0x152] sm:$0xff]
        %v5956 = vld [vmem:[#allocation2 + $0x15a] sm:$0xff]
        %v5957 = vld [vmem:[#allocation2 + $0x16a] sm:$0xff]
        %v5958 = vld [vmem:[#allocation2 + $0x172] sm:$0xff]
        %v5959 = vpack.c.bf16 %v5928, %v5927
        %v5960 = vpack.c.bf16 %v5930, %v5929
        %v5961 = vpack.c.bf16 %v5932, %v5931
        %v5962 = vpack.c.bf16 %v5934, %v5933
        %v5963 = vpack.c.bf16 %v5936, %v5935
        %v5964 = vpack.c.bf16 %v5938, %v5937
        %v5965 = vpack.c.bf16 %v5940, %v5939
        %v5966 = vpack.c.bf16 %v5942, %v5941
        %v5967 = vpack.c.bf16 %v5944, %v5943
        %v5968 = vpack.c.bf16 %v5946, %v5945
        %v5969 = vpack.c.bf16 %v5948, %v5947
        %v5970 = vpack.c.bf16 %v5950, %v5949
        %v5971 = vpack.c.bf16 %v5952, %v5951
        %v5972 = vpack.c.bf16 %v5954, %v5953
        %v5973 = vpack.c.bf16 %v5956, %v5955
        %v5974 = vpack.c.bf16 %v5958, %v5957
        %s5975 = scalar_lea.vmem [#allocation11], 128
        %v5976 = vld [vmem:[%s5975] sm:$0xf]
        %v5977 = vld [vmem:[%s5975 + $0x4] sm:$0xf]
        %v5978 = vld [vmem:[%s5975 + $0x8] sm:$0xf]
        %v5979 = vld [vmem:[%s5975 + $0xc] sm:$0xf]
        %v5980 = vld [vmem:[%s5975 + $0x10] sm:$0xf]
        %v5981 = vld [vmem:[%s5975 + $0x14] sm:$0xf]
        %v5982 = vld [vmem:[%s5975 + $0x18] sm:$0xf]
        %v5983 = vld [vmem:[%s5975 + $0x1c] sm:$0xf]
        %v5984 = vld [vmem:[%s5975 + $0x20] sm:$0xf]
        %v5985 = vld [vmem:[%s5975 + $0x24] sm:$0xf]
        %v5986 = vld [vmem:[%s5975 + $0x28] sm:$0xf]
        %v5987 = vld [vmem:[%s5975 + $0x2c] sm:$0xf]
        %v5988 = vld [vmem:[%s5975 + $0x30] sm:$0xf]
        %v5989 = vld [vmem:[%s5975 + $0x34] sm:$0xf]
        %v5990 = vld [vmem:[%s5975 + $0x38] sm:$0xf]
        %v5991 = vld [vmem:[%s5975 + $0x3c] sm:$0xf]
        %v6008 = vunpack.c.l.b16 %v5976
        %v6009 = vunpack.c.l.b16 %v5977
        %v6010 = vunpack.c.l.b16 %v5978
        %v6011 = vunpack.c.l.b16 %v5979
        %v6012 = vunpack.c.l.b16 %v5980
        %v6013 = vunpack.c.l.b16 %v5981
        %v6014 = vunpack.c.l.b16 %v5982
        %v6015 = vunpack.c.l.b16 %v5983
        %v6016 = vunpack.c.l.b16 %v5984
        %v6017 = vunpack.c.l.b16 %v5985
        %v6018 = vunpack.c.l.b16 %v5986
        %v6019 = vunpack.c.l.b16 %v5987
        %v6020 = vunpack.c.l.b16 %v5988
        %v6021 = vunpack.c.l.b16 %v5989
        %v6022 = vunpack.c.l.b16 %v5990
        %v6023 = vunpack.c.l.b16 %v5991
        %v6024 = vpack.c.b16 %v6009, %v6008
        %v6025 = vpack.c.b16 %v6011, %v6010
        %v6026 = vpack.c.b16 %v6013, %v6012
        %v6027 = vpack.c.b16 %v6015, %v6014
        %v6028 = vpack.c.b16 %v6017, %v6016
        %v6029 = vpack.c.b16 %v6019, %v6018
        %v6030 = vpack.c.b16 %v6021, %v6020
        %v6031 = vpack.c.b16 %v6023, %v6022
        %6040 = vmatpush.bf16.msra.mxu0 %v6031
        %6041 = vmatpush.bf16.msra.mxu0 %v6030
        %6042 = vmatpush.bf16.msra.mxu0 %v6029
        %6043 = vmatpush.bf16.msra.mxu0 %v6028
        %6044 = vmatpush.bf16.msra.mxu0 %v6027
        %6045 = vmatpush.bf16.msra.mxu0 %v6026
        %6046 = vmatpush.bf16.msra.mxu0 %v6025
        %6047 = vmatpush.bf16.msra.mxu0 %v6024
        %6048 = vmatmul.bf16.gmra.mxu0 %v5959
        %v6049 = vpop.f32.mrf.mxu0
        %v6050 = vadd.f32 0.0, %v6049
        %v6051 = vpop.f32.mrf.mxu0
        %v6052 = vadd.f32 0.0, %v6051
        %6053 = vmatmul.bf16.gmra.mxu0 %v5960
        %v6054 = vpop.f32.mrf.mxu0
        %v6055 = vadd.f32 0.0, %v6054
        %v6056 = vpop.f32.mrf.mxu0
        %v6057 = vadd.f32 0.0, %v6056
        %6058 = vmatmul.bf16.gmra.mxu0 %v5961
        %v6059 = vpop.f32.mrf.mxu0
        %v6060 = vadd.f32 0.0, %v6059
        %v6061 = vpop.f32.mrf.mxu0
        %v6062 = vadd.f32 0.0, %v6061
        %6063 = vmatmul.bf16.gmra.mxu0 %v5962
        %v6064 = vpop.f32.mrf.mxu0
        %v6065 = vadd.f32 0.0, %v6064
        %v6066 = vpop.f32.mrf.mxu0
        %v6067 = vadd.f32 0.0, %v6066
        %6068 = vmatmul.bf16.gmra.mxu0 %v5963
        %v6069 = vpop.f32.mrf.mxu0
        %v6070 = vadd.f32 0.0, %v6069
        %v6071 = vpop.f32.mrf.mxu0
        %v6072 = vadd.f32 0.0, %v6071
        %6073 = vmatmul.bf16.gmra.mxu0 %v5964
        %v6074 = vpop.f32.mrf.mxu0
        %v6075 = vadd.f32 0.0, %v6074
        %v6076 = vpop.f32.mrf.mxu0
        %v6077 = vadd.f32 0.0, %v6076
        %6078 = vmatmul.bf16.gmra.mxu0 %v5965
        %v6079 = vpop.f32.mrf.mxu0
        %v6080 = vadd.f32 0.0, %v6079
        %v6081 = vpop.f32.mrf.mxu0
        %v6082 = vadd.f32 0.0, %v6081
        %6083 = vmatmul.bf16.gmra.mxu0 %v5966
        %v6084 = vpop.f32.mrf.mxu0
        %v6085 = vadd.f32 0.0, %v6084
        %v6086 = vpop.f32.mrf.mxu0
        %v6087 = vadd.f32 0.0, %v6086
        %6088 = vmatmul.bf16.gmra.mxu0 %v5967
        %v6089 = vpop.f32.mrf.mxu0
        %v6090 = vadd.f32 0.0, %v6089
        %v6091 = vpop.f32.mrf.mxu0
        %v6092 = vadd.f32 0.0, %v6091
        %6093 = vmatmul.bf16.gmra.mxu0 %v5968
        %v6094 = vpop.f32.mrf.mxu0
        %v6095 = vadd.f32 0.0, %v6094
        %v6096 = vpop.f32.mrf.mxu0
        %v6097 = vadd.f32 0.0, %v6096
        %6098 = vmatmul.bf16.gmra.mxu0 %v5969
        %v6099 = vpop.f32.mrf.mxu0
        %v6100 = vadd.f32 0.0, %v6099
        %v6101 = vpop.f32.mrf.mxu0
        %v6102 = vadd.f32 0.0, %v6101
        %6103 = vmatmul.bf16.gmra.mxu0 %v5970
        %v6104 = vpop.f32.mrf.mxu0
        %v6105 = vadd.f32 0.0, %v6104
        %v6106 = vpop.f32.mrf.mxu0
        %v6107 = vadd.f32 0.0, %v6106
        %6108 = vmatmul.bf16.gmra.mxu0 %v5971
        %v6109 = vpop.f32.mrf.mxu0
        %v6110 = vadd.f32 0.0, %v6109
        %v6111 = vpop.f32.mrf.mxu0
        %v6112 = vadd.f32 0.0, %v6111
        %6113 = vmatmul.bf16.gmra.mxu0 %v5972
        %v6114 = vpop.f32.mrf.mxu0
        %v6115 = vadd.f32 0.0, %v6114
        %v6116 = vpop.f32.mrf.mxu0
        %v6117 = vadd.f32 0.0, %v6116
        %6118 = vmatmul.bf16.gmra.mxu0 %v5973
        %v6119 = vpop.f32.mrf.mxu0
        %v6120 = vadd.f32 0.0, %v6119
        %v6121 = vpop.f32.mrf.mxu0
        %v6122 = vadd.f32 0.0, %v6121
        %6123 = vmatmul.bf16.gmra.mxu0 %v5974
        %v6124 = vpop.f32.mrf.mxu0
        %v6125 = vadd.f32 0.0, %v6124
        %v6126 = vpop.f32.mrf.mxu0
        %v6127 = vadd.f32 0.0, %v6126
        %6128 = vdwg.mxu0
        %v6129 = vadd.f32 %v5848, %v6050
        %v6130 = vadd.f32 %v5850, %v6052
        %v6131 = vadd.f32 %v5853, %v6055
        %v6132 = vadd.f32 %v5855, %v6057
        %v6133 = vadd.f32 %v5858, %v6060
        %v6134 = vadd.f32 %v5860, %v6062
        %v6135 = vadd.f32 %v5863, %v6065
        %v6136 = vadd.f32 %v5865, %v6067
        %v6137 = vadd.f32 %v5868, %v6070
        %v6138 = vadd.f32 %v5870, %v6072
        %v6139 = vadd.f32 %v5873, %v6075
        %v6140 = vadd.f32 %v5875, %v6077
        %v6141 = vadd.f32 %v5878, %v6080
        %v6142 = vadd.f32 %v5880, %v6082
        %v6143 = vadd.f32 %v5883, %v6085
        %v6144 = vadd.f32 %v5885, %v6087
        %v6145 = vadd.f32 %v5888, %v6090
        %v6146 = vadd.f32 %v5890, %v6092
        %v6147 = vadd.f32 %v5893, %v6095
        %v6148 = vadd.f32 %v5895, %v6097
        %v6149 = vadd.f32 %v5898, %v6100
        %v6150 = vadd.f32 %v5900, %v6102
        %v6151 = vadd.f32 %v5903, %v6105
        %v6152 = vadd.f32 %v5905, %v6107
        %v6153 = vadd.f32 %v5908, %v6110
        %v6154 = vadd.f32 %v5910, %v6112
        %v6155 = vadd.f32 %v5913, %v6115
        %v6156 = vadd.f32 %v5915, %v6117
        %v6157 = vadd.f32 %v5918, %v6120
        %v6158 = vadd.f32 %v5920, %v6122
        %v6159 = vadd.f32 %v5923, %v6125
        %v6160 = vadd.f32 %v5925, %v6127
        %v6161 = vld [vmem:[%s521] sm:$0xff]
        %v6162 = vld [vmem:[%s521 + $0x8] sm:$0xff]
        %v6163 = vld [vmem:[%s521 + $0x18] sm:$0xff]
        %v6164 = vld [vmem:[%s521 + $0x20] sm:$0xff]
        %v6165 = vld [vmem:[%s521 + $0x30] sm:$0xff]
        %v6166 = vld [vmem:[%s521 + $0x38] sm:$0xff]
        %v6167 = vld [vmem:[%s521 + $0x48] sm:$0xff]
        %v6168 = vld [vmem:[%s521 + $0x50] sm:$0xff]
        %v6169 = vld [vmem:[%s521 + $0x60] sm:$0xff]
        %v6170 = vld [vmem:[%s521 + $0x68] sm:$0xff]
        %v6171 = vld [vmem:[%s521 + $0x78] sm:$0xff]
        %v6172 = vld [vmem:[%s521 + $0x80] sm:$0xff]
        %v6173 = vld [vmem:[%s521 + $0x90] sm:$0xff]
        %v6174 = vld [vmem:[%s521 + $0x98] sm:$0xff]
        %v6175 = vld [vmem:[%s521 + $0xa8] sm:$0xff]
        %v6176 = vld [vmem:[%s521 + $0xb0] sm:$0xff]
        %v6177 = vld [vmem:[%s521 + $0xc0] sm:$0xff]
        %v6178 = vld [vmem:[%s521 + $0xc8] sm:$0xff]
        %v6179 = vld [vmem:[%s521 + $0xd8] sm:$0xff]
        %v6180 = vld [vmem:[%s521 + $0xe0] sm:$0xff]
        %v6181 = vld [vmem:[%s521 + $0xf0] sm:$0xff]
        %v6182 = vld [vmem:[%s521 + $0xf8] sm:$0xff]
        %v6183 = vld [vmem:[%s521 + $0x108] sm:$0xff]
        %v6184 = vld [vmem:[%s521 + $0x110] sm:$0xff]
        %v6185 = vld [vmem:[%s521 + $0x120] sm:$0xff]
        %v6186 = vld [vmem:[%s521 + $0x128] sm:$0xff]
        %v6187 = vld [vmem:[%s521 + $0x138] sm:$0xff]
        %v6188 = vld [vmem:[%s521 + $0x140] sm:$0xff]
        %v6189 = vld [vmem:[%s521 + $0x150] sm:$0xff]
        %v6190 = vld [vmem:[%s521 + $0x158] sm:$0xff]
        %v6191 = vld [vmem:[%s521 + $0x168] sm:$0xff]
        %v6192 = vld [vmem:[%s521 + $0x170] sm:$0xff]
        %v6193 = vpack.c.bf16 %v6162, %v6161
        %v6194 = vpack.c.bf16 %v6164, %v6163
        %v6195 = vpack.c.bf16 %v6166, %v6165
        %v6196 = vpack.c.bf16 %v6168, %v6167
        %v6197 = vpack.c.bf16 %v6170, %v6169
        %v6198 = vpack.c.bf16 %v6172, %v6171
        %v6199 = vpack.c.bf16 %v6174, %v6173
        %v6200 = vpack.c.bf16 %v6176, %v6175
        %v6201 = vpack.c.bf16 %v6178, %v6177
        %v6202 = vpack.c.bf16 %v6180, %v6179
        %v6203 = vpack.c.bf16 %v6182, %v6181
        %v6204 = vpack.c.bf16 %v6184, %v6183
        %v6205 = vpack.c.bf16 %v6186, %v6185
        %v6206 = vpack.c.bf16 %v6188, %v6187
        %v6207 = vpack.c.bf16 %v6190, %v6189
        %v6208 = vpack.c.bf16 %v6192, %v6191
        %s6209 = scalar_lea.vmem [#allocation11], 192
        %v6210 = vld [vmem:[%s6209] sm:$0xf]
        %v6211 = vld [vmem:[%s6209 + $0x4] sm:$0xf]
        %v6212 = vld [vmem:[%s6209 + $0x8] sm:$0xf]
        %v6213 = vld [vmem:[%s6209 + $0xc] sm:$0xf]
        %v6214 = vld [vmem:[%s6209 + $0x10] sm:$0xf]
        %v6215 = vld [vmem:[%s6209 + $0x14] sm:$0xf]
        %v6216 = vld [vmem:[%s6209 + $0x18] sm:$0xf]
        %v6217 = vld [vmem:[%s6209 + $0x1c] sm:$0xf]
        %v6218 = vld [vmem:[%s6209 + $0x20] sm:$0xf]
        %v6219 = vld [vmem:[%s6209 + $0x24] sm:$0xf]
        %v6220 = vld [vmem:[%s6209 + $0x28] sm:$0xf]
        %v6221 = vld [vmem:[%s6209 + $0x2c] sm:$0xf]
        %v6222 = vld [vmem:[%s6209 + $0x30] sm:$0xf]
        %v6223 = vld [vmem:[%s6209 + $0x34] sm:$0xf]
        %v6224 = vld [vmem:[%s6209 + $0x38] sm:$0xf]
        %v6225 = vld [vmem:[%s6209 + $0x3c] sm:$0xf]
        %v6242 = vunpack.c.l.b16 %v6210
        %v6243 = vunpack.c.l.b16 %v6211
        %v6244 = vunpack.c.l.b16 %v6212
        %v6245 = vunpack.c.l.b16 %v6213
        %v6246 = vunpack.c.l.b16 %v6214
        %v6247 = vunpack.c.l.b16 %v6215
        %v6248 = vunpack.c.l.b16 %v6216
        %v6249 = vunpack.c.l.b16 %v6217
        %v6250 = vunpack.c.l.b16 %v6218
        %v6251 = vunpack.c.l.b16 %v6219
        %v6252 = vunpack.c.l.b16 %v6220
        %v6253 = vunpack.c.l.b16 %v6221
        %v6254 = vunpack.c.l.b16 %v6222
        %v6255 = vunpack.c.l.b16 %v6223
        %v6256 = vunpack.c.l.b16 %v6224
        %v6257 = vunpack.c.l.b16 %v6225
        %v6258 = vpack.c.b16 %v6243, %v6242
        %v6259 = vpack.c.b16 %v6245, %v6244
        %v6260 = vpack.c.b16 %v6247, %v6246
        %v6261 = vpack.c.b16 %v6249, %v6248
        %v6262 = vpack.c.b16 %v6251, %v6250
        %v6263 = vpack.c.b16 %v6253, %v6252
        %v6264 = vpack.c.b16 %v6255, %v6254
        %v6265 = vpack.c.b16 %v6257, %v6256
        %6274 = vmatpush.bf16.msra.mxu0 %v6265
        %6275 = vmatpush.bf16.msra.mxu0 %v6264
        %6276 = vmatpush.bf16.msra.mxu0 %v6263
        %6277 = vmatpush.bf16.msra.mxu0 %v6262
        %6278 = vmatpush.bf16.msra.mxu0 %v6261
        %6279 = vmatpush.bf16.msra.mxu0 %v6260
        %6280 = vmatpush.bf16.msra.mxu0 %v6259
        %6281 = vmatpush.bf16.msra.mxu0 %v6258
        %6282 = vmatmul.bf16.gmra.mxu0 %v6193
        %v6283 = vpop.f32.mrf.mxu0
        %v6284 = vadd.f32 0.0, %v6283
        %v6285 = vpop.f32.mrf.mxu0
        %v6286 = vadd.f32 0.0, %v6285
        %6287 = vmatmul.bf16.gmra.mxu0 %v6194
        %v6288 = vpop.f32.mrf.mxu0
        %v6289 = vadd.f32 0.0, %v6288
        %v6290 = vpop.f32.mrf.mxu0
        %v6291 = vadd.f32 0.0, %v6290
        %6292 = vmatmul.bf16.gmra.mxu0 %v6195
        %v6293 = vpop.f32.mrf.mxu0
        %v6294 = vadd.f32 0.0, %v6293
        %v6295 = vpop.f32.mrf.mxu0
        %v6296 = vadd.f32 0.0, %v6295
        %6297 = vmatmul.bf16.gmra.mxu0 %v6196
        %v6298 = vpop.f32.mrf.mxu0
        %v6299 = vadd.f32 0.0, %v6298
        %v6300 = vpop.f32.mrf.mxu0
        %v6301 = vadd.f32 0.0, %v6300
        %6302 = vmatmul.bf16.gmra.mxu0 %v6197
        %v6303 = vpop.f32.mrf.mxu0
        %v6304 = vadd.f32 0.0, %v6303
        %v6305 = vpop.f32.mrf.mxu0
        %v6306 = vadd.f32 0.0, %v6305
        %6307 = vmatmul.bf16.gmra.mxu0 %v6198
        %v6308 = vpop.f32.mrf.mxu0
        %v6309 = vadd.f32 0.0, %v6308
        %v6310 = vpop.f32.mrf.mxu0
        %v6311 = vadd.f32 0.0, %v6310
        %6312 = vmatmul.bf16.gmra.mxu0 %v6199
        %v6313 = vpop.f32.mrf.mxu0
        %v6314 = vadd.f32 0.0, %v6313
        %v6315 = vpop.f32.mrf.mxu0
        %v6316 = vadd.f32 0.0, %v6315
        %6317 = vmatmul.bf16.gmra.mxu0 %v6200
        %v6318 = vpop.f32.mrf.mxu0
        %v6319 = vadd.f32 0.0, %v6318
        %v6320 = vpop.f32.mrf.mxu0
        %v6321 = vadd.f32 0.0, %v6320
        %6322 = vmatmul.bf16.gmra.mxu0 %v6201
        %v6323 = vpop.f32.mrf.mxu0
        %v6324 = vadd.f32 0.0, %v6323
        %v6325 = vpop.f32.mrf.mxu0
        %v6326 = vadd.f32 0.0, %v6325
        %6327 = vmatmul.bf16.gmra.mxu0 %v6202
        %v6328 = vpop.f32.mrf.mxu0
        %v6329 = vadd.f32 0.0, %v6328
        %v6330 = vpop.f32.mrf.mxu0
        %v6331 = vadd.f32 0.0, %v6330
        %6332 = vmatmul.bf16.gmra.mxu0 %v6203
        %v6333 = vpop.f32.mrf.mxu0
        %v6334 = vadd.f32 0.0, %v6333
        %v6335 = vpop.f32.mrf.mxu0
        %v6336 = vadd.f32 0.0, %v6335
        %6337 = vmatmul.bf16.gmra.mxu0 %v6204
        %v6338 = vpop.f32.mrf.mxu0
        %v6339 = vadd.f32 0.0, %v6338
        %v6340 = vpop.f32.mrf.mxu0
        %v6341 = vadd.f32 0.0, %v6340
        %6342 = vmatmul.bf16.gmra.mxu0 %v6205
        %v6343 = vpop.f32.mrf.mxu0
        %v6344 = vadd.f32 0.0, %v6343
        %v6345 = vpop.f32.mrf.mxu0
        %v6346 = vadd.f32 0.0, %v6345
        %6347 = vmatmul.bf16.gmra.mxu0 %v6206
        %v6348 = vpop.f32.mrf.mxu0
        %v6349 = vadd.f32 0.0, %v6348
        %v6350 = vpop.f32.mrf.mxu0
        %v6351 = vadd.f32 0.0, %v6350
        %6352 = vmatmul.bf16.gmra.mxu0 %v6207
        %v6353 = vpop.f32.mrf.mxu0
        %v6354 = vadd.f32 0.0, %v6353
        %v6355 = vpop.f32.mrf.mxu0
        %v6356 = vadd.f32 0.0, %v6355
        %6357 = vmatmul.bf16.gmra.mxu0 %v6208
        %v6358 = vpop.f32.mrf.mxu0
        %v6359 = vadd.f32 0.0, %v6358
        %v6360 = vpop.f32.mrf.mxu0
        %v6361 = vadd.f32 0.0, %v6360
        %6362 = vdwg.mxu0
        %v6363 = vadd.f32 %v6129, %v6284
        %v6364 = vadd.f32 %v6130, %v6286
        %v6365 = vadd.f32 %v6131, %v6289
        %v6366 = vadd.f32 %v6132, %v6291
        %v6367 = vadd.f32 %v6133, %v6294
        %v6368 = vadd.f32 %v6134, %v6296
        %v6369 = vadd.f32 %v6135, %v6299
        %v6370 = vadd.f32 %v6136, %v6301
        %v6371 = vadd.f32 %v6137, %v6304
        %v6372 = vadd.f32 %v6138, %v6306
        %v6373 = vadd.f32 %v6139, %v6309
        %v6374 = vadd.f32 %v6140, %v6311
        %v6375 = vadd.f32 %v6141, %v6314
        %v6376 = vadd.f32 %v6142, %v6316
        %v6377 = vadd.f32 %v6143, %v6319
        %v6378 = vadd.f32 %v6144, %v6321
        %v6379 = vadd.f32 %v6145, %v6324
        %v6380 = vadd.f32 %v6146, %v6326
        %v6381 = vadd.f32 %v6147, %v6329
        %v6382 = vadd.f32 %v6148, %v6331
        %v6383 = vadd.f32 %v6149, %v6334
        %v6384 = vadd.f32 %v6150, %v6336
        %v6385 = vadd.f32 %v6151, %v6339
        %v6386 = vadd.f32 %v6152, %v6341
        %v6387 = vadd.f32 %v6153, %v6344
        %v6388 = vadd.f32 %v6154, %v6346
        %v6389 = vadd.f32 %v6155, %v6349
        %v6390 = vadd.f32 %v6156, %v6351
        %v6391 = vadd.f32 %v6157, %v6354
        %v6392 = vadd.f32 %v6158, %v6356
        %v6393 = vadd.f32 %v6159, %v6359
        %v6394 = vadd.f32 %v6160, %v6361
        %v6395 = vld [vmem:[%s521 + $0x1] sm:$0xff]
        %v6396 = vld [vmem:[%s521 + $0x9] sm:$0xff]
        %v6397 = vld [vmem:[%s521 + $0x19] sm:$0xff]
        %v6398 = vld [vmem:[%s521 + $0x21] sm:$0xff]
        %v6399 = vld [vmem:[%s521 + $0x31] sm:$0xff]
        %v6400 = vld [vmem:[%s521 + $0x39] sm:$0xff]
        %v6401 = vld [vmem:[%s521 + $0x49] sm:$0xff]
        %v6402 = vld [vmem:[%s521 + $0x51] sm:$0xff]
        %v6403 = vld [vmem:[%s521 + $0x61] sm:$0xff]
        %v6404 = vld [vmem:[%s521 + $0x69] sm:$0xff]
        %v6405 = vld [vmem:[%s521 + $0x79] sm:$0xff]
        %v6406 = vld [vmem:[%s521 + $0x81] sm:$0xff]
        %v6407 = vld [vmem:[%s521 + $0x91] sm:$0xff]
        %v6408 = vld [vmem:[%s521 + $0x99] sm:$0xff]
        %v6409 = vld [vmem:[%s521 + $0xa9] sm:$0xff]
        %v6410 = vld [vmem:[%s521 + $0xb1] sm:$0xff]
        %v6411 = vld [vmem:[%s521 + $0xc1] sm:$0xff]
        %v6412 = vld [vmem:[%s521 + $0xc9] sm:$0xff]
        %v6413 = vld [vmem:[%s521 + $0xd9] sm:$0xff]
        %v6414 = vld [vmem:[%s521 + $0xe1] sm:$0xff]
        %v6415 = vld [vmem:[%s521 + $0xf1] sm:$0xff]
        %v6416 = vld [vmem:[%s521 + $0xf9] sm:$0xff]
        %v6417 = vld [vmem:[%s521 + $0x109] sm:$0xff]
        %v6418 = vld [vmem:[%s521 + $0x111] sm:$0xff]
        %v6419 = vld [vmem:[%s521 + $0x121] sm:$0xff]
        %v6420 = vld [vmem:[%s521 + $0x129] sm:$0xff]
        %v6421 = vld [vmem:[%s521 + $0x139] sm:$0xff]
        %v6422 = vld [vmem:[%s521 + $0x141] sm:$0xff]
        %v6423 = vld [vmem:[%s521 + $0x151] sm:$0xff]
        %v6424 = vld [vmem:[%s521 + $0x159] sm:$0xff]
        %v6425 = vld [vmem:[%s521 + $0x169] sm:$0xff]
        %v6426 = vld [vmem:[%s521 + $0x171] sm:$0xff]
        %v6427 = vpack.c.bf16 %v6396, %v6395
        %v6428 = vpack.c.bf16 %v6398, %v6397
        %v6429 = vpack.c.bf16 %v6400, %v6399
        %v6430 = vpack.c.bf16 %v6402, %v6401
        %v6431 = vpack.c.bf16 %v6404, %v6403
        %v6432 = vpack.c.bf16 %v6406, %v6405
        %v6433 = vpack.c.bf16 %v6408, %v6407
        %v6434 = vpack.c.bf16 %v6410, %v6409
        %v6435 = vpack.c.bf16 %v6412, %v6411
        %v6436 = vpack.c.bf16 %v6414, %v6413
        %v6437 = vpack.c.bf16 %v6416, %v6415
        %v6438 = vpack.c.bf16 %v6418, %v6417
        %v6439 = vpack.c.bf16 %v6420, %v6419
        %v6440 = vpack.c.bf16 %v6422, %v6421
        %v6441 = vpack.c.bf16 %v6424, %v6423
        %v6442 = vpack.c.bf16 %v6426, %v6425
        %s6443 = scalar_lea.vmem [#allocation11], 256
        %v6444 = vld [vmem:[%s6443] sm:$0xf]
        %v6445 = vld [vmem:[%s6443 + $0x4] sm:$0xf]
        %v6446 = vld [vmem:[%s6443 + $0x8] sm:$0xf]
        %v6447 = vld [vmem:[%s6443 + $0xc] sm:$0xf]
        %v6448 = vld [vmem:[%s6443 + $0x10] sm:$0xf]
        %v6449 = vld [vmem:[%s6443 + $0x14] sm:$0xf]
        %v6450 = vld [vmem:[%s6443 + $0x18] sm:$0xf]
        %v6451 = vld [vmem:[%s6443 + $0x1c] sm:$0xf]
        %v6452 = vld [vmem:[%s6443 + $0x20] sm:$0xf]
        %v6453 = vld [vmem:[%s6443 + $0x24] sm:$0xf]
        %v6454 = vld [vmem:[%s6443 + $0x28] sm:$0xf]
        %v6455 = vld [vmem:[%s6443 + $0x2c] sm:$0xf]
        %v6456 = vld [vmem:[%s6443 + $0x30] sm:$0xf]
        %v6457 = vld [vmem:[%s6443 + $0x34] sm:$0xf]
        %v6458 = vld [vmem:[%s6443 + $0x38] sm:$0xf]
        %v6459 = vld [vmem:[%s6443 + $0x3c] sm:$0xf]
        %v6476 = vunpack.c.l.b16 %v6444
        %v6477 = vunpack.c.l.b16 %v6445
        %v6478 = vunpack.c.l.b16 %v6446
        %v6479 = vunpack.c.l.b16 %v6447
        %v6480 = vunpack.c.l.b16 %v6448
        %v6481 = vunpack.c.l.b16 %v6449
        %v6482 = vunpack.c.l.b16 %v6450
        %v6483 = vunpack.c.l.b16 %v6451
        %v6484 = vunpack.c.l.b16 %v6452
        %v6485 = vunpack.c.l.b16 %v6453
        %v6486 = vunpack.c.l.b16 %v6454
        %v6487 = vunpack.c.l.b16 %v6455
        %v6488 = vunpack.c.l.b16 %v6456
        %v6489 = vunpack.c.l.b16 %v6457
        %v6490 = vunpack.c.l.b16 %v6458
        %v6491 = vunpack.c.l.b16 %v6459
        %v6492 = vpack.c.b16 %v6477, %v6476
        %v6493 = vpack.c.b16 %v6479, %v6478
        %v6494 = vpack.c.b16 %v6481, %v6480
        %v6495 = vpack.c.b16 %v6483, %v6482
        %v6496 = vpack.c.b16 %v6485, %v6484
        %v6497 = vpack.c.b16 %v6487, %v6486
        %v6498 = vpack.c.b16 %v6489, %v6488
        %v6499 = vpack.c.b16 %v6491, %v6490
        %6508 = vmatpush.bf16.msra.mxu0 %v6499
        %6509 = vmatpush.bf16.msra.mxu0 %v6498
        %6510 = vmatpush.bf16.msra.mxu0 %v6497
        %6511 = vmatpush.bf16.msra.mxu0 %v6496
        %6512 = vmatpush.bf16.msra.mxu0 %v6495
        %6513 = vmatpush.bf16.msra.mxu0 %v6494
        %6514 = vmatpush.bf16.msra.mxu0 %v6493
        %6515 = vmatpush.bf16.msra.mxu0 %v6492
        %6516 = vmatmul.bf16.gmra.mxu0 %v6427
        %v6517 = vpop.f32.mrf.mxu0
        %v6518 = vadd.f32 0.0, %v6517
        %v6519 = vpop.f32.mrf.mxu0
        %v6520 = vadd.f32 0.0, %v6519
        %6521 = vmatmul.bf16.gmra.mxu0 %v6428
        %v6522 = vpop.f32.mrf.mxu0
        %v6523 = vadd.f32 0.0, %v6522
        %v6524 = vpop.f32.mrf.mxu0
        %v6525 = vadd.f32 0.0, %v6524
        %6526 = vmatmul.bf16.gmra.mxu0 %v6429
        %v6527 = vpop.f32.mrf.mxu0
        %v6528 = vadd.f32 0.0, %v6527
        %v6529 = vpop.f32.mrf.mxu0
        %v6530 = vadd.f32 0.0, %v6529
        %6531 = vmatmul.bf16.gmra.mxu0 %v6430
        %v6532 = vpop.f32.mrf.mxu0
        %v6533 = vadd.f32 0.0, %v6532
        %v6534 = vpop.f32.mrf.mxu0
        %v6535 = vadd.f32 0.0, %v6534
        %6536 = vmatmul.bf16.gmra.mxu0 %v6431
        %v6537 = vpop.f32.mrf.mxu0
        %v6538 = vadd.f32 0.0, %v6537
        %v6539 = vpop.f32.mrf.mxu0
        %v6540 = vadd.f32 0.0, %v6539
        %6541 = vmatmul.bf16.gmra.mxu0 %v6432
        %v6542 = vpop.f32.mrf.mxu0
        %v6543 = vadd.f32 0.0, %v6542
        %v6544 = vpop.f32.mrf.mxu0
        %v6545 = vadd.f32 0.0, %v6544
        %6546 = vmatmul.bf16.gmra.mxu0 %v6433
        %v6547 = vpop.f32.mrf.mxu0
        %v6548 = vadd.f32 0.0, %v6547
        %v6549 = vpop.f32.mrf.mxu0
        %v6550 = vadd.f32 0.0, %v6549
        %6551 = vmatmul.bf16.gmra.mxu0 %v6434
        %v6552 = vpop.f32.mrf.mxu0
        %v6553 = vadd.f32 0.0, %v6552
        %v6554 = vpop.f32.mrf.mxu0
        %v6555 = vadd.f32 0.0, %v6554
        %6556 = vmatmul.bf16.gmra.mxu0 %v6435
        %v6557 = vpop.f32.mrf.mxu0
        %v6558 = vadd.f32 0.0, %v6557
        %v6559 = vpop.f32.mrf.mxu0
        %v6560 = vadd.f32 0.0, %v6559
        %6561 = vmatmul.bf16.gmra.mxu0 %v6436
        %v6562 = vpop.f32.mrf.mxu0
        %v6563 = vadd.f32 0.0, %v6562
        %v6564 = vpop.f32.mrf.mxu0
        %v6565 = vadd.f32 0.0, %v6564
        %6566 = vmatmul.bf16.gmra.mxu0 %v6437
        %v6567 = vpop.f32.mrf.mxu0
        %v6568 = vadd.f32 0.0, %v6567
        %v6569 = vpop.f32.mrf.mxu0
        %v6570 = vadd.f32 0.0, %v6569
        %6571 = vmatmul.bf16.gmra.mxu0 %v6438
        %v6572 = vpop.f32.mrf.mxu0
        %v6573 = vadd.f32 0.0, %v6572
        %v6574 = vpop.f32.mrf.mxu0
        %v6575 = vadd.f32 0.0, %v6574
        %6576 = vmatmul.bf16.gmra.mxu0 %v6439
        %v6577 = vpop.f32.mrf.mxu0
        %v6578 = vadd.f32 0.0, %v6577
        %v6579 = vpop.f32.mrf.mxu0
        %v6580 = vadd.f32 0.0, %v6579
        %6581 = vmatmul.bf16.gmra.mxu0 %v6440
        %v6582 = vpop.f32.mrf.mxu0
        %v6583 = vadd.f32 0.0, %v6582
        %v6584 = vpop.f32.mrf.mxu0
        %v6585 = vadd.f32 0.0, %v6584
        %6586 = vmatmul.bf16.gmra.mxu0 %v6441
        %v6587 = vpop.f32.mrf.mxu0
        %v6588 = vadd.f32 0.0, %v6587
        %v6589 = vpop.f32.mrf.mxu0
        %v6590 = vadd.f32 0.0, %v6589
        %6591 = vmatmul.bf16.gmra.mxu0 %v6442
        %v6592 = vpop.f32.mrf.mxu0
        %v6593 = vadd.f32 0.0, %v6592
        %v6594 = vpop.f32.mrf.mxu0
        %v6595 = vadd.f32 0.0, %v6594
        %6596 = vdwg.mxu0
        %v6597 = vadd.f32 %v6363, %v6518
        %v6598 = vadd.f32 %v6364, %v6520
        %v6599 = vadd.f32 %v6365, %v6523
        %v6600 = vadd.f32 %v6366, %v6525
        %v6601 = vadd.f32 %v6367, %v6528
        %v6602 = vadd.f32 %v6368, %v6530
        %v6603 = vadd.f32 %v6369, %v6533
        %v6604 = vadd.f32 %v6370, %v6535
        %v6605 = vadd.f32 %v6371, %v6538
        %v6606 = vadd.f32 %v6372, %v6540
        %v6607 = vadd.f32 %v6373, %v6543
        %v6608 = vadd.f32 %v6374, %v6545
        %v6609 = vadd.f32 %v6375, %v6548
        %v6610 = vadd.f32 %v6376, %v6550
        %v6611 = vadd.f32 %v6377, %v6553
        %v6612 = vadd.f32 %v6378, %v6555
        %v6613 = vadd.f32 %v6379, %v6558
        %v6614 = vadd.f32 %v6380, %v6560
        %v6615 = vadd.f32 %v6381, %v6563
        %v6616 = vadd.f32 %v6382, %v6565
        %v6617 = vadd.f32 %v6383, %v6568
        %v6618 = vadd.f32 %v6384, %v6570
        %v6619 = vadd.f32 %v6385, %v6573
        %v6620 = vadd.f32 %v6386, %v6575
        %v6621 = vadd.f32 %v6387, %v6578
        %v6622 = vadd.f32 %v6388, %v6580
        %v6623 = vadd.f32 %v6389, %v6583
        %v6624 = vadd.f32 %v6390, %v6585
        %v6625 = vadd.f32 %v6391, %v6588
        %v6626 = vadd.f32 %v6392, %v6590
        %v6627 = vadd.f32 %v6393, %v6593
        %v6628 = vadd.f32 %v6394, %v6595
        %v6629 = vld [vmem:[%s521 + $0x2] sm:$0xff]
        %v6630 = vld [vmem:[%s521 + $0xa] sm:$0xff]
        %v6631 = vld [vmem:[%s521 + $0x1a] sm:$0xff]
        %v6632 = vld [vmem:[%s521 + $0x22] sm:$0xff]
        %v6633 = vld [vmem:[%s521 + $0x32] sm:$0xff]
        %v6634 = vld [vmem:[%s521 + $0x3a] sm:$0xff]
        %v6635 = vld [vmem:[%s521 + $0x4a] sm:$0xff]
        %v6636 = vld [vmem:[%s521 + $0x52] sm:$0xff]
        %v6637 = vld [vmem:[%s521 + $0x62] sm:$0xff]
        %v6638 = vld [vmem:[%s521 + $0x6a] sm:$0xff]
        %v6639 = vld [vmem:[%s521 + $0x7a] sm:$0xff]
        %v6640 = vld [vmem:[%s521 + $0x82] sm:$0xff]
        %v6641 = vld [vmem:[%s521 + $0x92] sm:$0xff]
        %v6642 = vld [vmem:[%s521 + $0x9a] sm:$0xff]
        %v6643 = vld [vmem:[%s521 + $0xaa] sm:$0xff]
        %v6644 = vld [vmem:[%s521 + $0xb2] sm:$0xff]
        %v6645 = vld [vmem:[%s521 + $0xc2] sm:$0xff]
        %v6646 = vld [vmem:[%s521 + $0xca] sm:$0xff]
        %v6647 = vld [vmem:[%s521 + $0xda] sm:$0xff]
        %v6648 = vld [vmem:[%s521 + $0xe2] sm:$0xff]
        %v6649 = vld [vmem:[%s521 + $0xf2] sm:$0xff]
        %v6650 = vld [vmem:[%s521 + $0xfa] sm:$0xff]
        %v6651 = vld [vmem:[%s521 + $0x10a] sm:$0xff]
        %v6652 = vld [vmem:[%s521 + $0x112] sm:$0xff]
        %v6653 = vld [vmem:[%s521 + $0x122] sm:$0xff]
        %v6654 = vld [vmem:[%s521 + $0x12a] sm:$0xff]
        %v6655 = vld [vmem:[%s521 + $0x13a] sm:$0xff]
        %v6656 = vld [vmem:[%s521 + $0x142] sm:$0xff]
        %v6657 = vld [vmem:[%s521 + $0x152] sm:$0xff]
        %v6658 = vld [vmem:[%s521 + $0x15a] sm:$0xff]
        %v6659 = vld [vmem:[%s521 + $0x16a] sm:$0xff]
        %v6660 = vld [vmem:[%s521 + $0x172] sm:$0xff]
        %v6661 = vpack.c.bf16 %v6630, %v6629
        %v6662 = vpack.c.bf16 %v6632, %v6631
        %v6663 = vpack.c.bf16 %v6634, %v6633
        %v6664 = vpack.c.bf16 %v6636, %v6635
        %v6665 = vpack.c.bf16 %v6638, %v6637
        %v6666 = vpack.c.bf16 %v6640, %v6639
        %v6667 = vpack.c.bf16 %v6642, %v6641
        %v6668 = vpack.c.bf16 %v6644, %v6643
        %v6669 = vpack.c.bf16 %v6646, %v6645
        %v6670 = vpack.c.bf16 %v6648, %v6647
        %v6671 = vpack.c.bf16 %v6650, %v6649
        %v6672 = vpack.c.bf16 %v6652, %v6651
        %v6673 = vpack.c.bf16 %v6654, %v6653
        %v6674 = vpack.c.bf16 %v6656, %v6655
        %v6675 = vpack.c.bf16 %v6658, %v6657
        %v6676 = vpack.c.bf16 %v6660, %v6659
        %s6677 = scalar_lea.vmem [#allocation11], 320
        %v6678 = vld [vmem:[%s6677] sm:$0xf]
        %v6679 = vld [vmem:[%s6677 + $0x4] sm:$0xf]
        %v6680 = vld [vmem:[%s6677 + $0x8] sm:$0xf]
        %v6681 = vld [vmem:[%s6677 + $0xc] sm:$0xf]
        %v6682 = vld [vmem:[%s6677 + $0x10] sm:$0xf]
        %v6683 = vld [vmem:[%s6677 + $0x14] sm:$0xf]
        %v6684 = vld [vmem:[%s6677 + $0x18] sm:$0xf]
        %v6685 = vld [vmem:[%s6677 + $0x1c] sm:$0xf]
        %v6686 = vld [vmem:[%s6677 + $0x20] sm:$0xf]
        %v6687 = vld [vmem:[%s6677 + $0x24] sm:$0xf]
        %v6688 = vld [vmem:[%s6677 + $0x28] sm:$0xf]
        %v6689 = vld [vmem:[%s6677 + $0x2c] sm:$0xf]
        %v6690 = vld [vmem:[%s6677 + $0x30] sm:$0xf]
        %v6691 = vld [vmem:[%s6677 + $0x34] sm:$0xf]
        %v6692 = vld [vmem:[%s6677 + $0x38] sm:$0xf]
        %v6693 = vld [vmem:[%s6677 + $0x3c] sm:$0xf]
        %v6710 = vunpack.c.l.b16 %v6678
        %v6711 = vunpack.c.l.b16 %v6679
        %v6712 = vunpack.c.l.b16 %v6680
        %v6713 = vunpack.c.l.b16 %v6681
        %v6714 = vunpack.c.l.b16 %v6682
        %v6715 = vunpack.c.l.b16 %v6683
        %v6716 = vunpack.c.l.b16 %v6684
        %v6717 = vunpack.c.l.b16 %v6685
        %v6718 = vunpack.c.l.b16 %v6686
        %v6719 = vunpack.c.l.b16 %v6687
        %v6720 = vunpack.c.l.b16 %v6688
        %v6721 = vunpack.c.l.b16 %v6689
        %v6722 = vunpack.c.l.b16 %v6690
        %v6723 = vunpack.c.l.b16 %v6691
        %v6724 = vunpack.c.l.b16 %v6692
        %v6725 = vunpack.c.l.b16 %v6693
        %v6726 = vpack.c.b16 %v6711, %v6710
        %v6727 = vpack.c.b16 %v6713, %v6712
        %v6728 = vpack.c.b16 %v6715, %v6714
        %v6729 = vpack.c.b16 %v6717, %v6716
        %v6730 = vpack.c.b16 %v6719, %v6718
        %v6731 = vpack.c.b16 %v6721, %v6720
        %v6732 = vpack.c.b16 %v6723, %v6722
        %v6733 = vpack.c.b16 %v6725, %v6724
        %6742 = vmatpush.bf16.msra.mxu0 %v6733
        %6743 = vmatpush.bf16.msra.mxu0 %v6732
        %6744 = vmatpush.bf16.msra.mxu0 %v6731
        %6745 = vmatpush.bf16.msra.mxu0 %v6730
        %6746 = vmatpush.bf16.msra.mxu0 %v6729
        %6747 = vmatpush.bf16.msra.mxu0 %v6728
        %6748 = vmatpush.bf16.msra.mxu0 %v6727
        %6749 = vmatpush.bf16.msra.mxu0 %v6726
        %6750 = vmatmul.bf16.gmra.mxu0 %v6661
        %v6751 = vpop.f32.mrf.mxu0
        %v6752 = vadd.f32 0.0, %v6751
        %v6753 = vpop.f32.mrf.mxu0
        %v6754 = vadd.f32 0.0, %v6753
        %6755 = vmatmul.bf16.gmra.mxu0 %v6662
        %v6756 = vpop.f32.mrf.mxu0
        %v6757 = vadd.f32 0.0, %v6756
        %v6758 = vpop.f32.mrf.mxu0
        %v6759 = vadd.f32 0.0, %v6758
        %6760 = vmatmul.bf16.gmra.mxu0 %v6663
        %v6761 = vpop.f32.mrf.mxu0
        %v6762 = vadd.f32 0.0, %v6761
        %v6763 = vpop.f32.mrf.mxu0
        %v6764 = vadd.f32 0.0, %v6763
        %6765 = vmatmul.bf16.gmra.mxu0 %v6664
        %v6766 = vpop.f32.mrf.mxu0
        %v6767 = vadd.f32 0.0, %v6766
        %v6768 = vpop.f32.mrf.mxu0
        %v6769 = vadd.f32 0.0, %v6768
        %6770 = vmatmul.bf16.gmra.mxu0 %v6665
        %v6771 = vpop.f32.mrf.mxu0
        %v6772 = vadd.f32 0.0, %v6771
        %v6773 = vpop.f32.mrf.mxu0
        %v6774 = vadd.f32 0.0, %v6773
        %6775 = vmatmul.bf16.gmra.mxu0 %v6666
        %v6776 = vpop.f32.mrf.mxu0
        %v6777 = vadd.f32 0.0, %v6776
        %v6778 = vpop.f32.mrf.mxu0
        %v6779 = vadd.f32 0.0, %v6778
        %6780 = vmatmul.bf16.gmra.mxu0 %v6667
        %v6781 = vpop.f32.mrf.mxu0
        %v6782 = vadd.f32 0.0, %v6781
        %v6783 = vpop.f32.mrf.mxu0
        %v6784 = vadd.f32 0.0, %v6783
        %6785 = vmatmul.bf16.gmra.mxu0 %v6668
        %v6786 = vpop.f32.mrf.mxu0
        %v6787 = vadd.f32 0.0, %v6786
        %v6788 = vpop.f32.mrf.mxu0
        %v6789 = vadd.f32 0.0, %v6788
        %6790 = vmatmul.bf16.gmra.mxu0 %v6669
        %v6791 = vpop.f32.mrf.mxu0
        %v6792 = vadd.f32 0.0, %v6791
        %v6793 = vpop.f32.mrf.mxu0
        %v6794 = vadd.f32 0.0, %v6793
        %6795 = vmatmul.bf16.gmra.mxu0 %v6670
        %v6796 = vpop.f32.mrf.mxu0
        %v6797 = vadd.f32 0.0, %v6796
        %v6798 = vpop.f32.mrf.mxu0
        %v6799 = vadd.f32 0.0, %v6798
        %6800 = vmatmul.bf16.gmra.mxu0 %v6671
        %v6801 = vpop.f32.mrf.mxu0
        %v6802 = vadd.f32 0.0, %v6801
        %v6803 = vpop.f32.mrf.mxu0
        %v6804 = vadd.f32 0.0, %v6803
        %6805 = vmatmul.bf16.gmra.mxu0 %v6672
        %v6806 = vpop.f32.mrf.mxu0
        %v6807 = vadd.f32 0.0, %v6806
        %v6808 = vpop.f32.mrf.mxu0
        %v6809 = vadd.f32 0.0, %v6808
        %6810 = vmatmul.bf16.gmra.mxu0 %v6673
        %v6811 = vpop.f32.mrf.mxu0
        %v6812 = vadd.f32 0.0, %v6811
        %v6813 = vpop.f32.mrf.mxu0
        %v6814 = vadd.f32 0.0, %v6813
        %6815 = vmatmul.bf16.gmra.mxu0 %v6674
        %v6816 = vpop.f32.mrf.mxu0
        %v6817 = vadd.f32 0.0, %v6816
        %v6818 = vpop.f32.mrf.mxu0
        %v6819 = vadd.f32 0.0, %v6818
        %6820 = vmatmul.bf16.gmra.mxu0 %v6675
        %v6821 = vpop.f32.mrf.mxu0
        %v6822 = vadd.f32 0.0, %v6821
        %v6823 = vpop.f32.mrf.mxu0
        %v6824 = vadd.f32 0.0, %v6823
        %6825 = vmatmul.bf16.gmra.mxu0 %v6676
        %v6826 = vpop.f32.mrf.mxu0
        %v6827 = vadd.f32 0.0, %v6826
        %v6828 = vpop.f32.mrf.mxu0
        %v6829 = vadd.f32 0.0, %v6828
        %6830 = vdwg.mxu0
        %v6831 = vadd.f32 %v6597, %v6752
        %v6832 = vadd.f32 %v6598, %v6754
        %v6833 = vadd.f32 %v6599, %v6757
        %v6834 = vadd.f32 %v6600, %v6759
        %v6835 = vadd.f32 %v6601, %v6762
        %v6836 = vadd.f32 %v6602, %v6764
        %v6837 = vadd.f32 %v6603, %v6767
        %v6838 = vadd.f32 %v6604, %v6769
        %v6839 = vadd.f32 %v6605, %v6772
        %v6840 = vadd.f32 %v6606, %v6774
        %v6841 = vadd.f32 %v6607, %v6777
        %v6842 = vadd.f32 %v6608, %v6779
        %v6843 = vadd.f32 %v6609, %v6782
        %v6844 = vadd.f32 %v6610, %v6784
        %v6845 = vadd.f32 %v6611, %v6787
        %v6846 = vadd.f32 %v6612, %v6789
        %v6847 = vadd.f32 %v6613, %v6792
        %v6848 = vadd.f32 %v6614, %v6794
        %v6849 = vadd.f32 %v6615, %v6797
        %v6850 = vadd.f32 %v6616, %v6799
        %v6851 = vadd.f32 %v6617, %v6802
        %v6852 = vadd.f32 %v6618, %v6804
        %v6853 = vadd.f32 %v6619, %v6807
        %v6854 = vadd.f32 %v6620, %v6809
        %v6855 = vadd.f32 %v6621, %v6812
        %v6856 = vadd.f32 %v6622, %v6814
        %v6857 = vadd.f32 %v6623, %v6817
        %v6858 = vadd.f32 %v6624, %v6819
        %v6859 = vadd.f32 %v6625, %v6822
        %v6860 = vadd.f32 %v6626, %v6824
        %v6861 = vadd.f32 %v6627, %v6827
        %v6862 = vadd.f32 %v6628, %v6829
        %v6863 = vld [vmem:[%s1893] sm:$0xff]
        %v6864 = vld [vmem:[%s1893 + $0x8] sm:$0xff]
        %v6865 = vld [vmem:[%s1893 + $0x18] sm:$0xff]
        %v6866 = vld [vmem:[%s1893 + $0x20] sm:$0xff]
        %v6867 = vld [vmem:[%s1893 + $0x30] sm:$0xff]
        %v6868 = vld [vmem:[%s1893 + $0x38] sm:$0xff]
        %v6869 = vld [vmem:[%s1893 + $0x48] sm:$0xff]
        %v6870 = vld [vmem:[%s1893 + $0x50] sm:$0xff]
        %v6871 = vld [vmem:[%s1893 + $0x60] sm:$0xff]
        %v6872 = vld [vmem:[%s1893 + $0x68] sm:$0xff]
        %v6873 = vld [vmem:[%s1893 + $0x78] sm:$0xff]
        %v6874 = vld [vmem:[%s1893 + $0x80] sm:$0xff]
        %v6875 = vld [vmem:[%s1893 + $0x90] sm:$0xff]
        %v6876 = vld [vmem:[%s1893 + $0x98] sm:$0xff]
        %v6877 = vld [vmem:[%s1893 + $0xa8] sm:$0xff]
        %v6878 = vld [vmem:[%s1893 + $0xb0] sm:$0xff]
        %v6879 = vld [vmem:[%s1893 + $0xc0] sm:$0xff]
        %v6880 = vld [vmem:[%s1893 + $0xc8] sm:$0xff]
        %v6881 = vld [vmem:[%s1893 + $0xd8] sm:$0xff]
        %v6882 = vld [vmem:[%s1893 + $0xe0] sm:$0xff]
        %v6883 = vld [vmem:[%s1893 + $0xf0] sm:$0xff]
        %v6884 = vld [vmem:[%s1893 + $0xf8] sm:$0xff]
        %v6885 = vld [vmem:[%s1893 + $0x108] sm:$0xff]
        %v6886 = vld [vmem:[%s1893 + $0x110] sm:$0xff]
        %v6887 = vld [vmem:[%s1893 + $0x120] sm:$0xff]
        %v6888 = vld [vmem:[%s1893 + $0x128] sm:$0xff]
        %v6889 = vld [vmem:[%s1893 + $0x138] sm:$0xff]
        %v6890 = vld [vmem:[%s1893 + $0x140] sm:$0xff]
        %v6891 = vld [vmem:[%s1893 + $0x150] sm:$0xff]
        %v6892 = vld [vmem:[%s1893 + $0x158] sm:$0xff]
        %v6893 = vld [vmem:[%s1893 + $0x168] sm:$0xff]
        %v6894 = vld [vmem:[%s1893 + $0x170] sm:$0xff]
        %v6895 = vpack.c.bf16 %v6864, %v6863
        %v6896 = vpack.c.bf16 %v6866, %v6865
        %v6897 = vpack.c.bf16 %v6868, %v6867
        %v6898 = vpack.c.bf16 %v6870, %v6869
        %v6899 = vpack.c.bf16 %v6872, %v6871
        %v6900 = vpack.c.bf16 %v6874, %v6873
        %v6901 = vpack.c.bf16 %v6876, %v6875
        %v6902 = vpack.c.bf16 %v6878, %v6877
        %v6903 = vpack.c.bf16 %v6880, %v6879
        %v6904 = vpack.c.bf16 %v6882, %v6881
        %v6905 = vpack.c.bf16 %v6884, %v6883
        %v6906 = vpack.c.bf16 %v6886, %v6885
        %v6907 = vpack.c.bf16 %v6888, %v6887
        %v6908 = vpack.c.bf16 %v6890, %v6889
        %v6909 = vpack.c.bf16 %v6892, %v6891
        %v6910 = vpack.c.bf16 %v6894, %v6893
        %s6911 = scalar_lea.vmem [#allocation11], 384
        %v6912 = vld [vmem:[%s6911] sm:$0xf]
        %v6913 = vld [vmem:[%s6911 + $0x4] sm:$0xf]
        %v6914 = vld [vmem:[%s6911 + $0x8] sm:$0xf]
        %v6915 = vld [vmem:[%s6911 + $0xc] sm:$0xf]
        %v6916 = vld [vmem:[%s6911 + $0x10] sm:$0xf]
        %v6917 = vld [vmem:[%s6911 + $0x14] sm:$0xf]
        %v6918 = vld [vmem:[%s6911 + $0x18] sm:$0xf]
        %v6919 = vld [vmem:[%s6911 + $0x1c] sm:$0xf]
        %v6920 = vld [vmem:[%s6911 + $0x20] sm:$0xf]
        %v6921 = vld [vmem:[%s6911 + $0x24] sm:$0xf]
        %v6922 = vld [vmem:[%s6911 + $0x28] sm:$0xf]
        %v6923 = vld [vmem:[%s6911 + $0x2c] sm:$0xf]
        %v6924 = vld [vmem:[%s6911 + $0x30] sm:$0xf]
        %v6925 = vld [vmem:[%s6911 + $0x34] sm:$0xf]
        %v6926 = vld [vmem:[%s6911 + $0x38] sm:$0xf]
        %v6927 = vld [vmem:[%s6911 + $0x3c] sm:$0xf]
        %v6944 = vunpack.c.l.b16 %v6912
        %v6945 = vunpack.c.l.b16 %v6913
        %v6946 = vunpack.c.l.b16 %v6914
        %v6947 = vunpack.c.l.b16 %v6915
        %v6948 = vunpack.c.l.b16 %v6916
        %v6949 = vunpack.c.l.b16 %v6917
        %v6950 = vunpack.c.l.b16 %v6918
        %v6951 = vunpack.c.l.b16 %v6919
        %v6952 = vunpack.c.l.b16 %v6920
        %v6953 = vunpack.c.l.b16 %v6921
        %v6954 = vunpack.c.l.b16 %v6922
        %v6955 = vunpack.c.l.b16 %v6923
        %v6956 = vunpack.c.l.b16 %v6924
        %v6957 = vunpack.c.l.b16 %v6925
        %v6958 = vunpack.c.l.b16 %v6926
        %v6959 = vunpack.c.l.b16 %v6927
        %v6960 = vpack.c.b16 %v6945, %v6944
        %v6961 = vpack.c.b16 %v6947, %v6946
        %v6962 = vpack.c.b16 %v6949, %v6948
        %v6963 = vpack.c.b16 %v6951, %v6950
        %v6964 = vpack.c.b16 %v6953, %v6952
        %v6965 = vpack.c.b16 %v6955, %v6954
        %v6966 = vpack.c.b16 %v6957, %v6956
        %v6967 = vpack.c.b16 %v6959, %v6958
        %6976 = vmatpush.bf16.msra.mxu0 %v6967
        %6977 = vmatpush.bf16.msra.mxu0 %v6966
        %6978 = vmatpush.bf16.msra.mxu0 %v6965
        %6979 = vmatpush.bf16.msra.mxu0 %v6964
        %6980 = vmatpush.bf16.msra.mxu0 %v6963
        %6981 = vmatpush.bf16.msra.mxu0 %v6962
        %6982 = vmatpush.bf16.msra.mxu0 %v6961
        %6983 = vmatpush.bf16.msra.mxu0 %v6960
        %6984 = vmatmul.bf16.gmra.mxu0 %v6895
        %v6985 = vpop.f32.mrf.mxu0
        %v6986 = vadd.f32 0.0, %v6985
        %v6987 = vpop.f32.mrf.mxu0
        %v6988 = vadd.f32 0.0, %v6987
        %6989 = vmatmul.bf16.gmra.mxu0 %v6896
        %v6990 = vpop.f32.mrf.mxu0
        %v6991 = vadd.f32 0.0, %v6990
        %v6992 = vpop.f32.mrf.mxu0
        %v6993 = vadd.f32 0.0, %v6992
        %6994 = vmatmul.bf16.gmra.mxu0 %v6897
        %v6995 = vpop.f32.mrf.mxu0
        %v6996 = vadd.f32 0.0, %v6995
        %v6997 = vpop.f32.mrf.mxu0
        %v6998 = vadd.f32 0.0, %v6997
        %6999 = vmatmul.bf16.gmra.mxu0 %v6898
        %v7000 = vpop.f32.mrf.mxu0
        %v7001 = vadd.f32 0.0, %v7000
        %v7002 = vpop.f32.mrf.mxu0
        %v7003 = vadd.f32 0.0, %v7002
        %7004 = vmatmul.bf16.gmra.mxu0 %v6899
        %v7005 = vpop.f32.mrf.mxu0
        %v7006 = vadd.f32 0.0, %v7005
        %v7007 = vpop.f32.mrf.mxu0
        %v7008 = vadd.f32 0.0, %v7007
        %7009 = vmatmul.bf16.gmra.mxu0 %v6900
        %v7010 = vpop.f32.mrf.mxu0
        %v7011 = vadd.f32 0.0, %v7010
        %v7012 = vpop.f32.mrf.mxu0
        %v7013 = vadd.f32 0.0, %v7012
        %7014 = vmatmul.bf16.gmra.mxu0 %v6901
        %v7015 = vpop.f32.mrf.mxu0
        %v7016 = vadd.f32 0.0, %v7015
        %v7017 = vpop.f32.mrf.mxu0
        %v7018 = vadd.f32 0.0, %v7017
        %7019 = vmatmul.bf16.gmra.mxu0 %v6902
        %v7020 = vpop.f32.mrf.mxu0
        %v7021 = vadd.f32 0.0, %v7020
        %v7022 = vpop.f32.mrf.mxu0
        %v7023 = vadd.f32 0.0, %v7022
        %7024 = vmatmul.bf16.gmra.mxu0 %v6903
        %v7025 = vpop.f32.mrf.mxu0
        %v7026 = vadd.f32 0.0, %v7025
        %v7027 = vpop.f32.mrf.mxu0
        %v7028 = vadd.f32 0.0, %v7027
        %7029 = vmatmul.bf16.gmra.mxu0 %v6904
        %v7030 = vpop.f32.mrf.mxu0
        %v7031 = vadd.f32 0.0, %v7030
        %v7032 = vpop.f32.mrf.mxu0
        %v7033 = vadd.f32 0.0, %v7032
        %7034 = vmatmul.bf16.gmra.mxu0 %v6905
        %v7035 = vpop.f32.mrf.mxu0
        %v7036 = vadd.f32 0.0, %v7035
        %v7037 = vpop.f32.mrf.mxu0
        %v7038 = vadd.f32 0.0, %v7037
        %7039 = vmatmul.bf16.gmra.mxu0 %v6906
        %v7040 = vpop.f32.mrf.mxu0
        %v7041 = vadd.f32 0.0, %v7040
        %v7042 = vpop.f32.mrf.mxu0
        %v7043 = vadd.f32 0.0, %v7042
        %7044 = vmatmul.bf16.gmra.mxu0 %v6907
        %v7045 = vpop.f32.mrf.mxu0
        %v7046 = vadd.f32 0.0, %v7045
        %v7047 = vpop.f32.mrf.mxu0
        %v7048 = vadd.f32 0.0, %v7047
        %7049 = vmatmul.bf16.gmra.mxu0 %v6908
        %v7050 = vpop.f32.mrf.mxu0
        %v7051 = vadd.f32 0.0, %v7050
        %v7052 = vpop.f32.mrf.mxu0
        %v7053 = vadd.f32 0.0, %v7052
        %7054 = vmatmul.bf16.gmra.mxu0 %v6909
        %v7055 = vpop.f32.mrf.mxu0
        %v7056 = vadd.f32 0.0, %v7055
        %v7057 = vpop.f32.mrf.mxu0
        %v7058 = vadd.f32 0.0, %v7057
        %7059 = vmatmul.bf16.gmra.mxu0 %v6910
        %v7060 = vpop.f32.mrf.mxu0
        %v7061 = vadd.f32 0.0, %v7060
        %v7062 = vpop.f32.mrf.mxu0
        %v7063 = vadd.f32 0.0, %v7062
        %7064 = vdwg.mxu0
        %v7065 = vadd.f32 %v6831, %v6986
        %v7066 = vadd.f32 %v6832, %v6988
        %v7067 = vadd.f32 %v6833, %v6991
        %v7068 = vadd.f32 %v6834, %v6993
        %v7069 = vadd.f32 %v6835, %v6996
        %v7070 = vadd.f32 %v6836, %v6998
        %v7071 = vadd.f32 %v6837, %v7001
        %v7072 = vadd.f32 %v6838, %v7003
        %v7073 = vadd.f32 %v6839, %v7006
        %v7074 = vadd.f32 %v6840, %v7008
        %v7075 = vadd.f32 %v6841, %v7011
        %v7076 = vadd.f32 %v6842, %v7013
        %v7077 = vadd.f32 %v6843, %v7016
        %v7078 = vadd.f32 %v6844, %v7018
        %v7079 = vadd.f32 %v6845, %v7021
        %v7080 = vadd.f32 %v6846, %v7023
        %v7081 = vadd.f32 %v6847, %v7026
        %v7082 = vadd.f32 %v6848, %v7028
        %v7083 = vadd.f32 %v6849, %v7031
        %v7084 = vadd.f32 %v6850, %v7033
        %v7085 = vadd.f32 %v6851, %v7036
        %v7086 = vadd.f32 %v6852, %v7038
        %v7087 = vadd.f32 %v6853, %v7041
        %v7088 = vadd.f32 %v6854, %v7043
        %v7089 = vadd.f32 %v6855, %v7046
        %v7090 = vadd.f32 %v6856, %v7048
        %v7091 = vadd.f32 %v6857, %v7051
        %v7092 = vadd.f32 %v6858, %v7053
        %v7093 = vadd.f32 %v6859, %v7056
        %v7094 = vadd.f32 %v6860, %v7058
        %v7095 = vadd.f32 %v6861, %v7061
        %v7096 = vadd.f32 %v6862, %v7063
        %v7097 = vld [vmem:[%s1893 + $0x1] sm:$0xff]
        %v7098 = vld [vmem:[%s1893 + $0x9] sm:$0xff]
        %v7099 = vld [vmem:[%s1893 + $0x19] sm:$0xff]
        %v7100 = vld [vmem:[%s1893 + $0x21] sm:$0xff]
        %v7101 = vld [vmem:[%s1893 + $0x31] sm:$0xff]
        %v7102 = vld [vmem:[%s1893 + $0x39] sm:$0xff]
        %v7103 = vld [vmem:[%s1893 + $0x49] sm:$0xff]
        %v7104 = vld [vmem:[%s1893 + $0x51] sm:$0xff]
        %v7105 = vld [vmem:[%s1893 + $0x61] sm:$0xff]
        %v7106 = vld [vmem:[%s1893 + $0x69] sm:$0xff]
        %v7107 = vld [vmem:[%s1893 + $0x79] sm:$0xff]
        %v7108 = vld [vmem:[%s1893 + $0x81] sm:$0xff]
        %v7109 = vld [vmem:[%s1893 + $0x91] sm:$0xff]
        %v7110 = vld [vmem:[%s1893 + $0x99] sm:$0xff]
        %v7111 = vld [vmem:[%s1893 + $0xa9] sm:$0xff]
        %v7112 = vld [vmem:[%s1893 + $0xb1] sm:$0xff]
        %v7113 = vld [vmem:[%s1893 + $0xc1] sm:$0xff]
        %v7114 = vld [vmem:[%s1893 + $0xc9] sm:$0xff]
        %v7115 = vld [vmem:[%s1893 + $0xd9] sm:$0xff]
        %v7116 = vld [vmem:[%s1893 + $0xe1] sm:$0xff]
        %v7117 = vld [vmem:[%s1893 + $0xf1] sm:$0xff]
        %v7118 = vld [vmem:[%s1893 + $0xf9] sm:$0xff]
        %v7119 = vld [vmem:[%s1893 + $0x109] sm:$0xff]
        %v7120 = vld [vmem:[%s1893 + $0x111] sm:$0xff]
        %v7121 = vld [vmem:[%s1893 + $0x121] sm:$0xff]
        %v7122 = vld [vmem:[%s1893 + $0x129] sm:$0xff]
        %v7123 = vld [vmem:[%s1893 + $0x139] sm:$0xff]
        %v7124 = vld [vmem:[%s1893 + $0x141] sm:$0xff]
        %v7125 = vld [vmem:[%s1893 + $0x151] sm:$0xff]
        %v7126 = vld [vmem:[%s1893 + $0x159] sm:$0xff]
        %v7127 = vld [vmem:[%s1893 + $0x169] sm:$0xff]
        %v7128 = vld [vmem:[%s1893 + $0x171] sm:$0xff]
        %v7129 = vpack.c.bf16 %v7098, %v7097
        %v7130 = vpack.c.bf16 %v7100, %v7099
        %v7131 = vpack.c.bf16 %v7102, %v7101
        %v7132 = vpack.c.bf16 %v7104, %v7103
        %v7133 = vpack.c.bf16 %v7106, %v7105
        %v7134 = vpack.c.bf16 %v7108, %v7107
        %v7135 = vpack.c.bf16 %v7110, %v7109
        %v7136 = vpack.c.bf16 %v7112, %v7111
        %v7137 = vpack.c.bf16 %v7114, %v7113
        %v7138 = vpack.c.bf16 %v7116, %v7115
        %v7139 = vpack.c.bf16 %v7118, %v7117
        %v7140 = vpack.c.bf16 %v7120, %v7119
        %v7141 = vpack.c.bf16 %v7122, %v7121
        %v7142 = vpack.c.bf16 %v7124, %v7123
        %v7143 = vpack.c.bf16 %v7126, %v7125
        %v7144 = vpack.c.bf16 %v7128, %v7127
        %s7145 = scalar_lea.vmem [#allocation11], 448
        %v7146 = vld [vmem:[%s7145] sm:$0xf]
        %v7147 = vld [vmem:[%s7145 + $0x4] sm:$0xf]
        %v7148 = vld [vmem:[%s7145 + $0x8] sm:$0xf]
        %v7149 = vld [vmem:[%s7145 + $0xc] sm:$0xf]
        %v7150 = vld [vmem:[%s7145 + $0x10] sm:$0xf]
        %v7151 = vld [vmem:[%s7145 + $0x14] sm:$0xf]
        %v7152 = vld [vmem:[%s7145 + $0x18] sm:$0xf]
        %v7153 = vld [vmem:[%s7145 + $0x1c] sm:$0xf]
        %v7154 = vld [vmem:[%s7145 + $0x20] sm:$0xf]
        %v7155 = vld [vmem:[%s7145 + $0x24] sm:$0xf]
        %v7156 = vld [vmem:[%s7145 + $0x28] sm:$0xf]
        %v7157 = vld [vmem:[%s7145 + $0x2c] sm:$0xf]
        %v7158 = vld [vmem:[%s7145 + $0x30] sm:$0xf]
        %v7159 = vld [vmem:[%s7145 + $0x34] sm:$0xf]
        %v7160 = vld [vmem:[%s7145 + $0x38] sm:$0xf]
        %v7161 = vld [vmem:[%s7145 + $0x3c] sm:$0xf]
        %v7178 = vunpack.c.l.b16 %v7146
        %v7179 = vunpack.c.l.b16 %v7147
        %v7180 = vunpack.c.l.b16 %v7148
        %v7181 = vunpack.c.l.b16 %v7149
        %v7182 = vunpack.c.l.b16 %v7150
        %v7183 = vunpack.c.l.b16 %v7151
        %v7184 = vunpack.c.l.b16 %v7152
        %v7185 = vunpack.c.l.b16 %v7153
        %v7186 = vunpack.c.l.b16 %v7154
        %v7187 = vunpack.c.l.b16 %v7155
        %v7188 = vunpack.c.l.b16 %v7156
        %v7189 = vunpack.c.l.b16 %v7157
        %v7190 = vunpack.c.l.b16 %v7158
        %v7191 = vunpack.c.l.b16 %v7159
        %v7192 = vunpack.c.l.b16 %v7160
        %v7193 = vunpack.c.l.b16 %v7161
        %v7194 = vpack.c.b16 %v7179, %v7178
        %v7195 = vpack.c.b16 %v7181, %v7180
        %v7196 = vpack.c.b16 %v7183, %v7182
        %v7197 = vpack.c.b16 %v7185, %v7184
        %v7198 = vpack.c.b16 %v7187, %v7186
        %v7199 = vpack.c.b16 %v7189, %v7188
        %v7200 = vpack.c.b16 %v7191, %v7190
        %v7201 = vpack.c.b16 %v7193, %v7192
        %7210 = vmatpush.bf16.msra.mxu0 %v7201
        %7211 = vmatpush.bf16.msra.mxu0 %v7200
        %7212 = vmatpush.bf16.msra.mxu0 %v7199
        %7213 = vmatpush.bf16.msra.mxu0 %v7198
        %7214 = vmatpush.bf16.msra.mxu0 %v7197
        %7215 = vmatpush.bf16.msra.mxu0 %v7196
        %7216 = vmatpush.bf16.msra.mxu0 %v7195
        %7217 = vmatpush.bf16.msra.mxu0 %v7194
        %7218 = vmatmul.bf16.gmra.mxu0 %v7129
        %v7219 = vpop.f32.mrf.mxu0
        %v7220 = vadd.f32 0.0, %v7219
        %v7221 = vpop.f32.mrf.mxu0
        %v7222 = vadd.f32 0.0, %v7221
        %7223 = vmatmul.bf16.gmra.mxu0 %v7130
        %v7224 = vpop.f32.mrf.mxu0
        %v7225 = vadd.f32 0.0, %v7224
        %v7226 = vpop.f32.mrf.mxu0
        %v7227 = vadd.f32 0.0, %v7226
        %7228 = vmatmul.bf16.gmra.mxu0 %v7131
        %v7229 = vpop.f32.mrf.mxu0
        %v7230 = vadd.f32 0.0, %v7229
        %v7231 = vpop.f32.mrf.mxu0
        %v7232 = vadd.f32 0.0, %v7231
        %7233 = vmatmul.bf16.gmra.mxu0 %v7132
        %v7234 = vpop.f32.mrf.mxu0
        %v7235 = vadd.f32 0.0, %v7234
        %v7236 = vpop.f32.mrf.mxu0
        %v7237 = vadd.f32 0.0, %v7236
        %7238 = vmatmul.bf16.gmra.mxu0 %v7133
        %v7239 = vpop.f32.mrf.mxu0
        %v7240 = vadd.f32 0.0, %v7239
        %v7241 = vpop.f32.mrf.mxu0
        %v7242 = vadd.f32 0.0, %v7241
        %7243 = vmatmul.bf16.gmra.mxu0 %v7134
        %v7244 = vpop.f32.mrf.mxu0
        %v7245 = vadd.f32 0.0, %v7244
        %v7246 = vpop.f32.mrf.mxu0
        %v7247 = vadd.f32 0.0, %v7246
        %7248 = vmatmul.bf16.gmra.mxu0 %v7135
        %v7249 = vpop.f32.mrf.mxu0
        %v7250 = vadd.f32 0.0, %v7249
        %v7251 = vpop.f32.mrf.mxu0
        %v7252 = vadd.f32 0.0, %v7251
        %7253 = vmatmul.bf16.gmra.mxu0 %v7136
        %v7254 = vpop.f32.mrf.mxu0
        %v7255 = vadd.f32 0.0, %v7254
        %v7256 = vpop.f32.mrf.mxu0
        %v7257 = vadd.f32 0.0, %v7256
        %7258 = vmatmul.bf16.gmra.mxu0 %v7137
        %v7259 = vpop.f32.mrf.mxu0
        %v7260 = vadd.f32 0.0, %v7259
        %v7261 = vpop.f32.mrf.mxu0
        %v7262 = vadd.f32 0.0, %v7261
        %7263 = vmatmul.bf16.gmra.mxu0 %v7138
        %v7264 = vpop.f32.mrf.mxu0
        %v7265 = vadd.f32 0.0, %v7264
        %v7266 = vpop.f32.mrf.mxu0
        %v7267 = vadd.f32 0.0, %v7266
        %7268 = vmatmul.bf16.gmra.mxu0 %v7139
        %v7269 = vpop.f32.mrf.mxu0
        %v7270 = vadd.f32 0.0, %v7269
        %v7271 = vpop.f32.mrf.mxu0
        %v7272 = vadd.f32 0.0, %v7271
        %7273 = vmatmul.bf16.gmra.mxu0 %v7140
        %v7274 = vpop.f32.mrf.mxu0
        %v7275 = vadd.f32 0.0, %v7274
        %v7276 = vpop.f32.mrf.mxu0
        %v7277 = vadd.f32 0.0, %v7276
        %7278 = vmatmul.bf16.gmra.mxu0 %v7141
        %v7279 = vpop.f32.mrf.mxu0
        %v7280 = vadd.f32 0.0, %v7279
        %v7281 = vpop.f32.mrf.mxu0
        %v7282 = vadd.f32 0.0, %v7281
        %7283 = vmatmul.bf16.gmra.mxu0 %v7142
        %v7284 = vpop.f32.mrf.mxu0
        %v7285 = vadd.f32 0.0, %v7284
        %v7286 = vpop.f32.mrf.mxu0
        %v7287 = vadd.f32 0.0, %v7286
        %7288 = vmatmul.bf16.gmra.mxu0 %v7143
        %v7289 = vpop.f32.mrf.mxu0
        %v7290 = vadd.f32 0.0, %v7289
        %v7291 = vpop.f32.mrf.mxu0
        %v7292 = vadd.f32 0.0, %v7291
        %7293 = vmatmul.bf16.gmra.mxu0 %v7144
        %v7294 = vpop.f32.mrf.mxu0
        %v7295 = vadd.f32 0.0, %v7294
        %v7296 = vpop.f32.mrf.mxu0
        %v7297 = vadd.f32 0.0, %v7296
        %7298 = vdwg.mxu0
        %v7299 = vadd.f32 %v7065, %v7220
        %v7300 = vadd.f32 %v7066, %v7222
        %v7301 = vadd.f32 %v7067, %v7225
        %v7302 = vadd.f32 %v7068, %v7227
        %v7303 = vadd.f32 %v7069, %v7230
        %v7304 = vadd.f32 %v7070, %v7232
        %v7305 = vadd.f32 %v7071, %v7235
        %v7306 = vadd.f32 %v7072, %v7237
        %v7307 = vadd.f32 %v7073, %v7240
        %v7308 = vadd.f32 %v7074, %v7242
        %v7309 = vadd.f32 %v7075, %v7245
        %v7310 = vadd.f32 %v7076, %v7247
        %v7311 = vadd.f32 %v7077, %v7250
        %v7312 = vadd.f32 %v7078, %v7252
        %v7313 = vadd.f32 %v7079, %v7255
        %v7314 = vadd.f32 %v7080, %v7257
        %v7315 = vadd.f32 %v7081, %v7260
        %v7316 = vadd.f32 %v7082, %v7262
        %v7317 = vadd.f32 %v7083, %v7265
        %v7318 = vadd.f32 %v7084, %v7267
        %v7319 = vadd.f32 %v7085, %v7270
        %v7320 = vadd.f32 %v7086, %v7272
        %v7321 = vadd.f32 %v7087, %v7275
        %v7322 = vadd.f32 %v7088, %v7277
        %v7323 = vadd.f32 %v7089, %v7280
        %v7324 = vadd.f32 %v7090, %v7282
        %v7325 = vadd.f32 %v7091, %v7285
        %v7326 = vadd.f32 %v7092, %v7287
        %v7327 = vadd.f32 %v7093, %v7290
        %v7328 = vadd.f32 %v7094, %v7292
        %v7329 = vadd.f32 %v7095, %v7295
        %v7330 = vadd.f32 %v7096, %v7297
        %v7331 = vld [vmem:[%s1893 + $0x2] sm:$0xff]
        %v7332 = vld [vmem:[%s1893 + $0xa] sm:$0xff]
        %v7333 = vld [vmem:[%s1893 + $0x1a] sm:$0xff]
        %v7334 = vld [vmem:[%s1893 + $0x22] sm:$0xff]
        %v7335 = vld [vmem:[%s1893 + $0x32] sm:$0xff]
        %v7336 = vld [vmem:[%s1893 + $0x3a] sm:$0xff]
        %v7337 = vld [vmem:[%s1893 + $0x4a] sm:$0xff]
        %v7338 = vld [vmem:[%s1893 + $0x52] sm:$0xff]
        %v7339 = vld [vmem:[%s1893 + $0x62] sm:$0xff]
        %v7340 = vld [vmem:[%s1893 + $0x6a] sm:$0xff]
        %v7341 = vld [vmem:[%s1893 + $0x7a] sm:$0xff]
        %v7342 = vld [vmem:[%s1893 + $0x82] sm:$0xff]
        %v7343 = vld [vmem:[%s1893 + $0x92] sm:$0xff]
        %v7344 = vld [vmem:[%s1893 + $0x9a] sm:$0xff]
        %v7345 = vld [vmem:[%s1893 + $0xaa] sm:$0xff]
        %v7346 = vld [vmem:[%s1893 + $0xb2] sm:$0xff]
        %v7347 = vld [vmem:[%s1893 + $0xc2] sm:$0xff]
        %v7348 = vld [vmem:[%s1893 + $0xca] sm:$0xff]
        %v7349 = vld [vmem:[%s1893 + $0xda] sm:$0xff]
        %v7350 = vld [vmem:[%s1893 + $0xe2] sm:$0xff]
        %v7351 = vld [vmem:[%s1893 + $0xf2] sm:$0xff]
        %v7352 = vld [vmem:[%s1893 + $0xfa] sm:$0xff]
        %v7353 = vld [vmem:[%s1893 + $0x10a] sm:$0xff]
        %v7354 = vld [vmem:[%s1893 + $0x112] sm:$0xff]
        %v7355 = vld [vmem:[%s1893 + $0x122] sm:$0xff]
        %v7356 = vld [vmem:[%s1893 + $0x12a] sm:$0xff]
        %v7357 = vld [vmem:[%s1893 + $0x13a] sm:$0xff]
        %v7358 = vld [vmem:[%s1893 + $0x142] sm:$0xff]
        %v7359 = vld [vmem:[%s1893 + $0x152] sm:$0xff]
        %v7360 = vld [vmem:[%s1893 + $0x15a] sm:$0xff]
        %v7361 = vld [vmem:[%s1893 + $0x16a] sm:$0xff]
        %v7362 = vld [vmem:[%s1893 + $0x172] sm:$0xff]
        %v7363 = vpack.c.bf16 %v7332, %v7331
        %v7364 = vpack.c.bf16 %v7334, %v7333
        %v7365 = vpack.c.bf16 %v7336, %v7335
        %v7366 = vpack.c.bf16 %v7338, %v7337
        %v7367 = vpack.c.bf16 %v7340, %v7339
        %v7368 = vpack.c.bf16 %v7342, %v7341
        %v7369 = vpack.c.bf16 %v7344, %v7343
        %v7370 = vpack.c.bf16 %v7346, %v7345
        %v7371 = vpack.c.bf16 %v7348, %v7347
        %v7372 = vpack.c.bf16 %v7350, %v7349
        %v7373 = vpack.c.bf16 %v7352, %v7351
        %v7374 = vpack.c.bf16 %v7354, %v7353
        %v7375 = vpack.c.bf16 %v7356, %v7355
        %v7376 = vpack.c.bf16 %v7358, %v7357
        %v7377 = vpack.c.bf16 %v7360, %v7359
        %v7378 = vpack.c.bf16 %v7362, %v7361
        %s7379 = scalar_lea.vmem [#allocation11], 512
        %v7380 = vld [vmem:[%s7379] sm:$0xf]
        %v7381 = vld [vmem:[%s7379 + $0x4] sm:$0xf]
        %v7382 = vld [vmem:[%s7379 + $0x8] sm:$0xf]
        %v7383 = vld [vmem:[%s7379 + $0xc] sm:$0xf]
        %v7384 = vld [vmem:[%s7379 + $0x10] sm:$0xf]
        %v7385 = vld [vmem:[%s7379 + $0x14] sm:$0xf]
        %v7386 = vld [vmem:[%s7379 + $0x18] sm:$0xf]
        %v7387 = vld [vmem:[%s7379 + $0x1c] sm:$0xf]
        %v7388 = vld [vmem:[%s7379 + $0x20] sm:$0xf]
        %v7389 = vld [vmem:[%s7379 + $0x24] sm:$0xf]
        %v7390 = vld [vmem:[%s7379 + $0x28] sm:$0xf]
        %v7391 = vld [vmem:[%s7379 + $0x2c] sm:$0xf]
        %v7392 = vld [vmem:[%s7379 + $0x30] sm:$0xf]
        %v7393 = vld [vmem:[%s7379 + $0x34] sm:$0xf]
        %v7394 = vld [vmem:[%s7379 + $0x38] sm:$0xf]
        %v7395 = vld [vmem:[%s7379 + $0x3c] sm:$0xf]
        %v7412 = vunpack.c.l.b16 %v7380
        %v7413 = vunpack.c.l.b16 %v7381
        %v7414 = vunpack.c.l.b16 %v7382
        %v7415 = vunpack.c.l.b16 %v7383
        %v7416 = vunpack.c.l.b16 %v7384
        %v7417 = vunpack.c.l.b16 %v7385
        %v7418 = vunpack.c.l.b16 %v7386
        %v7419 = vunpack.c.l.b16 %v7387
        %v7420 = vunpack.c.l.b16 %v7388
        %v7421 = vunpack.c.l.b16 %v7389
        %v7422 = vunpack.c.l.b16 %v7390
        %v7423 = vunpack.c.l.b16 %v7391
        %v7424 = vunpack.c.l.b16 %v7392
        %v7425 = vunpack.c.l.b16 %v7393
        %v7426 = vunpack.c.l.b16 %v7394
        %v7427 = vunpack.c.l.b16 %v7395
        %v7428 = vpack.c.b16 %v7413, %v7412
        %v7429 = vpack.c.b16 %v7415, %v7414
        %v7430 = vpack.c.b16 %v7417, %v7416
        %v7431 = vpack.c.b16 %v7419, %v7418
        %v7432 = vpack.c.b16 %v7421, %v7420
        %v7433 = vpack.c.b16 %v7423, %v7422
        %v7434 = vpack.c.b16 %v7425, %v7424
        %v7435 = vpack.c.b16 %v7427, %v7426
        %7444 = vmatpush.bf16.msra.mxu0 %v7435
        %7445 = vmatpush.bf16.msra.mxu0 %v7434
        %7446 = vmatpush.bf16.msra.mxu0 %v7433
        %7447 = vmatpush.bf16.msra.mxu0 %v7432
        %7448 = vmatpush.bf16.msra.mxu0 %v7431
        %7449 = vmatpush.bf16.msra.mxu0 %v7430
        %7450 = vmatpush.bf16.msra.mxu0 %v7429
        %7451 = vmatpush.bf16.msra.mxu0 %v7428
        %7452 = vmatmul.bf16.gmra.mxu0 %v7363
        %v7453 = vpop.f32.mrf.mxu0
        %v7454 = vadd.f32 0.0, %v7453
        %v7455 = vpop.f32.mrf.mxu0
        %v7456 = vadd.f32 0.0, %v7455
        %7457 = vmatmul.bf16.gmra.mxu0 %v7364
        %v7458 = vpop.f32.mrf.mxu0
        %v7459 = vadd.f32 0.0, %v7458
        %v7460 = vpop.f32.mrf.mxu0
        %v7461 = vadd.f32 0.0, %v7460
        %7462 = vmatmul.bf16.gmra.mxu0 %v7365
        %v7463 = vpop.f32.mrf.mxu0
        %v7464 = vadd.f32 0.0, %v7463
        %v7465 = vpop.f32.mrf.mxu0
        %v7466 = vadd.f32 0.0, %v7465
        %7467 = vmatmul.bf16.gmra.mxu0 %v7366
        %v7468 = vpop.f32.mrf.mxu0
        %v7469 = vadd.f32 0.0, %v7468
        %v7470 = vpop.f32.mrf.mxu0
        %v7471 = vadd.f32 0.0, %v7470
        %7472 = vmatmul.bf16.gmra.mxu0 %v7367
        %v7473 = vpop.f32.mrf.mxu0
        %v7474 = vadd.f32 0.0, %v7473
        %v7475 = vpop.f32.mrf.mxu0
        %v7476 = vadd.f32 0.0, %v7475
        %7477 = vmatmul.bf16.gmra.mxu0 %v7368
        %v7478 = vpop.f32.mrf.mxu0
        %v7479 = vadd.f32 0.0, %v7478
        %v7480 = vpop.f32.mrf.mxu0
        %v7481 = vadd.f32 0.0, %v7480
        %7482 = vmatmul.bf16.gmra.mxu0 %v7369
        %v7483 = vpop.f32.mrf.mxu0
        %v7484 = vadd.f32 0.0, %v7483
        %v7485 = vpop.f32.mrf.mxu0
        %v7486 = vadd.f32 0.0, %v7485
        %7487 = vmatmul.bf16.gmra.mxu0 %v7370
        %v7488 = vpop.f32.mrf.mxu0
        %v7489 = vadd.f32 0.0, %v7488
        %v7490 = vpop.f32.mrf.mxu0
        %v7491 = vadd.f32 0.0, %v7490
        %7492 = vmatmul.bf16.gmra.mxu0 %v7371
        %v7493 = vpop.f32.mrf.mxu0
        %v7494 = vadd.f32 0.0, %v7493
        %v7495 = vpop.f32.mrf.mxu0
        %v7496 = vadd.f32 0.0, %v7495
        %7497 = vmatmul.bf16.gmra.mxu0 %v7372
        %v7498 = vpop.f32.mrf.mxu0
        %v7499 = vadd.f32 0.0, %v7498
        %v7500 = vpop.f32.mrf.mxu0
        %v7501 = vadd.f32 0.0, %v7500
        %7502 = vmatmul.bf16.gmra.mxu0 %v7373
        %v7503 = vpop.f32.mrf.mxu0
        %v7504 = vadd.f32 0.0, %v7503
        %v7505 = vpop.f32.mrf.mxu0
        %v7506 = vadd.f32 0.0, %v7505
        %7507 = vmatmul.bf16.gmra.mxu0 %v7374
        %v7508 = vpop.f32.mrf.mxu0
        %v7509 = vadd.f32 0.0, %v7508
        %v7510 = vpop.f32.mrf.mxu0
        %v7511 = vadd.f32 0.0, %v7510
        %7512 = vmatmul.bf16.gmra.mxu0 %v7375
        %v7513 = vpop.f32.mrf.mxu0
        %v7514 = vadd.f32 0.0, %v7513
        %v7515 = vpop.f32.mrf.mxu0
        %v7516 = vadd.f32 0.0, %v7515
        %7517 = vmatmul.bf16.gmra.mxu0 %v7376
        %v7518 = vpop.f32.mrf.mxu0
        %v7519 = vadd.f32 0.0, %v7518
        %v7520 = vpop.f32.mrf.mxu0
        %v7521 = vadd.f32 0.0, %v7520
        %7522 = vmatmul.bf16.gmra.mxu0 %v7377
        %v7523 = vpop.f32.mrf.mxu0
        %v7524 = vadd.f32 0.0, %v7523
        %v7525 = vpop.f32.mrf.mxu0
        %v7526 = vadd.f32 0.0, %v7525
        %7527 = vmatmul.bf16.gmra.mxu0 %v7378
        %v7528 = vpop.f32.mrf.mxu0
        %v7529 = vadd.f32 0.0, %v7528
        %v7530 = vpop.f32.mrf.mxu0
        %v7531 = vadd.f32 0.0, %v7530
        %7532 = vdwg.mxu0
        %v7533 = vadd.f32 %v7299, %v7454
        %v7534 = vadd.f32 %v7300, %v7456
        %v7535 = vadd.f32 %v7301, %v7459
        %v7536 = vadd.f32 %v7302, %v7461
        %v7537 = vadd.f32 %v7303, %v7464
        %v7538 = vadd.f32 %v7304, %v7466
        %v7539 = vadd.f32 %v7305, %v7469
        %v7540 = vadd.f32 %v7306, %v7471
        %v7541 = vadd.f32 %v7307, %v7474
        %v7542 = vadd.f32 %v7308, %v7476
        %v7543 = vadd.f32 %v7309, %v7479
        %v7544 = vadd.f32 %v7310, %v7481
        %v7545 = vadd.f32 %v7311, %v7484
        %v7546 = vadd.f32 %v7312, %v7486
        %v7547 = vadd.f32 %v7313, %v7489
        %v7548 = vadd.f32 %v7314, %v7491
        %v7549 = vadd.f32 %v7315, %v7494
        %v7550 = vadd.f32 %v7316, %v7496
        %v7551 = vadd.f32 %v7317, %v7499
        %v7552 = vadd.f32 %v7318, %v7501
        %v7553 = vadd.f32 %v7319, %v7504
        %v7554 = vadd.f32 %v7320, %v7506
        %v7555 = vadd.f32 %v7321, %v7509
        %v7556 = vadd.f32 %v7322, %v7511
        %v7557 = vadd.f32 %v7323, %v7514
        %v7558 = vadd.f32 %v7324, %v7516
        %v7559 = vadd.f32 %v7325, %v7519
        %v7560 = vadd.f32 %v7326, %v7521
        %v7561 = vadd.f32 %v7327, %v7524
        %v7562 = vadd.f32 %v7328, %v7526
        %v7563 = vadd.f32 %v7329, %v7529
        %v7564 = vadd.f32 %v7330, %v7531
        %v7565 = vld [vmem:[%s9] sm:$0x1]
        %v7567 = vperm.slane %v7565, 0
        %v7569 = vadd.f32 %v7533, %v7567
        %v7570 = vadd.f32 %v7534, %v7567
        %v7571 = vadd.f32 %v7535, %v7567
        %v7572 = vadd.f32 %v7536, %v7567
        %v7573 = vadd.f32 %v7537, %v7567
        %v7574 = vadd.f32 %v7538, %v7567
        %v7575 = vadd.f32 %v7539, %v7567
        %v7576 = vadd.f32 %v7540, %v7567
        %v7577 = vadd.f32 %v7541, %v7567
        %v7578 = vadd.f32 %v7542, %v7567
        %v7579 = vadd.f32 %v7543, %v7567
        %v7580 = vadd.f32 %v7544, %v7567
        %v7581 = vadd.f32 %v7545, %v7567
        %v7582 = vadd.f32 %v7546, %v7567
        %v7583 = vadd.f32 %v7547, %v7567
        %v7584 = vadd.f32 %v7548, %v7567
        %v7585 = vadd.f32 %v7549, %v7567
        %v7586 = vadd.f32 %v7550, %v7567
        %v7587 = vadd.f32 %v7551, %v7567
        %v7588 = vadd.f32 %v7552, %v7567
        %v7589 = vadd.f32 %v7553, %v7567
        %v7590 = vadd.f32 %v7554, %v7567
        %v7591 = vadd.f32 %v7555, %v7567
        %v7592 = vadd.f32 %v7556, %v7567
        %v7593 = vadd.f32 %v7557, %v7567
        %v7594 = vadd.f32 %v7558, %v7567
        %v7595 = vadd.f32 %v7559, %v7567
        %v7596 = vadd.f32 %v7560, %v7567
        %v7597 = vadd.f32 %v7561, %v7567
        %v7598 = vadd.f32 %v7562, %v7567
        %v7599 = vadd.f32 %v7563, %v7567
        %v7600 = vadd.f32 %v7564, %v7567
        %7601 = vst [vmem:[%s445] sm:$0xff] %v7569
        %7602 = vst [vmem:[%s445 + $0x8] sm:$0xff] %v7570
        %7603 = vst [vmem:[%s445 + $0x10] sm:$0xff] %v7571
        %7604 = vst [vmem:[%s445 + $0x18] sm:$0xff] %v7572
        %7605 = vst [vmem:[%s445 + $0x20] sm:$0xff] %v7573
        %7606 = vst [vmem:[%s445 + $0x28] sm:$0xff] %v7574
        %7607 = vst [vmem:[%s445 + $0x30] sm:$0xff] %v7575
        %7608 = vst [vmem:[%s445 + $0x38] sm:$0xff] %v7576
        %7609 = vst [vmem:[%s445 + $0x40] sm:$0xff] %v7577
        %7610 = vst [vmem:[%s445 + $0x48] sm:$0xff] %v7578
        %7611 = vst [vmem:[%s445 + $0x50] sm:$0xff] %v7579
        %7612 = vst [vmem:[%s445 + $0x58] sm:$0xff] %v7580
        %7613 = vst [vmem:[%s445 + $0x60] sm:$0xff] %v7581
        %7614 = vst [vmem:[%s445 + $0x68] sm:$0xff] %v7582
        %7615 = vst [vmem:[%s445 + $0x70] sm:$0xff] %v7583
        %7616 = vst [vmem:[%s445 + $0x78] sm:$0xff] %v7584
        %7617 = vst [vmem:[%s445 + $0x80] sm:$0xff] %v7585
        %7618 = vst [vmem:[%s445 + $0x88] sm:$0xff] %v7586
        %7619 = vst [vmem:[%s445 + $0x90] sm:$0xff] %v7587
        %7620 = vst [vmem:[%s445 + $0x98] sm:$0xff] %v7588
        %7621 = vst [vmem:[%s445 + $0xa0] sm:$0xff] %v7589
        %7622 = vst [vmem:[%s445 + $0xa8] sm:$0xff] %v7590
        %7623 = vst [vmem:[%s445 + $0xb0] sm:$0xff] %v7591
        %7624 = vst [vmem:[%s445 + $0xb8] sm:$0xff] %v7592
        %7625 = vst [vmem:[%s445 + $0xc0] sm:$0xff] %v7593
        %7626 = vst [vmem:[%s445 + $0xc8] sm:$0xff] %v7594
        %7627 = vst [vmem:[%s445 + $0xd0] sm:$0xff] %v7595
        %7628 = vst [vmem:[%s445 + $0xd8] sm:$0xff] %v7596
        %7629 = vst [vmem:[%s445 + $0xe0] sm:$0xff] %v7597
        %7630 = vst [vmem:[%s445 + $0xe8] sm:$0xff] %v7598
        %7631 = vst [vmem:[%s445 + $0xf0] sm:$0xff] %v7599
        %7632 = vst [vmem:[%s445 + $0xf8] sm:$0xff] %v7600
        %s7633 = sand.u32 %s252, 1
        %s7634 = scalar_lea.sflag [#allocation5], %s7633
        %s7635 = sand.u32 %s252, 1
        %s7636 = smul.addr %s7635, 256
        %s7637 = scalar_lea.vmem [#allocation12], %s7636
        // Predicated region
        $region81: #{tpu_custom_call.1} parent=59 // pred_check
          %p7638 = pneg %p262
        $region82: #{tpu_custom_call.1} parent=59 // pred_check_branch
          %7640 = sbr.rel (%p7638) target = $region84
        $region83: #{tpu_custom_call.1} parent=59 // pred_region
          %7642 = vsyncadd %s7634, 0
          %s7643 = smul.addr %s29, 32
          %s7644 = smul.addr %s7643, 8
          %s7645 = scalar_lea.hbm %s10, %s7644
          %s7646 = sshll.u32 %s7637, 4
          %s7647 = int_to_ptr.vmem [resolvable:$true] %s7646
          %s7648 = sshll.u32 %s7645, 4
          %s7649 = int_to_ptr.hbm [resolvable:$true] %s7648
          %7654 = dma.vmem_to_hbm [thread:$0]  %s7647, 4096, %s7649, %s7634, 128, 128, 8
        $region84: #{tpu_custom_call.1} parent=59 // pred_fallthru
          _
      $region60: #{tpu_custom_call.1} parent=5 // pred_fallthru
        _
      %p7655 = scmp.le.s32.totalorder 2, %s24
      // Predicated region
      $region85: #{tpu_custom_call.1} parent=5 // pred_check
        %p7656 = pneg %p7655
      $region86: #{tpu_custom_call.1} parent=5 // pred_check_branch
        %7658 = sbr.rel (%p7656) target = $region88
      $region87: #{tpu_custom_call.1} parent=5 // pred_region
        %s7659 = ssub.s32 %s24, 2
        // Predicated region
        $region89: #{tpu_custom_call.1} parent=87 // pred_check
          %p7660 = pneg %p268
        $region90: #{tpu_custom_call.1} parent=87 // pred_check_branch
          %7662 = sbr.rel (%p7660) target = $region92
        $region91: #{tpu_custom_call.1} parent=87 // pred_region
          %s7663 = sand.u32 %s253, 1
          %s7664 = scalar_lea.sflag [#allocation5], %s7663
          %s7665 = sand.u32 %s253, 1
          %s7666 = smul.addr %s7665, 256
          %s7667 = scalar_lea.vmem [#allocation12], %s7666
          %7669 = dma.done %s7664, 4096
        $region92: #{tpu_custom_call.1} parent=87 // pred_fallthru
          _
      $region88: #{tpu_custom_call.1} parent=5 // pred_fallthru
        _
    $region6: #{tpu_custom_call.1} parent=1 // loop_footer
      %s28 = sadd.s32 1, %s24
    $region7: #{tpu_custom_call.1} parent=1 // loop_footer_branch
      %23 = sbr.rel target = $region3
    $region8: #{tpu_custom_call.1} parent=1 // loop_exit
      _
    %7670 = vsyncpa [#allocation4], 1
    %s7671 = scalar_lea.sflag [#allocation4], 1
    %7672 = vsyncpa %s7671, 1
    %7673 = vsyncpa [#allocation7], 1
    %7674 = vsyncpa [#allocation10], 1
    %7675 = vsyncpa [#allocation5], 1
    %s7676 = scalar_lea.sflag [#allocation5], 1
    %7677 = vsyncpa %s7676, 1

</llo_original>
